<compile_context>
chip_gen: v7x
topology: tpu7x:2x2x1
jax: 0.10.0
libtpu: 0.0.40
codegen_flags: <defaults>
</compile_context>

<pallas_src>
import numpy as np
import jax
import jax.numpy as jnp
from jax.experimental import pallas as pl
from jax.experimental.pallas import tpu as pltpu

# ----------------------------------------------------------------------------
# Filter banks (module parameters, initialized in-script).
# G0O/G1O match the published near_sym_a synthesis pair; the 10-tap q-shift
# quartet is built from a qshift-style lowpass with the standard dual-tree
# structural relations (tree b = time reverse of tree a).
# TODO(synk): substitute the published qshift_a coefficient table for bit-exact
#             parity with the dtcwt data files.
# ----------------------------------------------------------------------------
SQRT_HALF = float(np.sqrt(0.5))

G0O = np.array([-3.0, -15.0, 73.0, 170.0, 73.0, -15.0, -3.0]) / 280.0   # 7 taps
G1O = np.array([-0.05, -0.25, 0.60, -0.25, -0.05])                      # 5 taps

_H0 = np.array([0.03516384, 0.0, -0.08832942, 0.23389032, 0.76027237,
                0.58751830, 0.0, -0.11430184, 0.0, 0.0])                # 10 taps
G0A = _H0[::-1].copy()
G0B = G0A[::-1].copy()
G1A = np.array([(-1.0) ** n for n in range(10)]) * G0B
G1B = G1A[::-1].copy()


# ----------------------------------------------------------------------------
# Hardware-aware budgets (review item: derive from get_tpu_info, not constants)
# ----------------------------------------------------------------------------
def _vmem_budget():
    cap = 64 * 1024 * 1024                       # conservative default (v7x)
    try:
        info = pltpu.get_tpu_info()
        cap = int(getattr(info, "vmem_capacity_bytes", cap))
    except Exception:
        pass
    limit = min(int(cap * 3 // 4), 96 * 1024 * 1024)   # 48 MiB on v7x, 96 MiB on v5e/v6e
    limit = max(limit, 32 * 1024 * 1024)
    step_target = max(limit // 8, 2 * 1024 * 1024)     # leave room for double-buffering
    return limit, step_target


_VMEM_LIMIT_BYTES, _TARGET_STEP_BYTES = _vmem_budget()


# ----------------------------------------------------------------------------
# Constant FIR matrices (numpy, trace-time).  They encode the dtcwt reference
# semantics: symmetric extension, conv tap order, polyphase phase selection and
# the 4-phase 2x-upsample interleave.
# ----------------------------------------------------------------------------
_MAT_CACHE = {}


def _reflect(x, minx, maxx):
    rng = maxx - minx
    rng2 = 2.0 * rng
    mod = np.fmod(x - minx, rng2)
    mod = np.where(mod < 0, mod + rng2, mod)
    out = np.where(mod >= rng, rng2 - mod, mod) + minx
    return out.astype(np.int64)


def _symm_idx(n, pad):
    return _reflect(np.arange(-pad, n + pad, dtype=np.float64), -0.5, n - 0.5)


def _colfilter_matrix(n, h):
    """(n, n) matrix M with (M @ X) == dtcwt colfilter(X, h) along axis 0
    (odd-length filter, symmetric extension)."""
    h = np.asarray(h, dtype=np.float64)
    key = ("colfilter", int(n), h.tobytes())
    if key in _MAT_CACHE:
        return _MAT_CACHE[key]
    m = len(h)
    m2 = m // 2
    xe = _symm_idx(n, m2)                      # length n + m - 1
    hr = h[::-1]                               # reversed taps -> convolution
    T = np.zeros((n, n), dtype=np.float64)
    rows = np.arange(n)
    for k in range(m):
        np.add.at(T, (rows, xe[rows + k]), hr[k])
    T = np.ascontiguousarray(T, dtype=np.float32)
    _MAT_CACHE[key] = T
    return T


def _colifilt_matrix(n, ha, hb):
    """(2n, n) matrix M with (M @ X) == dtcwt colifilt(X, ha, hb) along axis 0
    (even-length q-shift pair, 2x-upsampled output, symmetric extension)."""
    ha = np.asarray(ha, dtype=np.float64)
    hb = np.asarray(hb, dtype=np.float64)
    key = ("colifilt", int(n), ha.tobytes(), hb.tobytes())
    if key in _MAT_CACHE:
        return _MAT_CACHE[key]
    assert n % 2 == 0
    m = len(ha)
    m2 = m // 2
    xe = _symm_idx(n, m2)                      # length n + m
    t = np.arange(3, n + m, 2) if m2 % 2 == 0 else np.arange(2, n + m - 1, 2)
    if np.sum(ha * hb) > 0:
        ta, tb = t, t - 1
    else:
        ta, tb = t - 1, t
    hao, hae = ha[0::2], ha[1::2]
    hbo, hbe = hb[0::2], hb[1::2]
    if m2 % 2 == 0:
        phase_defs = [(int(tb[0]) - 2, hae), (int(ta[0]) - 2, hbe),
                      (int(tb[0]), hao), (int(ta[0]), hbo)]
    else:
        phase_defs = [(int(tb[0]), hao), (int(ta[0]), hbo),
                      (int(tb[0]), hae), (int(ta[0]), hbe)]
    T = np.zeros((2 * n, n), dtype=np.float64)
    s = np.arange(n // 2)
    for p, (start, hsub) in enumerate(phase_defs):
        hr = hsub[::-1]                        # reversed taps -> convolution
        rows = 4 * s + p                       # Y[4s + p] = phase_p[s]
        for k in range(len(hr)):
            np.add.at(T, (rows, xe[start + 2 * s + 2 * k]), hr[k])
    T = np.ascontiguousarray(T, dtype=np.float32)
    _MAT_CACHE[key] = T
    return T


# ----------------------------------------------------------------------------
# The fused per-level Pallas kernel: six 2-D MXU matmuls per image.
#   t0/t1 : (Ho, H)  column-pass matrices (g0 branch, g1 branch)
#   s0/s1 : (W, Wo)  row-pass matrices, pre-transposed on the host
#   z/lh/hl/hh : (tb, H, W) data tiles ;  output (tb, Ho, Wo)
# The column-pass intermediates y1/y2 never leave VMEM/vregs.
# ----------------------------------------------------------------------------
def _make_level_kernel(tb):
    def kernel(t0_ref, t1_ref, s0_ref, s1_ref,
               z_ref, lh_ref, hl_ref, hh_ref, o_ref):
        t0 = t0_ref[...]
        t1 = t1_ref[...]
        s0 = s0_ref[...]
        s1 = s1_ref[...]
        for b in range(tb):                              # static unroll
            y1 = (jnp.dot(t0, z_ref[b], preferred_element_type=jnp.float32) +
                  jnp.dot(t1, lh_ref[b], preferred_element_type=jnp.float32))
            y2 = (jnp.dot(t0, hl_ref[b], preferred_element_type=jnp.float32) +
                  jnp.dot(t1, hh_ref[b], preferred_element_type=jnp.float32))
            o_ref[b] = (jnp.dot(y1, s0, preferred_element_type=jnp.float32) +
                        jnp.dot(y2, s1, preferred_element_type=jnp.float32))
    return kernel


def _fused_level(Z, lh, hl, hh, Tc0, Tc1, Tr0, Tr1):
    """One inverse level:  (Tc0@Z + Tc1@lh) @ Tr0^T + (Tc0@hl + Tc1@hh) @ Tr1^T
    applied independently to every (n, c) image, in a single pallas_call."""
    N, C, H, W = (int(d) for d in Z.shape)
    Ho = int(Tc0.shape[0])
    Wo = int(Tr0.shape[0])
    B = N * C

    t0 = jnp.asarray(Tc0, dtype=jnp.float32)                 # (Ho, H)
    t1 = jnp.asarray(Tc1, dtype=jnp.float32)                 # (Ho, H)
    s0 = jnp.asarray(np.ascontiguousarray(Tr0.T), jnp.float32)   # (W, Wo)
    s1 = jnp.asarray(np.ascontiguousarray(Tr1.T), jnp.float32)   # (W, Wo)

    def flat(x):
        return x.reshape(B, H, W).astype(jnp.float32)

    z, qlh, qhl, qhh = flat(Z), flat(lh), flat(hl), flat(hh)

    # Batch tile: fit the VMEM step budget, cap the unroll, and guarantee at
    # least 2 grid steps so v7x's two TensorCores both get work.
    bytes_per_b = 4 * (4 * H * W + Ho * Wo + 2 * Ho * W)
    tb = max(1, min(B, 8, _TARGET_STEP_BYTES // max(bytes_per_b, 1)))
    if B >= 2:
        tb = min(tb, max(1, B // 2))
    bp = ((B + tb - 1) // tb) * tb
    if bp != B:
        pad = ((0, bp - B), (0, 0), (0, 0))
        z, qlh, qhl, qhh = (jnp.pad(u, pad) for u in (z, qlh, qhl, qhh))

    def mat_spec(shape):
        # Constant operand: block == full array, same block index every step,
        # so Pallas keeps it resident (no per-step re-DMA).
        return pl.BlockSpec(shape, lambda i: (0, 0))

    def dat_spec(L, M):
        return pl.BlockSpec((tb, L, M), lambda i: (i, 0, 0))

    # TODO(synk): for very large images add a second (halo'd) spatial grid axis
    #             so one image + its output need not fit a single VMEM step.
    out = pl.pallas_call(
        _make_level_kernel(tb),
        out_shape=jax.ShapeDtypeStruct((bp, Ho, Wo), jnp.float32),
        grid=(bp // tb,),
        in_specs=[mat_spec((Ho, H)), mat_spec((Ho, H)),
                  mat_spec((W, Wo)), mat_spec((W, Wo)),
                  dat_spec(H, W), dat_spec(H, W), dat_spec(H, W), dat_spec(H, W)],
        out_specs=pl.BlockSpec((tb, Ho, Wo), lambda i: (i, 0, 0)),
        compiler_params=pltpu.CompilerParams(
            dimension_semantics=("parallel",),
            vmem_limit_bytes=_VMEM_LIMIT_BYTES),
    )(t0, t1, s0, s1, z, qlh, qhl, qhh)

    if bp != B:
        out = out[:B]
    return out.reshape(N, C, Ho, Wo)


# ----------------------------------------------------------------------------
# c2q: two complex subbands -> real quad image of double size (dtcwt reference
# placement, sqrt(0.5) scale).  Pure jnp: XLA fuses adds + scale into the
# single interleave write; the kernel then reads the quad image once.
# ----------------------------------------------------------------------------
def c2q(w1r, w1i, w2r, w2i):
    sc = SQRT_HALF
    x1 = sc * (w1r + w2r)    # x[0::2, 0::2]
    x2 = sc * (w1i + w2i)    # x[0::2, 1::2]
    x3 = sc * (w1i - w2i)    # x[1::2, 0::2]
    x4 = sc * (w2r - w1r)    # x[1::2, 1::2]
    n, c, hh, wh = w1r.shape
    q = jnp.stack([jnp.stack([x1, x2], axis=-1),
                   jnp.stack([x3, x4], axis=-1)], axis=-3)   # (N,C,Hh,2,Wh,2)
    return q.reshape(n, c, 2 * hh, 2 * wh).astype(jnp.float32)


def _c2q_level(yhr, yhi):
    lh = c2q(yhr[:, :, 0], yhi[:, :, 0], yhr[:, :, 5], yhi[:, :, 5])
    hl = c2q(yhr[:, :, 2], yhi[:, :, 2], yhr[:, :, 3], yhi[:, :, 3])
    hh = c2q(yhr[:, :, 1], yhi[:, :, 1], yhr[:, :, 4], yhi[:, :, 4])
    return lh, hl, hh


# ----------------------------------------------------------------------------
# Inverse DTCWT forward pass (== DTCWTInverse.forward, J=3, skip_hps=None)
# ----------------------------------------------------------------------------
def dtcwt_inverse(yl, yhr, yhi):
    """yl: (N,C,H,W); yhr/yhi: tuples of J arrays (N,C,6,Hj,Wj), finest first."""
    J = len(yhr)
    Z = yl.astype(jnp.float32)
    for level in range(J - 1, 0, -1):                      # q-shift levels J..2
        lh, hl, hh = _c2q_level(yhr[level], yhi[level])
        H, W = int(Z.shape[2]), int(Z.shape[3])
        Tc0 = _colifilt_matrix(H, G0B, G0A)                # columns, g0 branch
        Tc1 = _colifilt_matrix(H, G1B, G1A)                # columns, g1 branch
        Tr0 = _colifilt_matrix(W, G0B, G0A)                # rows,    g0 branch
        Tr1 = _colifilt_matrix(W, G1B, G1A)                # rows,    g1 branch
        Z = _fused_level(Z, lh, hl, hh, Tc0, Tc1, Tr0, Tr1)
        if Z.shape[2] != yhr[level - 1].shape[3] * 2:      # crop rows if needed
            Z = Z[:, :, 1:-1, :]
        if Z.shape[3] != yhr[level - 1].shape[4] * 2:      # crop cols if needed
            Z = Z[:, :, :, 1:-1]
    lh, hl, hh = _c2q_level(yhr[0], yhi[0])                # biort level 1
    H, W = int(Z.shape[2]), int(Z.shape[3])
    Uc0 = _colfilter_matrix(H, G0O)
    Uc1 = _colfilter_matrix(H, G1O)
    Ur0 = _colfilter_matrix(W, G0O)
    Ur1 = _colfilter_matrix(W, G1O)
    return _fused_level(Z, lh, hl, hh, Uc0, Uc1, Ur0, Ur1)


if __name__ == "__main__":
    N, C, J = 2, 4, 3
    H1, W1 = 16, 16                                     # level-1 highpass size (image 32x32)
    hp_shapes = [(H1 >> j, W1 >> j) for j in range(J)]  # (16,16), (8,8), (4,4)
    yl_shape = (N, C, hp_shapes[-1][0] * 2, hp_shapes[-1][1] * 2)  # (2,4,8,8)

    key = jax.random.PRNGKey(0)
    keys = jax.random.split(key, 1 + 2 * J)
    yl = jax.random.normal(keys[0], yl_shape, dtype=jnp.float32)
    yhr = tuple(jax.random.normal(keys[1 + j], (N, C, 6) + hp_shapes[j],
                                  dtype=jnp.float32) for j in range(J))
    yhi = tuple(jax.random.normal(keys[1 + J + j], (N, C, 6) + hp_shapes[j],
                                  dtype=jnp.float32) for j in range(J))

    fn = jax.jit(dtcwt_inverse)
    y = fn(yl, yhr, yhi)
    y = jax.block_until_ready(y)
    assert y.shape == (N, C, 2 * H1, 2 * W1), y.shape
    assert y.dtype == jnp.float32
    print("KERNEL_OK")
</pallas_src>

<mosaic_0001>
module attributes {stable_mosaic.version = 11 : i64} {
  func.func @kernel(%arg0: i32, %arg1: memref<16x8xf32, #tpu.memory_space<vmem>>, %arg2: memref<16x8xf32, #tpu.memory_space<vmem>>, %arg3: memref<8x16xf32, #tpu.memory_space<vmem>>, %arg4: memref<8x16xf32, #tpu.memory_space<vmem>>, %arg5: memref<4x8x8xf32, #tpu.memory_space<vmem>>, %arg6: memref<4x8x8xf32, #tpu.memory_space<vmem>>, %arg7: memref<4x8x8xf32, #tpu.memory_space<vmem>>, %arg8: memref<4x8x8xf32, #tpu.memory_space<vmem>>, %arg9: memref<4x16x16xf32, #tpu.memory_space<vmem>>) attributes {dimension_semantics = [#tpu.dimension_semantics<parallel>], iteration_bounds = array<i64: 2>, scalar_prefetch = 0 : i64, scratch_operands = 0 : i64, tpu.core_type = #tpu.core_type<tc>, window_params = [{pipeline_mode = #tpu.pipeline_mode<synchronous>, transform_indices = @transform_0, window_bounds = array<i64: 16, 8>}, {pipeline_mode = #tpu.pipeline_mode<synchronous>, transform_indices = @transform_1, window_bounds = array<i64: 16, 8>}, {pipeline_mode = #tpu.pipeline_mode<synchronous>, transform_indices = @transform_2, window_bounds = array<i64: 8, 16>}, {pipeline_mode = #tpu.pipeline_mode<synchronous>, transform_indices = @transform_3, window_bounds = array<i64: 8, 16>}, {transform_indices = @transform_4, window_bounds = array<i64: 4, 8, 8>}, {transform_indices = @transform_5, window_bounds = array<i64: 4, 8, 8>}, {transform_indices = @transform_6, window_bounds = array<i64: 4, 8, 8>}, {transform_indices = @transform_7, window_bounds = array<i64: 4, 8, 8>}, {transform_indices = @transform_8, window_bounds = array<i64: 4, 16, 16>}]} {
    %c0 = arith.constant 0 : index
    %c0_0 = arith.constant 0 : index
    %0 = vector.load %arg1[%c0, %c0_0] : memref<16x8xf32, #tpu.memory_space<vmem>>, vector<16x8xf32>
    %c0_1 = arith.constant 0 : index
    %c0_2 = arith.constant 0 : index
    %1 = vector.load %arg2[%c0_1, %c0_2] : memref<16x8xf32, #tpu.memory_space<vmem>>, vector<16x8xf32>
    %c0_3 = arith.constant 0 : index
    %c0_4 = arith.constant 0 : index
    %2 = vector.load %arg3[%c0_3, %c0_4] : memref<8x16xf32, #tpu.memory_space<vmem>>, vector<8x16xf32>
    %c0_5 = arith.constant 0 : index
    %c0_6 = arith.constant 0 : index
    %3 = vector.load %arg4[%c0_5, %c0_6] : memref<8x16xf32, #tpu.memory_space<vmem>>, vector<8x16xf32>
    %c0_7 = arith.constant 0 : index
    %c0_8 = arith.constant 0 : index
    %c0_9 = arith.constant 0 : index
    %4 = vector.load %arg5[%c0_7, %c0_8, %c0_9] : memref<4x8x8xf32, #tpu.memory_space<vmem>>, vector<1x8x8xf32>
    %5 = vector.shape_cast %4 : vector<1x8x8xf32> to vector<8x8xf32>
    %cst = arith.constant dense<0.000000e+00> : vector<16x8xf32>
    %6 = tpu.matmul %0, %5, %cst {dimension_numbers = #tpu.dot_dimension_numbers<[1], [0], [0], [1], [0, 0, 1, 1], [], []>} : vector<16x8xf32>, vector<8x8xf32>, vector<16x8xf32> -> vector<16x8xf32>
    %c0_10 = arith.constant 0 : index
    %c0_11 = arith.constant 0 : index
    %c0_12 = arith.constant 0 : index
    %7 = vector.load %arg6[%c0_10, %c0_11, %c0_12] : memref<4x8x8xf32, #tpu.memory_space<vmem>>, vector<1x8x8xf32>
    %8 = vector.shape_cast %7 : vector<1x8x8xf32> to vector<8x8xf32>
    %cst_13 = arith.constant dense<0.000000e+00> : vector<16x8xf32>
    %9 = tpu.matmul %1, %8, %cst_13 {dimension_numbers = #tpu.dot_dimension_numbers<[1], [0], [0], [1], [0, 0, 1, 1], [], []>} : vector<16x8xf32>, vector<8x8xf32>, vector<16x8xf32> -> vector<16x8xf32>
    %10 = arith.addf %6, %9 : vector<16x8xf32>
    %c0_14 = arith.constant 0 : index
    %c0_15 = arith.constant 0 : index
    %c0_16 = arith.constant 0 : index
    %11 = vector.load %arg7[%c0_14, %c0_15, %c0_16] : memref<4x8x8xf32, #tpu.memory_space<vmem>>, vector<1x8x8xf32>
    %12 = vector.shape_cast %11 : vector<1x8x8xf32> to vector<8x8xf32>
    %cst_17 = arith.constant dense<0.000000e+00> : vector<16x8xf32>
    %13 = tpu.matmul %0, %12, %cst_17 {dimension_numbers = #tpu.dot_dimension_numbers<[1], [0], [0], [1], [0, 0, 1, 1], [], []>} : vector<16x8xf32>, vector<8x8xf32>, vector<16x8xf32> -> vector<16x8xf32>
    %c0_18 = arith.constant 0 : index
    %c0_19 = arith.constant 0 : index
    %c0_20 = arith.constant 0 : index
    %14 = vector.load %arg8[%c0_18, %c0_19, %c0_20] : memref<4x8x8xf32, #tpu.memory_space<vmem>>, vector<1x8x8xf32>
    %15 = vector.shape_cast %14 : vector<1x8x8xf32> to vector<8x8xf32>
    %cst_21 = arith.constant dense<0.000000e+00> : vector<16x8xf32>
    %16 = tpu.matmul %1, %15, %cst_21 {dimension_numbers = #tpu.dot_dimension_numbers<[1], [0], [0], [1], [0, 0, 1, 1], [], []>} : vector<16x8xf32>, vector<8x8xf32>, vector<16x8xf32> -> vector<16x8xf32>
    %17 = arith.addf %13, %16 : vector<16x8xf32>
    %cst_22 = arith.constant dense<0.000000e+00> : vector<16x16xf32>
    %18 = tpu.matmul %10, %2, %cst_22 {dimension_numbers = #tpu.dot_dimension_numbers<[1], [0], [0], [1], [0, 0, 1, 1], [], []>} : vector<16x8xf32>, vector<8x16xf32>, vector<16x16xf32> -> vector<16x16xf32>
    %cst_23 = arith.constant dense<0.000000e+00> : vector<16x16xf32>
    %19 = tpu.matmul %17, %3, %cst_23 {dimension_numbers = #tpu.dot_dimension_numbers<[1], [0], [0], [1], [0, 0, 1, 1], [], []>} : vector<16x8xf32>, vector<8x16xf32>, vector<16x16xf32> -> vector<16x16xf32>
    %20 = arith.addf %18, %19 : vector<16x16xf32>
    %c0_24 = arith.constant 0 : index
    %c0_25 = arith.constant 0 : index
    %c0_26 = arith.constant 0 : index
    %21 = vector.load %arg9[%c0_24, %c0_25, %c0_26] : memref<4x16x16xf32, #tpu.memory_space<vmem>>, vector<1x16x16xf32>
    %22 = vector.shape_cast %21 : vector<1x16x16xf32> to vector<16x16xf32>
    %23 = vector.shape_cast %20 : vector<16x16xf32> to vector<1x16x16xf32>
    tpu.vector_store %arg9[%c0_24, %c0_25, %c0_26], %23 {strides = array<i32>} : memref<4x16x16xf32, #tpu.memory_space<vmem>>, vector<1x16x16xf32>,
    %c1 = arith.constant 1 : index
    %c0_27 = arith.constant 0 : index
    %c0_28 = arith.constant 0 : index
    %24 = vector.load %arg5[%c1, %c0_27, %c0_28] : memref<4x8x8xf32, #tpu.memory_space<vmem>>, vector<1x8x8xf32>
    %25 = vector.shape_cast %24 : vector<1x8x8xf32> to vector<8x8xf32>
    %cst_29 = arith.constant dense<0.000000e+00> : vector<16x8xf32>
    %26 = tpu.matmul %0, %25, %cst_29 {dimension_numbers = #tpu.dot_dimension_numbers<[1], [0], [0], [1], [0, 0, 1, 1], [], []>} : vector<16x8xf32>, vector<8x8xf32>, vector<16x8xf32> -> vector<16x8xf32>
    %c1_30 = arith.constant 1 : index
    %c0_31 = arith.constant 0 : index
    %c0_32 = arith.constant 0 : index
    %27 = vector.load %arg6[%c1_30, %c0_31, %c0_32] : memref<4x8x8xf32, #tpu.memory_space<vmem>>, vector<1x8x8xf32>
    %28 = vector.shape_cast %27 : vector<1x8x8xf32> to vector<8x8xf32>
    %cst_33 = arith.constant dense<0.000000e+00> : vector<16x8xf32>
    %29 = tpu.matmul %1, %28, %cst_33 {dimension_numbers = #tpu.dot_dimension_numbers<[1], [0], [0], [1], [0, 0, 1, 1], [], []>} : vector<16x8xf32>, vector<8x8xf32>, vector<16x8xf32> -> vector<16x8xf32>
    %30 = arith.addf %26, %29 : vector<16x8xf32>
    %c1_34 = arith.constant 1 : index
    %c0_35 = arith.constant 0 : index
    %c0_36 = arith.constant 0 : index
    %31 = vector.load %arg7[%c1_34, %c0_35, %c0_36] : memref<4x8x8xf32, #tpu.memory_space<vmem>>, vector<1x8x8xf32>
    %32 = vector.shape_cast %31 : vector<1x8x8xf32> to vector<8x8xf32>
    %cst_37 = arith.constant dense<0.000000e+00> : vector<16x8xf32>
    %33 = tpu.matmul %0, %32, %cst_37 {dimension_numbers = #tpu.dot_dimension_numbers<[1], [0], [0], [1], [0, 0, 1, 1], [], []>} : vector<16x8xf32>, vector<8x8xf32>, vector<16x8xf32> -> vector<16x8xf32>
    %c1_38 = arith.constant 1 : index
    %c0_39 = arith.constant 0 : index
    %c0_40 = arith.constant 0 : index
    %34 = vector.load %arg8[%c1_38, %c0_39, %c0_40] : memref<4x8x8xf32, #tpu.memory_space<vmem>>, vector<1x8x8xf32>
    %35 = vector.shape_cast %34 : vector<1x8x8xf32> to vector<8x8xf32>
    %cst_41 = arith.constant dense<0.000000e+00> : vector<16x8xf32>
    %36 = tpu.matmul %1, %35, %cst_41 {dimension_numbers = #tpu.dot_dimension_numbers<[1], [0], [0], [1], [0, 0, 1, 1], [], []>} : vector<16x8xf32>, vector<8x8xf32>, vector<16x8xf32> -> vector<16x8xf32>
    %37 = arith.addf %33, %36 : vector<16x8xf32>
    %cst_42 = arith.constant dense<0.000000e+00> : vector<16x16xf32>
    %38 = tpu.matmul %30, %2, %cst_42 {dimension_numbers = #tpu.dot_dimension_numbers<[1], [0], [0], [1], [0, 0, 1, 1], [], []>} : vector<16x8xf32>, vector<8x16xf32>, vector<16x16xf32> -> vector<16x16xf32>
    %cst_43 = arith.constant dense<0.000000e+00> : vector<16x16xf32>
    %39 = tpu.matmul %37, %3, %cst_43 {dimension_numbers = #tpu.dot_dimension_numbers<[1], [0], [0], [1], [0, 0, 1, 1], [], []>} : vector<16x8xf32>, vector<8x16xf32>, vector<16x16xf32> -> vector<16x16xf32>
    %40 = arith.addf %38, %39 : vector<16x16xf32>
    %c1_44 = arith.constant 1 : index
    %c0_45 = arith.constant 0 : index
    %c0_46 = arith.constant 0 : index
    %41 = vector.load %arg9[%c1_44, %c0_45, %c0_46] : memref<4x16x16xf32, #tpu.memory_space<vmem>>, vector<1x16x16xf32>
    %42 = vector.shape_cast %41 : vector<1x16x16xf32> to vector<16x16xf32>
    %43 = vector.shape_cast %40 : vector<16x16xf32> to vector<1x16x16xf32>
    tpu.vector_store %arg9[%c1_44, %c0_45, %c0_46], %43 {strides = array<i32>} : memref<4x16x16xf32, #tpu.memory_space<vmem>>, vector<1x16x16xf32>,
    %c2 = arith.constant 2 : index
    %c0_47 = arith.constant 0 : index
    %c0_48 = arith.constant 0 : index
    %44 = vector.load %arg5[%c2, %c0_47, %c0_48] : memref<4x8x8xf32, #tpu.memory_space<vmem>>, vector<1x8x8xf32>
    %45 = vector.shape_cast %44 : vector<1x8x8xf32> to vector<8x8xf32>
    %cst_49 = arith.constant dense<0.000000e+00> : vector<16x8xf32>
    %46 = tpu.matmul %0, %45, %cst_49 {dimension_numbers = #tpu.dot_dimension_numbers<[1], [0], [0], [1], [0, 0, 1, 1], [], []>} : vector<16x8xf32>, vector<8x8xf32>, vector<16x8xf32> -> vector<16x8xf32>
    %c2_50 = arith.constant 2 : index
    %c0_51 = arith.constant 0 : index
    %c0_52 = arith.constant 0 : index
    %47 = vector.load %arg6[%c2_50, %c0_51, %c0_52] : memref<4x8x8xf32, #tpu.memory_space<vmem>>, vector<1x8x8xf32>
    %48 = vector.shape_cast %47 : vector<1x8x8xf32> to vector<8x8xf32>
    %cst_53 = arith.constant dense<0.000000e+00> : vector<16x8xf32>
    %49 = tpu.matmul %1, %48, %cst_53 {dimension_numbers = #tpu.dot_dimension_numbers<[1], [0], [0], [1], [0, 0, 1, 1], [], []>} : vector<16x8xf32>, vector<8x8xf32>, vector<16x8xf32> -> vector<16x8xf32>
    %50 = arith.addf %46, %49 : vector<16x8xf32>
    %c2_54 = arith.constant 2 : index
    %c0_55 = arith.constant 0 : index
    %c0_56 = arith.constant 0 : index
    %51 = vector.load %arg7[%c2_54, %c0_55, %c0_56] : memref<4x8x8xf32, #tpu.memory_space<vmem>>, vector<1x8x8xf32>
    %52 = vector.shape_cast %51 : vector<1x8x8xf32> to vector<8x8xf32>
    %cst_57 = arith.constant dense<0.000000e+00> : vector<16x8xf32>
    %53 = tpu.matmul %0, %52, %cst_57 {dimension_numbers = #tpu.dot_dimension_numbers<[1], [0], [0], [1], [0, 0, 1, 1], [], []>} : vector<16x8xf32>, vector<8x8xf32>, vector<16x8xf32> -> vector<16x8xf32>
    %c2_58 = arith.constant 2 : index
    %c0_59 = arith.constant 0 : index
    %c0_60 = arith.constant 0 : index
    %54 = vector.load %arg8[%c2_58, %c0_59, %c0_60] : memref<4x8x8xf32, #tpu.memory_space<vmem>>, vector<1x8x8xf32>
    %55 = vector.shape_cast %54 : vector<1x8x8xf32> to vector<8x8xf32>
    %cst_61 = arith.constant dense<0.000000e+00> : vector<16x8xf32>
    %56 = tpu.matmul %1, %55, %cst_61 {dimension_numbers = #tpu.dot_dimension_numbers<[1], [0], [0], [1], [0, 0, 1, 1], [], []>} : vector<16x8xf32>, vector<8x8xf32>, vector<16x8xf32> -> vector<16x8xf32>
    %57 = arith.addf %53, %56 : vector<16x8xf32>
    %cst_62 = arith.constant dense<0.000000e+00> : vector<16x16xf32>
    %58 = tpu.matmul %50, %2, %cst_62 {dimension_numbers = #tpu.dot_dimension_numbers<[1], [0], [0], [1], [0, 0, 1, 1], [], []>} : vector<16x8xf32>, vector<8x16xf32>, vector<16x16xf32> -> vector<16x16xf32>
    %cst_63 = arith.constant dense<0.000000e+00> : vector<16x16xf32>
    %59 = tpu.matmul %57, %3, %cst_63 {dimension_numbers = #tpu.dot_dimension_numbers<[1], [0], [0], [1], [0, 0, 1, 1], [], []>} : vector<16x8xf32>, vector<8x16xf32>, vector<16x16xf32> -> vector<16x16xf32>
    %60 = arith.addf %58, %59 : vector<16x16xf32>
    %c2_64 = arith.constant 2 : index
    %c0_65 = arith.constant 0 : index
    %c0_66 = arith.constant 0 : index
    %61 = vector.load %arg9[%c2_64, %c0_65, %c0_66] : memref<4x16x16xf32, #tpu.memory_space<vmem>>, vector<1x16x16xf32>
    %62 = vector.shape_cast %61 : vector<1x16x16xf32> to vector<16x16xf32>
    %63 = vector.shape_cast %60 : vector<16x16xf32> to vector<1x16x16xf32>
    tpu.vector_store %arg9[%c2_64, %c0_65, %c0_66], %63 {strides = array<i32>} : memref<4x16x16xf32, #tpu.memory_space<vmem>>, vector<1x16x16xf32>,
    %c3 = arith.constant 3 : index
    %c0_67 = arith.constant 0 : index
    %c0_68 = arith.constant 0 : index
    %64 = vector.load %arg5[%c3, %c0_67, %c0_68] : memref<4x8x8xf32, #tpu.memory_space<vmem>>, vector<1x8x8xf32>
    %65 = vector.shape_cast %64 : vector<1x8x8xf32> to vector<8x8xf32>
    %cst_69 = arith.constant dense<0.000000e+00> : vector<16x8xf32>
    %66 = tpu.matmul %0, %65, %cst_69 {dimension_numbers = #tpu.dot_dimension_numbers<[1], [0], [0], [1], [0, 0, 1, 1], [], []>} : vector<16x8xf32>, vector<8x8xf32>, vector<16x8xf32> -> vector<16x8xf32>
    %c3_70 = arith.constant 3 : index
    %c0_71 = arith.constant 0 : index
    %c0_72 = arith.constant 0 : index
    %67 = vector.load %arg6[%c3_70, %c0_71, %c0_72] : memref<4x8x8xf32, #tpu.memory_space<vmem>>, vector<1x8x8xf32>
    %68 = vector.shape_cast %67 : vector<1x8x8xf32> to vector<8x8xf32>
    %cst_73 = arith.constant dense<0.000000e+00> : vector<16x8xf32>
    %69 = tpu.matmul %1, %68, %cst_73 {dimension_numbers = #tpu.dot_dimension_numbers<[1], [0], [0], [1], [0, 0, 1, 1], [], []>} : vector<16x8xf32>, vector<8x8xf32>, vector<16x8xf32> -> vector<16x8xf32>
    %70 = arith.addf %66, %69 : vector<16x8xf32>
    %c3_74 = arith.constant 3 : index
    %c0_75 = arith.constant 0 : index
    %c0_76 = arith.constant 0 : index
    %71 = vector.load %arg7[%c3_74, %c0_75, %c0_76] : memref<4x8x8xf32, #tpu.memory_space<vmem>>, vector<1x8x8xf32>
    %72 = vector.shape_cast %71 : vector<1x8x8xf32> to vector<8x8xf32>
    %cst_77 = arith.constant dense<0.000000e+00> : vector<16x8xf32>
    %73 = tpu.matmul %0, %72, %cst_77 {dimension_numbers = #tpu.dot_dimension_numbers<[1], [0], [0], [1], [0, 0, 1, 1], [], []>} : vector<16x8xf32>, vector<8x8xf32>, vector<16x8xf32> -> vector<16x8xf32>
    %c3_78 = arith.constant 3 : index
    %c0_79 = arith.constant 0 : index
    %c0_80 = arith.constant 0 : index
    %74 = vector.load %arg8[%c3_78, %c0_79, %c0_80] : memref<4x8x8xf32, #tpu.memory_space<vmem>>, vector<1x8x8xf32>
    %75 = vector.shape_cast %74 : vector<1x8x8xf32> to vector<8x8xf32>
    %cst_81 = arith.constant dense<0.000000e+00> : vector<16x8xf32>
    %76 = tpu.matmul %1, %75, %cst_81 {dimension_numbers = #tpu.dot_dimension_numbers<[1], [0], [0], [1], [0, 0, 1, 1], [], []>} : vector<16x8xf32>, vector<8x8xf32>, vector<16x8xf32> -> vector<16x8xf32>
    %77 = arith.addf %73, %76 : vector<16x8xf32>
    %cst_82 = arith.constant dense<0.000000e+00> : vector<16x16xf32>
    %78 = tpu.matmul %70, %2, %cst_82 {dimension_numbers = #tpu.dot_dimension_numbers<[1], [0], [0], [1], [0, 0, 1, 1], [], []>} : vector<16x8xf32>, vector<8x16xf32>, vector<16x16xf32> -> vector<16x16xf32>
    %cst_83 = arith.constant dense<0.000000e+00> : vector<16x16xf32>
    %79 = tpu.matmul %77, %3, %cst_83 {dimension_numbers = #tpu.dot_dimension_numbers<[1], [0], [0], [1], [0, 0, 1, 1], [], []>} : vector<16x8xf32>, vector<8x16xf32>, vector<16x16xf32> -> vector<16x16xf32>
    %80 = arith.addf %78, %79 : vector<16x16xf32>
    %c3_84 = arith.constant 3 : index
    %c0_85 = arith.constant 0 : index
    %c0_86 = arith.constant 0 : index
    %81 = vector.load %arg9[%c3_84, %c0_85, %c0_86] : memref<4x16x16xf32, #tpu.memory_space<vmem>>, vector<1x16x16xf32>
    %82 = vector.shape_cast %81 : vector<1x16x16xf32> to vector<16x16xf32>
    %83 = vector.shape_cast %80 : vector<16x16xf32> to vector<1x16x16xf32>
    tpu.vector_store %arg9[%c3_84, %c0_85, %c0_86], %83 {strides = array<i32>} : memref<4x16x16xf32, #tpu.memory_space<vmem>>, vector<1x16x16xf32>,
    return
  }
  func.func @transform_0(%arg0: i32) -> (i32, i32) {
    %c0_i32 = arith.constant 0 : i32
    %c0_i32_0 = arith.constant 0 : i32
    %c0_i32_1 = arith.constant 0 : i32
    return %c0_i32, %c0_i32_0 : i32, i32
  }
  func.func @transform_1(%arg0: i32) -> (i32, i32) {
    %c0_i32 = arith.constant 0 : i32
    %c0_i32_0 = arith.constant 0 : i32
    %c0_i32_1 = arith.constant 0 : i32
    return %c0_i32, %c0_i32_0 : i32, i32
  }
  func.func @transform_2(%arg0: i32) -> (i32, i32) {
    %c0_i32 = arith.constant 0 : i32
    %c0_i32_0 = arith.constant 0 : i32
    %c0_i32_1 = arith.constant 0 : i32
    return %c0_i32, %c0_i32_0 : i32, i32
  }
  func.func @transform_3(%arg0: i32) -> (i32, i32) {
    %c0_i32 = arith.constant 0 : i32
    %c0_i32_0 = arith.constant 0 : i32
    %c0_i32_1 = arith.constant 0 : i32
    return %c0_i32, %c0_i32_0 : i32, i32
  }
  func.func @transform_4(%arg0: i32) -> (i32, i32, i32) {
    %c0_i32 = arith.constant 0 : i32
    %c0_i32_0 = arith.constant 0 : i32
    %c0_i32_1 = arith.constant 0 : i32
    return %arg0, %c0_i32, %c0_i32_0 : i32, i32, i32
  }
  func.func @transform_5(%arg0: i32) -> (i32, i32, i32) {
    %c0_i32 = arith.constant 0 : i32
    %c0_i32_0 = arith.constant 0 : i32
    %c0_i32_1 = arith.constant 0 : i32
    return %arg0, %c0_i32, %c0_i32_0 : i32, i32, i32
  }
  func.func @transform_6(%arg0: i32) -> (i32, i32, i32) {
    %c0_i32 = arith.constant 0 : i32
    %c0_i32_0 = arith.constant 0 : i32
    %c0_i32_1 = arith.constant 0 : i32
    return %arg0, %c0_i32, %c0_i32_0 : i32, i32, i32
  }
  func.func @transform_7(%arg0: i32) -> (i32, i32, i32) {
    %c0_i32 = arith.constant 0 : i32
    %c0_i32_0 = arith.constant 0 : i32
    %c0_i32_1 = arith.constant 0 : i32
    return %arg0, %c0_i32, %c0_i32_0 : i32, i32, i32
  }
  func.func @transform_8(%arg0: i32) -> (i32, i32, i32) {
    %c0_i32 = arith.constant 0 : i32
    %c0_i32_0 = arith.constant 0 : i32
    %c0_i32_1 = arith.constant 0 : i32
    return %arg0, %c0_i32, %c0_i32_0 : i32, i32, i32
  }
}

module attributes {stable_mosaic.version = 11 : i64} {
  func.func @kernel(%arg0: i32, %arg1: memref<32x16xf32, #tpu.memory_space<vmem>>, %arg2: memref<32x16xf32, #tpu.memory_space<vmem>>, %arg3: memref<16x32xf32, #tpu.memory_space<vmem>>, %arg4: memref<16x32xf32, #tpu.memory_space<vmem>>, %arg5: memref<4x16x16xf32, #tpu.memory_space<vmem>>, %arg6: memref<4x16x16xf32, #tpu.memory_space<vmem>>, %arg7: memref<4x16x16xf32, #tpu.memory_space<vmem>>, %arg8: memref<4x16x16xf32, #tpu.memory_space<vmem>>, %arg9: memref<4x32x32xf32, #tpu.memory_space<vmem>>) attributes {dimension_semantics = [#tpu.dimension_semantics<parallel>], iteration_bounds = array<i64: 2>, scalar_prefetch = 0 : i64, scratch_operands = 0 : i64, tpu.core_type = #tpu.core_type<tc>, window_params = [{pipeline_mode = #tpu.pipeline_mode<synchronous>, transform_indices = @transform_0, window_bounds = array<i64: 32, 16>}, {pipeline_mode = #tpu.pipeline_mode<synchronous>, transform_indices = @transform_1, window_bounds = array<i64: 32, 16>}, {pipeline_mode = #tpu.pipeline_mode<synchronous>, transform_indices = @transform_2, window_bounds = array<i64: 16, 32>}, {pipeline_mode = #tpu.pipeline_mode<synchronous>, transform_indices = @transform_3, window_bounds = array<i64: 16, 32>}, {transform_indices = @transform_4, window_bounds = array<i64: 4, 16, 16>}, {transform_indices = @transform_5, window_bounds = array<i64: 4, 16, 16>}, {transform_indices = @transform_6, window_bounds = array<i64: 4, 16, 16>}, {transform_indices = @transform_7, window_bounds = array<i64: 4, 16, 16>}, {transform_indices = @transform_8, window_bounds = array<i64: 4, 32, 32>}]} {
    %c0 = arith.constant 0 : index
    %c0_0 = arith.constant 0 : index
    %0 = vector.load %arg1[%c0, %c0_0] : memref<32x16xf32, #tpu.memory_space<vmem>>, vector<32x16xf32>
    %c0_1 = arith.constant 0 : index
    %c0_2 = arith.constant 0 : index
    %1 = vector.load %arg2[%c0_1, %c0_2] : memref<32x16xf32, #tpu.memory_space<vmem>>, vector<32x16xf32>
    %c0_3 = arith.constant 0 : index
    %c0_4 = arith.constant 0 : index
    %2 = vector.load %arg3[%c0_3, %c0_4] : memref<16x32xf32, #tpu.memory_space<vmem>>, vector<16x32xf32>
    %c0_5 = arith.constant 0 : index
    %c0_6 = arith.constant 0 : index
    %3 = vector.load %arg4[%c0_5, %c0_6] : memref<16x32xf32, #tpu.memory_space<vmem>>, vector<16x32xf32>
    %c0_7 = arith.constant 0 : index
    %c0_8 = arith.constant 0 : index
    %c0_9 = arith.constant 0 : index
    %4 = vector.load %arg5[%c0_7, %c0_8, %c0_9] : memref<4x16x16xf32, #tpu.memory_space<vmem>>, vector<1x16x16xf32>
    %5 = vector.shape_cast %4 : vector<1x16x16xf32> to vector<16x16xf32>
    %cst = arith.constant dense<0.000000e+00> : vector<32x16xf32>
    %6 = tpu.matmul %0, %5, %cst {dimension_numbers = #tpu.dot_dimension_numbers<[1], [0], [0], [1], [0, 0, 1, 1], [], []>} : vector<32x16xf32>, vector<16x16xf32>, vector<32x16xf32> -> vector<32x16xf32>
    %c0_10 = arith.constant 0 : index
    %c0_11 = arith.constant 0 : index
    %c0_12 = arith.constant 0 : index
    %7 = vector.load %arg6[%c0_10, %c0_11, %c0_12] : memref<4x16x16xf32, #tpu.memory_space<vmem>>, vector<1x16x16xf32>
    %8 = vector.shape_cast %7 : vector<1x16x16xf32> to vector<16x16xf32>
    %cst_13 = arith.constant dense<0.000000e+00> : vector<32x16xf32>
    %9 = tpu.matmul %1, %8, %cst_13 {dimension_numbers = #tpu.dot_dimension_numbers<[1], [0], [0], [1], [0, 0, 1, 1], [], []>} : vector<32x16xf32>, vector<16x16xf32>, vector<32x16xf32> -> vector<32x16xf32>
    %10 = arith.addf %6, %9 : vector<32x16xf32>
    %c0_14 = arith.constant 0 : index
    %c0_15 = arith.constant 0 : index
    %c0_16 = arith.constant 0 : index
    %11 = vector.load %arg7[%c0_14, %c0_15, %c0_16] : memref<4x16x16xf32, #tpu.memory_space<vmem>>, vector<1x16x16xf32>
    %12 = vector.shape_cast %11 : vector<1x16x16xf32> to vector<16x16xf32>
    %cst_17 = arith.constant dense<0.000000e+00> : vector<32x16xf32>
    %13 = tpu.matmul %0, %12, %cst_17 {dimension_numbers = #tpu.dot_dimension_numbers<[1], [0], [0], [1], [0, 0, 1, 1], [], []>} : vector<32x16xf32>, vector<16x16xf32>, vector<32x16xf32> -> vector<32x16xf32>
    %c0_18 = arith.constant 0 : index
    %c0_19 = arith.constant 0 : index
    %c0_20 = arith.constant 0 : index
    %14 = vector.load %arg8[%c0_18, %c0_19, %c0_20] : memref<4x16x16xf32, #tpu.memory_space<vmem>>, vector<1x16x16xf32>
    %15 = vector.shape_cast %14 : vector<1x16x16xf32> to vector<16x16xf32>
    %cst_21 = arith.constant dense<0.000000e+00> : vector<32x16xf32>
    %16 = tpu.matmul %1, %15, %cst_21 {dimension_numbers = #tpu.dot_dimension_numbers<[1], [0], [0], [1], [0, 0, 1, 1], [], []>} : vector<32x16xf32>, vector<16x16xf32>, vector<32x16xf32> -> vector<32x16xf32>
    %17 = arith.addf %13, %16 : vector<32x16xf32>
    %cst_22 = arith.constant dense<0.000000e+00> : vector<32x32xf32>
    %18 = tpu.matmul %10, %2, %cst_22 {dimension_numbers = #tpu.dot_dimension_numbers<[1], [0], [0], [1], [0, 0, 1, 1], [], []>} : vector<32x16xf32>, vector<16x32xf32>, vector<32x32xf32> -> vector<32x32xf32>
    %cst_23 = arith.constant dense<0.000000e+00> : vector<32x32xf32>
    %19 = tpu.matmul %17, %3, %cst_23 {dimension_numbers = #tpu.dot_dimension_numbers<[1], [0], [0], [1], [0, 0, 1, 1], [], []>} : vector<32x16xf32>, vector<16x32xf32>, vector<32x32xf32> -> vector<32x32xf32>
    %20 = arith.addf %18, %19 : vector<32x32xf32>
    %c0_24 = arith.constant 0 : index
    %c0_25 = arith.constant 0 : index
    %c0_26 = arith.constant 0 : index
    %21 = vector.load %arg9[%c0_24, %c0_25, %c0_26] : memref<4x32x32xf32, #tpu.memory_space<vmem>>, vector<1x32x32xf32>
    %22 = vector.shape_cast %21 : vector<1x32x32xf32> to vector<32x32xf32>
    %23 = vector.shape_cast %20 : vector<32x32xf32> to vector<1x32x32xf32>
    tpu.vector_store %arg9[%c0_24, %c0_25, %c0_26], %23 {strides = array<i32>} : memref<4x32x32xf32, #tpu.memory_space<vmem>>, vector<1x32x32xf32>,
    %c1 = arith.constant 1 : index
    %c0_27 = arith.constant 0 : index
    %c0_28 = arith.constant 0 : index
    %24 = vector.load %arg5[%c1, %c0_27, %c0_28] : memref<4x16x16xf32, #tpu.memory_space<vmem>>, vector<1x16x16xf32>
    %25 = vector.shape_cast %24 : vector<1x16x16xf32> to vector<16x16xf32>
    %cst_29 = arith.constant dense<0.000000e+00> : vector<32x16xf32>
    %26 = tpu.matmul %0, %25, %cst_29 {dimension_numbers = #tpu.dot_dimension_numbers<[1], [0], [0], [1], [0, 0, 1, 1], [], []>} : vector<32x16xf32>, vector<16x16xf32>, vector<32x16xf32> -> vector<32x16xf32>
    %c1_30 = arith.constant 1 : index
    %c0_31 = arith.constant 0 : index
    %c0_32 = arith.constant 0 : index
    %27 = vector.load %arg6[%c1_30, %c0_31, %c0_32] : memref<4x16x16xf32, #tpu.memory_space<vmem>>, vector<1x16x16xf32>
    %28 = vector.shape_cast %27 : vector<1x16x16xf32> to vector<16x16xf32>
    %cst_33 = arith.constant dense<0.000000e+00> : vector<32x16xf32>
    %29 = tpu.matmul %1, %28, %cst_33 {dimension_numbers = #tpu.dot_dimension_numbers<[1], [0], [0], [1], [0, 0, 1, 1], [], []>} : vector<32x16xf32>, vector<16x16xf32>, vector<32x16xf32> -> vector<32x16xf32>
    %30 = arith.addf %26, %29 : vector<32x16xf32>
    %c1_34 = arith.constant 1 : index
    %c0_35 = arith.constant 0 : index
    %c0_36 = arith.constant 0 : index
    %31 = vector.load %arg7[%c1_34, %c0_35, %c0_36] : memref<4x16x16xf32, #tpu.memory_space<vmem>>, vector<1x16x16xf32>
    %32 = vector.shape_cast %31 : vector<1x16x16xf32> to vector<16x16xf32>
    %cst_37 = arith.constant dense<0.000000e+00> : vector<32x16xf32>
    %33 = tpu.matmul %0, %32, %cst_37 {dimension_numbers = #tpu.dot_dimension_numbers<[1], [0], [0], [1], [0, 0, 1, 1], [], []>} : vector<32x16xf32>, vector<16x16xf32>, vector<32x16xf32> -> vector<32x16xf32>
    %c1_38 = arith.constant 1 : index
    %c0_39 = arith.constant 0 : index
    %c0_40 = arith.constant 0 : index
    %34 = vector.load %arg8[%c1_38, %c0_39, %c0_40] : memref<4x16x16xf32, #tpu.memory_space<vmem>>, vector<1x16x16xf32>
    %35 = vector.shape_cast %34 : vector<1x16x16xf32> to vector<16x16xf32>
    %cst_41 = arith.constant dense<0.000000e+00> : vector<32x16xf32>
    %36 = tpu.matmul %1, %35, %cst_41 {dimension_numbers = #tpu.dot_dimension_numbers<[1], [0], [0], [1], [0, 0, 1, 1], [], []>} : vector<32x16xf32>, vector<16x16xf32>, vector<32x16xf32> -> vector<32x16xf32>
    %37 = arith.addf %33, %36 : vector<32x16xf32>
    %cst_42 = arith.constant dense<0.000000e+00> : vector<32x32xf32>
    %38 = tpu.matmul %30, %2, %cst_42 {dimension_numbers = #tpu.dot_dimension_numbers<[1], [0], [0], [1], [0, 0, 1, 1], [], []>} : vector<32x16xf32>, vector<16x32xf32>, vector<32x32xf32> -> vector<32x32xf32>
    %cst_43 = arith.constant dense<0.000000e+00> : vector<32x32xf32>
    %39 = tpu.matmul %37, %3, %cst_43 {dimension_numbers = #tpu.dot_dimension_numbers<[1], [0], [0], [1], [0, 0, 1, 1], [], []>} : vector<32x16xf32>, vector<16x32xf32>, vector<32x32xf32> -> vector<32x32xf32>
    %40 = arith.addf %38, %39 : vector<32x32xf32>
    %c1_44 = arith.constant 1 : index
    %c0_45 = arith.constant 0 : index
    %c0_46 = arith.constant 0 : index
    %41 = vector.load %arg9[%c1_44, %c0_45, %c0_46] : memref<4x32x32xf32, #tpu.memory_space<vmem>>, vector<1x32x32xf32>
    %42 = vector.shape_cast %41 : vector<1x32x32xf32> to vector<32x32xf32>
    %43 = vector.shape_cast %40 : vector<32x32xf32> to vector<1x32x32xf32>
    tpu.vector_store %arg9[%c1_44, %c0_45, %c0_46], %43 {strides = array<i32>} : memref<4x32x32xf32, #tpu.memory_space<vmem>>, vector<1x32x32xf32>,
    %c2 = arith.constant 2 : index
    %c0_47 = arith.constant 0 : index
    %c0_48 = arith.constant 0 : index
    %44 = vector.load %arg5[%c2, %c0_47, %c0_48] : memref<4x16x16xf32, #tpu.memory_space<vmem>>, vector<1x16x16xf32>
    %45 = vector.shape_cast %44 : vector<1x16x16xf32> to vector<16x16xf32>
    %cst_49 = arith.constant dense<0.000000e+00> : vector<32x16xf32>
    %46 = tpu.matmul %0, %45, %cst_49 {dimension_numbers = #tpu.dot_dimension_numbers<[1], [0], [0], [1], [0, 0, 1, 1], [], []>} : vector<32x16xf32>, vector<16x16xf32>, vector<32x16xf32> -> vector<32x16xf32>
    %c2_50 = arith.constant 2 : index
    %c0_51 = arith.constant 0 : index
    %c0_52 = arith.constant 0 : index
    %47 = vector.load %arg6[%c2_50, %c0_51, %c0_52] : memref<4x16x16xf32, #tpu.memory_space<vmem>>, vector<1x16x16xf32>
    %48 = vector.shape_cast %47 : vector<1x16x16xf32> to vector<16x16xf32>
    %cst_53 = arith.constant dense<0.000000e+00> : vector<32x16xf32>
    %49 = tpu.matmul %1, %48, %cst_53 {dimension_numbers = #tpu.dot_dimension_numbers<[1], [0], [0], [1], [0, 0, 1, 1], [], []>} : vector<32x16xf32>, vector<16x16xf32>, vector<32x16xf32> -> vector<32x16xf32>
    %50 = arith.addf %46, %49 : vector<32x16xf32>
    %c2_54 = arith.constant 2 : index
    %c0_55 = arith.constant 0 : index
    %c0_56 = arith.constant 0 : index
    %51 = vector.load %arg7[%c2_54, %c0_55, %c0_56] : memref<4x16x16xf32, #tpu.memory_space<vmem>>, vector<1x16x16xf32>
    %52 = vector.shape_cast %51 : vector<1x16x16xf32> to vector<16x16xf32>
    %cst_57 = arith.constant dense<0.000000e+00> : vector<32x16xf32>
    %53 = tpu.matmul %0, %52, %cst_57 {dimension_numbers = #tpu.dot_dimension_numbers<[1], [0], [0], [1], [0, 0, 1, 1], [], []>} : vector<32x16xf32>, vector<16x16xf32>, vector<32x16xf32> -> vector<32x16xf32>
    %c2_58 = arith.constant 2 : index
    %c0_59 = arith.constant 0 : index
    %c0_60 = arith.constant 0 : index
    %54 = vector.load %arg8[%c2_58, %c0_59, %c0_60] : memref<4x16x16xf32, #tpu.memory_space<vmem>>, vector<1x16x16xf32>
    %55 = vector.shape_cast %54 : vector<1x16x16xf32> to vector<16x16xf32>
    %cst_61 = arith.constant dense<0.000000e+00> : vector<32x16xf32>
    %56 = tpu.matmul %1, %55, %cst_61 {dimension_numbers = #tpu.dot_dimension_numbers<[1], [0], [0], [1], [0, 0, 1, 1], [], []>} : vector<32x16xf32>, vector<16x16xf32>, vector<32x16xf32> -> vector<32x16xf32>
    %57 = arith.addf %53, %56 : vector<32x16xf32>
    %cst_62 = arith.constant dense<0.000000e+00> : vector<32x32xf32>
    %58 = tpu.matmul %50, %2, %cst_62 {dimension_numbers = #tpu.dot_dimension_numbers<[1], [0], [0], [1], [0, 0, 1, 1], [], []>} : vector<32x16xf32>, vector<16x32xf32>, vector<32x32xf32> -> vector<32x32xf32>
    %cst_63 = arith.constant dense<0.000000e+00> : vector<32x32xf32>
    %59 = tpu.matmul %57, %3, %cst_63 {dimension_numbers = #tpu.dot_dimension_numbers<[1], [0], [0], [1], [0, 0, 1, 1], [], []>} : vector<32x16xf32>, vector<16x32xf32>, vector<32x32xf32> -> vector<32x32xf32>
    %60 = arith.addf %58, %59 : vector<32x32xf32>
    %c2_64 = arith.constant 2 : index
    %c0_65 = arith.constant 0 : index
    %c0_66 = arith.constant 0 : index
    %61 = vector.load %arg9[%c2_64, %c0_65, %c0_66] : memref<4x32x32xf32, #tpu.memory_space<vmem>>, vector<1x32x32xf32>
    %62 = vector.shape_cast %61 : vector<1x32x32xf32> to vector<32x32xf32>
    %63 = vector.shape_cast %60 : vector<32x32xf32> to vector<1x32x32xf32>
    tpu.vector_store %arg9[%c2_64, %c0_65, %c0_66], %63 {strides = array<i32>} : memref<4x32x32xf32, #tpu.memory_space<vmem>>, vector<1x32x32xf32>,
    %c3 = arith.constant 3 : index
    %c0_67 = arith.constant 0 : index
    %c0_68 = arith.constant 0 : index
    %64 = vector.load %arg5[%c3, %c0_67, %c0_68] : memref<4x16x16xf32, #tpu.memory_space<vmem>>, vector<1x16x16xf32>
    %65 = vector.shape_cast %64 : vector<1x16x16xf32> to vector<16x16xf32>
    %cst_69 = arith.constant dense<0.000000e+00> : vector<32x16xf32>
    %66 = tpu.matmul %0, %65, %cst_69 {dimension_numbers = #tpu.dot_dimension_numbers<[1], [0], [0], [1], [0, 0, 1, 1], [], []>} : vector<32x16xf32>, vector<16x16xf32>, vector<32x16xf32> -> vector<32x16xf32>
    %c3_70 = arith.constant 3 : index
    %c0_71 = arith.constant 0 : index
    %c0_72 = arith.constant 0 : index
    %67 = vector.load %arg6[%c3_70, %c0_71, %c0_72] : memref<4x16x16xf32, #tpu.memory_space<vmem>>, vector<1x16x16xf32>
    %68 = vector.shape_cast %67 : vector<1x16x16xf32> to vector<16x16xf32>
    %cst_73 = arith.constant dense<0.000000e+00> : vector<32x16xf32>
    %69 = tpu.matmul %1, %68, %cst_73 {dimension_numbers = #tpu.dot_dimension_numbers<[1], [0], [0], [1], [0, 0, 1, 1], [], []>} : vector<32x16xf32>, vector<16x16xf32>, vector<32x16xf32> -> vector<32x16xf32>
    %70 = arith.addf %66, %69 : vector<32x16xf32>
    %c3_74 = arith.constant 3 : index
    %c0_75 = arith.constant 0 : index
    %c0_76 = arith.constant 0 : index
    %71 = vector.load %arg7[%c3_74, %c0_75, %c0_76] : memref<4x16x16xf32, #tpu.memory_space<vmem>>, vector<1x16x16xf32>
    %72 = vector.shape_cast %71 : vector<1x16x16xf32> to vector<16x16xf32>
    %cst_77 = arith.constant dense<0.000000e+00> : vector<32x16xf32>
    %73 = tpu.matmul %0, %72, %cst_77 {dimension_numbers = #tpu.dot_dimension_numbers<[1], [0], [0], [1], [0, 0, 1, 1], [], []>} : vector<32x16xf32>, vector<16x16xf32>, vector<32x16xf32> -> vector<32x16xf32>
    %c3_78 = arith.constant 3 : index
    %c0_79 = arith.constant 0 : index
    %c0_80 = arith.constant 0 : index
    %74 = vector.load %arg8[%c3_78, %c0_79, %c0_80] : memref<4x16x16xf32, #tpu.memory_space<vmem>>, vector<1x16x16xf32>
    %75 = vector.shape_cast %74 : vector<1x16x16xf32> to vector<16x16xf32>
    %cst_81 = arith.constant dense<0.000000e+00> : vector<32x16xf32>
    %76 = tpu.matmul %1, %75, %cst_81 {dimension_numbers = #tpu.dot_dimension_numbers<[1], [0], [0], [1], [0, 0, 1, 1], [], []>} : vector<32x16xf32>, vector<16x16xf32>, vector<32x16xf32> -> vector<32x16xf32>
    %77 = arith.addf %73, %76 : vector<32x16xf32>
    %cst_82 = arith.constant dense<0.000000e+00> : vector<32x32xf32>
    %78 = tpu.matmul %70, %2, %cst_82 {dimension_numbers = #tpu.dot_dimension_numbers<[1], [0], [0], [1], [0, 0, 1, 1], [], []>} : vector<32x16xf32>, vector<16x32xf32>, vector<32x32xf32> -> vector<32x32xf32>
    %cst_83 = arith.constant dense<0.000000e+00> : vector<32x32xf32>
    %79 = tpu.matmul %77, %3, %cst_83 {dimension_numbers = #tpu.dot_dimension_numbers<[1], [0], [0], [1], [0, 0, 1, 1], [], []>} : vector<32x16xf32>, vector<16x32xf32>, vector<32x32xf32> -> vector<32x32xf32>
    %80 = arith.addf %78, %79 : vector<32x32xf32>
    %c3_84 = arith.constant 3 : index
    %c0_85 = arith.constant 0 : index
    %c0_86 = arith.constant 0 : index
    %81 = vector.load %arg9[%c3_84, %c0_85, %c0_86] : memref<4x32x32xf32, #tpu.memory_space<vmem>>, vector<1x32x32xf32>
    %82 = vector.shape_cast %81 : vector<1x32x32xf32> to vector<32x32xf32>
    %83 = vector.shape_cast %80 : vector<32x32xf32> to vector<1x32x32xf32>
    tpu.vector_store %arg9[%c3_84, %c0_85, %c0_86], %83 {strides = array<i32>} : memref<4x32x32xf32, #tpu.memory_space<vmem>>, vector<1x32x32xf32>,
    return
  }
  func.func @transform_0(%arg0: i32) -> (i32, i32) {
    %c0_i32 = arith.constant 0 : i32
    %c0_i32_0 = arith.constant 0 : i32
    %c0_i32_1 = arith.constant 0 : i32
    return %c0_i32, %c0_i32_0 : i32, i32
  }
  func.func @transform_1(%arg0: i32) -> (i32, i32) {
    %c0_i32 = arith.constant 0 : i32
    %c0_i32_0 = arith.constant 0 : i32
    %c0_i32_1 = arith.constant 0 : i32
    return %c0_i32, %c0_i32_0 : i32, i32
  }
  func.func @transform_2(%arg0: i32) -> (i32, i32) {
    %c0_i32 = arith.constant 0 : i32
    %c0_i32_0 = arith.constant 0 : i32
    %c0_i32_1 = arith.constant 0 : i32
    return %c0_i32, %c0_i32_0 : i32, i32
  }
  func.func @transform_3(%arg0: i32) -> (i32, i32) {
    %c0_i32 = arith.constant 0 : i32
    %c0_i32_0 = arith.constant 0 : i32
    %c0_i32_1 = arith.constant 0 : i32
    return %c0_i32, %c0_i32_0 : i32, i32
  }
  func.func @transform_4(%arg0: i32) -> (i32, i32, i32) {
    %c0_i32 = arith.constant 0 : i32
    %c0_i32_0 = arith.constant 0 : i32
    %c0_i32_1 = arith.constant 0 : i32
    return %arg0, %c0_i32, %c0_i32_0 : i32, i32, i32
  }
  func.func @transform_5(%arg0: i32) -> (i32, i32, i32) {
    %c0_i32 = arith.constant 0 : i32
    %c0_i32_0 = arith.constant 0 : i32
    %c0_i32_1 = arith.constant 0 : i32
    return %arg0, %c0_i32, %c0_i32_0 : i32, i32, i32
  }
  func.func @transform_6(%arg0: i32) -> (i32, i32, i32) {
    %c0_i32 = arith.constant 0 : i32
    %c0_i32_0 = arith.constant 0 : i32
    %c0_i32_1 = arith.constant 0 : i32
    return %arg0, %c0_i32, %c0_i32_0 : i32, i32, i32
  }
  func.func @transform_7(%arg0: i32) -> (i32, i32, i32) {
    %c0_i32 = arith.constant 0 : i32
    %c0_i32_0 = arith.constant 0 : i32
    %c0_i32_1 = arith.constant 0 : i32
    return %arg0, %c0_i32, %c0_i32_0 : i32, i32, i32
  }
  func.func @transform_8(%arg0: i32) -> (i32, i32, i32) {
    %c0_i32 = arith.constant 0 : i32
    %c0_i32_0 = arith.constant 0 : i32
    %c0_i32_1 = arith.constant 0 : i32
    return %arg0, %c0_i32, %c0_i32_0 : i32, i32, i32
  }
}

module attributes {stable_mosaic.version = 11 : i64} {
  func.func @kernel(%arg0: i32, %arg1: memref<32x32xf32, #tpu.memory_space<vmem>>, %arg2: memref<32x32xf32, #tpu.memory_space<vmem>>, %arg3: memref<32x32xf32, #tpu.memory_space<vmem>>, %arg4: memref<32x32xf32, #tpu.memory_space<vmem>>, %arg5: memref<4x32x32xf32, #tpu.memory_space<vmem>>, %arg6: memref<4x32x32xf32, #tpu.memory_space<vmem>>, %arg7: memref<4x32x32xf32, #tpu.memory_space<vmem>>, %arg8: memref<4x32x32xf32, #tpu.memory_space<vmem>>, %arg9: memref<4x32x32xf32, #tpu.memory_space<vmem>>) attributes {dimension_semantics = [#tpu.dimension_semantics<parallel>], iteration_bounds = array<i64: 2>, scalar_prefetch = 0 : i64, scratch_operands = 0 : i64, tpu.core_type = #tpu.core_type<tc>, window_params = [{pipeline_mode = #tpu.pipeline_mode<synchronous>, transform_indices = @transform_0, window_bounds = array<i64: 32, 32>}, {pipeline_mode = #tpu.pipeline_mode<synchronous>, transform_indices = @transform_1, window_bounds = array<i64: 32, 32>}, {pipeline_mode = #tpu.pipeline_mode<synchronous>, transform_indices = @transform_2, window_bounds = array<i64: 32, 32>}, {pipeline_mode = #tpu.pipeline_mode<synchronous>, transform_indices = @transform_3, window_bounds = array<i64: 32, 32>}, {transform_indices = @transform_4, window_bounds = array<i64: 4, 32, 32>}, {transform_indices = @transform_5, window_bounds = array<i64: 4, 32, 32>}, {transform_indices = @transform_6, window_bounds = array<i64: 4, 32, 32>}, {transform_indices = @transform_7, window_bounds = array<i64: 4, 32, 32>}, {transform_indices = @transform_8, window_bounds = array<i64: 4, 32, 32>}]} {
    %c0 = arith.constant 0 : index
    %c0_0 = arith.constant 0 : index
    %0 = vector.load %arg1[%c0, %c0_0] : memref<32x32xf32, #tpu.memory_space<vmem>>, vector<32x32xf32>
    %c0_1 = arith.constant 0 : index
    %c0_2 = arith.constant 0 : index
    %1 = vector.load %arg2[%c0_1, %c0_2] : memref<32x32xf32, #tpu.memory_space<vmem>>, vector<32x32xf32>
    %c0_3 = arith.constant 0 : index
    %c0_4 = arith.constant 0 : index
    %2 = vector.load %arg3[%c0_3, %c0_4] : memref<32x32xf32, #tpu.memory_space<vmem>>, vector<32x32xf32>
    %c0_5 = arith.constant 0 : index
    %c0_6 = arith.constant 0 : index
    %3 = vector.load %arg4[%c0_5, %c0_6] : memref<32x32xf32, #tpu.memory_space<vmem>>, vector<32x32xf32>
    %c0_7 = arith.constant 0 : index
    %c0_8 = arith.constant 0 : index
    %c0_9 = arith.constant 0 : index
    %4 = vector.load %arg5[%c0_7, %c0_8, %c0_9] : memref<4x32x32xf32, #tpu.memory_space<vmem>>, vector<1x32x32xf32>
    %5 = vector.shape_cast %4 : vector<1x32x32xf32> to vector<32x32xf32>
    %cst = arith.constant dense<0.000000e+00> : vector<32x32xf32>
    %6 = tpu.matmul %0, %5, %cst {dimension_numbers = #tpu.dot_dimension_numbers<[1], [0], [0], [1], [0, 0, 1, 1], [], []>} : vector<32x32xf32>, vector<32x32xf32>, vector<32x32xf32> -> vector<32x32xf32>
    %c0_10 = arith.constant 0 : index
    %c0_11 = arith.constant 0 : index
    %c0_12 = arith.constant 0 : index
    %7 = vector.load %arg6[%c0_10, %c0_11, %c0_12] : memref<4x32x32xf32, #tpu.memory_space<vmem>>, vector<1x32x32xf32>
    %8 = vector.shape_cast %7 : vector<1x32x32xf32> to vector<32x32xf32>
    %cst_13 = arith.constant dense<0.000000e+00> : vector<32x32xf32>
    %9 = tpu.matmul %1, %8, %cst_13 {dimension_numbers = #tpu.dot_dimension_numbers<[1], [0], [0], [1], [0, 0, 1, 1], [], []>} : vector<32x32xf32>, vector<32x32xf32>, vector<32x32xf32> -> vector<32x32xf32>
    %10 = arith.addf %6, %9 : vector<32x32xf32>
    %c0_14 = arith.constant 0 : index
    %c0_15 = arith.constant 0 : index
    %c0_16 = arith.constant 0 : index
    %11 = vector.load %arg7[%c0_14, %c0_15, %c0_16] : memref<4x32x32xf32, #tpu.memory_space<vmem>>, vector<1x32x32xf32>
    %12 = vector.shape_cast %11 : vector<1x32x32xf32> to vector<32x32xf32>
    %cst_17 = arith.constant dense<0.000000e+00> : vector<32x32xf32>
    %13 = tpu.matmul %0, %12, %cst_17 {dimension_numbers = #tpu.dot_dimension_numbers<[1], [0], [0], [1], [0, 0, 1, 1], [], []>} : vector<32x32xf32>, vector<32x32xf32>, vector<32x32xf32> -> vector<32x32xf32>
    %c0_18 = arith.constant 0 : index
    %c0_19 = arith.constant 0 : index
    %c0_20 = arith.constant 0 : index
    %14 = vector.load %arg8[%c0_18, %c0_19, %c0_20] : memref<4x32x32xf32, #tpu.memory_space<vmem>>, vector<1x32x32xf32>
    %15 = vector.shape_cast %14 : vector<1x32x32xf32> to vector<32x32xf32>
    %cst_21 = arith.constant dense<0.000000e+00> : vector<32x32xf32>
    %16 = tpu.matmul %1, %15, %cst_21 {dimension_numbers = #tpu.dot_dimension_numbers<[1], [0], [0], [1], [0, 0, 1, 1], [], []>} : vector<32x32xf32>, vector<32x32xf32>, vector<32x32xf32> -> vector<32x32xf32>
    %17 = arith.addf %13, %16 : vector<32x32xf32>
    %cst_22 = arith.constant dense<0.000000e+00> : vector<32x32xf32>
    %18 = tpu.matmul %10, %2, %cst_22 {dimension_numbers = #tpu.dot_dimension_numbers<[1], [0], [0], [1], [0, 0, 1, 1], [], []>} : vector<32x32xf32>, vector<32x32xf32>, vector<32x32xf32> -> vector<32x32xf32>
    %cst_23 = arith.constant dense<0.000000e+00> : vector<32x32xf32>
    %19 = tpu.matmul %17, %3, %cst_23 {dimension_numbers = #tpu.dot_dimension_numbers<[1], [0], [0], [1], [0, 0, 1, 1], [], []>} : vector<32x32xf32>, vector<32x32xf32>, vector<32x32xf32> -> vector<32x32xf32>
    %20 = arith.addf %18, %19 : vector<32x32xf32>
    %c0_24 = arith.constant 0 : index
    %c0_25 = arith.constant 0 : index
    %c0_26 = arith.constant 0 : index
    %21 = vector.load %arg9[%c0_24, %c0_25, %c0_26] : memref<4x32x32xf32, #tpu.memory_space<vmem>>, vector<1x32x32xf32>
    %22 = vector.shape_cast %21 : vector<1x32x32xf32> to vector<32x32xf32>
    %23 = vector.shape_cast %20 : vector<32x32xf32> to vector<1x32x32xf32>
    tpu.vector_store %arg9[%c0_24, %c0_25, %c0_26], %23 {strides = array<i32>} : memref<4x32x32xf32, #tpu.memory_space<vmem>>, vector<1x32x32xf32>,
    %c1 = arith.constant 1 : index
    %c0_27 = arith.constant 0 : index
    %c0_28 = arith.constant 0 : index
    %24 = vector.load %arg5[%c1, %c0_27, %c0_28] : memref<4x32x32xf32, #tpu.memory_space<vmem>>, vector<1x32x32xf32>
    %25 = vector.shape_cast %24 : vector<1x32x32xf32> to vector<32x32xf32>
    %cst_29 = arith.constant dense<0.000000e+00> : vector<32x32xf32>
    %26 = tpu.matmul %0, %25, %cst_29 {dimension_numbers = #tpu.dot_dimension_numbers<[1], [0], [0], [1], [0, 0, 1, 1], [], []>} : vector<32x32xf32>, vector<32x32xf32>, vector<32x32xf32> -> vector<32x32xf32>
    %c1_30 = arith.constant 1 : index
    %c0_31 = arith.constant 0 : index
    %c0_32 = arith.constant 0 : index
    %27 = vector.load %arg6[%c1_30, %c0_31, %c0_32] : memref<4x32x32xf32, #tpu.memory_space<vmem>>, vector<1x32x32xf32>
    %28 = vector.shape_cast %27 : vector<1x32x32xf32> to vector<32x32xf32>
    %cst_33 = arith.constant dense<0.000000e+00> : vector<32x32xf32>
    %29 = tpu.matmul %1, %28, %cst_33 {dimension_numbers = #tpu.dot_dimension_numbers<[1], [0], [0], [1], [0, 0, 1, 1], [], []>} : vector<32x32xf32>, vector<32x32xf32>, vector<32x32xf32> -> vector<32x32xf32>
    %30 = arith.addf %26, %29 : vector<32x32xf32>
    %c1_34 = arith.constant 1 : index
    %c0_35 = arith.constant 0 : index
    %c0_36 = arith.constant 0 : index
    %31 = vector.load %arg7[%c1_34, %c0_35, %c0_36] : memref<4x32x32xf32, #tpu.memory_space<vmem>>, vector<1x32x32xf32>
    %32 = vector.shape_cast %31 : vector<1x32x32xf32> to vector<32x32xf32>
    %cst_37 = arith.constant dense<0.000000e+00> : vector<32x32xf32>
    %33 = tpu.matmul %0, %32, %cst_37 {dimension_numbers = #tpu.dot_dimension_numbers<[1], [0], [0], [1], [0, 0, 1, 1], [], []>} : vector<32x32xf32>, vector<32x32xf32>, vector<32x32xf32> -> vector<32x32xf32>
    %c1_38 = arith.constant 1 : index
    %c0_39 = arith.constant 0 : index
    %c0_40 = arith.constant 0 : index
    %34 = vector.load %arg8[%c1_38, %c0_39, %c0_40] : memref<4x32x32xf32, #tpu.memory_space<vmem>>, vector<1x32x32xf32>
    %35 = vector.shape_cast %34 : vector<1x32x32xf32> to vector<32x32xf32>
    %cst_41 = arith.constant dense<0.000000e+00> : vector<32x32xf32>
    %36 = tpu.matmul %1, %35, %cst_41 {dimension_numbers = #tpu.dot_dimension_numbers<[1], [0], [0], [1], [0, 0, 1, 1], [], []>} : vector<32x32xf32>, vector<32x32xf32>, vector<32x32xf32> -> vector<32x32xf32>
    %37 = arith.addf %33, %36 : vector<32x32xf32>
    %cst_42 = arith.constant dense<0.000000e+00> : vector<32x32xf32>
    %38 = tpu.matmul %30, %2, %cst_42 {dimension_numbers = #tpu.dot_dimension_numbers<[1], [0], [0], [1], [0, 0, 1, 1], [], []>} : vector<32x32xf32>, vector<32x32xf32>, vector<32x32xf32> -> vector<32x32xf32>
    %cst_43 = arith.constant dense<0.000000e+00> : vector<32x32xf32>
    %39 = tpu.matmul %37, %3, %cst_43 {dimension_numbers = #tpu.dot_dimension_numbers<[1], [0], [0], [1], [0, 0, 1, 1], [], []>} : vector<32x32xf32>, vector<32x32xf32>, vector<32x32xf32> -> vector<32x32xf32>
    %40 = arith.addf %38, %39 : vector<32x32xf32>
    %c1_44 = arith.constant 1 : index
    %c0_45 = arith.constant 0 : index
    %c0_46 = arith.constant 0 : index
    %41 = vector.load %arg9[%c1_44, %c0_45, %c0_46] : memref<4x32x32xf32, #tpu.memory_space<vmem>>, vector<1x32x32xf32>
    %42 = vector.shape_cast %41 : vector<1x32x32xf32> to vector<32x32xf32>
    %43 = vector.shape_cast %40 : vector<32x32xf32> to vector<1x32x32xf32>
    tpu.vector_store %arg9[%c1_44, %c0_45, %c0_46], %43 {strides = array<i32>} : memref<4x32x32xf32, #tpu.memory_space<vmem>>, vector<1x32x32xf32>,
    %c2 = arith.constant 2 : index
    %c0_47 = arith.constant 0 : index
    %c0_48 = arith.constant 0 : index
    %44 = vector.load %arg5[%c2, %c0_47, %c0_48] : memref<4x32x32xf32, #tpu.memory_space<vmem>>, vector<1x32x32xf32>
    %45 = vector.shape_cast %44 : vector<1x32x32xf32> to vector<32x32xf32>
    %cst_49 = arith.constant dense<0.000000e+00> : vector<32x32xf32>
    %46 = tpu.matmul %0, %45, %cst_49 {dimension_numbers = #tpu.dot_dimension_numbers<[1], [0], [0], [1], [0, 0, 1, 1], [], []>} : vector<32x32xf32>, vector<32x32xf32>, vector<32x32xf32> -> vector<32x32xf32>
    %c2_50 = arith.constant 2 : index
    %c0_51 = arith.constant 0 : index
    %c0_52 = arith.constant 0 : index
    %47 = vector.load %arg6[%c2_50, %c0_51, %c0_52] : memref<4x32x32xf32, #tpu.memory_space<vmem>>, vector<1x32x32xf32>
    %48 = vector.shape_cast %47 : vector<1x32x32xf32> to vector<32x32xf32>
    %cst_53 = arith.constant dense<0.000000e+00> : vector<32x32xf32>
    %49 = tpu.matmul %1, %48, %cst_53 {dimension_numbers = #tpu.dot_dimension_numbers<[1], [0], [0], [1], [0, 0, 1, 1], [], []>} : vector<32x32xf32>, vector<32x32xf32>, vector<32x32xf32> -> vector<32x32xf32>
    %50 = arith.addf %46, %49 : vector<32x32xf32>
    %c2_54 = arith.constant 2 : index
    %c0_55 = arith.constant 0 : index
    %c0_56 = arith.constant 0 : index
    %51 = vector.load %arg7[%c2_54, %c0_55, %c0_56] : memref<4x32x32xf32, #tpu.memory_space<vmem>>, vector<1x32x32xf32>
    %52 = vector.shape_cast %51 : vector<1x32x32xf32> to vector<32x32xf32>
    %cst_57 = arith.constant dense<0.000000e+00> : vector<32x32xf32>
    %53 = tpu.matmul %0, %52, %cst_57 {dimension_numbers = #tpu.dot_dimension_numbers<[1], [0], [0], [1], [0, 0, 1, 1], [], []>} : vector<32x32xf32>, vector<32x32xf32>, vector<32x32xf32> -> vector<32x32xf32>
    %c2_58 = arith.constant 2 : index
    %c0_59 = arith.constant 0 : index
    %c0_60 = arith.constant 0 : index
    %54 = vector.load %arg8[%c2_58, %c0_59, %c0_60] : memref<4x32x32xf32, #tpu.memory_space<vmem>>, vector<1x32x32xf32>
    %55 = vector.shape_cast %54 : vector<1x32x32xf32> to vector<32x32xf32>
    %cst_61 = arith.constant dense<0.000000e+00> : vector<32x32xf32>
    %56 = tpu.matmul %1, %55, %cst_61 {dimension_numbers = #tpu.dot_dimension_numbers<[1], [0], [0], [1], [0, 0, 1, 1], [], []>} : vector<32x32xf32>, vector<32x32xf32>, vector<32x32xf32> -> vector<32x32xf32>
    %57 = arith.addf %53, %56 : vector<32x32xf32>
    %cst_62 = arith.constant dense<0.000000e+00> : vector<32x32xf32>
    %58 = tpu.matmul %50, %2, %cst_62 {dimension_numbers = #tpu.dot_dimension_numbers<[1], [0], [0], [1], [0, 0, 1, 1], [], []>} : vector<32x32xf32>, vector<32x32xf32>, vector<32x32xf32> -> vector<32x32xf32>
    %cst_63 = arith.constant dense<0.000000e+00> : vector<32x32xf32>
    %59 = tpu.matmul %57, %3, %cst_63 {dimension_numbers = #tpu.dot_dimension_numbers<[1], [0], [0], [1], [0, 0, 1, 1], [], []>} : vector<32x32xf32>, vector<32x32xf32>, vector<32x32xf32> -> vector<32x32xf32>
    %60 = arith.addf %58, %59 : vector<32x32xf32>
    %c2_64 = arith.constant 2 : index
    %c0_65 = arith.constant 0 : index
    %c0_66 = arith.constant 0 : index
    %61 = vector.load %arg9[%c2_64, %c0_65, %c0_66] : memref<4x32x32xf32, #tpu.memory_space<vmem>>, vector<1x32x32xf32>
    %62 = vector.shape_cast %61 : vector<1x32x32xf32> to vector<32x32xf32>
    %63 = vector.shape_cast %60 : vector<32x32xf32> to vector<1x32x32xf32>
    tpu.vector_store %arg9[%c2_64, %c0_65, %c0_66], %63 {strides = array<i32>} : memref<4x32x32xf32, #tpu.memory_space<vmem>>, vector<1x32x32xf32>,
    %c3 = arith.constant 3 : index
    %c0_67 = arith.constant 0 : index
    %c0_68 = arith.constant 0 : index
    %64 = vector.load %arg5[%c3, %c0_67, %c0_68] : memref<4x32x32xf32, #tpu.memory_space<vmem>>, vector<1x32x32xf32>
    %65 = vector.shape_cast %64 : vector<1x32x32xf32> to vector<32x32xf32>
    %cst_69 = arith.constant dense<0.000000e+00> : vector<32x32xf32>
    %66 = tpu.matmul %0, %65, %cst_69 {dimension_numbers = #tpu.dot_dimension_numbers<[1], [0], [0], [1], [0, 0, 1, 1], [], []>} : vector<32x32xf32>, vector<32x32xf32>, vector<32x32xf32> -> vector<32x32xf32>
    %c3_70 = arith.constant 3 : index
    %c0_71 = arith.constant 0 : index
    %c0_72 = arith.constant 0 : index
    %67 = vector.load %arg6[%c3_70, %c0_71, %c0_72] : memref<4x32x32xf32, #tpu.memory_space<vmem>>, vector<1x32x32xf32>
    %68 = vector.shape_cast %67 : vector<1x32x32xf32> to vector<32x32xf32>
    %cst_73 = arith.constant dense<0.000000e+00> : vector<32x32xf32>
    %69 = tpu.matmul %1, %68, %cst_73 {dimension_numbers = #tpu.dot_dimension_numbers<[1], [0], [0], [1], [0, 0, 1, 1], [], []>} : vector<32x32xf32>, vector<32x32xf32>, vector<32x32xf32> -> vector<32x32xf32>
    %70 = arith.addf %66, %69 : vector<32x32xf32>
    %c3_74 = arith.constant 3 : index
    %c0_75 = arith.constant 0 : index
    %c0_76 = arith.constant 0 : index
    %71 = vector.load %arg7[%c3_74, %c0_75, %c0_76] : memref<4x32x32xf32, #tpu.memory_space<vmem>>, vector<1x32x32xf32>
    %72 = vector.shape_cast %71 : vector<1x32x32xf32> to vector<32x32xf32>
    %cst_77 = arith.constant dense<0.000000e+00> : vector<32x32xf32>
    %73 = tpu.matmul %0, %72, %cst_77 {dimension_numbers = #tpu.dot_dimension_numbers<[1], [0], [0], [1], [0, 0, 1, 1], [], []>} : vector<32x32xf32>, vector<32x32xf32>, vector<32x32xf32> -> vector<32x32xf32>
    %c3_78 = arith.constant 3 : index
    %c0_79 = arith.constant 0 : index
    %c0_80 = arith.constant 0 : index
    %74 = vector.load %arg8[%c3_78, %c0_79, %c0_80] : memref<4x32x32xf32, #tpu.memory_space<vmem>>, vector<1x32x32xf32>
    %75 = vector.shape_cast %74 : vector<1x32x32xf32> to vector<32x32xf32>
    %cst_81 = arith.constant dense<0.000000e+00> : vector<32x32xf32>
    %76 = tpu.matmul %1, %75, %cst_81 {dimension_numbers = #tpu.dot_dimension_numbers<[1], [0], [0], [1], [0, 0, 1, 1], [], []>} : vector<32x32xf32>, vector<32x32xf32>, vector<32x32xf32> -> vector<32x32xf32>
    %77 = arith.addf %73, %76 : vector<32x32xf32>
    %cst_82 = arith.constant dense<0.000000e+00> : vector<32x32xf32>
    %78 = tpu.matmul %70, %2, %cst_82 {dimension_numbers = #tpu.dot_dimension_numbers<[1], [0], [0], [1], [0, 0, 1, 1], [], []>} : vector<32x32xf32>, vector<32x32xf32>, vector<32x32xf32> -> vector<32x32xf32>
    %cst_83 = arith.constant dense<0.000000e+00> : vector<32x32xf32>
    %79 = tpu.matmul %77, %3, %cst_83 {dimension_numbers = #tpu.dot_dimension_numbers<[1], [0], [0], [1], [0, 0, 1, 1], [], []>} : vector<32x32xf32>, vector<32x32xf32>, vector<32x32xf32> -> vector<32x32xf32>
    %80 = arith.addf %78, %79 : vector<32x32xf32>
    %c3_84 = arith.constant 3 : index
    %c0_85 = arith.constant 0 : index
    %c0_86 = arith.constant 0 : index
    %81 = vector.load %arg9[%c3_84, %c0_85, %c0_86] : memref<4x32x32xf32, #tpu.memory_space<vmem>>, vector<1x32x32xf32>
    %82 = vector.shape_cast %81 : vector<1x32x32xf32> to vector<32x32xf32>
    %83 = vector.shape_cast %80 : vector<32x32xf32> to vector<1x32x32xf32>
    tpu.vector_store %arg9[%c3_84, %c0_85, %c0_86], %83 {strides = array<i32>} : memref<4x32x32xf32, #tpu.memory_space<vmem>>, vector<1x32x32xf32>,
    return
  }
  func.func @transform_0(%arg0: i32) -> (i32, i32) {
    %c0_i32 = arith.constant 0 : i32
    %c0_i32_0 = arith.constant 0 : i32
    %c0_i32_1 = arith.constant 0 : i32
    return %c0_i32, %c0_i32_0 : i32, i32
  }
  func.func @transform_1(%arg0: i32) -> (i32, i32) {
    %c0_i32 = arith.constant 0 : i32
    %c0_i32_0 = arith.constant 0 : i32
    %c0_i32_1 = arith.constant 0 : i32
    return %c0_i32, %c0_i32_0 : i32, i32
  }
  func.func @transform_2(%arg0: i32) -> (i32, i32) {
    %c0_i32 = arith.constant 0 : i32
    %c0_i32_0 = arith.constant 0 : i32
    %c0_i32_1 = arith.constant 0 : i32
    return %c0_i32, %c0_i32_0 : i32, i32
  }
  func.func @transform_3(%arg0: i32) -> (i32, i32) {
    %c0_i32 = arith.constant 0 : i32
    %c0_i32_0 = arith.constant 0 : i32
    %c0_i32_1 = arith.constant 0 : i32
    return %c0_i32, %c0_i32_0 : i32, i32
  }
  func.func @transform_4(%arg0: i32) -> (i32, i32, i32) {
    %c0_i32 = arith.constant 0 : i32
    %c0_i32_0 = arith.constant 0 : i32
    %c0_i32_1 = arith.constant 0 : i32
    return %arg0, %c0_i32, %c0_i32_0 : i32, i32, i32
  }
  func.func @transform_5(%arg0: i32) -> (i32, i32, i32) {
    %c0_i32 = arith.constant 0 : i32
    %c0_i32_0 = arith.constant 0 : i32
    %c0_i32_1 = arith.constant 0 : i32
    return %arg0, %c0_i32, %c0_i32_0 : i32, i32, i32
  }
  func.func @transform_6(%arg0: i32) -> (i32, i32, i32) {
    %c0_i32 = arith.constant 0 : i32
    %c0_i32_0 = arith.constant 0 : i32
    %c0_i32_1 = arith.constant 0 : i32
    return %arg0, %c0_i32, %c0_i32_0 : i32, i32, i32
  }
  func.func @transform_7(%arg0: i32) -> (i32, i32, i32) {
    %c0_i32 = arith.constant 0 : i32
    %c0_i32_0 = arith.constant 0 : i32
    %c0_i32_1 = arith.constant 0 : i32
    return %arg0, %c0_i32, %c0_i32_0 : i32, i32, i32
  }
  func.func @transform_8(%arg0: i32) -> (i32, i32, i32) {
    %c0_i32 = arith.constant 0 : i32
    %c0_i32_0 = arith.constant 0 : i32
    %c0_i32_1 = arith.constant 0 : i32
    return %arg0, %c0_i32, %c0_i32_0 : i32, i32, i32
  }
}

</mosaic_0001>

<llo_original>
// kernel: dtcwt_inverse.3
$region0: #{dtcwt_inverse.3}
  #allocation0 [shape = 'u32[]', space=smem, size = 0x4, offset = 0x4, fixed_abs, tag = 'smem constant byte address 0x4 - core index']
  #allocation1 [shape = 'u32[144,128]{1,0:T(1,128)}', space=vmem, size = 0x12000, scoped, tag = 'internal scratch']
  %s0 = inlined_call_operand.vmem [shape: f32[16,8], index: 0, kind: input, shape index: {}]
  %s1 = inlined_call_operand.vmem [shape: f32[16,8], index: 1, kind: input, shape index: {}]
  %s2 = inlined_call_operand.vmem [shape: f32[8,16], index: 2, kind: input, shape index: {}]
  %s3 = inlined_call_operand.vmem [shape: f32[8,16], index: 3, kind: input, shape index: {}]
  %s4 = inlined_call_operand.vmem [shape: f32[8,8,8], index: 4, kind: input, shape index: {}]
  %s5 = inlined_call_operand.vmem [shape: f32[8,8,8], index: 5, kind: input, shape index: {}]
  %s6 = inlined_call_operand.vmem [shape: f32[8,8,8], index: 6, kind: input, shape index: {}]
  %s7 = inlined_call_operand.vmem [shape: f32[8,8,8], index: 7, kind: input, shape index: {}]
  %s8 = inlined_call_operand.vmem [shape: f32[8,16,16], index: 8, kind: output, shape index: {}]
  %s9 = sld [smem:[#allocation0]]
  $region65: #{dtcwt_inverse.3} parent=0
    _
  %s11 = ssub.s32 1, %s9
  %s12 = scalar_select 0, %s11, %s9
  loop: start=0, step=1, limit=4
  $region2: #{dtcwt_inverse.3} parent=0 // loop_pre_header
    _
  $region3: #{dtcwt_inverse.3} parent=0 // loop_header
    %s14 = sphi 0, %s18
    %p15 = scmp.ge.s32.totalorder %s14, 4
    %s22 = sphi 0, %s22
    %s24 = sphi 0, %s22
    %s25 = sphi 0, %s24
    %s39 = sphi 0, %s25
    %s43 = sphi 0, %s43
    %s45 = sphi 0, %s43
    %s46 = sphi 0, %s45
    %s60 = sphi 0, %s46
    %s64 = sphi 0, %s64
    %s66 = sphi 0, %s64
    %s67 = sphi 0, %s66
    %s81 = sphi 0, %s67
    %s85 = sphi 0, %s85
    %s87 = sphi 0, %s85
    %s88 = sphi 0, %s87
    %s102 = sphi 0, %s88
    %s108 = sphi 0, %s110
    %s111 = sphi 0, %s108
    %s112 = sphi 0, %s111
    %s128 = sphi 0, %s112
    %s134 = sphi 0, %s136
    %s137 = sphi 0, %s134
    %s138 = sphi 0, %s137
    %s154 = sphi 0, %s138
    %s160 = sphi 0, %s162
    %s163 = sphi 0, %s160
    %s164 = sphi 0, %s163
    %s180 = sphi 0, %s164
    %s186 = sphi 0, %s188
    %s189 = sphi 0, %s186
    %s190 = sphi 0, %s189
    %s206 = sphi 0, %s190
    %s212 = sphi 0, %s214
    %s215 = sphi 0, %s212
    %s216 = sphi 0, %s215
    %s232 = sphi 0, %s216
  $region4: #{dtcwt_inverse.3} parent=0 // loop_header_branch
    %17 = sbr.rel (%p15) target = $region8
  $region5: #{dtcwt_inverse.3} parent=0 // loop_body
    %s19 = ssub.s32 %s14, 1
    %s20 = ssub.s32 %s14, 2
    %s21 = sadd.s32 %s14, 1
    %s23 = sadd.s32 %s22, 1
    %p26 = scmp.eq.s32.totalorder %s14, 1
    %p27 = scmp.ne.s32.totalorder %s22, %s24
    %p28 = scmp.eq.s32.totalorder %s14, 0
    %p29 = por %p27, %p28
    %p30 = scmp.ne.s32.totalorder %s22, %s24
    %p31 = scmp.eq.s32.totalorder %s19, 1
    %p32 = por %p30, %p31
    %p33 = scmp.ne.s32.totalorder %s24, %s25
    %p34 = scmp.eq.s32.totalorder %s19, 0
    %p35 = por %p33, %p34
    %p36 = scmp.ne.s32.totalorder %s24, %s25
    %p37 = scmp.eq.s32.totalorder %s20, 1
    %p38 = por %p36, %p37
    %p40 = scmp.ne.s32.totalorder %s25, %s39
    %p41 = scmp.eq.s32.totalorder %s20, 0
    %p42 = por %p40, %p41
    %s44 = sadd.s32 %s43, 1
    %p47 = scmp.eq.s32.totalorder %s14, 1
    %p48 = scmp.ne.s32.totalorder %s43, %s45
    %p49 = scmp.eq.s32.totalorder %s14, 0
    %p50 = por %p48, %p49
    %p51 = scmp.ne.s32.totalorder %s43, %s45
    %p52 = scmp.eq.s32.totalorder %s19, 1
    %p53 = por %p51, %p52
    %p54 = scmp.ne.s32.totalorder %s45, %s46
    %p55 = scmp.eq.s32.totalorder %s19, 0
    %p56 = por %p54, %p55
    %p57 = scmp.ne.s32.totalorder %s45, %s46
    %p58 = scmp.eq.s32.totalorder %s20, 1
    %p59 = por %p57, %p58
    %p61 = scmp.ne.s32.totalorder %s46, %s60
    %p62 = scmp.eq.s32.totalorder %s20, 0
    %p63 = por %p61, %p62
    %s65 = sadd.s32 %s64, 1
    %p68 = scmp.eq.s32.totalorder %s14, 1
    %p69 = scmp.ne.s32.totalorder %s64, %s66
    %p70 = scmp.eq.s32.totalorder %s14, 0
    %p71 = por %p69, %p70
    %p72 = scmp.ne.s32.totalorder %s64, %s66
    %p73 = scmp.eq.s32.totalorder %s19, 1
    %p74 = por %p72, %p73
    %p75 = scmp.ne.s32.totalorder %s66, %s67
    %p76 = scmp.eq.s32.totalorder %s19, 0
    %p77 = por %p75, %p76
    %p78 = scmp.ne.s32.totalorder %s66, %s67
    %p79 = scmp.eq.s32.totalorder %s20, 1
    %p80 = por %p78, %p79
    %p82 = scmp.ne.s32.totalorder %s67, %s81
    %p83 = scmp.eq.s32.totalorder %s20, 0
    %p84 = por %p82, %p83
    %s86 = sadd.s32 %s85, 1
    %p89 = scmp.eq.s32.totalorder %s14, 1
    %p90 = scmp.ne.s32.totalorder %s85, %s87
    %p91 = scmp.eq.s32.totalorder %s14, 0
    %p92 = por %p90, %p91
    %p93 = scmp.ne.s32.totalorder %s85, %s87
    %p94 = scmp.eq.s32.totalorder %s19, 1
    %p95 = por %p93, %p94
    %p96 = scmp.ne.s32.totalorder %s87, %s88
    %p97 = scmp.eq.s32.totalorder %s19, 0
    %p98 = por %p96, %p97
    %p99 = scmp.ne.s32.totalorder %s87, %s88
    %p100 = scmp.eq.s32.totalorder %s20, 1
    %p101 = por %p99, %p100
    %p103 = scmp.ne.s32.totalorder %s88, %s102
    %p104 = scmp.eq.s32.totalorder %s20, 0
    %p105 = por %p103, %p104
    %s106 = ssub.s32 %s14, %s21
    %p107 = scmp.eq.s32.totalorder %s106, 0
    %s109 = sadd.s32 %s108, 1
    %s110 = scalar_select %p107, %s108, %s109
    %p113 = pneg %p107
    %p114 = scmp.eq.s32.totalorder %s14, 1
    %p115 = por %p113, %p114
    %p116 = scmp.ne.s32.totalorder %s108, %s111
    %p117 = scmp.eq.s32.totalorder %s14, 0
    %p118 = por %p116, %p117
    %p119 = scmp.ne.s32.totalorder %s108, %s111
    %p120 = scmp.eq.s32.totalorder %s19, 1
    %p121 = por %p119, %p120
    %p122 = scmp.ne.s32.totalorder %s111, %s112
    %p123 = scmp.eq.s32.totalorder %s19, 0
    %p124 = por %p122, %p123
    %p125 = scmp.ne.s32.totalorder %s111, %s112
    %p126 = scmp.eq.s32.totalorder %s20, 1
    %p127 = por %p125, %p126
    %p129 = scmp.ne.s32.totalorder %s112, %s128
    %p130 = scmp.eq.s32.totalorder %s20, 0
    %p131 = por %p129, %p130
    %s132 = ssub.s32 %s14, %s21
    %p133 = scmp.eq.s32.totalorder %s132, 0
    %s135 = sadd.s32 %s134, 1
    %s136 = scalar_select %p133, %s134, %s135
    %p139 = pneg %p133
    %p140 = scmp.eq.s32.totalorder %s14, 1
    %p141 = por %p139, %p140
    %p142 = scmp.ne.s32.totalorder %s134, %s137
    %p143 = scmp.eq.s32.totalorder %s14, 0
    %p144 = por %p142, %p143
    %p145 = scmp.ne.s32.totalorder %s134, %s137
    %p146 = scmp.eq.s32.totalorder %s19, 1
    %p147 = por %p145, %p146
    %p148 = scmp.ne.s32.totalorder %s137, %s138
    %p149 = scmp.eq.s32.totalorder %s19, 0
    %p150 = por %p148, %p149
    %p151 = scmp.ne.s32.totalorder %s137, %s138
    %p152 = scmp.eq.s32.totalorder %s20, 1
    %p153 = por %p151, %p152
    %p155 = scmp.ne.s32.totalorder %s138, %s154
    %p156 = scmp.eq.s32.totalorder %s20, 0
    %p157 = por %p155, %p156
    %s158 = ssub.s32 %s14, %s21
    %p159 = scmp.eq.s32.totalorder %s158, 0
    %s161 = sadd.s32 %s160, 1
    %s162 = scalar_select %p159, %s160, %s161
    %p165 = pneg %p159
    %p166 = scmp.eq.s32.totalorder %s14, 1
    %p167 = por %p165, %p166
    %p168 = scmp.ne.s32.totalorder %s160, %s163
    %p169 = scmp.eq.s32.totalorder %s14, 0
    %p170 = por %p168, %p169
    %p171 = scmp.ne.s32.totalorder %s160, %s163
    %p172 = scmp.eq.s32.totalorder %s19, 1
    %p173 = por %p171, %p172
    %p174 = scmp.ne.s32.totalorder %s163, %s164
    %p175 = scmp.eq.s32.totalorder %s19, 0
    %p176 = por %p174, %p175
    %p177 = scmp.ne.s32.totalorder %s163, %s164
    %p178 = scmp.eq.s32.totalorder %s20, 1
    %p179 = por %p177, %p178
    %p181 = scmp.ne.s32.totalorder %s164, %s180
    %p182 = scmp.eq.s32.totalorder %s20, 0
    %p183 = por %p181, %p182
    %s184 = ssub.s32 %s14, %s21
    %p185 = scmp.eq.s32.totalorder %s184, 0
    %s187 = sadd.s32 %s186, 1
    %s188 = scalar_select %p185, %s186, %s187
    %p191 = pneg %p185
    %p192 = scmp.eq.s32.totalorder %s14, 1
    %p193 = por %p191, %p192
    %p194 = scmp.ne.s32.totalorder %s186, %s189
    %p195 = scmp.eq.s32.totalorder %s14, 0
    %p196 = por %p194, %p195
    %p197 = scmp.ne.s32.totalorder %s186, %s189
    %p198 = scmp.eq.s32.totalorder %s19, 1
    %p199 = por %p197, %p198
    %p200 = scmp.ne.s32.totalorder %s189, %s190
    %p201 = scmp.eq.s32.totalorder %s19, 0
    %p202 = por %p200, %p201
    %p203 = scmp.ne.s32.totalorder %s189, %s190
    %p204 = scmp.eq.s32.totalorder %s20, 1
    %p205 = por %p203, %p204
    %p207 = scmp.ne.s32.totalorder %s190, %s206
    %p208 = scmp.eq.s32.totalorder %s20, 0
    %p209 = por %p207, %p208
    %s210 = ssub.s32 %s14, %s21
    %p211 = scmp.eq.s32.totalorder %s210, 0
    %s213 = sadd.s32 %s212, 1
    %s214 = scalar_select %p211, %s212, %s213
    %p217 = pneg %p211
    %p218 = scmp.eq.s32.totalorder %s14, 1
    %p219 = por %p217, %p218
    %p220 = scmp.ne.s32.totalorder %s212, %s215
    %p221 = scmp.eq.s32.totalorder %s14, 0
    %p222 = por %p220, %p221
    %p223 = scmp.ne.s32.totalorder %s212, %s215
    %p224 = scmp.eq.s32.totalorder %s19, 1
    %p225 = por %p223, %p224
    %p226 = scmp.ne.s32.totalorder %s215, %s216
    %p227 = scmp.eq.s32.totalorder %s19, 0
    %p228 = por %p226, %p227
    %p229 = scmp.ne.s32.totalorder %s215, %s216
    %p230 = scmp.eq.s32.totalorder %s20, 1
    %p231 = por %p229, %p230
    %p233 = scmp.ne.s32.totalorder %s216, %s232
    %p234 = scmp.eq.s32.totalorder %s20, 0
    %p235 = por %p233, %p234
    %p236 = scmp.le.s32.totalorder 1, %s14
    %p237 = scmp.lt.s32.totalorder %s14, 3
    %p238 = pnand %p236, %p237
    %p239 = pneg %p238
    // Predicated region
    $region9: #{dtcwt_inverse.3} parent=5 // pred_check
      _
    $region10: #{dtcwt_inverse.3} parent=5 // pred_check_branch
      %241 = sbr.rel (%p238) target = $region12
    $region11: #{dtcwt_inverse.3} parent=5 // pred_region
      %s242 = ssub.s32 %s14, 1
      // Predicated region
      $region13: #{dtcwt_inverse.3} parent=11 // pred_check
        %p243 = pneg %p35
      $region14: #{dtcwt_inverse.3} parent=11 // pred_check_branch
        %245 = sbr.rel (%p243) target = $region16
      $region15: #{dtcwt_inverse.3} parent=11 // pred_region
        _
      $region16: #{dtcwt_inverse.3} parent=11 // pred_fallthru
        _
      // Predicated region
      $region17: #{dtcwt_inverse.3} parent=11 // pred_check
        %p246 = pneg %p56
      $region18: #{dtcwt_inverse.3} parent=11 // pred_check_branch
        %248 = sbr.rel (%p246) target = $region20
      $region19: #{dtcwt_inverse.3} parent=11 // pred_region
        _
      $region20: #{dtcwt_inverse.3} parent=11 // pred_fallthru
        _
      // Predicated region
      $region21: #{dtcwt_inverse.3} parent=11 // pred_check
        %p249 = pneg %p77
      $region22: #{dtcwt_inverse.3} parent=11 // pred_check_branch
        %251 = sbr.rel (%p249) target = $region24
      $region23: #{dtcwt_inverse.3} parent=11 // pred_region
        _
      $region24: #{dtcwt_inverse.3} parent=11 // pred_fallthru
        _
      // Predicated region
      $region25: #{dtcwt_inverse.3} parent=11 // pred_check
        %p252 = pneg %p98
      $region26: #{dtcwt_inverse.3} parent=11 // pred_check_branch
        %254 = sbr.rel (%p252) target = $region28
      $region27: #{dtcwt_inverse.3} parent=11 // pred_region
        _
      $region28: #{dtcwt_inverse.3} parent=11 // pred_fallthru
        _
    $region12: #{dtcwt_inverse.3} parent=5 // pred_fallthru
      _
    %p255 = scmp.lt.s32.totalorder %s14, 2
    // Predicated region
    $region29: #{dtcwt_inverse.3} parent=5 // pred_check
      %p256 = pneg %p255
    $region30: #{dtcwt_inverse.3} parent=5 // pred_check_branch
      %258 = sbr.rel (%p256) target = $region32
    $region31: #{dtcwt_inverse.3} parent=5 // pred_region
      // Predicated region
      $region33: #{dtcwt_inverse.3} parent=31 // pred_check
        %p259 = pneg %p118
      $region34: #{dtcwt_inverse.3} parent=31 // pred_check_branch
        %261 = sbr.rel (%p259) target = $region36
      $region35: #{dtcwt_inverse.3} parent=31 // pred_region
        %s262 = smul.u32 4, %s14
        %p263 = scmp.lt.s32.totalorder %s262, 7
        %s264 = scalar_select %p263, %s262, 7
        %s265 = smul.addr %s264, 8
        %s266 = scalar_lea.vmem %s4, %s265
        %s267 = smul.u32 4, %s14
      $region36: #{dtcwt_inverse.3} parent=31 // pred_fallthru
        _
      // Predicated region
      $region37: #{dtcwt_inverse.3} parent=31 // pred_check
        %p268 = pneg %p144
      $region38: #{dtcwt_inverse.3} parent=31 // pred_check_branch
        %270 = sbr.rel (%p268) target = $region40
      $region39: #{dtcwt_inverse.3} parent=31 // pred_region
        %s271 = smul.u32 4, %s14
        %p272 = scmp.lt.s32.totalorder %s271, 7
        %s273 = scalar_select %p272, %s271, 7
        %s274 = smul.addr %s273, 8
        %s275 = scalar_lea.vmem %s5, %s274
        %s276 = smul.u32 4, %s14
      $region40: #{dtcwt_inverse.3} parent=31 // pred_fallthru
        _
      // Predicated region
      $region41: #{dtcwt_inverse.3} parent=31 // pred_check
        %p277 = pneg %p170
      $region42: #{dtcwt_inverse.3} parent=31 // pred_check_branch
        %279 = sbr.rel (%p277) target = $region44
      $region43: #{dtcwt_inverse.3} parent=31 // pred_region
        %s280 = smul.u32 4, %s14
        %p281 = scmp.lt.s32.totalorder %s280, 7
        %s282 = scalar_select %p281, %s280, 7
        %s283 = smul.addr %s282, 8
        %s284 = scalar_lea.vmem %s6, %s283
        %s285 = smul.u32 4, %s14
      $region44: #{dtcwt_inverse.3} parent=31 // pred_fallthru
        _
      // Predicated region
      $region45: #{dtcwt_inverse.3} parent=31 // pred_check
        %p286 = pneg %p196
      $region46: #{dtcwt_inverse.3} parent=31 // pred_check_branch
        %288 = sbr.rel (%p286) target = $region48
      $region47: #{dtcwt_inverse.3} parent=31 // pred_region
        %s289 = smul.u32 4, %s14
        %p290 = scmp.lt.s32.totalorder %s289, 7
        %s291 = scalar_select %p290, %s289, 7
        %s292 = smul.addr %s291, 8
        %s293 = scalar_lea.vmem %s7, %s292
        %s294 = smul.u32 4, %s14
      $region48: #{dtcwt_inverse.3} parent=31 // pred_fallthru
        _
    $region32: #{dtcwt_inverse.3} parent=5 // pred_fallthru
      _
    %p295 = scmp.le.s32.totalorder 1, %s14
    %p296 = scmp.lt.s32.totalorder %s14, 3
    %p297 = pnand %p295, %p296
    %p298 = pneg %p297
    // Predicated region
    $region49: #{dtcwt_inverse.3} parent=5 // pred_check
      _
    $region50: #{dtcwt_inverse.3} parent=5 // pred_check_branch
      %300 = sbr.rel (%p297) target = $region52
    $region51: #{dtcwt_inverse.3} parent=5 // pred_region
      %s301 = ssub.s32 %s14, 1
      %p302 = pneg %p35
      %p303 = pneg %p32
      %p304 = pneg %p56
      %p305 = pneg %p53
      %p306 = pneg %p77
      %p307 = pneg %p74
      %p308 = pneg %p98
      %p309 = pneg %p95
      %s310 = smul.u32 4, %s19
      %p311 = scmp.lt.s32.totalorder %s310, 7
      %s312 = scalar_select %p311, %s310, 7
      %s313 = smul.addr %s312, 8
      %s314 = scalar_lea.vmem %s4, %s313
      %p315 = pneg %p124
      %p316 = pneg %p121
      %s317 = smul.u32 4, %s19
      %p318 = scmp.lt.s32.totalorder %s317, 7
      %s319 = scalar_select %p318, %s317, 7
      %s320 = smul.addr %s319, 8
      %s321 = scalar_lea.vmem %s5, %s320
      %p322 = pneg %p150
      %p323 = pneg %p147
      %s324 = smul.u32 4, %s19
      %p325 = scmp.lt.s32.totalorder %s324, 7
      %s326 = scalar_select %p325, %s324, 7
      %s327 = smul.addr %s326, 8
      %s328 = scalar_lea.vmem %s6, %s327
      %p329 = pneg %p176
      %p330 = pneg %p173
      %s331 = smul.u32 4, %s19
      %p332 = scmp.lt.s32.totalorder %s331, 7
      %s333 = scalar_select %p332, %s331, 7
      %s334 = smul.addr %s333, 8
      %s335 = scalar_lea.vmem %s7, %s334
      %p336 = pneg %p202
      %p337 = pneg %p199
      %p338 = pneg %p228
      %p339 = pneg %p225
      %s340 = smul.u32 4, %s19
      %p341 = scmp.lt.s32.totalorder %s340, 7
      %s342 = scalar_select %p341, %s340, 7
      %s343 = smul.addr %s342, 2
      %s344 = smul.addr %s343, 8
      %s345 = scalar_lea.vmem %s8, %s344
      %s346 = smul.u32 4, %s19
      %p347 = scmp.lt.s32.totalorder %s346, 7
      %s348 = scalar_select %p347, %s346, 7
      %s349 = smul.addr %s348, 8
      %s350 = scalar_lea.vmem %s4, %s349
      %s351 = smul.u32 4, %s19
      %s352 = smul.u32 4, %s19
      %p353 = scmp.lt.s32.totalorder %s352, 7
      %s354 = scalar_select %p353, %s352, 7
      %s355 = smul.addr %s354, 8
      %s356 = scalar_lea.vmem %s5, %s355
      %s357 = smul.u32 4, %s19
      %s358 = smul.u32 4, %s19
      %p359 = scmp.lt.s32.totalorder %s358, 7
      %s360 = scalar_select %p359, %s358, 7
      %s361 = smul.addr %s360, 8
      %s362 = scalar_lea.vmem %s6, %s361
      %s363 = smul.u32 4, %s19
      %s364 = smul.u32 4, %s19
      %p365 = scmp.lt.s32.totalorder %s364, 7
      %s366 = scalar_select %p365, %s364, 7
      %s367 = smul.addr %s366, 8
      %s368 = scalar_lea.vmem %s7, %s367
      %s369 = smul.u32 4, %s19
      %s370 = smul.u32 4, %s19
      %p371 = scmp.lt.s32.totalorder %s370, 7
      %s372 = scalar_select %p371, %s370, 7
      %s373 = smul.addr %s372, 2
      %s374 = smul.addr %s373, 8
      %s375 = scalar_lea.vmem %s8, %s374
      %s376 = smul.u32 4, %s19
      %v377 = vld [vmem:[%s0] sm:$0xff]
      %v378 = vld [vmem:[%s0 + $0x8] sm:$0xff]
      %v379 = vld [vmem:[%s1] sm:$0xff]
      %v380 = vld [vmem:[%s1 + $0x8] sm:$0xff]
      %v381 = vld [vmem:[%s2] sm:$0xff]
      %v382 = vld [vmem:[%s3] sm:$0xff]
      %v383 = vld [vmem:[%s350] sm:$0xff]
      %v384 = vld [vmem:[%s356] sm:$0xff]
      %vm385 = vcmask 64512
      %v387 = vsel %vm385, %v379, 0
      %v390 = vsel %vm385, %v380, 0
      %392 = vmatprep.subr.mxu0 0.0
      %393 = vmatpush1.msra.mxu0 %v384
      %394 = vmatprep.subr.mxu0 0.0
      %395 = vmatpush1.msra.mxu0 0.0
      %396 = vmatprep.subr.mxu0 0.0
      %397 = vmatpush1.msra.mxu0 0.0
      %398 = vmatprep.subr.mxu0 0.0
      %399 = vmatpush1.msra.mxu0 0.0
      %400 = vmatprep.subr.mxu0 0.0
      %401 = vmatpush1.msra.mxu0 0.0
      %402 = vmatprep.subr.mxu0 0.0
      %403 = vmatpush1.msra.mxu0 0.0
      %404 = vmatprep.subr.mxu0 0.0
      %405 = vmatpush1.msra.mxu0 0.0
      %406 = vmatprep.subr.mxu0 0.0
      %407 = vmatpush1.msra.mxu0 0.0
      %408 = vmatprep.subr.mxu0 0.0
      %409 = vmatpush1.msra.mxu0 0.0
      %410 = vmatprep.subr.mxu0 0.0
      %411 = vmatpush1.msra.mxu0 0.0
      %412 = vmatprep.subr.mxu0 0.0
      %413 = vmatpush1.msra.mxu0 0.0
      %414 = vmatprep.subr.mxu0 0.0
      %415 = vmatpush1.msra.mxu0 0.0
      %416 = vmatprep.subr.mxu0 0.0
      %417 = vmatpush1.msra.mxu0 0.0
      %418 = vmatprep.subr.mxu0 0.0
      %419 = vmatpush1.msra.mxu0 0.0
      %420 = vmatprep.subr.mxu0 0.0
      %421 = vmatpush1.msra.mxu0 0.0
      %422 = vmatprep.subr.mxu0 0.0
      %423 = vmatpush1.msra.mxu0 0.0
      %424 = vmatprep.subr.mxu0 0.0
      %425 = vmatpush1.msra.mxu0 0.0
      %426 = vmatprep.subr.mxu0 0.0
      %427 = vmatpush1.msra.mxu0 0.0
      %428 = vmatprep.subr.mxu0 0.0
      %429 = vmatpush1.msra.mxu0 0.0
      %430 = vmatprep.subr.mxu0 0.0
      %431 = vmatpush1.msra.mxu0 0.0
      %432 = vmatprep.subr.mxu0 0.0
      %433 = vmatpush1.msra.mxu0 0.0
      %434 = vmatprep.subr.mxu0 0.0
      %435 = vmatpush1.msra.mxu0 0.0
      %436 = vmatprep.subr.mxu0 0.0
      %437 = vmatpush1.msra.mxu0 0.0
      %438 = vmatprep.subr.mxu0 0.0
      %439 = vmatpush1.msra.mxu0 0.0
      %440 = vmatprep.subr.mxu0 0.0
      %441 = vmatpush1.msra.mxu0 0.0
      %442 = vmatprep.subr.mxu0 0.0
      %443 = vmatpush1.msra.mxu0 0.0
      %444 = vmatprep.subr.mxu0 0.0
      %445 = vmatpush1.msra.mxu0 0.0
      %446 = vmatprep.subr.mxu0 0.0
      %447 = vmatpush1.msra.mxu0 0.0
      %448 = vmatprep.subr.mxu0 0.0
      %449 = vmatpush1.msra.mxu0 0.0
      %450 = vmatprep.subr.mxu0 0.0
      %451 = vmatpush1.msra.mxu0 0.0
      %452 = vmatprep.subr.mxu0 0.0
      %453 = vmatpush1.msra.mxu0 0.0
      %454 = vmatprep.subr.mxu0 0.0
      %455 = vmatpush1.msra.mxu0 0.0
      %456 = vmatprep.mubr.f32.mxu0 0.0
      %457 = vmatmul.mubr.f32.gmra.mrb[0].mxu0 %v387
      %v458 = vpop.f32.mrb[0].mxu0
      %v459 = vadd.f32 0.0, %v458
      %v460 = vpop.f32.mrb[0].mxu0
      %461 = vmatprep.mubr.f32.mxu0 0.0
      %462 = vmatmul.mubr.f32.gmra.mrb[0].mxu0 %v390
      %v463 = vpop.f32.mrb[0].mxu0
      %v464 = vadd.f32 0.0, %v463
      %v465 = vpop.f32.mrb[0].mxu0
      %466 = vdwg.mxu0
      %v468 = vsel %vm385, %v377, 0
      %v471 = vsel %vm385, %v378, 0
      %473 = vmatprep.subr.mxu0 0.0
      %474 = vmatpush1.msra.mxu0 %v383
      %475 = vmatprep.subr.mxu0 0.0
      %476 = vmatpush1.msra.mxu0 0.0
      %477 = vmatprep.subr.mxu0 0.0
      %478 = vmatpush1.msra.mxu0 0.0
      %479 = vmatprep.subr.mxu0 0.0
      %480 = vmatpush1.msra.mxu0 0.0
      %481 = vmatprep.subr.mxu0 0.0
      %482 = vmatpush1.msra.mxu0 0.0
      %483 = vmatprep.subr.mxu0 0.0
      %484 = vmatpush1.msra.mxu0 0.0
      %485 = vmatprep.subr.mxu0 0.0
      %486 = vmatpush1.msra.mxu0 0.0
      %487 = vmatprep.subr.mxu0 0.0
      %488 = vmatpush1.msra.mxu0 0.0
      %489 = vmatprep.subr.mxu0 0.0
      %490 = vmatpush1.msra.mxu0 0.0
      %491 = vmatprep.subr.mxu0 0.0
      %492 = vmatpush1.msra.mxu0 0.0
      %493 = vmatprep.subr.mxu0 0.0
      %494 = vmatpush1.msra.mxu0 0.0
      %495 = vmatprep.subr.mxu0 0.0
      %496 = vmatpush1.msra.mxu0 0.0
      %497 = vmatprep.subr.mxu0 0.0
      %498 = vmatpush1.msra.mxu0 0.0
      %499 = vmatprep.subr.mxu0 0.0
      %500 = vmatpush1.msra.mxu0 0.0
      %501 = vmatprep.subr.mxu0 0.0
      %502 = vmatpush1.msra.mxu0 0.0
      %503 = vmatprep.subr.mxu0 0.0
      %504 = vmatpush1.msra.mxu0 0.0
      %505 = vmatprep.subr.mxu0 0.0
      %506 = vmatpush1.msra.mxu0 0.0
      %507 = vmatprep.subr.mxu0 0.0
      %508 = vmatpush1.msra.mxu0 0.0
      %509 = vmatprep.subr.mxu0 0.0
      %510 = vmatpush1.msra.mxu0 0.0
      %511 = vmatprep.subr.mxu0 0.0
      %512 = vmatpush1.msra.mxu0 0.0
      %513 = vmatprep.subr.mxu0 0.0
      %514 = vmatpush1.msra.mxu0 0.0
      %515 = vmatprep.subr.mxu0 0.0
      %516 = vmatpush1.msra.mxu0 0.0
      %517 = vmatprep.subr.mxu0 0.0
      %518 = vmatpush1.msra.mxu0 0.0
      %519 = vmatprep.subr.mxu0 0.0
      %520 = vmatpush1.msra.mxu0 0.0
      %521 = vmatprep.subr.mxu0 0.0
      %522 = vmatpush1.msra.mxu0 0.0
      %523 = vmatprep.subr.mxu0 0.0
      %524 = vmatpush1.msra.mxu0 0.0
      %525 = vmatprep.subr.mxu0 0.0
      %526 = vmatpush1.msra.mxu0 0.0
      %527 = vmatprep.subr.mxu0 0.0
      %528 = vmatpush1.msra.mxu0 0.0
      %529 = vmatprep.subr.mxu0 0.0
      %530 = vmatpush1.msra.mxu0 0.0
      %531 = vmatprep.subr.mxu0 0.0
      %532 = vmatpush1.msra.mxu0 0.0
      %533 = vmatprep.subr.mxu0 0.0
      %534 = vmatpush1.msra.mxu0 0.0
      %535 = vmatprep.subr.mxu0 0.0
      %536 = vmatpush1.msra.mxu0 0.0
      %537 = vmatprep.mubr.f32.mxu0 0.0
      %538 = vmatmul.mubr.f32.gmra.mrb[0].mxu0 %v468
      %v539 = vpop.f32.mrb[0].mxu0
      %v540 = vadd.f32 %v459, %v539
      %v541 = vpop.f32.mrb[0].mxu0
      %542 = vmatprep.mubr.f32.mxu0 0.0
      %543 = vmatmul.mubr.f32.gmra.mrb[0].mxu0 %v471
      %v544 = vpop.f32.mrb[0].mxu0
      %v545 = vadd.f32 %v464, %v544
      %v546 = vpop.f32.mrb[0].mxu0
      %547 = vdwg.mxu0
      %v548 = vld [vmem:[%s362] sm:$0xff]
      %v549 = vld [vmem:[%s368] sm:$0xff]
      %550 = vmatprep.subr.mxu0 0.0
      %551 = vmatpush1.msra.mxu0 %v549
      %552 = vmatprep.subr.mxu0 0.0
      %553 = vmatpush1.msra.mxu0 0.0
      %554 = vmatprep.subr.mxu0 0.0
      %555 = vmatpush1.msra.mxu0 0.0
      %556 = vmatprep.subr.mxu0 0.0
      %557 = vmatpush1.msra.mxu0 0.0
      %558 = vmatprep.subr.mxu0 0.0
      %559 = vmatpush1.msra.mxu0 0.0
      %560 = vmatprep.subr.mxu0 0.0
      %561 = vmatpush1.msra.mxu0 0.0
      %562 = vmatprep.subr.mxu0 0.0
      %563 = vmatpush1.msra.mxu0 0.0
      %564 = vmatprep.subr.mxu0 0.0
      %565 = vmatpush1.msra.mxu0 0.0
      %566 = vmatprep.subr.mxu0 0.0
      %567 = vmatpush1.msra.mxu0 0.0
      %568 = vmatprep.subr.mxu0 0.0
      %569 = vmatpush1.msra.mxu0 0.0
      %570 = vmatprep.subr.mxu0 0.0
      %571 = vmatpush1.msra.mxu0 0.0
      %572 = vmatprep.subr.mxu0 0.0
      %573 = vmatpush1.msra.mxu0 0.0
      %574 = vmatprep.subr.mxu0 0.0
      %575 = vmatpush1.msra.mxu0 0.0
      %576 = vmatprep.subr.mxu0 0.0
      %577 = vmatpush1.msra.mxu0 0.0
      %578 = vmatprep.subr.mxu0 0.0
      %579 = vmatpush1.msra.mxu0 0.0
      %580 = vmatprep.subr.mxu0 0.0
      %581 = vmatpush1.msra.mxu0 0.0
      %582 = vmatprep.subr.mxu0 0.0
      %583 = vmatpush1.msra.mxu0 0.0
      %584 = vmatprep.subr.mxu0 0.0
      %585 = vmatpush1.msra.mxu0 0.0
      %586 = vmatprep.subr.mxu0 0.0
      %587 = vmatpush1.msra.mxu0 0.0
      %588 = vmatprep.subr.mxu0 0.0
      %589 = vmatpush1.msra.mxu0 0.0
      %590 = vmatprep.subr.mxu0 0.0
      %591 = vmatpush1.msra.mxu0 0.0
      %592 = vmatprep.subr.mxu0 0.0
      %593 = vmatpush1.msra.mxu0 0.0
      %594 = vmatprep.subr.mxu0 0.0
      %595 = vmatpush1.msra.mxu0 0.0
      %596 = vmatprep.subr.mxu0 0.0
      %597 = vmatpush1.msra.mxu0 0.0
      %598 = vmatprep.subr.mxu0 0.0
      %599 = vmatpush1.msra.mxu0 0.0
      %600 = vmatprep.subr.mxu0 0.0
      %601 = vmatpush1.msra.mxu0 0.0
      %602 = vmatprep.subr.mxu0 0.0
      %603 = vmatpush1.msra.mxu0 0.0
      %604 = vmatprep.subr.mxu0 0.0
      %605 = vmatpush1.msra.mxu0 0.0
      %606 = vmatprep.subr.mxu0 0.0
      %607 = vmatpush1.msra.mxu0 0.0
      %608 = vmatprep.subr.mxu0 0.0
      %609 = vmatpush1.msra.mxu0 0.0
      %610 = vmatprep.subr.mxu0 0.0
      %611 = vmatpush1.msra.mxu0 0.0
      %612 = vmatprep.subr.mxu0 0.0
      %613 = vmatpush1.msra.mxu0 0.0
      %614 = vmatprep.mubr.f32.mxu0 0.0
      %615 = vmatmul.mubr.f32.gmra.mrb[0].mxu0 %v387
      %v616 = vpop.f32.mrb[0].mxu0
      %v617 = vadd.f32 0.0, %v616
      %v618 = vpop.f32.mrb[0].mxu0
      %619 = vmatprep.mubr.f32.mxu0 0.0
      %620 = vmatmul.mubr.f32.gmra.mrb[0].mxu0 %v390
      %v621 = vpop.f32.mrb[0].mxu0
      %v622 = vadd.f32 0.0, %v621
      %v623 = vpop.f32.mrb[0].mxu0
      %624 = vdwg.mxu0
      %625 = vmatprep.subr.mxu0 0.0
      %626 = vmatpush1.msra.mxu0 %v548
      %627 = vmatprep.subr.mxu0 0.0
      %628 = vmatpush1.msra.mxu0 0.0
      %629 = vmatprep.subr.mxu0 0.0
      %630 = vmatpush1.msra.mxu0 0.0
      %631 = vmatprep.subr.mxu0 0.0
      %632 = vmatpush1.msra.mxu0 0.0
      %633 = vmatprep.subr.mxu0 0.0
      %634 = vmatpush1.msra.mxu0 0.0
      %635 = vmatprep.subr.mxu0 0.0
      %636 = vmatpush1.msra.mxu0 0.0
      %637 = vmatprep.subr.mxu0 0.0
      %638 = vmatpush1.msra.mxu0 0.0
      %639 = vmatprep.subr.mxu0 0.0
      %640 = vmatpush1.msra.mxu0 0.0
      %641 = vmatprep.subr.mxu0 0.0
      %642 = vmatpush1.msra.mxu0 0.0
      %643 = vmatprep.subr.mxu0 0.0
      %644 = vmatpush1.msra.mxu0 0.0
      %645 = vmatprep.subr.mxu0 0.0
      %646 = vmatpush1.msra.mxu0 0.0
      %647 = vmatprep.subr.mxu0 0.0
      %648 = vmatpush1.msra.mxu0 0.0
      %649 = vmatprep.subr.mxu0 0.0
      %650 = vmatpush1.msra.mxu0 0.0
      %651 = vmatprep.subr.mxu0 0.0
      %652 = vmatpush1.msra.mxu0 0.0
      %653 = vmatprep.subr.mxu0 0.0
      %654 = vmatpush1.msra.mxu0 0.0
      %655 = vmatprep.subr.mxu0 0.0
      %656 = vmatpush1.msra.mxu0 0.0
      %657 = vmatprep.subr.mxu0 0.0
      %658 = vmatpush1.msra.mxu0 0.0
      %659 = vmatprep.subr.mxu0 0.0
      %660 = vmatpush1.msra.mxu0 0.0
      %661 = vmatprep.subr.mxu0 0.0
      %662 = vmatpush1.msra.mxu0 0.0
      %663 = vmatprep.subr.mxu0 0.0
      %664 = vmatpush1.msra.mxu0 0.0
      %665 = vmatprep.subr.mxu0 0.0
      %666 = vmatpush1.msra.mxu0 0.0
      %667 = vmatprep.subr.mxu0 0.0
      %668 = vmatpush1.msra.mxu0 0.0
      %669 = vmatprep.subr.mxu0 0.0
      %670 = vmatpush1.msra.mxu0 0.0
      %671 = vmatprep.subr.mxu0 0.0
      %672 = vmatpush1.msra.mxu0 0.0
      %673 = vmatprep.subr.mxu0 0.0
      %674 = vmatpush1.msra.mxu0 0.0
      %675 = vmatprep.subr.mxu0 0.0
      %676 = vmatpush1.msra.mxu0 0.0
      %677 = vmatprep.subr.mxu0 0.0
      %678 = vmatpush1.msra.mxu0 0.0
      %679 = vmatprep.subr.mxu0 0.0
      %680 = vmatpush1.msra.mxu0 0.0
      %681 = vmatprep.subr.mxu0 0.0
      %682 = vmatpush1.msra.mxu0 0.0
      %683 = vmatprep.subr.mxu0 0.0
      %684 = vmatpush1.msra.mxu0 0.0
      %685 = vmatprep.subr.mxu0 0.0
      %686 = vmatpush1.msra.mxu0 0.0
      %687 = vmatprep.subr.mxu0 0.0
      %688 = vmatpush1.msra.mxu0 0.0
      %689 = vmatprep.mubr.f32.mxu0 0.0
      %690 = vmatmul.mubr.f32.gmra.mrb[0].mxu0 %v468
      %v691 = vpop.f32.mrb[0].mxu0
      %v692 = vadd.f32 %v617, %v691
      %v693 = vpop.f32.mrb[0].mxu0
      %694 = vmatprep.mubr.f32.mxu0 0.0
      %695 = vmatmul.mubr.f32.gmra.mrb[0].mxu0 %v471
      %v696 = vpop.f32.mrb[0].mxu0
      %v697 = vadd.f32 %v622, %v696
      %v698 = vpop.f32.mrb[0].mxu0
      %699 = vdwg.mxu0
      %v701 = vsel %vm385, %v692, 0
      %v704 = vsel %vm385, %v697, 0
      %706 = vmatprep.subr.mxu0 0.0
      %707 = vmatpush1.msra.mxu0 %v382
      %708 = vmatprep.subr.mxu0 0.0
      %709 = vmatpush1.msra.mxu0 0.0
      %710 = vmatprep.subr.mxu0 0.0
      %711 = vmatpush1.msra.mxu0 0.0
      %712 = vmatprep.subr.mxu0 0.0
      %713 = vmatpush1.msra.mxu0 0.0
      %714 = vmatprep.subr.mxu0 0.0
      %715 = vmatpush1.msra.mxu0 0.0
      %716 = vmatprep.subr.mxu0 0.0
      %717 = vmatpush1.msra.mxu0 0.0
      %718 = vmatprep.subr.mxu0 0.0
      %719 = vmatpush1.msra.mxu0 0.0
      %720 = vmatprep.subr.mxu0 0.0
      %721 = vmatpush1.msra.mxu0 0.0
      %722 = vmatprep.subr.mxu0 0.0
      %723 = vmatpush1.msra.mxu0 0.0
      %724 = vmatprep.subr.mxu0 0.0
      %725 = vmatpush1.msra.mxu0 0.0
      %726 = vmatprep.subr.mxu0 0.0
      %727 = vmatpush1.msra.mxu0 0.0
      %728 = vmatprep.subr.mxu0 0.0
      %729 = vmatpush1.msra.mxu0 0.0
      %730 = vmatprep.subr.mxu0 0.0
      %731 = vmatpush1.msra.mxu0 0.0
      %732 = vmatprep.subr.mxu0 0.0
      %733 = vmatpush1.msra.mxu0 0.0
      %734 = vmatprep.subr.mxu0 0.0
      %735 = vmatpush1.msra.mxu0 0.0
      %736 = vmatprep.subr.mxu0 0.0
      %737 = vmatpush1.msra.mxu0 0.0
      %738 = vmatprep.subr.mxu0 0.0
      %739 = vmatpush1.msra.mxu0 0.0
      %740 = vmatprep.subr.mxu0 0.0
      %741 = vmatpush1.msra.mxu0 0.0
      %742 = vmatprep.subr.mxu0 0.0
      %743 = vmatpush1.msra.mxu0 0.0
      %744 = vmatprep.subr.mxu0 0.0
      %745 = vmatpush1.msra.mxu0 0.0
      %746 = vmatprep.subr.mxu0 0.0
      %747 = vmatpush1.msra.mxu0 0.0
      %748 = vmatprep.subr.mxu0 0.0
      %749 = vmatpush1.msra.mxu0 0.0
      %750 = vmatprep.subr.mxu0 0.0
      %751 = vmatpush1.msra.mxu0 0.0
      %752 = vmatprep.subr.mxu0 0.0
      %753 = vmatpush1.msra.mxu0 0.0
      %754 = vmatprep.subr.mxu0 0.0
      %755 = vmatpush1.msra.mxu0 0.0
      %756 = vmatprep.subr.mxu0 0.0
      %757 = vmatpush1.msra.mxu0 0.0
      %758 = vmatprep.subr.mxu0 0.0
      %759 = vmatpush1.msra.mxu0 0.0
      %760 = vmatprep.subr.mxu0 0.0
      %761 = vmatpush1.msra.mxu0 0.0
      %762 = vmatprep.subr.mxu0 0.0
      %763 = vmatpush1.msra.mxu0 0.0
      %764 = vmatprep.subr.mxu0 0.0
      %765 = vmatpush1.msra.mxu0 0.0
      %766 = vmatprep.subr.mxu0 0.0
      %767 = vmatpush1.msra.mxu0 0.0
      %768 = vmatprep.subr.mxu0 0.0
      %769 = vmatpush1.msra.mxu0 0.0
      %770 = vmatprep.mubr.f32.mxu0 0.0
      %771 = vmatmul.mubr.f32.gmra.mrb[0].mxu0 %v701
      %v772 = vpop.f32.mrb[0].mxu0
      %v773 = vadd.f32 0.0, %v772
      %v774 = vpop.f32.mrb[0].mxu0
      %775 = vmatprep.mubr.f32.mxu0 0.0
      %776 = vmatmul.mubr.f32.gmra.mrb[0].mxu0 %v704
      %v777 = vpop.f32.mrb[0].mxu0
      %v778 = vadd.f32 0.0, %v777
      %v779 = vpop.f32.mrb[0].mxu0
      %780 = vdwg.mxu0
      %v782 = vsel %vm385, %v540, 0
      %v785 = vsel %vm385, %v545, 0
      %787 = vmatprep.subr.mxu0 0.0
      %788 = vmatpush1.msra.mxu0 %v381
      %789 = vmatprep.subr.mxu0 0.0
      %790 = vmatpush1.msra.mxu0 0.0
      %791 = vmatprep.subr.mxu0 0.0
      %792 = vmatpush1.msra.mxu0 0.0
      %793 = vmatprep.subr.mxu0 0.0
      %794 = vmatpush1.msra.mxu0 0.0
      %795 = vmatprep.subr.mxu0 0.0
      %796 = vmatpush1.msra.mxu0 0.0
      %797 = vmatprep.subr.mxu0 0.0
      %798 = vmatpush1.msra.mxu0 0.0
      %799 = vmatprep.subr.mxu0 0.0
      %800 = vmatpush1.msra.mxu0 0.0
      %801 = vmatprep.subr.mxu0 0.0
      %802 = vmatpush1.msra.mxu0 0.0
      %803 = vmatprep.subr.mxu0 0.0
      %804 = vmatpush1.msra.mxu0 0.0
      %805 = vmatprep.subr.mxu0 0.0
      %806 = vmatpush1.msra.mxu0 0.0
      %807 = vmatprep.subr.mxu0 0.0
      %808 = vmatpush1.msra.mxu0 0.0
      %809 = vmatprep.subr.mxu0 0.0
      %810 = vmatpush1.msra.mxu0 0.0
      %811 = vmatprep.subr.mxu0 0.0
      %812 = vmatpush1.msra.mxu0 0.0
      %813 = vmatprep.subr.mxu0 0.0
      %814 = vmatpush1.msra.mxu0 0.0
      %815 = vmatprep.subr.mxu0 0.0
      %816 = vmatpush1.msra.mxu0 0.0
      %817 = vmatprep.subr.mxu0 0.0
      %818 = vmatpush1.msra.mxu0 0.0
      %819 = vmatprep.subr.mxu0 0.0
      %820 = vmatpush1.msra.mxu0 0.0
      %821 = vmatprep.subr.mxu0 0.0
      %822 = vmatpush1.msra.mxu0 0.0
      %823 = vmatprep.subr.mxu0 0.0
      %824 = vmatpush1.msra.mxu0 0.0
      %825 = vmatprep.subr.mxu0 0.0
      %826 = vmatpush1.msra.mxu0 0.0
      %827 = vmatprep.subr.mxu0 0.0
      %828 = vmatpush1.msra.mxu0 0.0
      %829 = vmatprep.subr.mxu0 0.0
      %830 = vmatpush1.msra.mxu0 0.0
      %831 = vmatprep.subr.mxu0 0.0
      %832 = vmatpush1.msra.mxu0 0.0
      %833 = vmatprep.subr.mxu0 0.0
      %834 = vmatpush1.msra.mxu0 0.0
      %835 = vmatprep.subr.mxu0 0.0
      %836 = vmatpush1.msra.mxu0 0.0
      %837 = vmatprep.subr.mxu0 0.0
      %838 = vmatpush1.msra.mxu0 0.0
      %839 = vmatprep.subr.mxu0 0.0
      %840 = vmatpush1.msra.mxu0 0.0
      %841 = vmatprep.subr.mxu0 0.0
      %842 = vmatpush1.msra.mxu0 0.0
      %843 = vmatprep.subr.mxu0 0.0
      %844 = vmatpush1.msra.mxu0 0.0
      %845 = vmatprep.subr.mxu0 0.0
      %846 = vmatpush1.msra.mxu0 0.0
      %847 = vmatprep.subr.mxu0 0.0
      %848 = vmatpush1.msra.mxu0 0.0
      %849 = vmatprep.subr.mxu0 0.0
      %850 = vmatpush1.msra.mxu0 0.0
      %851 = vmatprep.mubr.f32.mxu0 0.0
      %852 = vmatmul.mubr.f32.gmra.mrb[0].mxu0 %v782
      %v853 = vpop.f32.mrb[0].mxu0
      %v854 = vadd.f32 %v773, %v853
      %v855 = vpop.f32.mrb[0].mxu0
      %856 = vmatprep.mubr.f32.mxu0 0.0
      %857 = vmatmul.mubr.f32.gmra.mrb[0].mxu0 %v785
      %v858 = vpop.f32.mrb[0].mxu0
      %v859 = vadd.f32 %v778, %v858
      %v860 = vpop.f32.mrb[0].mxu0
      %861 = vdwg.mxu0
      %vm862 = vcmask 130048
      %863 = vst.msk [vmem:[%s375] sm:$0xff] %vm862, %v854
      %864 = vst.msk [vmem:[%s375 + $0x8] sm:$0xff] %vm862, %v859
      %s865 = scalar_lea.vmem %s350, 8
      %v866 = vld [vmem:[%s865] sm:$0xff]
      %s867 = scalar_lea.vmem %s356, 8
      %v868 = vld [vmem:[%s867] sm:$0xff]
      %869 = vmatprep.subr.mxu0 0.0
      %870 = vmatpush1.msra.mxu0 %v868
      %871 = vmatprep.subr.mxu0 0.0
      %872 = vmatpush1.msra.mxu0 0.0
      %873 = vmatprep.subr.mxu0 0.0
      %874 = vmatpush1.msra.mxu0 0.0
      %875 = vmatprep.subr.mxu0 0.0
      %876 = vmatpush1.msra.mxu0 0.0
      %877 = vmatprep.subr.mxu0 0.0
      %878 = vmatpush1.msra.mxu0 0.0
      %879 = vmatprep.subr.mxu0 0.0
      %880 = vmatpush1.msra.mxu0 0.0
      %881 = vmatprep.subr.mxu0 0.0
      %882 = vmatpush1.msra.mxu0 0.0
      %883 = vmatprep.subr.mxu0 0.0
      %884 = vmatpush1.msra.mxu0 0.0
      %885 = vmatprep.subr.mxu0 0.0
      %886 = vmatpush1.msra.mxu0 0.0
      %887 = vmatprep.subr.mxu0 0.0
      %888 = vmatpush1.msra.mxu0 0.0
      %889 = vmatprep.subr.mxu0 0.0
      %890 = vmatpush1.msra.mxu0 0.0
      %891 = vmatprep.subr.mxu0 0.0
      %892 = vmatpush1.msra.mxu0 0.0
      %893 = vmatprep.subr.mxu0 0.0
      %894 = vmatpush1.msra.mxu0 0.0
      %895 = vmatprep.subr.mxu0 0.0
      %896 = vmatpush1.msra.mxu0 0.0
      %897 = vmatprep.subr.mxu0 0.0
      %898 = vmatpush1.msra.mxu0 0.0
      %899 = vmatprep.subr.mxu0 0.0
      %900 = vmatpush1.msra.mxu0 0.0
      %901 = vmatprep.subr.mxu0 0.0
      %902 = vmatpush1.msra.mxu0 0.0
      %903 = vmatprep.subr.mxu0 0.0
      %904 = vmatpush1.msra.mxu0 0.0
      %905 = vmatprep.subr.mxu0 0.0
      %906 = vmatpush1.msra.mxu0 0.0
      %907 = vmatprep.subr.mxu0 0.0
      %908 = vmatpush1.msra.mxu0 0.0
      %909 = vmatprep.subr.mxu0 0.0
      %910 = vmatpush1.msra.mxu0 0.0
      %911 = vmatprep.subr.mxu0 0.0
      %912 = vmatpush1.msra.mxu0 0.0
      %913 = vmatprep.subr.mxu0 0.0
      %914 = vmatpush1.msra.mxu0 0.0
      %915 = vmatprep.subr.mxu0 0.0
      %916 = vmatpush1.msra.mxu0 0.0
      %917 = vmatprep.subr.mxu0 0.0
      %918 = vmatpush1.msra.mxu0 0.0
      %919 = vmatprep.subr.mxu0 0.0
      %920 = vmatpush1.msra.mxu0 0.0
      %921 = vmatprep.subr.mxu0 0.0
      %922 = vmatpush1.msra.mxu0 0.0
      %923 = vmatprep.subr.mxu0 0.0
      %924 = vmatpush1.msra.mxu0 0.0
      %925 = vmatprep.subr.mxu0 0.0
      %926 = vmatpush1.msra.mxu0 0.0
      %927 = vmatprep.subr.mxu0 0.0
      %928 = vmatpush1.msra.mxu0 0.0
      %929 = vmatprep.subr.mxu0 0.0
      %930 = vmatpush1.msra.mxu0 0.0
      %931 = vmatprep.subr.mxu0 0.0
      %932 = vmatpush1.msra.mxu0 0.0
      %933 = vmatprep.mubr.f32.mxu0 0.0
      %934 = vmatmul.mubr.f32.gmra.mrb[0].mxu0 %v387
      %v935 = vpop.f32.mrb[0].mxu0
      %v936 = vadd.f32 0.0, %v935
      %v937 = vpop.f32.mrb[0].mxu0
      %938 = vmatprep.mubr.f32.mxu0 0.0
      %939 = vmatmul.mubr.f32.gmra.mrb[0].mxu0 %v390
      %v940 = vpop.f32.mrb[0].mxu0
      %v941 = vadd.f32 0.0, %v940
      %v942 = vpop.f32.mrb[0].mxu0
      %943 = vdwg.mxu0
      %944 = vmatprep.subr.mxu0 0.0
      %945 = vmatpush1.msra.mxu0 %v866
      %946 = vmatprep.subr.mxu0 0.0
      %947 = vmatpush1.msra.mxu0 0.0
      %948 = vmatprep.subr.mxu0 0.0
      %949 = vmatpush1.msra.mxu0 0.0
      %950 = vmatprep.subr.mxu0 0.0
      %951 = vmatpush1.msra.mxu0 0.0
      %952 = vmatprep.subr.mxu0 0.0
      %953 = vmatpush1.msra.mxu0 0.0
      %954 = vmatprep.subr.mxu0 0.0
      %955 = vmatpush1.msra.mxu0 0.0
      %956 = vmatprep.subr.mxu0 0.0
      %957 = vmatpush1.msra.mxu0 0.0
      %958 = vmatprep.subr.mxu0 0.0
      %959 = vmatpush1.msra.mxu0 0.0
      %960 = vmatprep.subr.mxu0 0.0
      %961 = vmatpush1.msra.mxu0 0.0
      %962 = vmatprep.subr.mxu0 0.0
      %963 = vmatpush1.msra.mxu0 0.0
      %964 = vmatprep.subr.mxu0 0.0
      %965 = vmatpush1.msra.mxu0 0.0
      %966 = vmatprep.subr.mxu0 0.0
      %967 = vmatpush1.msra.mxu0 0.0
      %968 = vmatprep.subr.mxu0 0.0
      %969 = vmatpush1.msra.mxu0 0.0
      %970 = vmatprep.subr.mxu0 0.0
      %971 = vmatpush1.msra.mxu0 0.0
      %972 = vmatprep.subr.mxu0 0.0
      %973 = vmatpush1.msra.mxu0 0.0
      %974 = vmatprep.subr.mxu0 0.0
      %975 = vmatpush1.msra.mxu0 0.0
      %976 = vmatprep.subr.mxu0 0.0
      %977 = vmatpush1.msra.mxu0 0.0
      %978 = vmatprep.subr.mxu0 0.0
      %979 = vmatpush1.msra.mxu0 0.0
      %980 = vmatprep.subr.mxu0 0.0
      %981 = vmatpush1.msra.mxu0 0.0
      %982 = vmatprep.subr.mxu0 0.0
      %983 = vmatpush1.msra.mxu0 0.0
      %984 = vmatprep.subr.mxu0 0.0
      %985 = vmatpush1.msra.mxu0 0.0
      %986 = vmatprep.subr.mxu0 0.0
      %987 = vmatpush1.msra.mxu0 0.0
      %988 = vmatprep.subr.mxu0 0.0
      %989 = vmatpush1.msra.mxu0 0.0
      %990 = vmatprep.subr.mxu0 0.0
      %991 = vmatpush1.msra.mxu0 0.0
      %992 = vmatprep.subr.mxu0 0.0
      %993 = vmatpush1.msra.mxu0 0.0
      %994 = vmatprep.subr.mxu0 0.0
      %995 = vmatpush1.msra.mxu0 0.0
      %996 = vmatprep.subr.mxu0 0.0
      %997 = vmatpush1.msra.mxu0 0.0
      %998 = vmatprep.subr.mxu0 0.0
      %999 = vmatpush1.msra.mxu0 0.0
      %1000 = vmatprep.subr.mxu0 0.0
      %1001 = vmatpush1.msra.mxu0 0.0
      %1002 = vmatprep.subr.mxu0 0.0
      %1003 = vmatpush1.msra.mxu0 0.0
      %1004 = vmatprep.subr.mxu0 0.0
      %1005 = vmatpush1.msra.mxu0 0.0
      %1006 = vmatprep.subr.mxu0 0.0
      %1007 = vmatpush1.msra.mxu0 0.0
      %1008 = vmatprep.mubr.f32.mxu0 0.0
      %1009 = vmatmul.mubr.f32.gmra.mrb[0].mxu0 %v468
      %v1010 = vpop.f32.mrb[0].mxu0
      %v1011 = vadd.f32 %v936, %v1010
      %v1012 = vpop.f32.mrb[0].mxu0
      %1013 = vmatprep.mubr.f32.mxu0 0.0
      %1014 = vmatmul.mubr.f32.gmra.mrb[0].mxu0 %v471
      %v1015 = vpop.f32.mrb[0].mxu0
      %v1016 = vadd.f32 %v941, %v1015
      %v1017 = vpop.f32.mrb[0].mxu0
      %1018 = vdwg.mxu0
      %s1019 = scalar_lea.vmem %s362, 8
      %v1020 = vld [vmem:[%s1019] sm:$0xff]
      %s1021 = scalar_lea.vmem %s368, 8
      %v1022 = vld [vmem:[%s1021] sm:$0xff]
      %1023 = vmatprep.subr.mxu0 0.0
      %1024 = vmatpush1.msra.mxu0 %v1022
      %1025 = vmatprep.subr.mxu0 0.0
      %1026 = vmatpush1.msra.mxu0 0.0
      %1027 = vmatprep.subr.mxu0 0.0
      %1028 = vmatpush1.msra.mxu0 0.0
      %1029 = vmatprep.subr.mxu0 0.0
      %1030 = vmatpush1.msra.mxu0 0.0
      %1031 = vmatprep.subr.mxu0 0.0
      %1032 = vmatpush1.msra.mxu0 0.0
      %1033 = vmatprep.subr.mxu0 0.0
      %1034 = vmatpush1.msra.mxu0 0.0
      %1035 = vmatprep.subr.mxu0 0.0
      %1036 = vmatpush1.msra.mxu0 0.0
      %1037 = vmatprep.subr.mxu0 0.0
      %1038 = vmatpush1.msra.mxu0 0.0
      %1039 = vmatprep.subr.mxu0 0.0
      %1040 = vmatpush1.msra.mxu0 0.0
      %1041 = vmatprep.subr.mxu0 0.0
      %1042 = vmatpush1.msra.mxu0 0.0
      %1043 = vmatprep.subr.mxu0 0.0
      %1044 = vmatpush1.msra.mxu0 0.0
      %1045 = vmatprep.subr.mxu0 0.0
      %1046 = vmatpush1.msra.mxu0 0.0
      %1047 = vmatprep.subr.mxu0 0.0
      %1048 = vmatpush1.msra.mxu0 0.0
      %1049 = vmatprep.subr.mxu0 0.0
      %1050 = vmatpush1.msra.mxu0 0.0
      %1051 = vmatprep.subr.mxu0 0.0
      %1052 = vmatpush1.msra.mxu0 0.0
      %1053 = vmatprep.subr.mxu0 0.0
      %1054 = vmatpush1.msra.mxu0 0.0
      %1055 = vmatprep.subr.mxu0 0.0
      %1056 = vmatpush1.msra.mxu0 0.0
      %1057 = vmatprep.subr.mxu0 0.0
      %1058 = vmatpush1.msra.mxu0 0.0
      %1059 = vmatprep.subr.mxu0 0.0
      %1060 = vmatpush1.msra.mxu0 0.0
      %1061 = vmatprep.subr.mxu0 0.0
      %1062 = vmatpush1.msra.mxu0 0.0
      %1063 = vmatprep.subr.mxu0 0.0
      %1064 = vmatpush1.msra.mxu0 0.0
      %1065 = vmatprep.subr.mxu0 0.0
      %1066 = vmatpush1.msra.mxu0 0.0
      %1067 = vmatprep.subr.mxu0 0.0
      %1068 = vmatpush1.msra.mxu0 0.0
      %1069 = vmatprep.subr.mxu0 0.0
      %1070 = vmatpush1.msra.mxu0 0.0
      %1071 = vmatprep.subr.mxu0 0.0
      %1072 = vmatpush1.msra.mxu0 0.0
      %1073 = vmatprep.subr.mxu0 0.0
      %1074 = vmatpush1.msra.mxu0 0.0
      %1075 = vmatprep.subr.mxu0 0.0
      %1076 = vmatpush1.msra.mxu0 0.0
      %1077 = vmatprep.subr.mxu0 0.0
      %1078 = vmatpush1.msra.mxu0 0.0
      %1079 = vmatprep.subr.mxu0 0.0
      %1080 = vmatpush1.msra.mxu0 0.0
      %1081 = vmatprep.subr.mxu0 0.0
      %1082 = vmatpush1.msra.mxu0 0.0
      %1083 = vmatprep.subr.mxu0 0.0
      %1084 = vmatpush1.msra.mxu0 0.0
      %1085 = vmatprep.subr.mxu0 0.0
      %1086 = vmatpush1.msra.mxu0 0.0
      %1087 = vmatprep.mubr.f32.mxu0 0.0
      %1088 = vmatmul.mubr.f32.gmra.mrb[0].mxu0 %v387
      %v1089 = vpop.f32.mrb[0].mxu0
      %v1090 = vadd.f32 0.0, %v1089
      %v1091 = vpop.f32.mrb[0].mxu0
      %1092 = vmatprep.mubr.f32.mxu0 0.0
      %1093 = vmatmul.mubr.f32.gmra.mrb[0].mxu0 %v390
      %v1094 = vpop.f32.mrb[0].mxu0
      %v1095 = vadd.f32 0.0, %v1094
      %v1096 = vpop.f32.mrb[0].mxu0
      %1097 = vdwg.mxu0
      %1098 = vmatprep.subr.mxu0 0.0
      %1099 = vmatpush1.msra.mxu0 %v1020
      %1100 = vmatprep.subr.mxu0 0.0
      %1101 = vmatpush1.msra.mxu0 0.0
      %1102 = vmatprep.subr.mxu0 0.0
      %1103 = vmatpush1.msra.mxu0 0.0
      %1104 = vmatprep.subr.mxu0 0.0
      %1105 = vmatpush1.msra.mxu0 0.0
      %1106 = vmatprep.subr.mxu0 0.0
      %1107 = vmatpush1.msra.mxu0 0.0
      %1108 = vmatprep.subr.mxu0 0.0
      %1109 = vmatpush1.msra.mxu0 0.0
      %1110 = vmatprep.subr.mxu0 0.0
      %1111 = vmatpush1.msra.mxu0 0.0
      %1112 = vmatprep.subr.mxu0 0.0
      %1113 = vmatpush1.msra.mxu0 0.0
      %1114 = vmatprep.subr.mxu0 0.0
      %1115 = vmatpush1.msra.mxu0 0.0
      %1116 = vmatprep.subr.mxu0 0.0
      %1117 = vmatpush1.msra.mxu0 0.0
      %1118 = vmatprep.subr.mxu0 0.0
      %1119 = vmatpush1.msra.mxu0 0.0
      %1120 = vmatprep.subr.mxu0 0.0
      %1121 = vmatpush1.msra.mxu0 0.0
      %1122 = vmatprep.subr.mxu0 0.0
      %1123 = vmatpush1.msra.mxu0 0.0
      %1124 = vmatprep.subr.mxu0 0.0
      %1125 = vmatpush1.msra.mxu0 0.0
      %1126 = vmatprep.subr.mxu0 0.0
      %1127 = vmatpush1.msra.mxu0 0.0
      %1128 = vmatprep.subr.mxu0 0.0
      %1129 = vmatpush1.msra.mxu0 0.0
      %1130 = vmatprep.subr.mxu0 0.0
      %1131 = vmatpush1.msra.mxu0 0.0
      %1132 = vmatprep.subr.mxu0 0.0
      %1133 = vmatpush1.msra.mxu0 0.0
      %1134 = vmatprep.subr.mxu0 0.0
      %1135 = vmatpush1.msra.mxu0 0.0
      %1136 = vmatprep.subr.mxu0 0.0
      %1137 = vmatpush1.msra.mxu0 0.0
      %1138 = vmatprep.subr.mxu0 0.0
      %1139 = vmatpush1.msra.mxu0 0.0
      %1140 = vmatprep.subr.mxu0 0.0
      %1141 = vmatpush1.msra.mxu0 0.0
      %1142 = vmatprep.subr.mxu0 0.0
      %1143 = vmatpush1.msra.mxu0 0.0
      %1144 = vmatprep.subr.mxu0 0.0
      %1145 = vmatpush1.msra.mxu0 0.0
      %1146 = vmatprep.subr.mxu0 0.0
      %1147 = vmatpush1.msra.mxu0 0.0
      %1148 = vmatprep.subr.mxu0 0.0
      %1149 = vmatpush1.msra.mxu0 0.0
      %1150 = vmatprep.subr.mxu0 0.0
      %1151 = vmatpush1.msra.mxu0 0.0
      %1152 = vmatprep.subr.mxu0 0.0
      %1153 = vmatpush1.msra.mxu0 0.0
      %1154 = vmatprep.subr.mxu0 0.0
      %1155 = vmatpush1.msra.mxu0 0.0
      %1156 = vmatprep.subr.mxu0 0.0
      %1157 = vmatpush1.msra.mxu0 0.0
      %1158 = vmatprep.subr.mxu0 0.0
      %1159 = vmatpush1.msra.mxu0 0.0
      %1160 = vmatprep.subr.mxu0 0.0
      %1161 = vmatpush1.msra.mxu0 0.0
      %1162 = vmatprep.mubr.f32.mxu0 0.0
      %1163 = vmatmul.mubr.f32.gmra.mrb[0].mxu0 %v468
      %v1164 = vpop.f32.mrb[0].mxu0
      %v1165 = vadd.f32 %v1090, %v1164
      %v1166 = vpop.f32.mrb[0].mxu0
      %1167 = vmatprep.mubr.f32.mxu0 0.0
      %1168 = vmatmul.mubr.f32.gmra.mrb[0].mxu0 %v471
      %v1169 = vpop.f32.mrb[0].mxu0
      %v1170 = vadd.f32 %v1095, %v1169
      %v1171 = vpop.f32.mrb[0].mxu0
      %1172 = vdwg.mxu0
      %v1174 = vsel %vm385, %v1165, 0
      %v1177 = vsel %vm385, %v1170, 0
      %1179 = vmatprep.subr.mxu0 0.0
      %1180 = vmatpush1.msra.mxu0 %v382
      %1181 = vmatprep.subr.mxu0 0.0
      %1182 = vmatpush1.msra.mxu0 0.0
      %1183 = vmatprep.subr.mxu0 0.0
      %1184 = vmatpush1.msra.mxu0 0.0
      %1185 = vmatprep.subr.mxu0 0.0
      %1186 = vmatpush1.msra.mxu0 0.0
      %1187 = vmatprep.subr.mxu0 0.0
      %1188 = vmatpush1.msra.mxu0 0.0
      %1189 = vmatprep.subr.mxu0 0.0
      %1190 = vmatpush1.msra.mxu0 0.0
      %1191 = vmatprep.subr.mxu0 0.0
      %1192 = vmatpush1.msra.mxu0 0.0
      %1193 = vmatprep.subr.mxu0 0.0
      %1194 = vmatpush1.msra.mxu0 0.0
      %1195 = vmatprep.subr.mxu0 0.0
      %1196 = vmatpush1.msra.mxu0 0.0
      %1197 = vmatprep.subr.mxu0 0.0
      %1198 = vmatpush1.msra.mxu0 0.0
      %1199 = vmatprep.subr.mxu0 0.0
      %1200 = vmatpush1.msra.mxu0 0.0
      %1201 = vmatprep.subr.mxu0 0.0
      %1202 = vmatpush1.msra.mxu0 0.0
      %1203 = vmatprep.subr.mxu0 0.0
      %1204 = vmatpush1.msra.mxu0 0.0
      %1205 = vmatprep.subr.mxu0 0.0
      %1206 = vmatpush1.msra.mxu0 0.0
      %1207 = vmatprep.subr.mxu0 0.0
      %1208 = vmatpush1.msra.mxu0 0.0
      %1209 = vmatprep.subr.mxu0 0.0
      %1210 = vmatpush1.msra.mxu0 0.0
      %1211 = vmatprep.subr.mxu0 0.0
      %1212 = vmatpush1.msra.mxu0 0.0
      %1213 = vmatprep.subr.mxu0 0.0
      %1214 = vmatpush1.msra.mxu0 0.0
      %1215 = vmatprep.subr.mxu0 0.0
      %1216 = vmatpush1.msra.mxu0 0.0
      %1217 = vmatprep.subr.mxu0 0.0
      %1218 = vmatpush1.msra.mxu0 0.0
      %1219 = vmatprep.subr.mxu0 0.0
      %1220 = vmatpush1.msra.mxu0 0.0
      %1221 = vmatprep.subr.mxu0 0.0
      %1222 = vmatpush1.msra.mxu0 0.0
      %1223 = vmatprep.subr.mxu0 0.0
      %1224 = vmatpush1.msra.mxu0 0.0
      %1225 = vmatprep.subr.mxu0 0.0
      %1226 = vmatpush1.msra.mxu0 0.0
      %1227 = vmatprep.subr.mxu0 0.0
      %1228 = vmatpush1.msra.mxu0 0.0
      %1229 = vmatprep.subr.mxu0 0.0
      %1230 = vmatpush1.msra.mxu0 0.0
      %1231 = vmatprep.subr.mxu0 0.0
      %1232 = vmatpush1.msra.mxu0 0.0
      %1233 = vmatprep.subr.mxu0 0.0
      %1234 = vmatpush1.msra.mxu0 0.0
      %1235 = vmatprep.subr.mxu0 0.0
      %1236 = vmatpush1.msra.mxu0 0.0
      %1237 = vmatprep.subr.mxu0 0.0
      %1238 = vmatpush1.msra.mxu0 0.0
      %1239 = vmatprep.subr.mxu0 0.0
      %1240 = vmatpush1.msra.mxu0 0.0
      %1241 = vmatprep.subr.mxu0 0.0
      %1242 = vmatpush1.msra.mxu0 0.0
      %1243 = vmatprep.mubr.f32.mxu0 0.0
      %1244 = vmatmul.mubr.f32.gmra.mrb[0].mxu0 %v1174
      %v1245 = vpop.f32.mrb[0].mxu0
      %v1246 = vadd.f32 0.0, %v1245
      %v1247 = vpop.f32.mrb[0].mxu0
      %1248 = vmatprep.mubr.f32.mxu0 0.0
      %1249 = vmatmul.mubr.f32.gmra.mrb[0].mxu0 %v1177
      %v1250 = vpop.f32.mrb[0].mxu0
      %v1251 = vadd.f32 0.0, %v1250
      %v1252 = vpop.f32.mrb[0].mxu0
      %1253 = vdwg.mxu0
      %v1255 = vsel %vm385, %v1011, 0
      %v1258 = vsel %vm385, %v1016, 0
      %1260 = vmatprep.subr.mxu0 0.0
      %1261 = vmatpush1.msra.mxu0 %v381
      %1262 = vmatprep.subr.mxu0 0.0
      %1263 = vmatpush1.msra.mxu0 0.0
      %1264 = vmatprep.subr.mxu0 0.0
      %1265 = vmatpush1.msra.mxu0 0.0
      %1266 = vmatprep.subr.mxu0 0.0
      %1267 = vmatpush1.msra.mxu0 0.0
      %1268 = vmatprep.subr.mxu0 0.0
      %1269 = vmatpush1.msra.mxu0 0.0
      %1270 = vmatprep.subr.mxu0 0.0
      %1271 = vmatpush1.msra.mxu0 0.0
      %1272 = vmatprep.subr.mxu0 0.0
      %1273 = vmatpush1.msra.mxu0 0.0
      %1274 = vmatprep.subr.mxu0 0.0
      %1275 = vmatpush1.msra.mxu0 0.0
      %1276 = vmatprep.subr.mxu0 0.0
      %1277 = vmatpush1.msra.mxu0 0.0
      %1278 = vmatprep.subr.mxu0 0.0
      %1279 = vmatpush1.msra.mxu0 0.0
      %1280 = vmatprep.subr.mxu0 0.0
      %1281 = vmatpush1.msra.mxu0 0.0
      %1282 = vmatprep.subr.mxu0 0.0
      %1283 = vmatpush1.msra.mxu0 0.0
      %1284 = vmatprep.subr.mxu0 0.0
      %1285 = vmatpush1.msra.mxu0 0.0
      %1286 = vmatprep.subr.mxu0 0.0
      %1287 = vmatpush1.msra.mxu0 0.0
      %1288 = vmatprep.subr.mxu0 0.0
      %1289 = vmatpush1.msra.mxu0 0.0
      %1290 = vmatprep.subr.mxu0 0.0
      %1291 = vmatpush1.msra.mxu0 0.0
      %1292 = vmatprep.subr.mxu0 0.0
      %1293 = vmatpush1.msra.mxu0 0.0
      %1294 = vmatprep.subr.mxu0 0.0
      %1295 = vmatpush1.msra.mxu0 0.0
      %1296 = vmatprep.subr.mxu0 0.0
      %1297 = vmatpush1.msra.mxu0 0.0
      %1298 = vmatprep.subr.mxu0 0.0
      %1299 = vmatpush1.msra.mxu0 0.0
      %1300 = vmatprep.subr.mxu0 0.0
      %1301 = vmatpush1.msra.mxu0 0.0
      %1302 = vmatprep.subr.mxu0 0.0
      %1303 = vmatpush1.msra.mxu0 0.0
      %1304 = vmatprep.subr.mxu0 0.0
      %1305 = vmatpush1.msra.mxu0 0.0
      %1306 = vmatprep.subr.mxu0 0.0
      %1307 = vmatpush1.msra.mxu0 0.0
      %1308 = vmatprep.subr.mxu0 0.0
      %1309 = vmatpush1.msra.mxu0 0.0
      %1310 = vmatprep.subr.mxu0 0.0
      %1311 = vmatpush1.msra.mxu0 0.0
      %1312 = vmatprep.subr.mxu0 0.0
      %1313 = vmatpush1.msra.mxu0 0.0
      %1314 = vmatprep.subr.mxu0 0.0
      %1315 = vmatpush1.msra.mxu0 0.0
      %1316 = vmatprep.subr.mxu0 0.0
      %1317 = vmatpush1.msra.mxu0 0.0
      %1318 = vmatprep.subr.mxu0 0.0
      %1319 = vmatpush1.msra.mxu0 0.0
      %1320 = vmatprep.subr.mxu0 0.0
      %1321 = vmatpush1.msra.mxu0 0.0
      %1322 = vmatprep.subr.mxu0 0.0
      %1323 = vmatpush1.msra.mxu0 0.0
      %1324 = vmatprep.mubr.f32.mxu0 0.0
      %1325 = vmatmul.mubr.f32.gmra.mrb[0].mxu0 %v1255
      %v1326 = vpop.f32.mrb[0].mxu0
      %v1327 = vadd.f32 %v1246, %v1326
      %v1328 = vpop.f32.mrb[0].mxu0
      %1329 = vmatprep.mubr.f32.mxu0 0.0
      %1330 = vmatmul.mubr.f32.gmra.mrb[0].mxu0 %v1258
      %v1331 = vpop.f32.mrb[0].mxu0
      %v1332 = vadd.f32 %v1251, %v1331
      %v1333 = vpop.f32.mrb[0].mxu0
      %1334 = vdwg.mxu0
      %s1335 = scalar_lea.vmem %s375, 16
      %1336 = vst.msk [vmem:[%s1335] sm:$0xff] %vm862, %v1327
      %1337 = vst.msk [vmem:[%s1335 + $0x8] sm:$0xff] %vm862, %v1332
      %s1338 = scalar_lea.vmem %s350, 16
      %v1339 = vld [vmem:[%s1338] sm:$0xff]
      %s1340 = scalar_lea.vmem %s356, 16
      %v1341 = vld [vmem:[%s1340] sm:$0xff]
      %1342 = vmatprep.subr.mxu0 0.0
      %1343 = vmatpush1.msra.mxu0 %v1341
      %1344 = vmatprep.subr.mxu0 0.0
      %1345 = vmatpush1.msra.mxu0 0.0
      %1346 = vmatprep.subr.mxu0 0.0
      %1347 = vmatpush1.msra.mxu0 0.0
      %1348 = vmatprep.subr.mxu0 0.0
      %1349 = vmatpush1.msra.mxu0 0.0
      %1350 = vmatprep.subr.mxu0 0.0
      %1351 = vmatpush1.msra.mxu0 0.0
      %1352 = vmatprep.subr.mxu0 0.0
      %1353 = vmatpush1.msra.mxu0 0.0
      %1354 = vmatprep.subr.mxu0 0.0
      %1355 = vmatpush1.msra.mxu0 0.0
      %1356 = vmatprep.subr.mxu0 0.0
      %1357 = vmatpush1.msra.mxu0 0.0
      %1358 = vmatprep.subr.mxu0 0.0
      %1359 = vmatpush1.msra.mxu0 0.0
      %1360 = vmatprep.subr.mxu0 0.0
      %1361 = vmatpush1.msra.mxu0 0.0
      %1362 = vmatprep.subr.mxu0 0.0
      %1363 = vmatpush1.msra.mxu0 0.0
      %1364 = vmatprep.subr.mxu0 0.0
      %1365 = vmatpush1.msra.mxu0 0.0
      %1366 = vmatprep.subr.mxu0 0.0
      %1367 = vmatpush1.msra.mxu0 0.0
      %1368 = vmatprep.subr.mxu0 0.0
      %1369 = vmatpush1.msra.mxu0 0.0
      %1370 = vmatprep.subr.mxu0 0.0
      %1371 = vmatpush1.msra.mxu0 0.0
      %1372 = vmatprep.subr.mxu0 0.0
      %1373 = vmatpush1.msra.mxu0 0.0
      %1374 = vmatprep.subr.mxu0 0.0
      %1375 = vmatpush1.msra.mxu0 0.0
      %1376 = vmatprep.subr.mxu0 0.0
      %1377 = vmatpush1.msra.mxu0 0.0
      %1378 = vmatprep.subr.mxu0 0.0
      %1379 = vmatpush1.msra.mxu0 0.0
      %1380 = vmatprep.subr.mxu0 0.0
      %1381 = vmatpush1.msra.mxu0 0.0
      %1382 = vmatprep.subr.mxu0 0.0
      %1383 = vmatpush1.msra.mxu0 0.0
      %1384 = vmatprep.subr.mxu0 0.0
      %1385 = vmatpush1.msra.mxu0 0.0
      %1386 = vmatprep.subr.mxu0 0.0
      %1387 = vmatpush1.msra.mxu0 0.0
      %1388 = vmatprep.subr.mxu0 0.0
      %1389 = vmatpush1.msra.mxu0 0.0
      %1390 = vmatprep.subr.mxu0 0.0
      %1391 = vmatpush1.msra.mxu0 0.0
      %1392 = vmatprep.subr.mxu0 0.0
      %1393 = vmatpush1.msra.mxu0 0.0
      %1394 = vmatprep.subr.mxu0 0.0
      %1395 = vmatpush1.msra.mxu0 0.0
      %1396 = vmatprep.subr.mxu0 0.0
      %1397 = vmatpush1.msra.mxu0 0.0
      %1398 = vmatprep.subr.mxu0 0.0
      %1399 = vmatpush1.msra.mxu0 0.0
      %1400 = vmatprep.subr.mxu0 0.0
      %1401 = vmatpush1.msra.mxu0 0.0
      %1402 = vmatprep.subr.mxu0 0.0
      %1403 = vmatpush1.msra.mxu0 0.0
      %1404 = vmatprep.subr.mxu0 0.0
      %1405 = vmatpush1.msra.mxu0 0.0
      %1406 = vmatprep.mubr.f32.mxu0 0.0
      %1407 = vmatmul.mubr.f32.gmra.mrb[0].mxu0 %v387
      %v1408 = vpop.f32.mrb[0].mxu0
      %v1409 = vadd.f32 0.0, %v1408
      %v1410 = vpop.f32.mrb[0].mxu0
      %1411 = vmatprep.mubr.f32.mxu0 0.0
      %1412 = vmatmul.mubr.f32.gmra.mrb[0].mxu0 %v390
      %v1413 = vpop.f32.mrb[0].mxu0
      %v1414 = vadd.f32 0.0, %v1413
      %v1415 = vpop.f32.mrb[0].mxu0
      %1416 = vdwg.mxu0
      %1417 = vmatprep.subr.mxu0 0.0
      %1418 = vmatpush1.msra.mxu0 %v1339
      %1419 = vmatprep.subr.mxu0 0.0
      %1420 = vmatpush1.msra.mxu0 0.0
      %1421 = vmatprep.subr.mxu0 0.0
      %1422 = vmatpush1.msra.mxu0 0.0
      %1423 = vmatprep.subr.mxu0 0.0
      %1424 = vmatpush1.msra.mxu0 0.0
      %1425 = vmatprep.subr.mxu0 0.0
      %1426 = vmatpush1.msra.mxu0 0.0
      %1427 = vmatprep.subr.mxu0 0.0
      %1428 = vmatpush1.msra.mxu0 0.0
      %1429 = vmatprep.subr.mxu0 0.0
      %1430 = vmatpush1.msra.mxu0 0.0
      %1431 = vmatprep.subr.mxu0 0.0
      %1432 = vmatpush1.msra.mxu0 0.0
      %1433 = vmatprep.subr.mxu0 0.0
      %1434 = vmatpush1.msra.mxu0 0.0
      %1435 = vmatprep.subr.mxu0 0.0
      %1436 = vmatpush1.msra.mxu0 0.0
      %1437 = vmatprep.subr.mxu0 0.0
      %1438 = vmatpush1.msra.mxu0 0.0
      %1439 = vmatprep.subr.mxu0 0.0
      %1440 = vmatpush1.msra.mxu0 0.0
      %1441 = vmatprep.subr.mxu0 0.0
      %1442 = vmatpush1.msra.mxu0 0.0
      %1443 = vmatprep.subr.mxu0 0.0
      %1444 = vmatpush1.msra.mxu0 0.0
      %1445 = vmatprep.subr.mxu0 0.0
      %1446 = vmatpush1.msra.mxu0 0.0
      %1447 = vmatprep.subr.mxu0 0.0
      %1448 = vmatpush1.msra.mxu0 0.0
      %1449 = vmatprep.subr.mxu0 0.0
      %1450 = vmatpush1.msra.mxu0 0.0
      %1451 = vmatprep.subr.mxu0 0.0
      %1452 = vmatpush1.msra.mxu0 0.0
      %1453 = vmatprep.subr.mxu0 0.0
      %1454 = vmatpush1.msra.mxu0 0.0
      %1455 = vmatprep.subr.mxu0 0.0
      %1456 = vmatpush1.msra.mxu0 0.0
      %1457 = vmatprep.subr.mxu0 0.0
      %1458 = vmatpush1.msra.mxu0 0.0
      %1459 = vmatprep.subr.mxu0 0.0
      %1460 = vmatpush1.msra.mxu0 0.0
      %1461 = vmatprep.subr.mxu0 0.0
      %1462 = vmatpush1.msra.mxu0 0.0
      %1463 = vmatprep.subr.mxu0 0.0
      %1464 = vmatpush1.msra.mxu0 0.0
      %1465 = vmatprep.subr.mxu0 0.0
      %1466 = vmatpush1.msra.mxu0 0.0
      %1467 = vmatprep.subr.mxu0 0.0
      %1468 = vmatpush1.msra.mxu0 0.0
      %1469 = vmatprep.subr.mxu0 0.0
      %1470 = vmatpush1.msra.mxu0 0.0
      %1471 = vmatprep.subr.mxu0 0.0
      %1472 = vmatpush1.msra.mxu0 0.0
      %1473 = vmatprep.subr.mxu0 0.0
      %1474 = vmatpush1.msra.mxu0 0.0
      %1475 = vmatprep.subr.mxu0 0.0
      %1476 = vmatpush1.msra.mxu0 0.0
      %1477 = vmatprep.subr.mxu0 0.0
      %1478 = vmatpush1.msra.mxu0 0.0
      %1479 = vmatprep.subr.mxu0 0.0
      %1480 = vmatpush1.msra.mxu0 0.0
      %1481 = vmatprep.mubr.f32.mxu0 0.0
      %1482 = vmatmul.mubr.f32.gmra.mrb[0].mxu0 %v468
      %v1483 = vpop.f32.mrb[0].mxu0
      %v1484 = vadd.f32 %v1409, %v1483
      %v1485 = vpop.f32.mrb[0].mxu0
      %1486 = vmatprep.mubr.f32.mxu0 0.0
      %1487 = vmatmul.mubr.f32.gmra.mrb[0].mxu0 %v471
      %v1488 = vpop.f32.mrb[0].mxu0
      %v1489 = vadd.f32 %v1414, %v1488
      %v1490 = vpop.f32.mrb[0].mxu0
      %1491 = vdwg.mxu0
      %s1492 = scalar_lea.vmem %s362, 16
      %v1493 = vld [vmem:[%s1492] sm:$0xff]
      %s1494 = scalar_lea.vmem %s368, 16
      %v1495 = vld [vmem:[%s1494] sm:$0xff]
      %1496 = vmatprep.subr.mxu0 0.0
      %1497 = vmatpush1.msra.mxu0 %v1495
      %1498 = vmatprep.subr.mxu0 0.0
      %1499 = vmatpush1.msra.mxu0 0.0
      %1500 = vmatprep.subr.mxu0 0.0
      %1501 = vmatpush1.msra.mxu0 0.0
      %1502 = vmatprep.subr.mxu0 0.0
      %1503 = vmatpush1.msra.mxu0 0.0
      %1504 = vmatprep.subr.mxu0 0.0
      %1505 = vmatpush1.msra.mxu0 0.0
      %1506 = vmatprep.subr.mxu0 0.0
      %1507 = vmatpush1.msra.mxu0 0.0
      %1508 = vmatprep.subr.mxu0 0.0
      %1509 = vmatpush1.msra.mxu0 0.0
      %1510 = vmatprep.subr.mxu0 0.0
      %1511 = vmatpush1.msra.mxu0 0.0
      %1512 = vmatprep.subr.mxu0 0.0
      %1513 = vmatpush1.msra.mxu0 0.0
      %1514 = vmatprep.subr.mxu0 0.0
      %1515 = vmatpush1.msra.mxu0 0.0
      %1516 = vmatprep.subr.mxu0 0.0
      %1517 = vmatpush1.msra.mxu0 0.0
      %1518 = vmatprep.subr.mxu0 0.0
      %1519 = vmatpush1.msra.mxu0 0.0
      %1520 = vmatprep.subr.mxu0 0.0
      %1521 = vmatpush1.msra.mxu0 0.0
      %1522 = vmatprep.subr.mxu0 0.0
      %1523 = vmatpush1.msra.mxu0 0.0
      %1524 = vmatprep.subr.mxu0 0.0
      %1525 = vmatpush1.msra.mxu0 0.0
      %1526 = vmatprep.subr.mxu0 0.0
      %1527 = vmatpush1.msra.mxu0 0.0
      %1528 = vmatprep.subr.mxu0 0.0
      %1529 = vmatpush1.msra.mxu0 0.0
      %1530 = vmatprep.subr.mxu0 0.0
      %1531 = vmatpush1.msra.mxu0 0.0
      %1532 = vmatprep.subr.mxu0 0.0
      %1533 = vmatpush1.msra.mxu0 0.0
      %1534 = vmatprep.subr.mxu0 0.0
      %1535 = vmatpush1.msra.mxu0 0.0
      %1536 = vmatprep.subr.mxu0 0.0
      %1537 = vmatpush1.msra.mxu0 0.0
      %1538 = vmatprep.subr.mxu0 0.0
      %1539 = vmatpush1.msra.mxu0 0.0
      %1540 = vmatprep.subr.mxu0 0.0
      %1541 = vmatpush1.msra.mxu0 0.0
      %1542 = vmatprep.subr.mxu0 0.0
      %1543 = vmatpush1.msra.mxu0 0.0
      %1544 = vmatprep.subr.mxu0 0.0
      %1545 = vmatpush1.msra.mxu0 0.0
      %1546 = vmatprep.subr.mxu0 0.0
      %1547 = vmatpush1.msra.mxu0 0.0
      %1548 = vmatprep.subr.mxu0 0.0
      %1549 = vmatpush1.msra.mxu0 0.0
      %1550 = vmatprep.subr.mxu0 0.0
      %1551 = vmatpush1.msra.mxu0 0.0
      %1552 = vmatprep.subr.mxu0 0.0
      %1553 = vmatpush1.msra.mxu0 0.0
      %1554 = vmatprep.subr.mxu0 0.0
      %1555 = vmatpush1.msra.mxu0 0.0
      %1556 = vmatprep.subr.mxu0 0.0
      %1557 = vmatpush1.msra.mxu0 0.0
      %1558 = vmatprep.subr.mxu0 0.0
      %1559 = vmatpush1.msra.mxu0 0.0
      %1560 = vmatprep.mubr.f32.mxu0 0.0
      %1561 = vmatmul.mubr.f32.gmra.mrb[0].mxu0 %v387
      %v1562 = vpop.f32.mrb[0].mxu0
      %v1563 = vadd.f32 0.0, %v1562
      %v1564 = vpop.f32.mrb[0].mxu0
      %1565 = vmatprep.mubr.f32.mxu0 0.0
      %1566 = vmatmul.mubr.f32.gmra.mrb[0].mxu0 %v390
      %v1567 = vpop.f32.mrb[0].mxu0
      %v1568 = vadd.f32 0.0, %v1567
      %v1569 = vpop.f32.mrb[0].mxu0
      %1570 = vdwg.mxu0
      %1571 = vmatprep.subr.mxu0 0.0
      %1572 = vmatpush1.msra.mxu0 %v1493
      %1573 = vmatprep.subr.mxu0 0.0
      %1574 = vmatpush1.msra.mxu0 0.0
      %1575 = vmatprep.subr.mxu0 0.0
      %1576 = vmatpush1.msra.mxu0 0.0
      %1577 = vmatprep.subr.mxu0 0.0
      %1578 = vmatpush1.msra.mxu0 0.0
      %1579 = vmatprep.subr.mxu0 0.0
      %1580 = vmatpush1.msra.mxu0 0.0
      %1581 = vmatprep.subr.mxu0 0.0
      %1582 = vmatpush1.msra.mxu0 0.0
      %1583 = vmatprep.subr.mxu0 0.0
      %1584 = vmatpush1.msra.mxu0 0.0
      %1585 = vmatprep.subr.mxu0 0.0
      %1586 = vmatpush1.msra.mxu0 0.0
      %1587 = vmatprep.subr.mxu0 0.0
      %1588 = vmatpush1.msra.mxu0 0.0
      %1589 = vmatprep.subr.mxu0 0.0
      %1590 = vmatpush1.msra.mxu0 0.0
      %1591 = vmatprep.subr.mxu0 0.0
      %1592 = vmatpush1.msra.mxu0 0.0
      %1593 = vmatprep.subr.mxu0 0.0
      %1594 = vmatpush1.msra.mxu0 0.0
      %1595 = vmatprep.subr.mxu0 0.0
      %1596 = vmatpush1.msra.mxu0 0.0
      %1597 = vmatprep.subr.mxu0 0.0
      %1598 = vmatpush1.msra.mxu0 0.0
      %1599 = vmatprep.subr.mxu0 0.0
      %1600 = vmatpush1.msra.mxu0 0.0
      %1601 = vmatprep.subr.mxu0 0.0
      %1602 = vmatpush1.msra.mxu0 0.0
      %1603 = vmatprep.subr.mxu0 0.0
      %1604 = vmatpush1.msra.mxu0 0.0
      %1605 = vmatprep.subr.mxu0 0.0
      %1606 = vmatpush1.msra.mxu0 0.0
      %1607 = vmatprep.subr.mxu0 0.0
      %1608 = vmatpush1.msra.mxu0 0.0
      %1609 = vmatprep.subr.mxu0 0.0
      %1610 = vmatpush1.msra.mxu0 0.0
      %1611 = vmatprep.subr.mxu0 0.0
      %1612 = vmatpush1.msra.mxu0 0.0
      %1613 = vmatprep.subr.mxu0 0.0
      %1614 = vmatpush1.msra.mxu0 0.0
      %1615 = vmatprep.subr.mxu0 0.0
      %1616 = vmatpush1.msra.mxu0 0.0
      %1617 = vmatprep.subr.mxu0 0.0
      %1618 = vmatpush1.msra.mxu0 0.0
      %1619 = vmatprep.subr.mxu0 0.0
      %1620 = vmatpush1.msra.mxu0 0.0
      %1621 = vmatprep.subr.mxu0 0.0
      %1622 = vmatpush1.msra.mxu0 0.0
      %1623 = vmatprep.subr.mxu0 0.0
      %1624 = vmatpush1.msra.mxu0 0.0
      %1625 = vmatprep.subr.mxu0 0.0
      %1626 = vmatpush1.msra.mxu0 0.0
      %1627 = vmatprep.subr.mxu0 0.0
      %1628 = vmatpush1.msra.mxu0 0.0
      %1629 = vmatprep.subr.mxu0 0.0
      %1630 = vmatpush1.msra.mxu0 0.0
      %1631 = vmatprep.subr.mxu0 0.0
      %1632 = vmatpush1.msra.mxu0 0.0
      %1633 = vmatprep.subr.mxu0 0.0
      %1634 = vmatpush1.msra.mxu0 0.0
      %1635 = vmatprep.mubr.f32.mxu0 0.0
      %1636 = vmatmul.mubr.f32.gmra.mrb[0].mxu0 %v468
      %v1637 = vpop.f32.mrb[0].mxu0
      %v1638 = vadd.f32 %v1563, %v1637
      %v1639 = vpop.f32.mrb[0].mxu0
      %1640 = vmatprep.mubr.f32.mxu0 0.0
      %1641 = vmatmul.mubr.f32.gmra.mrb[0].mxu0 %v471
      %v1642 = vpop.f32.mrb[0].mxu0
      %v1643 = vadd.f32 %v1568, %v1642
      %v1644 = vpop.f32.mrb[0].mxu0
      %1645 = vdwg.mxu0
      %v1647 = vsel %vm385, %v1638, 0
      %v1650 = vsel %vm385, %v1643, 0
      %1652 = vmatprep.subr.mxu0 0.0
      %1653 = vmatpush1.msra.mxu0 %v382
      %1654 = vmatprep.subr.mxu0 0.0
      %1655 = vmatpush1.msra.mxu0 0.0
      %1656 = vmatprep.subr.mxu0 0.0
      %1657 = vmatpush1.msra.mxu0 0.0
      %1658 = vmatprep.subr.mxu0 0.0
      %1659 = vmatpush1.msra.mxu0 0.0
      %1660 = vmatprep.subr.mxu0 0.0
      %1661 = vmatpush1.msra.mxu0 0.0
      %1662 = vmatprep.subr.mxu0 0.0
      %1663 = vmatpush1.msra.mxu0 0.0
      %1664 = vmatprep.subr.mxu0 0.0
      %1665 = vmatpush1.msra.mxu0 0.0
      %1666 = vmatprep.subr.mxu0 0.0
      %1667 = vmatpush1.msra.mxu0 0.0
      %1668 = vmatprep.subr.mxu0 0.0
      %1669 = vmatpush1.msra.mxu0 0.0
      %1670 = vmatprep.subr.mxu0 0.0
      %1671 = vmatpush1.msra.mxu0 0.0
      %1672 = vmatprep.subr.mxu0 0.0
      %1673 = vmatpush1.msra.mxu0 0.0
      %1674 = vmatprep.subr.mxu0 0.0
      %1675 = vmatpush1.msra.mxu0 0.0
      %1676 = vmatprep.subr.mxu0 0.0
      %1677 = vmatpush1.msra.mxu0 0.0
      %1678 = vmatprep.subr.mxu0 0.0
      %1679 = vmatpush1.msra.mxu0 0.0
      %1680 = vmatprep.subr.mxu0 0.0
      %1681 = vmatpush1.msra.mxu0 0.0
      %1682 = vmatprep.subr.mxu0 0.0
      %1683 = vmatpush1.msra.mxu0 0.0
      %1684 = vmatprep.subr.mxu0 0.0
      %1685 = vmatpush1.msra.mxu0 0.0
      %1686 = vmatprep.subr.mxu0 0.0
      %1687 = vmatpush1.msra.mxu0 0.0
      %1688 = vmatprep.subr.mxu0 0.0
      %1689 = vmatpush1.msra.mxu0 0.0
      %1690 = vmatprep.subr.mxu0 0.0
      %1691 = vmatpush1.msra.mxu0 0.0
      %1692 = vmatprep.subr.mxu0 0.0
      %1693 = vmatpush1.msra.mxu0 0.0
      %1694 = vmatprep.subr.mxu0 0.0
      %1695 = vmatpush1.msra.mxu0 0.0
      %1696 = vmatprep.subr.mxu0 0.0
      %1697 = vmatpush1.msra.mxu0 0.0
      %1698 = vmatprep.subr.mxu0 0.0
      %1699 = vmatpush1.msra.mxu0 0.0
      %1700 = vmatprep.subr.mxu0 0.0
      %1701 = vmatpush1.msra.mxu0 0.0
      %1702 = vmatprep.subr.mxu0 0.0
      %1703 = vmatpush1.msra.mxu0 0.0
      %1704 = vmatprep.subr.mxu0 0.0
      %1705 = vmatpush1.msra.mxu0 0.0
      %1706 = vmatprep.subr.mxu0 0.0
      %1707 = vmatpush1.msra.mxu0 0.0
      %1708 = vmatprep.subr.mxu0 0.0
      %1709 = vmatpush1.msra.mxu0 0.0
      %1710 = vmatprep.subr.mxu0 0.0
      %1711 = vmatpush1.msra.mxu0 0.0
      %1712 = vmatprep.subr.mxu0 0.0
      %1713 = vmatpush1.msra.mxu0 0.0
      %1714 = vmatprep.subr.mxu0 0.0
      %1715 = vmatpush1.msra.mxu0 0.0
      %1716 = vmatprep.mubr.f32.mxu0 0.0
      %1717 = vmatmul.mubr.f32.gmra.mrb[0].mxu0 %v1647
      %v1718 = vpop.f32.mrb[0].mxu0
      %v1719 = vadd.f32 0.0, %v1718
      %v1720 = vpop.f32.mrb[0].mxu0
      %1721 = vmatprep.mubr.f32.mxu0 0.0
      %1722 = vmatmul.mubr.f32.gmra.mrb[0].mxu0 %v1650
      %v1723 = vpop.f32.mrb[0].mxu0
      %v1724 = vadd.f32 0.0, %v1723
      %v1725 = vpop.f32.mrb[0].mxu0
      %1726 = vdwg.mxu0
      %v1728 = vsel %vm385, %v1484, 0
      %v1731 = vsel %vm385, %v1489, 0
      %1733 = vmatprep.subr.mxu0 0.0
      %1734 = vmatpush1.msra.mxu0 %v381
      %1735 = vmatprep.subr.mxu0 0.0
      %1736 = vmatpush1.msra.mxu0 0.0
      %1737 = vmatprep.subr.mxu0 0.0
      %1738 = vmatpush1.msra.mxu0 0.0
      %1739 = vmatprep.subr.mxu0 0.0
      %1740 = vmatpush1.msra.mxu0 0.0
      %1741 = vmatprep.subr.mxu0 0.0
      %1742 = vmatpush1.msra.mxu0 0.0
      %1743 = vmatprep.subr.mxu0 0.0
      %1744 = vmatpush1.msra.mxu0 0.0
      %1745 = vmatprep.subr.mxu0 0.0
      %1746 = vmatpush1.msra.mxu0 0.0
      %1747 = vmatprep.subr.mxu0 0.0
      %1748 = vmatpush1.msra.mxu0 0.0
      %1749 = vmatprep.subr.mxu0 0.0
      %1750 = vmatpush1.msra.mxu0 0.0
      %1751 = vmatprep.subr.mxu0 0.0
      %1752 = vmatpush1.msra.mxu0 0.0
      %1753 = vmatprep.subr.mxu0 0.0
      %1754 = vmatpush1.msra.mxu0 0.0
      %1755 = vmatprep.subr.mxu0 0.0
      %1756 = vmatpush1.msra.mxu0 0.0
      %1757 = vmatprep.subr.mxu0 0.0
      %1758 = vmatpush1.msra.mxu0 0.0
      %1759 = vmatprep.subr.mxu0 0.0
      %1760 = vmatpush1.msra.mxu0 0.0
      %1761 = vmatprep.subr.mxu0 0.0
      %1762 = vmatpush1.msra.mxu0 0.0
      %1763 = vmatprep.subr.mxu0 0.0
      %1764 = vmatpush1.msra.mxu0 0.0
      %1765 = vmatprep.subr.mxu0 0.0
      %1766 = vmatpush1.msra.mxu0 0.0
      %1767 = vmatprep.subr.mxu0 0.0
      %1768 = vmatpush1.msra.mxu0 0.0
      %1769 = vmatprep.subr.mxu0 0.0
      %1770 = vmatpush1.msra.mxu0 0.0
      %1771 = vmatprep.subr.mxu0 0.0
      %1772 = vmatpush1.msra.mxu0 0.0
      %1773 = vmatprep.subr.mxu0 0.0
      %1774 = vmatpush1.msra.mxu0 0.0
      %1775 = vmatprep.subr.mxu0 0.0
      %1776 = vmatpush1.msra.mxu0 0.0
      %1777 = vmatprep.subr.mxu0 0.0
      %1778 = vmatpush1.msra.mxu0 0.0
      %1779 = vmatprep.subr.mxu0 0.0
      %1780 = vmatpush1.msra.mxu0 0.0
      %1781 = vmatprep.subr.mxu0 0.0
      %1782 = vmatpush1.msra.mxu0 0.0
      %1783 = vmatprep.subr.mxu0 0.0
      %1784 = vmatpush1.msra.mxu0 0.0
      %1785 = vmatprep.subr.mxu0 0.0
      %1786 = vmatpush1.msra.mxu0 0.0
      %1787 = vmatprep.subr.mxu0 0.0
      %1788 = vmatpush1.msra.mxu0 0.0
      %1789 = vmatprep.subr.mxu0 0.0
      %1790 = vmatpush1.msra.mxu0 0.0
      %1791 = vmatprep.subr.mxu0 0.0
      %1792 = vmatpush1.msra.mxu0 0.0
      %1793 = vmatprep.subr.mxu0 0.0
      %1794 = vmatpush1.msra.mxu0 0.0
      %1795 = vmatprep.subr.mxu0 0.0
      %1796 = vmatpush1.msra.mxu0 0.0
      %1797 = vmatprep.mubr.f32.mxu0 0.0
      %1798 = vmatmul.mubr.f32.gmra.mrb[0].mxu0 %v1728
      %v1799 = vpop.f32.mrb[0].mxu0
      %v1800 = vadd.f32 %v1719, %v1799
      %v1801 = vpop.f32.mrb[0].mxu0
      %1802 = vmatprep.mubr.f32.mxu0 0.0
      %1803 = vmatmul.mubr.f32.gmra.mrb[0].mxu0 %v1731
      %v1804 = vpop.f32.mrb[0].mxu0
      %v1805 = vadd.f32 %v1724, %v1804
      %v1806 = vpop.f32.mrb[0].mxu0
      %1807 = vdwg.mxu0
      %s1808 = scalar_lea.vmem %s375, 32
      %1809 = vst.msk [vmem:[%s1808] sm:$0xff] %vm862, %v1800
      %1810 = vst.msk [vmem:[%s1808 + $0x8] sm:$0xff] %vm862, %v1805
      %s1811 = scalar_lea.vmem %s350, 24
      %v1812 = vld [vmem:[%s1811] sm:$0xff]
      %s1813 = scalar_lea.vmem %s356, 24
      %v1814 = vld [vmem:[%s1813] sm:$0xff]
      %1815 = vmatprep.subr.mxu0 0.0
      %1816 = vmatpush1.msra.mxu0 %v1814
      %1817 = vmatprep.subr.mxu0 0.0
      %1818 = vmatpush1.msra.mxu0 0.0
      %1819 = vmatprep.subr.mxu0 0.0
      %1820 = vmatpush1.msra.mxu0 0.0
      %1821 = vmatprep.subr.mxu0 0.0
      %1822 = vmatpush1.msra.mxu0 0.0
      %1823 = vmatprep.subr.mxu0 0.0
      %1824 = vmatpush1.msra.mxu0 0.0
      %1825 = vmatprep.subr.mxu0 0.0
      %1826 = vmatpush1.msra.mxu0 0.0
      %1827 = vmatprep.subr.mxu0 0.0
      %1828 = vmatpush1.msra.mxu0 0.0
      %1829 = vmatprep.subr.mxu0 0.0
      %1830 = vmatpush1.msra.mxu0 0.0
      %1831 = vmatprep.subr.mxu0 0.0
      %1832 = vmatpush1.msra.mxu0 0.0
      %1833 = vmatprep.subr.mxu0 0.0
      %1834 = vmatpush1.msra.mxu0 0.0
      %1835 = vmatprep.subr.mxu0 0.0
      %1836 = vmatpush1.msra.mxu0 0.0
      %1837 = vmatprep.subr.mxu0 0.0
      %1838 = vmatpush1.msra.mxu0 0.0
      %1839 = vmatprep.subr.mxu0 0.0
      %1840 = vmatpush1.msra.mxu0 0.0
      %1841 = vmatprep.subr.mxu0 0.0
      %1842 = vmatpush1.msra.mxu0 0.0
      %1843 = vmatprep.subr.mxu0 0.0
      %1844 = vmatpush1.msra.mxu0 0.0
      %1845 = vmatprep.subr.mxu0 0.0
      %1846 = vmatpush1.msra.mxu0 0.0
      %1847 = vmatprep.subr.mxu0 0.0
      %1848 = vmatpush1.msra.mxu0 0.0
      %1849 = vmatprep.subr.mxu0 0.0
      %1850 = vmatpush1.msra.mxu0 0.0
      %1851 = vmatprep.subr.mxu0 0.0
      %1852 = vmatpush1.msra.mxu0 0.0
      %1853 = vmatprep.subr.mxu0 0.0
      %1854 = vmatpush1.msra.mxu0 0.0
      %1855 = vmatprep.subr.mxu0 0.0
      %1856 = vmatpush1.msra.mxu0 0.0
      %1857 = vmatprep.subr.mxu0 0.0
      %1858 = vmatpush1.msra.mxu0 0.0
      %1859 = vmatprep.subr.mxu0 0.0
      %1860 = vmatpush1.msra.mxu0 0.0
      %1861 = vmatprep.subr.mxu0 0.0
      %1862 = vmatpush1.msra.mxu0 0.0
      %1863 = vmatprep.subr.mxu0 0.0
      %1864 = vmatpush1.msra.mxu0 0.0
      %1865 = vmatprep.subr.mxu0 0.0
      %1866 = vmatpush1.msra.mxu0 0.0
      %1867 = vmatprep.subr.mxu0 0.0
      %1868 = vmatpush1.msra.mxu0 0.0
      %1869 = vmatprep.subr.mxu0 0.0
      %1870 = vmatpush1.msra.mxu0 0.0
      %1871 = vmatprep.subr.mxu0 0.0
      %1872 = vmatpush1.msra.mxu0 0.0
      %1873 = vmatprep.subr.mxu0 0.0
      %1874 = vmatpush1.msra.mxu0 0.0
      %1875 = vmatprep.subr.mxu0 0.0
      %1876 = vmatpush1.msra.mxu0 0.0
      %1877 = vmatprep.subr.mxu0 0.0
      %1878 = vmatpush1.msra.mxu0 0.0
      %1879 = vmatprep.mubr.f32.mxu0 0.0
      %1880 = vmatmul.mubr.f32.gmra.mrb[0].mxu0 %v387
      %v1881 = vpop.f32.mrb[0].mxu0
      %v1882 = vadd.f32 0.0, %v1881
      %v1883 = vpop.f32.mrb[0].mxu0
      %1884 = vmatprep.mubr.f32.mxu0 0.0
      %1885 = vmatmul.mubr.f32.gmra.mrb[0].mxu0 %v390
      %v1886 = vpop.f32.mrb[0].mxu0
      %v1887 = vadd.f32 0.0, %v1886
      %v1888 = vpop.f32.mrb[0].mxu0
      %1889 = vdwg.mxu0
      %1890 = vmatprep.subr.mxu0 0.0
      %1891 = vmatpush1.msra.mxu0 %v1812
      %1892 = vmatprep.subr.mxu0 0.0
      %1893 = vmatpush1.msra.mxu0 0.0
      %1894 = vmatprep.subr.mxu0 0.0
      %1895 = vmatpush1.msra.mxu0 0.0
      %1896 = vmatprep.subr.mxu0 0.0
      %1897 = vmatpush1.msra.mxu0 0.0
      %1898 = vmatprep.subr.mxu0 0.0
      %1899 = vmatpush1.msra.mxu0 0.0
      %1900 = vmatprep.subr.mxu0 0.0
      %1901 = vmatpush1.msra.mxu0 0.0
      %1902 = vmatprep.subr.mxu0 0.0
      %1903 = vmatpush1.msra.mxu0 0.0
      %1904 = vmatprep.subr.mxu0 0.0
      %1905 = vmatpush1.msra.mxu0 0.0
      %1906 = vmatprep.subr.mxu0 0.0
      %1907 = vmatpush1.msra.mxu0 0.0
      %1908 = vmatprep.subr.mxu0 0.0
      %1909 = vmatpush1.msra.mxu0 0.0
      %1910 = vmatprep.subr.mxu0 0.0
      %1911 = vmatpush1.msra.mxu0 0.0
      %1912 = vmatprep.subr.mxu0 0.0
      %1913 = vmatpush1.msra.mxu0 0.0
      %1914 = vmatprep.subr.mxu0 0.0
      %1915 = vmatpush1.msra.mxu0 0.0
      %1916 = vmatprep.subr.mxu0 0.0
      %1917 = vmatpush1.msra.mxu0 0.0
      %1918 = vmatprep.subr.mxu0 0.0
      %1919 = vmatpush1.msra.mxu0 0.0
      %1920 = vmatprep.subr.mxu0 0.0
      %1921 = vmatpush1.msra.mxu0 0.0
      %1922 = vmatprep.subr.mxu0 0.0
      %1923 = vmatpush1.msra.mxu0 0.0
      %1924 = vmatprep.subr.mxu0 0.0
      %1925 = vmatpush1.msra.mxu0 0.0
      %1926 = vmatprep.subr.mxu0 0.0
      %1927 = vmatpush1.msra.mxu0 0.0
      %1928 = vmatprep.subr.mxu0 0.0
      %1929 = vmatpush1.msra.mxu0 0.0
      %1930 = vmatprep.subr.mxu0 0.0
      %1931 = vmatpush1.msra.mxu0 0.0
      %1932 = vmatprep.subr.mxu0 0.0
      %1933 = vmatpush1.msra.mxu0 0.0
      %1934 = vmatprep.subr.mxu0 0.0
      %1935 = vmatpush1.msra.mxu0 0.0
      %1936 = vmatprep.subr.mxu0 0.0
      %1937 = vmatpush1.msra.mxu0 0.0
      %1938 = vmatprep.subr.mxu0 0.0
      %1939 = vmatpush1.msra.mxu0 0.0
      %1940 = vmatprep.subr.mxu0 0.0
      %1941 = vmatpush1.msra.mxu0 0.0
      %1942 = vmatprep.subr.mxu0 0.0
      %1943 = vmatpush1.msra.mxu0 0.0
      %1944 = vmatprep.subr.mxu0 0.0
      %1945 = vmatpush1.msra.mxu0 0.0
      %1946 = vmatprep.subr.mxu0 0.0
      %1947 = vmatpush1.msra.mxu0 0.0
      %1948 = vmatprep.subr.mxu0 0.0
      %1949 = vmatpush1.msra.mxu0 0.0
      %1950 = vmatprep.subr.mxu0 0.0
      %1951 = vmatpush1.msra.mxu0 0.0
      %1952 = vmatprep.subr.mxu0 0.0
      %1953 = vmatpush1.msra.mxu0 0.0
      %1954 = vmatprep.mubr.f32.mxu0 0.0
      %1955 = vmatmul.mubr.f32.gmra.mrb[0].mxu0 %v468
      %v1956 = vpop.f32.mrb[0].mxu0
      %v1957 = vadd.f32 %v1882, %v1956
      %v1958 = vpop.f32.mrb[0].mxu0
      %1959 = vmatprep.mubr.f32.mxu0 0.0
      %1960 = vmatmul.mubr.f32.gmra.mrb[0].mxu0 %v471
      %v1961 = vpop.f32.mrb[0].mxu0
      %v1962 = vadd.f32 %v1887, %v1961
      %v1963 = vpop.f32.mrb[0].mxu0
      %1964 = vdwg.mxu0
      %s1965 = scalar_lea.vmem %s362, 24
      %v1966 = vld [vmem:[%s1965] sm:$0xff]
      %s1967 = scalar_lea.vmem %s368, 24
      %v1968 = vld [vmem:[%s1967] sm:$0xff]
      %1969 = vmatprep.subr.mxu0 0.0
      %1970 = vmatpush1.msra.mxu0 %v1968
      %1971 = vmatprep.subr.mxu0 0.0
      %1972 = vmatpush1.msra.mxu0 0.0
      %1973 = vmatprep.subr.mxu0 0.0
      %1974 = vmatpush1.msra.mxu0 0.0
      %1975 = vmatprep.subr.mxu0 0.0
      %1976 = vmatpush1.msra.mxu0 0.0
      %1977 = vmatprep.subr.mxu0 0.0
      %1978 = vmatpush1.msra.mxu0 0.0
      %1979 = vmatprep.subr.mxu0 0.0
      %1980 = vmatpush1.msra.mxu0 0.0
      %1981 = vmatprep.subr.mxu0 0.0
      %1982 = vmatpush1.msra.mxu0 0.0
      %1983 = vmatprep.subr.mxu0 0.0
      %1984 = vmatpush1.msra.mxu0 0.0
      %1985 = vmatprep.subr.mxu0 0.0
      %1986 = vmatpush1.msra.mxu0 0.0
      %1987 = vmatprep.subr.mxu0 0.0
      %1988 = vmatpush1.msra.mxu0 0.0
      %1989 = vmatprep.subr.mxu0 0.0
      %1990 = vmatpush1.msra.mxu0 0.0
      %1991 = vmatprep.subr.mxu0 0.0
      %1992 = vmatpush1.msra.mxu0 0.0
      %1993 = vmatprep.subr.mxu0 0.0
      %1994 = vmatpush1.msra.mxu0 0.0
      %1995 = vmatprep.subr.mxu0 0.0
      %1996 = vmatpush1.msra.mxu0 0.0
      %1997 = vmatprep.subr.mxu0 0.0
      %1998 = vmatpush1.msra.mxu0 0.0
      %1999 = vmatprep.subr.mxu0 0.0
      %2000 = vmatpush1.msra.mxu0 0.0
      %2001 = vmatprep.subr.mxu0 0.0
      %2002 = vmatpush1.msra.mxu0 0.0
      %2003 = vmatprep.subr.mxu0 0.0
      %2004 = vmatpush1.msra.mxu0 0.0
      %2005 = vmatprep.subr.mxu0 0.0
      %2006 = vmatpush1.msra.mxu0 0.0
      %2007 = vmatprep.subr.mxu0 0.0
      %2008 = vmatpush1.msra.mxu0 0.0
      %2009 = vmatprep.subr.mxu0 0.0
      %2010 = vmatpush1.msra.mxu0 0.0
      %2011 = vmatprep.subr.mxu0 0.0
      %2012 = vmatpush1.msra.mxu0 0.0
      %2013 = vmatprep.subr.mxu0 0.0
      %2014 = vmatpush1.msra.mxu0 0.0
      %2015 = vmatprep.subr.mxu0 0.0
      %2016 = vmatpush1.msra.mxu0 0.0
      %2017 = vmatprep.subr.mxu0 0.0
      %2018 = vmatpush1.msra.mxu0 0.0
      %2019 = vmatprep.subr.mxu0 0.0
      %2020 = vmatpush1.msra.mxu0 0.0
      %2021 = vmatprep.subr.mxu0 0.0
      %2022 = vmatpush1.msra.mxu0 0.0
      %2023 = vmatprep.subr.mxu0 0.0
      %2024 = vmatpush1.msra.mxu0 0.0
      %2025 = vmatprep.subr.mxu0 0.0
      %2026 = vmatpush1.msra.mxu0 0.0
      %2027 = vmatprep.subr.mxu0 0.0
      %2028 = vmatpush1.msra.mxu0 0.0
      %2029 = vmatprep.subr.mxu0 0.0
      %2030 = vmatpush1.msra.mxu0 0.0
      %2031 = vmatprep.subr.mxu0 0.0
      %2032 = vmatpush1.msra.mxu0 0.0
      %2033 = vmatprep.mubr.f32.mxu0 0.0
      %2034 = vmatmul.mubr.f32.gmra.mrb[0].mxu0 %v387
      %v2035 = vpop.f32.mrb[0].mxu0
      %v2036 = vadd.f32 0.0, %v2035
      %v2037 = vpop.f32.mrb[0].mxu0
      %2038 = vmatprep.mubr.f32.mxu0 0.0
      %2039 = vmatmul.mubr.f32.gmra.mrb[0].mxu0 %v390
      %v2040 = vpop.f32.mrb[0].mxu0
      %v2041 = vadd.f32 0.0, %v2040
      %v2042 = vpop.f32.mrb[0].mxu0
      %2043 = vdwg.mxu0
      %2044 = vmatprep.subr.mxu0 0.0
      %2045 = vmatpush1.msra.mxu0 %v1966
      %2046 = vmatprep.subr.mxu0 0.0
      %2047 = vmatpush1.msra.mxu0 0.0
      %2048 = vmatprep.subr.mxu0 0.0
      %2049 = vmatpush1.msra.mxu0 0.0
      %2050 = vmatprep.subr.mxu0 0.0
      %2051 = vmatpush1.msra.mxu0 0.0
      %2052 = vmatprep.subr.mxu0 0.0
      %2053 = vmatpush1.msra.mxu0 0.0
      %2054 = vmatprep.subr.mxu0 0.0
      %2055 = vmatpush1.msra.mxu0 0.0
      %2056 = vmatprep.subr.mxu0 0.0
      %2057 = vmatpush1.msra.mxu0 0.0
      %2058 = vmatprep.subr.mxu0 0.0
      %2059 = vmatpush1.msra.mxu0 0.0
      %2060 = vmatprep.subr.mxu0 0.0
      %2061 = vmatpush1.msra.mxu0 0.0
      %2062 = vmatprep.subr.mxu0 0.0
      %2063 = vmatpush1.msra.mxu0 0.0
      %2064 = vmatprep.subr.mxu0 0.0
      %2065 = vmatpush1.msra.mxu0 0.0
      %2066 = vmatprep.subr.mxu0 0.0
      %2067 = vmatpush1.msra.mxu0 0.0
      %2068 = vmatprep.subr.mxu0 0.0
      %2069 = vmatpush1.msra.mxu0 0.0
      %2070 = vmatprep.subr.mxu0 0.0
      %2071 = vmatpush1.msra.mxu0 0.0
      %2072 = vmatprep.subr.mxu0 0.0
      %2073 = vmatpush1.msra.mxu0 0.0
      %2074 = vmatprep.subr.mxu0 0.0
      %2075 = vmatpush1.msra.mxu0 0.0
      %2076 = vmatprep.subr.mxu0 0.0
      %2077 = vmatpush1.msra.mxu0 0.0
      %2078 = vmatprep.subr.mxu0 0.0
      %2079 = vmatpush1.msra.mxu0 0.0
      %2080 = vmatprep.subr.mxu0 0.0
      %2081 = vmatpush1.msra.mxu0 0.0
      %2082 = vmatprep.subr.mxu0 0.0
      %2083 = vmatpush1.msra.mxu0 0.0
      %2084 = vmatprep.subr.mxu0 0.0
      %2085 = vmatpush1.msra.mxu0 0.0
      %2086 = vmatprep.subr.mxu0 0.0
      %2087 = vmatpush1.msra.mxu0 0.0
      %2088 = vmatprep.subr.mxu0 0.0
      %2089 = vmatpush1.msra.mxu0 0.0
      %2090 = vmatprep.subr.mxu0 0.0
      %2091 = vmatpush1.msra.mxu0 0.0
      %2092 = vmatprep.subr.mxu0 0.0
      %2093 = vmatpush1.msra.mxu0 0.0
      %2094 = vmatprep.subr.mxu0 0.0
      %2095 = vmatpush1.msra.mxu0 0.0
      %2096 = vmatprep.subr.mxu0 0.0
      %2097 = vmatpush1.msra.mxu0 0.0
      %2098 = vmatprep.subr.mxu0 0.0
      %2099 = vmatpush1.msra.mxu0 0.0
      %2100 = vmatprep.subr.mxu0 0.0
      %2101 = vmatpush1.msra.mxu0 0.0
      %2102 = vmatprep.subr.mxu0 0.0
      %2103 = vmatpush1.msra.mxu0 0.0
      %2104 = vmatprep.subr.mxu0 0.0
      %2105 = vmatpush1.msra.mxu0 0.0
      %2106 = vmatprep.subr.mxu0 0.0
      %2107 = vmatpush1.msra.mxu0 0.0
      %2108 = vmatprep.mubr.f32.mxu0 0.0
      %2109 = vmatmul.mubr.f32.gmra.mrb[0].mxu0 %v468
      %v2110 = vpop.f32.mrb[0].mxu0
      %v2111 = vadd.f32 %v2036, %v2110
      %v2112 = vpop.f32.mrb[0].mxu0
      %2113 = vmatprep.mubr.f32.mxu0 0.0
      %2114 = vmatmul.mubr.f32.gmra.mrb[0].mxu0 %v471
      %v2115 = vpop.f32.mrb[0].mxu0
      %v2116 = vadd.f32 %v2041, %v2115
      %v2117 = vpop.f32.mrb[0].mxu0
      %2118 = vdwg.mxu0
      %v2120 = vsel %vm385, %v2111, 0
      %v2123 = vsel %vm385, %v2116, 0
      %2125 = vmatprep.subr.mxu0 0.0
      %2126 = vmatpush1.msra.mxu0 %v382
      %2127 = vmatprep.subr.mxu0 0.0
      %2128 = vmatpush1.msra.mxu0 0.0
      %2129 = vmatprep.subr.mxu0 0.0
      %2130 = vmatpush1.msra.mxu0 0.0
      %2131 = vmatprep.subr.mxu0 0.0
      %2132 = vmatpush1.msra.mxu0 0.0
      %2133 = vmatprep.subr.mxu0 0.0
      %2134 = vmatpush1.msra.mxu0 0.0
      %2135 = vmatprep.subr.mxu0 0.0
      %2136 = vmatpush1.msra.mxu0 0.0
      %2137 = vmatprep.subr.mxu0 0.0
      %2138 = vmatpush1.msra.mxu0 0.0
      %2139 = vmatprep.subr.mxu0 0.0
      %2140 = vmatpush1.msra.mxu0 0.0
      %2141 = vmatprep.subr.mxu0 0.0
      %2142 = vmatpush1.msra.mxu0 0.0
      %2143 = vmatprep.subr.mxu0 0.0
      %2144 = vmatpush1.msra.mxu0 0.0
      %2145 = vmatprep.subr.mxu0 0.0
      %2146 = vmatpush1.msra.mxu0 0.0
      %2147 = vmatprep.subr.mxu0 0.0
      %2148 = vmatpush1.msra.mxu0 0.0
      %2149 = vmatprep.subr.mxu0 0.0
      %2150 = vmatpush1.msra.mxu0 0.0
      %2151 = vmatprep.subr.mxu0 0.0
      %2152 = vmatpush1.msra.mxu0 0.0
      %2153 = vmatprep.subr.mxu0 0.0
      %2154 = vmatpush1.msra.mxu0 0.0
      %2155 = vmatprep.subr.mxu0 0.0
      %2156 = vmatpush1.msra.mxu0 0.0
      %2157 = vmatprep.subr.mxu0 0.0
      %2158 = vmatpush1.msra.mxu0 0.0
      %2159 = vmatprep.subr.mxu0 0.0
      %2160 = vmatpush1.msra.mxu0 0.0
      %2161 = vmatprep.subr.mxu0 0.0
      %2162 = vmatpush1.msra.mxu0 0.0
      %2163 = vmatprep.subr.mxu0 0.0
      %2164 = vmatpush1.msra.mxu0 0.0
      %2165 = vmatprep.subr.mxu0 0.0
      %2166 = vmatpush1.msra.mxu0 0.0
      %2167 = vmatprep.subr.mxu0 0.0
      %2168 = vmatpush1.msra.mxu0 0.0
      %2169 = vmatprep.subr.mxu0 0.0
      %2170 = vmatpush1.msra.mxu0 0.0
      %2171 = vmatprep.subr.mxu0 0.0
      %2172 = vmatpush1.msra.mxu0 0.0
      %2173 = vmatprep.subr.mxu0 0.0
      %2174 = vmatpush1.msra.mxu0 0.0
      %2175 = vmatprep.subr.mxu0 0.0
      %2176 = vmatpush1.msra.mxu0 0.0
      %2177 = vmatprep.subr.mxu0 0.0
      %2178 = vmatpush1.msra.mxu0 0.0
      %2179 = vmatprep.subr.mxu0 0.0
      %2180 = vmatpush1.msra.mxu0 0.0
      %2181 = vmatprep.subr.mxu0 0.0
      %2182 = vmatpush1.msra.mxu0 0.0
      %2183 = vmatprep.subr.mxu0 0.0
      %2184 = vmatpush1.msra.mxu0 0.0
      %2185 = vmatprep.subr.mxu0 0.0
      %2186 = vmatpush1.msra.mxu0 0.0
      %2187 = vmatprep.subr.mxu0 0.0
      %2188 = vmatpush1.msra.mxu0 0.0
      %2189 = vmatprep.mubr.f32.mxu0 0.0
      %2190 = vmatmul.mubr.f32.gmra.mrb[0].mxu0 %v2120
      %v2191 = vpop.f32.mrb[0].mxu0
      %v2192 = vadd.f32 0.0, %v2191
      %v2193 = vpop.f32.mrb[0].mxu0
      %2194 = vmatprep.mubr.f32.mxu0 0.0
      %2195 = vmatmul.mubr.f32.gmra.mrb[0].mxu0 %v2123
      %v2196 = vpop.f32.mrb[0].mxu0
      %v2197 = vadd.f32 0.0, %v2196
      %v2198 = vpop.f32.mrb[0].mxu0
      %2199 = vdwg.mxu0
      %v2201 = vsel %vm385, %v1957, 0
      %v2204 = vsel %vm385, %v1962, 0
      %2206 = vmatprep.subr.mxu0 0.0
      %2207 = vmatpush1.msra.mxu0 %v381
      %2208 = vmatprep.subr.mxu0 0.0
      %2209 = vmatpush1.msra.mxu0 0.0
      %2210 = vmatprep.subr.mxu0 0.0
      %2211 = vmatpush1.msra.mxu0 0.0
      %2212 = vmatprep.subr.mxu0 0.0
      %2213 = vmatpush1.msra.mxu0 0.0
      %2214 = vmatprep.subr.mxu0 0.0
      %2215 = vmatpush1.msra.mxu0 0.0
      %2216 = vmatprep.subr.mxu0 0.0
      %2217 = vmatpush1.msra.mxu0 0.0
      %2218 = vmatprep.subr.mxu0 0.0
      %2219 = vmatpush1.msra.mxu0 0.0
      %2220 = vmatprep.subr.mxu0 0.0
      %2221 = vmatpush1.msra.mxu0 0.0
      %2222 = vmatprep.subr.mxu0 0.0
      %2223 = vmatpush1.msra.mxu0 0.0
      %2224 = vmatprep.subr.mxu0 0.0
      %2225 = vmatpush1.msra.mxu0 0.0
      %2226 = vmatprep.subr.mxu0 0.0
      %2227 = vmatpush1.msra.mxu0 0.0
      %2228 = vmatprep.subr.mxu0 0.0
      %2229 = vmatpush1.msra.mxu0 0.0
      %2230 = vmatprep.subr.mxu0 0.0
      %2231 = vmatpush1.msra.mxu0 0.0
      %2232 = vmatprep.subr.mxu0 0.0
      %2233 = vmatpush1.msra.mxu0 0.0
      %2234 = vmatprep.subr.mxu0 0.0
      %2235 = vmatpush1.msra.mxu0 0.0
      %2236 = vmatprep.subr.mxu0 0.0
      %2237 = vmatpush1.msra.mxu0 0.0
      %2238 = vmatprep.subr.mxu0 0.0
      %2239 = vmatpush1.msra.mxu0 0.0
      %2240 = vmatprep.subr.mxu0 0.0
      %2241 = vmatpush1.msra.mxu0 0.0
      %2242 = vmatprep.subr.mxu0 0.0
      %2243 = vmatpush1.msra.mxu0 0.0
      %2244 = vmatprep.subr.mxu0 0.0
      %2245 = vmatpush1.msra.mxu0 0.0
      %2246 = vmatprep.subr.mxu0 0.0
      %2247 = vmatpush1.msra.mxu0 0.0
      %2248 = vmatprep.subr.mxu0 0.0
      %2249 = vmatpush1.msra.mxu0 0.0
      %2250 = vmatprep.subr.mxu0 0.0
      %2251 = vmatpush1.msra.mxu0 0.0
      %2252 = vmatprep.subr.mxu0 0.0
      %2253 = vmatpush1.msra.mxu0 0.0
      %2254 = vmatprep.subr.mxu0 0.0
      %2255 = vmatpush1.msra.mxu0 0.0
      %2256 = vmatprep.subr.mxu0 0.0
      %2257 = vmatpush1.msra.mxu0 0.0
      %2258 = vmatprep.subr.mxu0 0.0
      %2259 = vmatpush1.msra.mxu0 0.0
      %2260 = vmatprep.subr.mxu0 0.0
      %2261 = vmatpush1.msra.mxu0 0.0
      %2262 = vmatprep.subr.mxu0 0.0
      %2263 = vmatpush1.msra.mxu0 0.0
      %2264 = vmatprep.subr.mxu0 0.0
      %2265 = vmatpush1.msra.mxu0 0.0
      %2266 = vmatprep.subr.mxu0 0.0
      %2267 = vmatpush1.msra.mxu0 0.0
      %2268 = vmatprep.subr.mxu0 0.0
      %2269 = vmatpush1.msra.mxu0 0.0
      %2270 = vmatprep.mubr.f32.mxu0 0.0
      %2271 = vmatmul.mubr.f32.gmra.mrb[0].mxu0 %v2201
      %v2272 = vpop.f32.mrb[0].mxu0
      %v2273 = vadd.f32 %v2192, %v2272
      %v2274 = vpop.f32.mrb[0].mxu0
      %2275 = vmatprep.mubr.f32.mxu0 0.0
      %2276 = vmatmul.mubr.f32.gmra.mrb[0].mxu0 %v2204
      %v2277 = vpop.f32.mrb[0].mxu0
      %v2278 = vadd.f32 %v2197, %v2277
      %v2279 = vpop.f32.mrb[0].mxu0
      %2280 = vdwg.mxu0
      %s2281 = scalar_lea.vmem %s375, 48
      %2282 = vst.msk [vmem:[%s2281] sm:$0xff] %vm862, %v2273
      %2283 = vst.msk [vmem:[%s2281 + $0x8] sm:$0xff] %vm862, %v2278
      %s2284 = smul.u32 4, %s19
      %p2285 = scmp.lt.s32.totalorder %s2284, 7
      %s2286 = scalar_select %p2285, %s2284, 7
      %s2287 = smul.addr %s2286, 2
      %s2288 = smul.addr %s2287, 8
      %s2289 = scalar_lea.vmem %s8, %s2288
      // Predicated region
      $region53: #{dtcwt_inverse.3} parent=51 // pred_check
        %p2290 = pneg %p225
      $region54: #{dtcwt_inverse.3} parent=51 // pred_check_branch
        %2292 = sbr.rel (%p2290) target = $region56
      $region55: #{dtcwt_inverse.3} parent=51 // pred_region
        %s2293 = smul.u32 4, %s19
      $region56: #{dtcwt_inverse.3} parent=51 // pred_fallthru
        _
    $region52: #{dtcwt_inverse.3} parent=5 // pred_fallthru
      _
    %p2294 = scmp.le.s32.totalorder 2, %s14
    // Predicated region
    $region57: #{dtcwt_inverse.3} parent=5 // pred_check
      %p2295 = pneg %p2294
    $region58: #{dtcwt_inverse.3} parent=5 // pred_check_branch
      %2297 = sbr.rel (%p2295) target = $region60
    $region59: #{dtcwt_inverse.3} parent=5 // pred_region
      %s2298 = ssub.s32 %s14, 2
      // Predicated region
      $region61: #{dtcwt_inverse.3} parent=59 // pred_check
        %p2299 = pneg %p231
      $region62: #{dtcwt_inverse.3} parent=59 // pred_check_branch
        %2301 = sbr.rel (%p2299) target = $region64
      $region63: #{dtcwt_inverse.3} parent=59 // pred_region
        %s2302 = smul.u32 4, %s20
        %p2303 = scmp.lt.s32.totalorder %s2302, 7
        %s2304 = scalar_select %p2303, %s2302, 7
        %s2305 = smul.addr %s2304, 2
        %s2306 = smul.addr %s2305, 8
        %s2307 = scalar_lea.vmem %s8, %s2306
      $region64: #{dtcwt_inverse.3} parent=59 // pred_fallthru
        _
    $region60: #{dtcwt_inverse.3} parent=5 // pred_fallthru
      _
  $region6: #{dtcwt_inverse.3} parent=0 // loop_footer
    %s18 = sadd.s32 1, %s14
  $region7: #{dtcwt_inverse.3} parent=0 // loop_footer_branch
    %13 = sbr.rel target = $region3
  $region8: #{dtcwt_inverse.3} parent=0 // loop_exit
    _

// kernel: dtcwt_inverse.4
$region0: #{dtcwt_inverse.4}
  #allocation0 [shape = 'u32[]', space=smem, size = 0x4, offset = 0x4, fixed_abs, tag = 'smem constant byte address 0x4 - core index']
  #allocation1 [shape = 'u32[144,128]{1,0:T(1,128)}', space=vmem, size = 0x12000, scoped, tag = 'internal scratch']
  %s0 = inlined_call_operand.vmem [shape: f32[32,16], index: 0, kind: input, shape index: {}]
  %s1 = inlined_call_operand.vmem [shape: f32[32,16], index: 1, kind: input, shape index: {}]
  %s2 = inlined_call_operand.vmem [shape: f32[16,32], index: 2, kind: input, shape index: {}]
  %s3 = inlined_call_operand.vmem [shape: f32[16,32], index: 3, kind: input, shape index: {}]
  %s4 = inlined_call_operand.vmem [shape: f32[8,16,16], index: 4, kind: input, shape index: {}]
  %s5 = inlined_call_operand.vmem [shape: f32[8,16,16], index: 5, kind: input, shape index: {}]
  %s6 = inlined_call_operand.vmem [shape: f32[8,16,16], index: 6, kind: input, shape index: {}]
  %s7 = inlined_call_operand.vmem [shape: f32[8,16,16], index: 7, kind: input, shape index: {}]
  %s8 = inlined_call_operand.vmem [shape: f32[8,32,32], index: 8, kind: output, shape index: {}]
  %s9 = sld [smem:[#allocation0]]
  $region65: #{dtcwt_inverse.4} parent=0
    _
  %s11 = ssub.s32 1, %s9
  %s12 = scalar_select 0, %s11, %s9
  loop: start=0, step=1, limit=4
  $region2: #{dtcwt_inverse.4} parent=0 // loop_pre_header
    _
  $region3: #{dtcwt_inverse.4} parent=0 // loop_header
    %s14 = sphi 0, %s18
    %p15 = scmp.ge.s32.totalorder %s14, 4
    %s22 = sphi 0, %s22
    %s24 = sphi 0, %s22
    %s25 = sphi 0, %s24
    %s39 = sphi 0, %s25
    %s43 = sphi 0, %s43
    %s45 = sphi 0, %s43
    %s46 = sphi 0, %s45
    %s60 = sphi 0, %s46
    %s64 = sphi 0, %s64
    %s66 = sphi 0, %s64
    %s67 = sphi 0, %s66
    %s81 = sphi 0, %s67
    %s85 = sphi 0, %s85
    %s87 = sphi 0, %s85
    %s88 = sphi 0, %s87
    %s102 = sphi 0, %s88
    %s108 = sphi 0, %s110
    %s111 = sphi 0, %s108
    %s112 = sphi 0, %s111
    %s128 = sphi 0, %s112
    %s134 = sphi 0, %s136
    %s137 = sphi 0, %s134
    %s138 = sphi 0, %s137
    %s154 = sphi 0, %s138
    %s160 = sphi 0, %s162
    %s163 = sphi 0, %s160
    %s164 = sphi 0, %s163
    %s180 = sphi 0, %s164
    %s186 = sphi 0, %s188
    %s189 = sphi 0, %s186
    %s190 = sphi 0, %s189
    %s206 = sphi 0, %s190
    %s212 = sphi 0, %s214
    %s215 = sphi 0, %s212
    %s216 = sphi 0, %s215
    %s232 = sphi 0, %s216
  $region4: #{dtcwt_inverse.4} parent=0 // loop_header_branch
    %17 = sbr.rel (%p15) target = $region8
  $region5: #{dtcwt_inverse.4} parent=0 // loop_body
    %s19 = ssub.s32 %s14, 1
    %s20 = ssub.s32 %s14, 2
    %s21 = sadd.s32 %s14, 1
    %s23 = sadd.s32 %s22, 1
    %p26 = scmp.eq.s32.totalorder %s14, 1
    %p27 = scmp.ne.s32.totalorder %s22, %s24
    %p28 = scmp.eq.s32.totalorder %s14, 0
    %p29 = por %p27, %p28
    %p30 = scmp.ne.s32.totalorder %s22, %s24
    %p31 = scmp.eq.s32.totalorder %s19, 1
    %p32 = por %p30, %p31
    %p33 = scmp.ne.s32.totalorder %s24, %s25
    %p34 = scmp.eq.s32.totalorder %s19, 0
    %p35 = por %p33, %p34
    %p36 = scmp.ne.s32.totalorder %s24, %s25
    %p37 = scmp.eq.s32.totalorder %s20, 1
    %p38 = por %p36, %p37
    %p40 = scmp.ne.s32.totalorder %s25, %s39
    %p41 = scmp.eq.s32.totalorder %s20, 0
    %p42 = por %p40, %p41
    %s44 = sadd.s32 %s43, 1
    %p47 = scmp.eq.s32.totalorder %s14, 1
    %p48 = scmp.ne.s32.totalorder %s43, %s45
    %p49 = scmp.eq.s32.totalorder %s14, 0
    %p50 = por %p48, %p49
    %p51 = scmp.ne.s32.totalorder %s43, %s45
    %p52 = scmp.eq.s32.totalorder %s19, 1
    %p53 = por %p51, %p52
    %p54 = scmp.ne.s32.totalorder %s45, %s46
    %p55 = scmp.eq.s32.totalorder %s19, 0
    %p56 = por %p54, %p55
    %p57 = scmp.ne.s32.totalorder %s45, %s46
    %p58 = scmp.eq.s32.totalorder %s20, 1
    %p59 = por %p57, %p58
    %p61 = scmp.ne.s32.totalorder %s46, %s60
    %p62 = scmp.eq.s32.totalorder %s20, 0
    %p63 = por %p61, %p62
    %s65 = sadd.s32 %s64, 1
    %p68 = scmp.eq.s32.totalorder %s14, 1
    %p69 = scmp.ne.s32.totalorder %s64, %s66
    %p70 = scmp.eq.s32.totalorder %s14, 0
    %p71 = por %p69, %p70
    %p72 = scmp.ne.s32.totalorder %s64, %s66
    %p73 = scmp.eq.s32.totalorder %s19, 1
    %p74 = por %p72, %p73
    %p75 = scmp.ne.s32.totalorder %s66, %s67
    %p76 = scmp.eq.s32.totalorder %s19, 0
    %p77 = por %p75, %p76
    %p78 = scmp.ne.s32.totalorder %s66, %s67
    %p79 = scmp.eq.s32.totalorder %s20, 1
    %p80 = por %p78, %p79
    %p82 = scmp.ne.s32.totalorder %s67, %s81
    %p83 = scmp.eq.s32.totalorder %s20, 0
    %p84 = por %p82, %p83
    %s86 = sadd.s32 %s85, 1
    %p89 = scmp.eq.s32.totalorder %s14, 1
    %p90 = scmp.ne.s32.totalorder %s85, %s87
    %p91 = scmp.eq.s32.totalorder %s14, 0
    %p92 = por %p90, %p91
    %p93 = scmp.ne.s32.totalorder %s85, %s87
    %p94 = scmp.eq.s32.totalorder %s19, 1
    %p95 = por %p93, %p94
    %p96 = scmp.ne.s32.totalorder %s87, %s88
    %p97 = scmp.eq.s32.totalorder %s19, 0
    %p98 = por %p96, %p97
    %p99 = scmp.ne.s32.totalorder %s87, %s88
    %p100 = scmp.eq.s32.totalorder %s20, 1
    %p101 = por %p99, %p100
    %p103 = scmp.ne.s32.totalorder %s88, %s102
    %p104 = scmp.eq.s32.totalorder %s20, 0
    %p105 = por %p103, %p104
    %s106 = ssub.s32 %s14, %s21
    %p107 = scmp.eq.s32.totalorder %s106, 0
    %s109 = sadd.s32 %s108, 1
    %s110 = scalar_select %p107, %s108, %s109
    %p113 = pneg %p107
    %p114 = scmp.eq.s32.totalorder %s14, 1
    %p115 = por %p113, %p114
    %p116 = scmp.ne.s32.totalorder %s108, %s111
    %p117 = scmp.eq.s32.totalorder %s14, 0
    %p118 = por %p116, %p117
    %p119 = scmp.ne.s32.totalorder %s108, %s111
    %p120 = scmp.eq.s32.totalorder %s19, 1
    %p121 = por %p119, %p120
    %p122 = scmp.ne.s32.totalorder %s111, %s112
    %p123 = scmp.eq.s32.totalorder %s19, 0
    %p124 = por %p122, %p123
    %p125 = scmp.ne.s32.totalorder %s111, %s112
    %p126 = scmp.eq.s32.totalorder %s20, 1
    %p127 = por %p125, %p126
    %p129 = scmp.ne.s32.totalorder %s112, %s128
    %p130 = scmp.eq.s32.totalorder %s20, 0
    %p131 = por %p129, %p130
    %s132 = ssub.s32 %s14, %s21
    %p133 = scmp.eq.s32.totalorder %s132, 0
    %s135 = sadd.s32 %s134, 1
    %s136 = scalar_select %p133, %s134, %s135
    %p139 = pneg %p133
    %p140 = scmp.eq.s32.totalorder %s14, 1
    %p141 = por %p139, %p140
    %p142 = scmp.ne.s32.totalorder %s134, %s137
    %p143 = scmp.eq.s32.totalorder %s14, 0
    %p144 = por %p142, %p143
    %p145 = scmp.ne.s32.totalorder %s134, %s137
    %p146 = scmp.eq.s32.totalorder %s19, 1
    %p147 = por %p145, %p146
    %p148 = scmp.ne.s32.totalorder %s137, %s138
    %p149 = scmp.eq.s32.totalorder %s19, 0
    %p150 = por %p148, %p149
    %p151 = scmp.ne.s32.totalorder %s137, %s138
    %p152 = scmp.eq.s32.totalorder %s20, 1
    %p153 = por %p151, %p152
    %p155 = scmp.ne.s32.totalorder %s138, %s154
    %p156 = scmp.eq.s32.totalorder %s20, 0
    %p157 = por %p155, %p156
    %s158 = ssub.s32 %s14, %s21
    %p159 = scmp.eq.s32.totalorder %s158, 0
    %s161 = sadd.s32 %s160, 1
    %s162 = scalar_select %p159, %s160, %s161
    %p165 = pneg %p159
    %p166 = scmp.eq.s32.totalorder %s14, 1
    %p167 = por %p165, %p166
    %p168 = scmp.ne.s32.totalorder %s160, %s163
    %p169 = scmp.eq.s32.totalorder %s14, 0
    %p170 = por %p168, %p169
    %p171 = scmp.ne.s32.totalorder %s160, %s163
    %p172 = scmp.eq.s32.totalorder %s19, 1
    %p173 = por %p171, %p172
    %p174 = scmp.ne.s32.totalorder %s163, %s164
    %p175 = scmp.eq.s32.totalorder %s19, 0
    %p176 = por %p174, %p175
    %p177 = scmp.ne.s32.totalorder %s163, %s164
    %p178 = scmp.eq.s32.totalorder %s20, 1
    %p179 = por %p177, %p178
    %p181 = scmp.ne.s32.totalorder %s164, %s180
    %p182 = scmp.eq.s32.totalorder %s20, 0
    %p183 = por %p181, %p182
    %s184 = ssub.s32 %s14, %s21
    %p185 = scmp.eq.s32.totalorder %s184, 0
    %s187 = sadd.s32 %s186, 1
    %s188 = scalar_select %p185, %s186, %s187
    %p191 = pneg %p185
    %p192 = scmp.eq.s32.totalorder %s14, 1
    %p193 = por %p191, %p192
    %p194 = scmp.ne.s32.totalorder %s186, %s189
    %p195 = scmp.eq.s32.totalorder %s14, 0
    %p196 = por %p194, %p195
    %p197 = scmp.ne.s32.totalorder %s186, %s189
    %p198 = scmp.eq.s32.totalorder %s19, 1
    %p199 = por %p197, %p198
    %p200 = scmp.ne.s32.totalorder %s189, %s190
    %p201 = scmp.eq.s32.totalorder %s19, 0
    %p202 = por %p200, %p201
    %p203 = scmp.ne.s32.totalorder %s189, %s190
    %p204 = scmp.eq.s32.totalorder %s20, 1
    %p205 = por %p203, %p204
    %p207 = scmp.ne.s32.totalorder %s190, %s206
    %p208 = scmp.eq.s32.totalorder %s20, 0
    %p209 = por %p207, %p208
    %s210 = ssub.s32 %s14, %s21
    %p211 = scmp.eq.s32.totalorder %s210, 0
    %s213 = sadd.s32 %s212, 1
    %s214 = scalar_select %p211, %s212, %s213
    %p217 = pneg %p211
    %p218 = scmp.eq.s32.totalorder %s14, 1
    %p219 = por %p217, %p218
    %p220 = scmp.ne.s32.totalorder %s212, %s215
    %p221 = scmp.eq.s32.totalorder %s14, 0
    %p222 = por %p220, %p221
    %p223 = scmp.ne.s32.totalorder %s212, %s215
    %p224 = scmp.eq.s32.totalorder %s19, 1
    %p225 = por %p223, %p224
    %p226 = scmp.ne.s32.totalorder %s215, %s216
    %p227 = scmp.eq.s32.totalorder %s19, 0
    %p228 = por %p226, %p227
    %p229 = scmp.ne.s32.totalorder %s215, %s216
    %p230 = scmp.eq.s32.totalorder %s20, 1
    %p231 = por %p229, %p230
    %p233 = scmp.ne.s32.totalorder %s216, %s232
    %p234 = scmp.eq.s32.totalorder %s20, 0
    %p235 = por %p233, %p234
    %p236 = scmp.le.s32.totalorder 1, %s14
    %p237 = scmp.lt.s32.totalorder %s14, 3
    %p238 = pnand %p236, %p237
    %p239 = pneg %p238
    // Predicated region
    $region9: #{dtcwt_inverse.4} parent=5 // pred_check
      _
    $region10: #{dtcwt_inverse.4} parent=5 // pred_check_branch
      %241 = sbr.rel (%p238) target = $region12
    $region11: #{dtcwt_inverse.4} parent=5 // pred_region
      %s242 = ssub.s32 %s14, 1
      // Predicated region
      $region13: #{dtcwt_inverse.4} parent=11 // pred_check
        %p243 = pneg %p35
      $region14: #{dtcwt_inverse.4} parent=11 // pred_check_branch
        %245 = sbr.rel (%p243) target = $region16
      $region15: #{dtcwt_inverse.4} parent=11 // pred_region
        _
      $region16: #{dtcwt_inverse.4} parent=11 // pred_fallthru
        _
      // Predicated region
      $region17: #{dtcwt_inverse.4} parent=11 // pred_check
        %p246 = pneg %p56
      $region18: #{dtcwt_inverse.4} parent=11 // pred_check_branch
        %248 = sbr.rel (%p246) target = $region20
      $region19: #{dtcwt_inverse.4} parent=11 // pred_region
        _
      $region20: #{dtcwt_inverse.4} parent=11 // pred_fallthru
        _
      // Predicated region
      $region21: #{dtcwt_inverse.4} parent=11 // pred_check
        %p249 = pneg %p77
      $region22: #{dtcwt_inverse.4} parent=11 // pred_check_branch
        %251 = sbr.rel (%p249) target = $region24
      $region23: #{dtcwt_inverse.4} parent=11 // pred_region
        _
      $region24: #{dtcwt_inverse.4} parent=11 // pred_fallthru
        _
      // Predicated region
      $region25: #{dtcwt_inverse.4} parent=11 // pred_check
        %p252 = pneg %p98
      $region26: #{dtcwt_inverse.4} parent=11 // pred_check_branch
        %254 = sbr.rel (%p252) target = $region28
      $region27: #{dtcwt_inverse.4} parent=11 // pred_region
        _
      $region28: #{dtcwt_inverse.4} parent=11 // pred_fallthru
        _
    $region12: #{dtcwt_inverse.4} parent=5 // pred_fallthru
      _
    %p255 = scmp.lt.s32.totalorder %s14, 2
    // Predicated region
    $region29: #{dtcwt_inverse.4} parent=5 // pred_check
      %p256 = pneg %p255
    $region30: #{dtcwt_inverse.4} parent=5 // pred_check_branch
      %258 = sbr.rel (%p256) target = $region32
    $region31: #{dtcwt_inverse.4} parent=5 // pred_region
      // Predicated region
      $region33: #{dtcwt_inverse.4} parent=31 // pred_check
        %p259 = pneg %p118
      $region34: #{dtcwt_inverse.4} parent=31 // pred_check_branch
        %261 = sbr.rel (%p259) target = $region36
      $region35: #{dtcwt_inverse.4} parent=31 // pred_region
        %s262 = smul.u32 4, %s14
        %p263 = scmp.lt.s32.totalorder %s262, 7
        %s264 = scalar_select %p263, %s262, 7
        %s265 = smul.addr %s264, 2
        %s266 = smul.addr %s265, 8
        %s267 = scalar_lea.vmem %s4, %s266
        %s268 = smul.u32 4, %s14
      $region36: #{dtcwt_inverse.4} parent=31 // pred_fallthru
        _
      // Predicated region
      $region37: #{dtcwt_inverse.4} parent=31 // pred_check
        %p269 = pneg %p144
      $region38: #{dtcwt_inverse.4} parent=31 // pred_check_branch
        %271 = sbr.rel (%p269) target = $region40
      $region39: #{dtcwt_inverse.4} parent=31 // pred_region
        %s272 = smul.u32 4, %s14
        %p273 = scmp.lt.s32.totalorder %s272, 7
        %s274 = scalar_select %p273, %s272, 7
        %s275 = smul.addr %s274, 2
        %s276 = smul.addr %s275, 8
        %s277 = scalar_lea.vmem %s5, %s276
        %s278 = smul.u32 4, %s14
      $region40: #{dtcwt_inverse.4} parent=31 // pred_fallthru
        _
      // Predicated region
      $region41: #{dtcwt_inverse.4} parent=31 // pred_check
        %p279 = pneg %p170
      $region42: #{dtcwt_inverse.4} parent=31 // pred_check_branch
        %281 = sbr.rel (%p279) target = $region44
      $region43: #{dtcwt_inverse.4} parent=31 // pred_region
        %s282 = smul.u32 4, %s14
        %p283 = scmp.lt.s32.totalorder %s282, 7
        %s284 = scalar_select %p283, %s282, 7
        %s285 = smul.addr %s284, 2
        %s286 = smul.addr %s285, 8
        %s287 = scalar_lea.vmem %s6, %s286
        %s288 = smul.u32 4, %s14
      $region44: #{dtcwt_inverse.4} parent=31 // pred_fallthru
        _
      // Predicated region
      $region45: #{dtcwt_inverse.4} parent=31 // pred_check
        %p289 = pneg %p196
      $region46: #{dtcwt_inverse.4} parent=31 // pred_check_branch
        %291 = sbr.rel (%p289) target = $region48
      $region47: #{dtcwt_inverse.4} parent=31 // pred_region
        %s292 = smul.u32 4, %s14
        %p293 = scmp.lt.s32.totalorder %s292, 7
        %s294 = scalar_select %p293, %s292, 7
        %s295 = smul.addr %s294, 2
        %s296 = smul.addr %s295, 8
        %s297 = scalar_lea.vmem %s7, %s296
        %s298 = smul.u32 4, %s14
      $region48: #{dtcwt_inverse.4} parent=31 // pred_fallthru
        _
    $region32: #{dtcwt_inverse.4} parent=5 // pred_fallthru
      _
    %p299 = scmp.le.s32.totalorder 1, %s14
    %p300 = scmp.lt.s32.totalorder %s14, 3
    %p301 = pnand %p299, %p300
    %p302 = pneg %p301
    // Predicated region
    $region49: #{dtcwt_inverse.4} parent=5 // pred_check
      _
    $region50: #{dtcwt_inverse.4} parent=5 // pred_check_branch
      %304 = sbr.rel (%p301) target = $region52
    $region51: #{dtcwt_inverse.4} parent=5 // pred_region
      %s305 = ssub.s32 %s14, 1
      %p306 = pneg %p35
      %p307 = pneg %p32
      %p308 = pneg %p56
      %p309 = pneg %p53
      %p310 = pneg %p77
      %p311 = pneg %p74
      %p312 = pneg %p98
      %p313 = pneg %p95
      %s314 = smul.u32 4, %s19
      %p315 = scmp.lt.s32.totalorder %s314, 7
      %s316 = scalar_select %p315, %s314, 7
      %s317 = smul.addr %s316, 2
      %s318 = smul.addr %s317, 8
      %s319 = scalar_lea.vmem %s4, %s318
      %p320 = pneg %p124
      %p321 = pneg %p121
      %s322 = smul.u32 4, %s19
      %p323 = scmp.lt.s32.totalorder %s322, 7
      %s324 = scalar_select %p323, %s322, 7
      %s325 = smul.addr %s324, 2
      %s326 = smul.addr %s325, 8
      %s327 = scalar_lea.vmem %s5, %s326
      %p328 = pneg %p150
      %p329 = pneg %p147
      %s330 = smul.u32 4, %s19
      %p331 = scmp.lt.s32.totalorder %s330, 7
      %s332 = scalar_select %p331, %s330, 7
      %s333 = smul.addr %s332, 2
      %s334 = smul.addr %s333, 8
      %s335 = scalar_lea.vmem %s6, %s334
      %p336 = pneg %p176
      %p337 = pneg %p173
      %s338 = smul.u32 4, %s19
      %p339 = scmp.lt.s32.totalorder %s338, 7
      %s340 = scalar_select %p339, %s338, 7
      %s341 = smul.addr %s340, 2
      %s342 = smul.addr %s341, 8
      %s343 = scalar_lea.vmem %s7, %s342
      %p344 = pneg %p202
      %p345 = pneg %p199
      %p346 = pneg %p228
      %p347 = pneg %p225
      %s348 = smul.u32 4, %s19
      %p349 = scmp.lt.s32.totalorder %s348, 7
      %s350 = scalar_select %p349, %s348, 7
      %s351 = smul.addr %s350, 4
      %s352 = smul.addr %s351, 8
      %s353 = scalar_lea.vmem %s8, %s352
      %s354 = smul.u32 4, %s19
      %p355 = scmp.lt.s32.totalorder %s354, 7
      %s356 = scalar_select %p355, %s354, 7
      %s357 = smul.addr %s356, 2
      %s358 = smul.addr %s357, 8
      %s359 = scalar_lea.vmem %s4, %s358
      %s360 = smul.u32 4, %s19
      %s361 = smul.u32 4, %s19
      %p362 = scmp.lt.s32.totalorder %s361, 7
      %s363 = scalar_select %p362, %s361, 7
      %s364 = smul.addr %s363, 2
      %s365 = smul.addr %s364, 8
      %s366 = scalar_lea.vmem %s5, %s365
      %s367 = smul.u32 4, %s19
      %s368 = smul.u32 4, %s19
      %p369 = scmp.lt.s32.totalorder %s368, 7
      %s370 = scalar_select %p369, %s368, 7
      %s371 = smul.addr %s370, 2
      %s372 = smul.addr %s371, 8
      %s373 = scalar_lea.vmem %s6, %s372
      %s374 = smul.u32 4, %s19
      %s375 = smul.u32 4, %s19
      %p376 = scmp.lt.s32.totalorder %s375, 7
      %s377 = scalar_select %p376, %s375, 7
      %s378 = smul.addr %s377, 2
      %s379 = smul.addr %s378, 8
      %s380 = scalar_lea.vmem %s7, %s379
      %s381 = smul.u32 4, %s19
      %s382 = smul.u32 4, %s19
      %p383 = scmp.lt.s32.totalorder %s382, 7
      %s384 = scalar_select %p383, %s382, 7
      %s385 = smul.addr %s384, 4
      %s386 = smul.addr %s385, 8
      %s387 = scalar_lea.vmem %s8, %s386
      %s388 = smul.u32 4, %s19
      %v389 = vld [vmem:[%s0] sm:$0xff]
      %v390 = vld [vmem:[%s0 + $0x8] sm:$0xff]
      %v391 = vld [vmem:[%s0 + $0x10] sm:$0xff]
      %v392 = vld [vmem:[%s0 + $0x18] sm:$0xff]
      %v393 = vld [vmem:[%s1] sm:$0xff]
      %v394 = vld [vmem:[%s1 + $0x8] sm:$0xff]
      %v395 = vld [vmem:[%s1 + $0x10] sm:$0xff]
      %v396 = vld [vmem:[%s1 + $0x18] sm:$0xff]
      %v397 = vld [vmem:[%s2] sm:$0xff]
      %v398 = vld [vmem:[%s2 + $0x8] sm:$0xff]
      %v399 = vld [vmem:[%s3] sm:$0xff]
      %v400 = vld [vmem:[%s3 + $0x8] sm:$0xff]
      %v401 = vld [vmem:[%s359] sm:$0xff]
      %v402 = vld [vmem:[%s359 + $0x8] sm:$0xff]
      %v403 = vld [vmem:[%s366] sm:$0xff]
      %v404 = vld [vmem:[%s366 + $0x8] sm:$0xff]
      %vm405 = vcmask 130048
      %v407 = vsel %vm405, %v393, 0
      %v410 = vsel %vm405, %v394, 0
      %v413 = vsel %vm405, %v395, 0
      %v416 = vsel %vm405, %v396, 0
      %418 = vmatprep.subr.mxu0 0.0
      %419 = vmatpush1.msra.mxu0 %v403
      %420 = vmatprep.subr.mxu0 0.0
      %421 = vmatpush1.msra.mxu0 %v404
      %422 = vmatprep.subr.mxu0 0.0
      %423 = vmatpush1.msra.mxu0 0.0
      %424 = vmatprep.subr.mxu0 0.0
      %425 = vmatpush1.msra.mxu0 0.0
      %426 = vmatprep.subr.mxu0 0.0
      %427 = vmatpush1.msra.mxu0 0.0
      %428 = vmatprep.subr.mxu0 0.0
      %429 = vmatpush1.msra.mxu0 0.0
      %430 = vmatprep.subr.mxu0 0.0
      %431 = vmatpush1.msra.mxu0 0.0
      %432 = vmatprep.subr.mxu0 0.0
      %433 = vmatpush1.msra.mxu0 0.0
      %434 = vmatprep.subr.mxu0 0.0
      %435 = vmatpush1.msra.mxu0 0.0
      %436 = vmatprep.subr.mxu0 0.0
      %437 = vmatpush1.msra.mxu0 0.0
      %438 = vmatprep.subr.mxu0 0.0
      %439 = vmatpush1.msra.mxu0 0.0
      %440 = vmatprep.subr.mxu0 0.0
      %441 = vmatpush1.msra.mxu0 0.0
      %442 = vmatprep.subr.mxu0 0.0
      %443 = vmatpush1.msra.mxu0 0.0
      %444 = vmatprep.subr.mxu0 0.0
      %445 = vmatpush1.msra.mxu0 0.0
      %446 = vmatprep.subr.mxu0 0.0
      %447 = vmatpush1.msra.mxu0 0.0
      %448 = vmatprep.subr.mxu0 0.0
      %449 = vmatpush1.msra.mxu0 0.0
      %450 = vmatprep.subr.mxu0 0.0
      %451 = vmatpush1.msra.mxu0 0.0
      %452 = vmatprep.subr.mxu0 0.0
      %453 = vmatpush1.msra.mxu0 0.0
      %454 = vmatprep.subr.mxu0 0.0
      %455 = vmatpush1.msra.mxu0 0.0
      %456 = vmatprep.subr.mxu0 0.0
      %457 = vmatpush1.msra.mxu0 0.0
      %458 = vmatprep.subr.mxu0 0.0
      %459 = vmatpush1.msra.mxu0 0.0
      %460 = vmatprep.subr.mxu0 0.0
      %461 = vmatpush1.msra.mxu0 0.0
      %462 = vmatprep.subr.mxu0 0.0
      %463 = vmatpush1.msra.mxu0 0.0
      %464 = vmatprep.subr.mxu0 0.0
      %465 = vmatpush1.msra.mxu0 0.0
      %466 = vmatprep.subr.mxu0 0.0
      %467 = vmatpush1.msra.mxu0 0.0
      %468 = vmatprep.subr.mxu0 0.0
      %469 = vmatpush1.msra.mxu0 0.0
      %470 = vmatprep.subr.mxu0 0.0
      %471 = vmatpush1.msra.mxu0 0.0
      %472 = vmatprep.subr.mxu0 0.0
      %473 = vmatpush1.msra.mxu0 0.0
      %474 = vmatprep.subr.mxu0 0.0
      %475 = vmatpush1.msra.mxu0 0.0
      %476 = vmatprep.subr.mxu0 0.0
      %477 = vmatpush1.msra.mxu0 0.0
      %478 = vmatprep.subr.mxu0 0.0
      %479 = vmatpush1.msra.mxu0 0.0
      %480 = vmatprep.subr.mxu0 0.0
      %481 = vmatpush1.msra.mxu0 0.0
      %482 = vmatprep.mubr.f32.mxu0 0.0
      %483 = vmatmul.mubr.f32.gmra.mrb[0].mxu0 %v407
      %v484 = vpop.f32.mrb[0].mxu0
      %v485 = vadd.f32 0.0, %v484
      %v486 = vpop.f32.mrb[0].mxu0
      %487 = vmatprep.mubr.f32.mxu0 0.0
      %488 = vmatmul.mubr.f32.gmra.mrb[0].mxu0 %v410
      %v489 = vpop.f32.mrb[0].mxu0
      %v490 = vadd.f32 0.0, %v489
      %v491 = vpop.f32.mrb[0].mxu0
      %492 = vmatprep.mubr.f32.mxu0 0.0
      %493 = vmatmul.mubr.f32.gmra.mrb[0].mxu0 %v413
      %v494 = vpop.f32.mrb[0].mxu0
      %v495 = vadd.f32 0.0, %v494
      %v496 = vpop.f32.mrb[0].mxu0
      %497 = vmatprep.mubr.f32.mxu0 0.0
      %498 = vmatmul.mubr.f32.gmra.mrb[0].mxu0 %v416
      %v499 = vpop.f32.mrb[0].mxu0
      %v500 = vadd.f32 0.0, %v499
      %v501 = vpop.f32.mrb[0].mxu0
      %502 = vdwg.mxu0
      %v504 = vsel %vm405, %v389, 0
      %v507 = vsel %vm405, %v390, 0
      %v510 = vsel %vm405, %v391, 0
      %v513 = vsel %vm405, %v392, 0
      %515 = vmatprep.subr.mxu0 0.0
      %516 = vmatpush1.msra.mxu0 %v401
      %517 = vmatprep.subr.mxu0 0.0
      %518 = vmatpush1.msra.mxu0 %v402
      %519 = vmatprep.subr.mxu0 0.0
      %520 = vmatpush1.msra.mxu0 0.0
      %521 = vmatprep.subr.mxu0 0.0
      %522 = vmatpush1.msra.mxu0 0.0
      %523 = vmatprep.subr.mxu0 0.0
      %524 = vmatpush1.msra.mxu0 0.0
      %525 = vmatprep.subr.mxu0 0.0
      %526 = vmatpush1.msra.mxu0 0.0
      %527 = vmatprep.subr.mxu0 0.0
      %528 = vmatpush1.msra.mxu0 0.0
      %529 = vmatprep.subr.mxu0 0.0
      %530 = vmatpush1.msra.mxu0 0.0
      %531 = vmatprep.subr.mxu0 0.0
      %532 = vmatpush1.msra.mxu0 0.0
      %533 = vmatprep.subr.mxu0 0.0
      %534 = vmatpush1.msra.mxu0 0.0
      %535 = vmatprep.subr.mxu0 0.0
      %536 = vmatpush1.msra.mxu0 0.0
      %537 = vmatprep.subr.mxu0 0.0
      %538 = vmatpush1.msra.mxu0 0.0
      %539 = vmatprep.subr.mxu0 0.0
      %540 = vmatpush1.msra.mxu0 0.0
      %541 = vmatprep.subr.mxu0 0.0
      %542 = vmatpush1.msra.mxu0 0.0
      %543 = vmatprep.subr.mxu0 0.0
      %544 = vmatpush1.msra.mxu0 0.0
      %545 = vmatprep.subr.mxu0 0.0
      %546 = vmatpush1.msra.mxu0 0.0
      %547 = vmatprep.subr.mxu0 0.0
      %548 = vmatpush1.msra.mxu0 0.0
      %549 = vmatprep.subr.mxu0 0.0
      %550 = vmatpush1.msra.mxu0 0.0
      %551 = vmatprep.subr.mxu0 0.0
      %552 = vmatpush1.msra.mxu0 0.0
      %553 = vmatprep.subr.mxu0 0.0
      %554 = vmatpush1.msra.mxu0 0.0
      %555 = vmatprep.subr.mxu0 0.0
      %556 = vmatpush1.msra.mxu0 0.0
      %557 = vmatprep.subr.mxu0 0.0
      %558 = vmatpush1.msra.mxu0 0.0
      %559 = vmatprep.subr.mxu0 0.0
      %560 = vmatpush1.msra.mxu0 0.0
      %561 = vmatprep.subr.mxu0 0.0
      %562 = vmatpush1.msra.mxu0 0.0
      %563 = vmatprep.subr.mxu0 0.0
      %564 = vmatpush1.msra.mxu0 0.0
      %565 = vmatprep.subr.mxu0 0.0
      %566 = vmatpush1.msra.mxu0 0.0
      %567 = vmatprep.subr.mxu0 0.0
      %568 = vmatpush1.msra.mxu0 0.0
      %569 = vmatprep.subr.mxu0 0.0
      %570 = vmatpush1.msra.mxu0 0.0
      %571 = vmatprep.subr.mxu0 0.0
      %572 = vmatpush1.msra.mxu0 0.0
      %573 = vmatprep.subr.mxu0 0.0
      %574 = vmatpush1.msra.mxu0 0.0
      %575 = vmatprep.subr.mxu0 0.0
      %576 = vmatpush1.msra.mxu0 0.0
      %577 = vmatprep.subr.mxu0 0.0
      %578 = vmatpush1.msra.mxu0 0.0
      %579 = vmatprep.mubr.f32.mxu0 0.0
      %580 = vmatmul.mubr.f32.gmra.mrb[0].mxu0 %v504
      %v581 = vpop.f32.mrb[0].mxu0
      %v582 = vadd.f32 %v485, %v581
      %v583 = vpop.f32.mrb[0].mxu0
      %584 = vmatprep.mubr.f32.mxu0 0.0
      %585 = vmatmul.mubr.f32.gmra.mrb[0].mxu0 %v507
      %v586 = vpop.f32.mrb[0].mxu0
      %v587 = vadd.f32 %v490, %v586
      %v588 = vpop.f32.mrb[0].mxu0
      %589 = vmatprep.mubr.f32.mxu0 0.0
      %590 = vmatmul.mubr.f32.gmra.mrb[0].mxu0 %v510
      %v591 = vpop.f32.mrb[0].mxu0
      %v592 = vadd.f32 %v495, %v591
      %v593 = vpop.f32.mrb[0].mxu0
      %594 = vmatprep.mubr.f32.mxu0 0.0
      %595 = vmatmul.mubr.f32.gmra.mrb[0].mxu0 %v513
      %v596 = vpop.f32.mrb[0].mxu0
      %v597 = vadd.f32 %v500, %v596
      %v598 = vpop.f32.mrb[0].mxu0
      %599 = vdwg.mxu0
      %v600 = vld [vmem:[%s373] sm:$0xff]
      %v601 = vld [vmem:[%s373 + $0x8] sm:$0xff]
      %v602 = vld [vmem:[%s380] sm:$0xff]
      %v603 = vld [vmem:[%s380 + $0x8] sm:$0xff]
      %604 = vmatprep.subr.mxu0 0.0
      %605 = vmatpush1.msra.mxu0 %v602
      %606 = vmatprep.subr.mxu0 0.0
      %607 = vmatpush1.msra.mxu0 %v603
      %608 = vmatprep.subr.mxu0 0.0
      %609 = vmatpush1.msra.mxu0 0.0
      %610 = vmatprep.subr.mxu0 0.0
      %611 = vmatpush1.msra.mxu0 0.0
      %612 = vmatprep.subr.mxu0 0.0
      %613 = vmatpush1.msra.mxu0 0.0
      %614 = vmatprep.subr.mxu0 0.0
      %615 = vmatpush1.msra.mxu0 0.0
      %616 = vmatprep.subr.mxu0 0.0
      %617 = vmatpush1.msra.mxu0 0.0
      %618 = vmatprep.subr.mxu0 0.0
      %619 = vmatpush1.msra.mxu0 0.0
      %620 = vmatprep.subr.mxu0 0.0
      %621 = vmatpush1.msra.mxu0 0.0
      %622 = vmatprep.subr.mxu0 0.0
      %623 = vmatpush1.msra.mxu0 0.0
      %624 = vmatprep.subr.mxu0 0.0
      %625 = vmatpush1.msra.mxu0 0.0
      %626 = vmatprep.subr.mxu0 0.0
      %627 = vmatpush1.msra.mxu0 0.0
      %628 = vmatprep.subr.mxu0 0.0
      %629 = vmatpush1.msra.mxu0 0.0
      %630 = vmatprep.subr.mxu0 0.0
      %631 = vmatpush1.msra.mxu0 0.0
      %632 = vmatprep.subr.mxu0 0.0
      %633 = vmatpush1.msra.mxu0 0.0
      %634 = vmatprep.subr.mxu0 0.0
      %635 = vmatpush1.msra.mxu0 0.0
      %636 = vmatprep.subr.mxu0 0.0
      %637 = vmatpush1.msra.mxu0 0.0
      %638 = vmatprep.subr.mxu0 0.0
      %639 = vmatpush1.msra.mxu0 0.0
      %640 = vmatprep.subr.mxu0 0.0
      %641 = vmatpush1.msra.mxu0 0.0
      %642 = vmatprep.subr.mxu0 0.0
      %643 = vmatpush1.msra.mxu0 0.0
      %644 = vmatprep.subr.mxu0 0.0
      %645 = vmatpush1.msra.mxu0 0.0
      %646 = vmatprep.subr.mxu0 0.0
      %647 = vmatpush1.msra.mxu0 0.0
      %648 = vmatprep.subr.mxu0 0.0
      %649 = vmatpush1.msra.mxu0 0.0
      %650 = vmatprep.subr.mxu0 0.0
      %651 = vmatpush1.msra.mxu0 0.0
      %652 = vmatprep.subr.mxu0 0.0
      %653 = vmatpush1.msra.mxu0 0.0
      %654 = vmatprep.subr.mxu0 0.0
      %655 = vmatpush1.msra.mxu0 0.0
      %656 = vmatprep.subr.mxu0 0.0
      %657 = vmatpush1.msra.mxu0 0.0
      %658 = vmatprep.subr.mxu0 0.0
      %659 = vmatpush1.msra.mxu0 0.0
      %660 = vmatprep.subr.mxu0 0.0
      %661 = vmatpush1.msra.mxu0 0.0
      %662 = vmatprep.subr.mxu0 0.0
      %663 = vmatpush1.msra.mxu0 0.0
      %664 = vmatprep.subr.mxu0 0.0
      %665 = vmatpush1.msra.mxu0 0.0
      %666 = vmatprep.subr.mxu0 0.0
      %667 = vmatpush1.msra.mxu0 0.0
      %668 = vmatprep.mubr.f32.mxu0 0.0
      %669 = vmatmul.mubr.f32.gmra.mrb[0].mxu0 %v407
      %v670 = vpop.f32.mrb[0].mxu0
      %v671 = vadd.f32 0.0, %v670
      %v672 = vpop.f32.mrb[0].mxu0
      %673 = vmatprep.mubr.f32.mxu0 0.0
      %674 = vmatmul.mubr.f32.gmra.mrb[0].mxu0 %v410
      %v675 = vpop.f32.mrb[0].mxu0
      %v676 = vadd.f32 0.0, %v675
      %v677 = vpop.f32.mrb[0].mxu0
      %678 = vmatprep.mubr.f32.mxu0 0.0
      %679 = vmatmul.mubr.f32.gmra.mrb[0].mxu0 %v413
      %v680 = vpop.f32.mrb[0].mxu0
      %v681 = vadd.f32 0.0, %v680
      %v682 = vpop.f32.mrb[0].mxu0
      %683 = vmatprep.mubr.f32.mxu0 0.0
      %684 = vmatmul.mubr.f32.gmra.mrb[0].mxu0 %v416
      %v685 = vpop.f32.mrb[0].mxu0
      %v686 = vadd.f32 0.0, %v685
      %v687 = vpop.f32.mrb[0].mxu0
      %688 = vdwg.mxu0
      %689 = vmatprep.subr.mxu0 0.0
      %690 = vmatpush1.msra.mxu0 %v600
      %691 = vmatprep.subr.mxu0 0.0
      %692 = vmatpush1.msra.mxu0 %v601
      %693 = vmatprep.subr.mxu0 0.0
      %694 = vmatpush1.msra.mxu0 0.0
      %695 = vmatprep.subr.mxu0 0.0
      %696 = vmatpush1.msra.mxu0 0.0
      %697 = vmatprep.subr.mxu0 0.0
      %698 = vmatpush1.msra.mxu0 0.0
      %699 = vmatprep.subr.mxu0 0.0
      %700 = vmatpush1.msra.mxu0 0.0
      %701 = vmatprep.subr.mxu0 0.0
      %702 = vmatpush1.msra.mxu0 0.0
      %703 = vmatprep.subr.mxu0 0.0
      %704 = vmatpush1.msra.mxu0 0.0
      %705 = vmatprep.subr.mxu0 0.0
      %706 = vmatpush1.msra.mxu0 0.0
      %707 = vmatprep.subr.mxu0 0.0
      %708 = vmatpush1.msra.mxu0 0.0
      %709 = vmatprep.subr.mxu0 0.0
      %710 = vmatpush1.msra.mxu0 0.0
      %711 = vmatprep.subr.mxu0 0.0
      %712 = vmatpush1.msra.mxu0 0.0
      %713 = vmatprep.subr.mxu0 0.0
      %714 = vmatpush1.msra.mxu0 0.0
      %715 = vmatprep.subr.mxu0 0.0
      %716 = vmatpush1.msra.mxu0 0.0
      %717 = vmatprep.subr.mxu0 0.0
      %718 = vmatpush1.msra.mxu0 0.0
      %719 = vmatprep.subr.mxu0 0.0
      %720 = vmatpush1.msra.mxu0 0.0
      %721 = vmatprep.subr.mxu0 0.0
      %722 = vmatpush1.msra.mxu0 0.0
      %723 = vmatprep.subr.mxu0 0.0
      %724 = vmatpush1.msra.mxu0 0.0
      %725 = vmatprep.subr.mxu0 0.0
      %726 = vmatpush1.msra.mxu0 0.0
      %727 = vmatprep.subr.mxu0 0.0
      %728 = vmatpush1.msra.mxu0 0.0
      %729 = vmatprep.subr.mxu0 0.0
      %730 = vmatpush1.msra.mxu0 0.0
      %731 = vmatprep.subr.mxu0 0.0
      %732 = vmatpush1.msra.mxu0 0.0
      %733 = vmatprep.subr.mxu0 0.0
      %734 = vmatpush1.msra.mxu0 0.0
      %735 = vmatprep.subr.mxu0 0.0
      %736 = vmatpush1.msra.mxu0 0.0
      %737 = vmatprep.subr.mxu0 0.0
      %738 = vmatpush1.msra.mxu0 0.0
      %739 = vmatprep.subr.mxu0 0.0
      %740 = vmatpush1.msra.mxu0 0.0
      %741 = vmatprep.subr.mxu0 0.0
      %742 = vmatpush1.msra.mxu0 0.0
      %743 = vmatprep.subr.mxu0 0.0
      %744 = vmatpush1.msra.mxu0 0.0
      %745 = vmatprep.subr.mxu0 0.0
      %746 = vmatpush1.msra.mxu0 0.0
      %747 = vmatprep.subr.mxu0 0.0
      %748 = vmatpush1.msra.mxu0 0.0
      %749 = vmatprep.subr.mxu0 0.0
      %750 = vmatpush1.msra.mxu0 0.0
      %751 = vmatprep.subr.mxu0 0.0
      %752 = vmatpush1.msra.mxu0 0.0
      %753 = vmatprep.mubr.f32.mxu0 0.0
      %754 = vmatmul.mubr.f32.gmra.mrb[0].mxu0 %v504
      %v755 = vpop.f32.mrb[0].mxu0
      %v756 = vadd.f32 %v671, %v755
      %v757 = vpop.f32.mrb[0].mxu0
      %758 = vmatprep.mubr.f32.mxu0 0.0
      %759 = vmatmul.mubr.f32.gmra.mrb[0].mxu0 %v507
      %v760 = vpop.f32.mrb[0].mxu0
      %v761 = vadd.f32 %v676, %v760
      %v762 = vpop.f32.mrb[0].mxu0
      %763 = vmatprep.mubr.f32.mxu0 0.0
      %764 = vmatmul.mubr.f32.gmra.mrb[0].mxu0 %v510
      %v765 = vpop.f32.mrb[0].mxu0
      %v766 = vadd.f32 %v681, %v765
      %v767 = vpop.f32.mrb[0].mxu0
      %768 = vmatprep.mubr.f32.mxu0 0.0
      %769 = vmatmul.mubr.f32.gmra.mrb[0].mxu0 %v513
      %v770 = vpop.f32.mrb[0].mxu0
      %v771 = vadd.f32 %v686, %v770
      %v772 = vpop.f32.mrb[0].mxu0
      %773 = vdwg.mxu0
      %v775 = vsel %vm405, %v756, 0
      %v778 = vsel %vm405, %v761, 0
      %v781 = vsel %vm405, %v766, 0
      %v784 = vsel %vm405, %v771, 0
      %786 = vmatprep.subr.mxu0 0.0
      %787 = vmatpush1.msra.mxu0 %v399
      %788 = vmatprep.subr.mxu0 0.0
      %789 = vmatpush1.msra.mxu0 %v400
      %790 = vmatprep.subr.mxu0 0.0
      %791 = vmatpush1.msra.mxu0 0.0
      %792 = vmatprep.subr.mxu0 0.0
      %793 = vmatpush1.msra.mxu0 0.0
      %794 = vmatprep.subr.mxu0 0.0
      %795 = vmatpush1.msra.mxu0 0.0
      %796 = vmatprep.subr.mxu0 0.0
      %797 = vmatpush1.msra.mxu0 0.0
      %798 = vmatprep.subr.mxu0 0.0
      %799 = vmatpush1.msra.mxu0 0.0
      %800 = vmatprep.subr.mxu0 0.0
      %801 = vmatpush1.msra.mxu0 0.0
      %802 = vmatprep.subr.mxu0 0.0
      %803 = vmatpush1.msra.mxu0 0.0
      %804 = vmatprep.subr.mxu0 0.0
      %805 = vmatpush1.msra.mxu0 0.0
      %806 = vmatprep.subr.mxu0 0.0
      %807 = vmatpush1.msra.mxu0 0.0
      %808 = vmatprep.subr.mxu0 0.0
      %809 = vmatpush1.msra.mxu0 0.0
      %810 = vmatprep.subr.mxu0 0.0
      %811 = vmatpush1.msra.mxu0 0.0
      %812 = vmatprep.subr.mxu0 0.0
      %813 = vmatpush1.msra.mxu0 0.0
      %814 = vmatprep.subr.mxu0 0.0
      %815 = vmatpush1.msra.mxu0 0.0
      %816 = vmatprep.subr.mxu0 0.0
      %817 = vmatpush1.msra.mxu0 0.0
      %818 = vmatprep.subr.mxu0 0.0
      %819 = vmatpush1.msra.mxu0 0.0
      %820 = vmatprep.subr.mxu0 0.0
      %821 = vmatpush1.msra.mxu0 0.0
      %822 = vmatprep.subr.mxu0 0.0
      %823 = vmatpush1.msra.mxu0 0.0
      %824 = vmatprep.subr.mxu0 0.0
      %825 = vmatpush1.msra.mxu0 0.0
      %826 = vmatprep.subr.mxu0 0.0
      %827 = vmatpush1.msra.mxu0 0.0
      %828 = vmatprep.subr.mxu0 0.0
      %829 = vmatpush1.msra.mxu0 0.0
      %830 = vmatprep.subr.mxu0 0.0
      %831 = vmatpush1.msra.mxu0 0.0
      %832 = vmatprep.subr.mxu0 0.0
      %833 = vmatpush1.msra.mxu0 0.0
      %834 = vmatprep.subr.mxu0 0.0
      %835 = vmatpush1.msra.mxu0 0.0
      %836 = vmatprep.subr.mxu0 0.0
      %837 = vmatpush1.msra.mxu0 0.0
      %838 = vmatprep.subr.mxu0 0.0
      %839 = vmatpush1.msra.mxu0 0.0
      %840 = vmatprep.subr.mxu0 0.0
      %841 = vmatpush1.msra.mxu0 0.0
      %842 = vmatprep.subr.mxu0 0.0
      %843 = vmatpush1.msra.mxu0 0.0
      %844 = vmatprep.subr.mxu0 0.0
      %845 = vmatpush1.msra.mxu0 0.0
      %846 = vmatprep.subr.mxu0 0.0
      %847 = vmatpush1.msra.mxu0 0.0
      %848 = vmatprep.subr.mxu0 0.0
      %849 = vmatpush1.msra.mxu0 0.0
      %850 = vmatprep.mubr.f32.mxu0 0.0
      %851 = vmatmul.mubr.f32.gmra.mrb[0].mxu0 %v775
      %v852 = vpop.f32.mrb[0].mxu0
      %v853 = vadd.f32 0.0, %v852
      %v854 = vpop.f32.mrb[0].mxu0
      %855 = vmatprep.mubr.f32.mxu0 0.0
      %856 = vmatmul.mubr.f32.gmra.mrb[0].mxu0 %v778
      %v857 = vpop.f32.mrb[0].mxu0
      %v858 = vadd.f32 0.0, %v857
      %v859 = vpop.f32.mrb[0].mxu0
      %860 = vmatprep.mubr.f32.mxu0 0.0
      %861 = vmatmul.mubr.f32.gmra.mrb[0].mxu0 %v781
      %v862 = vpop.f32.mrb[0].mxu0
      %v863 = vadd.f32 0.0, %v862
      %v864 = vpop.f32.mrb[0].mxu0
      %865 = vmatprep.mubr.f32.mxu0 0.0
      %866 = vmatmul.mubr.f32.gmra.mrb[0].mxu0 %v784
      %v867 = vpop.f32.mrb[0].mxu0
      %v868 = vadd.f32 0.0, %v867
      %v869 = vpop.f32.mrb[0].mxu0
      %870 = vdwg.mxu0
      %v872 = vsel %vm405, %v582, 0
      %v875 = vsel %vm405, %v587, 0
      %v878 = vsel %vm405, %v592, 0
      %v881 = vsel %vm405, %v597, 0
      %883 = vmatprep.subr.mxu0 0.0
      %884 = vmatpush1.msra.mxu0 %v397
      %885 = vmatprep.subr.mxu0 0.0
      %886 = vmatpush1.msra.mxu0 %v398
      %887 = vmatprep.subr.mxu0 0.0
      %888 = vmatpush1.msra.mxu0 0.0
      %889 = vmatprep.subr.mxu0 0.0
      %890 = vmatpush1.msra.mxu0 0.0
      %891 = vmatprep.subr.mxu0 0.0
      %892 = vmatpush1.msra.mxu0 0.0
      %893 = vmatprep.subr.mxu0 0.0
      %894 = vmatpush1.msra.mxu0 0.0
      %895 = vmatprep.subr.mxu0 0.0
      %896 = vmatpush1.msra.mxu0 0.0
      %897 = vmatprep.subr.mxu0 0.0
      %898 = vmatpush1.msra.mxu0 0.0
      %899 = vmatprep.subr.mxu0 0.0
      %900 = vmatpush1.msra.mxu0 0.0
      %901 = vmatprep.subr.mxu0 0.0
      %902 = vmatpush1.msra.mxu0 0.0
      %903 = vmatprep.subr.mxu0 0.0
      %904 = vmatpush1.msra.mxu0 0.0
      %905 = vmatprep.subr.mxu0 0.0
      %906 = vmatpush1.msra.mxu0 0.0
      %907 = vmatprep.subr.mxu0 0.0
      %908 = vmatpush1.msra.mxu0 0.0
      %909 = vmatprep.subr.mxu0 0.0
      %910 = vmatpush1.msra.mxu0 0.0
      %911 = vmatprep.subr.mxu0 0.0
      %912 = vmatpush1.msra.mxu0 0.0
      %913 = vmatprep.subr.mxu0 0.0
      %914 = vmatpush1.msra.mxu0 0.0
      %915 = vmatprep.subr.mxu0 0.0
      %916 = vmatpush1.msra.mxu0 0.0
      %917 = vmatprep.subr.mxu0 0.0
      %918 = vmatpush1.msra.mxu0 0.0
      %919 = vmatprep.subr.mxu0 0.0
      %920 = vmatpush1.msra.mxu0 0.0
      %921 = vmatprep.subr.mxu0 0.0
      %922 = vmatpush1.msra.mxu0 0.0
      %923 = vmatprep.subr.mxu0 0.0
      %924 = vmatpush1.msra.mxu0 0.0
      %925 = vmatprep.subr.mxu0 0.0
      %926 = vmatpush1.msra.mxu0 0.0
      %927 = vmatprep.subr.mxu0 0.0
      %928 = vmatpush1.msra.mxu0 0.0
      %929 = vmatprep.subr.mxu0 0.0
      %930 = vmatpush1.msra.mxu0 0.0
      %931 = vmatprep.subr.mxu0 0.0
      %932 = vmatpush1.msra.mxu0 0.0
      %933 = vmatprep.subr.mxu0 0.0
      %934 = vmatpush1.msra.mxu0 0.0
      %935 = vmatprep.subr.mxu0 0.0
      %936 = vmatpush1.msra.mxu0 0.0
      %937 = vmatprep.subr.mxu0 0.0
      %938 = vmatpush1.msra.mxu0 0.0
      %939 = vmatprep.subr.mxu0 0.0
      %940 = vmatpush1.msra.mxu0 0.0
      %941 = vmatprep.subr.mxu0 0.0
      %942 = vmatpush1.msra.mxu0 0.0
      %943 = vmatprep.subr.mxu0 0.0
      %944 = vmatpush1.msra.mxu0 0.0
      %945 = vmatprep.subr.mxu0 0.0
      %946 = vmatpush1.msra.mxu0 0.0
      %947 = vmatprep.mubr.f32.mxu0 0.0
      %948 = vmatmul.mubr.f32.gmra.mrb[0].mxu0 %v872
      %v949 = vpop.f32.mrb[0].mxu0
      %v950 = vadd.f32 %v853, %v949
      %v951 = vpop.f32.mrb[0].mxu0
      %952 = vmatprep.mubr.f32.mxu0 0.0
      %953 = vmatmul.mubr.f32.gmra.mrb[0].mxu0 %v875
      %v954 = vpop.f32.mrb[0].mxu0
      %v955 = vadd.f32 %v858, %v954
      %v956 = vpop.f32.mrb[0].mxu0
      %957 = vmatprep.mubr.f32.mxu0 0.0
      %958 = vmatmul.mubr.f32.gmra.mrb[0].mxu0 %v878
      %v959 = vpop.f32.mrb[0].mxu0
      %v960 = vadd.f32 %v863, %v959
      %v961 = vpop.f32.mrb[0].mxu0
      %962 = vmatprep.mubr.f32.mxu0 0.0
      %963 = vmatmul.mubr.f32.gmra.mrb[0].mxu0 %v881
      %v964 = vpop.f32.mrb[0].mxu0
      %v965 = vadd.f32 %v868, %v964
      %v966 = vpop.f32.mrb[0].mxu0
      %967 = vdwg.mxu0
      %vm968 = vcmask 261120
      %969 = vst.msk [vmem:[%s387] sm:$0xff] %vm968, %v950
      %970 = vst.msk [vmem:[%s387 + $0x8] sm:$0xff] %vm968, %v955
      %971 = vst.msk [vmem:[%s387 + $0x10] sm:$0xff] %vm968, %v960
      %972 = vst.msk [vmem:[%s387 + $0x18] sm:$0xff] %vm968, %v965
      %s973 = scalar_lea.vmem %s359, 16
      %v974 = vld [vmem:[%s973] sm:$0xff]
      %v975 = vld [vmem:[%s973 + $0x8] sm:$0xff]
      %s976 = scalar_lea.vmem %s366, 16
      %v977 = vld [vmem:[%s976] sm:$0xff]
      %v978 = vld [vmem:[%s976 + $0x8] sm:$0xff]
      %979 = vmatprep.subr.mxu0 0.0
      %980 = vmatpush1.msra.mxu0 %v977
      %981 = vmatprep.subr.mxu0 0.0
      %982 = vmatpush1.msra.mxu0 %v978
      %983 = vmatprep.subr.mxu0 0.0
      %984 = vmatpush1.msra.mxu0 0.0
      %985 = vmatprep.subr.mxu0 0.0
      %986 = vmatpush1.msra.mxu0 0.0
      %987 = vmatprep.subr.mxu0 0.0
      %988 = vmatpush1.msra.mxu0 0.0
      %989 = vmatprep.subr.mxu0 0.0
      %990 = vmatpush1.msra.mxu0 0.0
      %991 = vmatprep.subr.mxu0 0.0
      %992 = vmatpush1.msra.mxu0 0.0
      %993 = vmatprep.subr.mxu0 0.0
      %994 = vmatpush1.msra.mxu0 0.0
      %995 = vmatprep.subr.mxu0 0.0
      %996 = vmatpush1.msra.mxu0 0.0
      %997 = vmatprep.subr.mxu0 0.0
      %998 = vmatpush1.msra.mxu0 0.0
      %999 = vmatprep.subr.mxu0 0.0
      %1000 = vmatpush1.msra.mxu0 0.0
      %1001 = vmatprep.subr.mxu0 0.0
      %1002 = vmatpush1.msra.mxu0 0.0
      %1003 = vmatprep.subr.mxu0 0.0
      %1004 = vmatpush1.msra.mxu0 0.0
      %1005 = vmatprep.subr.mxu0 0.0
      %1006 = vmatpush1.msra.mxu0 0.0
      %1007 = vmatprep.subr.mxu0 0.0
      %1008 = vmatpush1.msra.mxu0 0.0
      %1009 = vmatprep.subr.mxu0 0.0
      %1010 = vmatpush1.msra.mxu0 0.0
      %1011 = vmatprep.subr.mxu0 0.0
      %1012 = vmatpush1.msra.mxu0 0.0
      %1013 = vmatprep.subr.mxu0 0.0
      %1014 = vmatpush1.msra.mxu0 0.0
      %1015 = vmatprep.subr.mxu0 0.0
      %1016 = vmatpush1.msra.mxu0 0.0
      %1017 = vmatprep.subr.mxu0 0.0
      %1018 = vmatpush1.msra.mxu0 0.0
      %1019 = vmatprep.subr.mxu0 0.0
      %1020 = vmatpush1.msra.mxu0 0.0
      %1021 = vmatprep.subr.mxu0 0.0
      %1022 = vmatpush1.msra.mxu0 0.0
      %1023 = vmatprep.subr.mxu0 0.0
      %1024 = vmatpush1.msra.mxu0 0.0
      %1025 = vmatprep.subr.mxu0 0.0
      %1026 = vmatpush1.msra.mxu0 0.0
      %1027 = vmatprep.subr.mxu0 0.0
      %1028 = vmatpush1.msra.mxu0 0.0
      %1029 = vmatprep.subr.mxu0 0.0
      %1030 = vmatpush1.msra.mxu0 0.0
      %1031 = vmatprep.subr.mxu0 0.0
      %1032 = vmatpush1.msra.mxu0 0.0
      %1033 = vmatprep.subr.mxu0 0.0
      %1034 = vmatpush1.msra.mxu0 0.0
      %1035 = vmatprep.subr.mxu0 0.0
      %1036 = vmatpush1.msra.mxu0 0.0
      %1037 = vmatprep.subr.mxu0 0.0
      %1038 = vmatpush1.msra.mxu0 0.0
      %1039 = vmatprep.subr.mxu0 0.0
      %1040 = vmatpush1.msra.mxu0 0.0
      %1041 = vmatprep.subr.mxu0 0.0
      %1042 = vmatpush1.msra.mxu0 0.0
      %1043 = vmatprep.mubr.f32.mxu0 0.0
      %1044 = vmatmul.mubr.f32.gmra.mrb[0].mxu0 %v407
      %v1045 = vpop.f32.mrb[0].mxu0
      %v1046 = vadd.f32 0.0, %v1045
      %v1047 = vpop.f32.mrb[0].mxu0
      %1048 = vmatprep.mubr.f32.mxu0 0.0
      %1049 = vmatmul.mubr.f32.gmra.mrb[0].mxu0 %v410
      %v1050 = vpop.f32.mrb[0].mxu0
      %v1051 = vadd.f32 0.0, %v1050
      %v1052 = vpop.f32.mrb[0].mxu0
      %1053 = vmatprep.mubr.f32.mxu0 0.0
      %1054 = vmatmul.mubr.f32.gmra.mrb[0].mxu0 %v413
      %v1055 = vpop.f32.mrb[0].mxu0
      %v1056 = vadd.f32 0.0, %v1055
      %v1057 = vpop.f32.mrb[0].mxu0
      %1058 = vmatprep.mubr.f32.mxu0 0.0
      %1059 = vmatmul.mubr.f32.gmra.mrb[0].mxu0 %v416
      %v1060 = vpop.f32.mrb[0].mxu0
      %v1061 = vadd.f32 0.0, %v1060
      %v1062 = vpop.f32.mrb[0].mxu0
      %1063 = vdwg.mxu0
      %1064 = vmatprep.subr.mxu0 0.0
      %1065 = vmatpush1.msra.mxu0 %v974
      %1066 = vmatprep.subr.mxu0 0.0
      %1067 = vmatpush1.msra.mxu0 %v975
      %1068 = vmatprep.subr.mxu0 0.0
      %1069 = vmatpush1.msra.mxu0 0.0
      %1070 = vmatprep.subr.mxu0 0.0
      %1071 = vmatpush1.msra.mxu0 0.0
      %1072 = vmatprep.subr.mxu0 0.0
      %1073 = vmatpush1.msra.mxu0 0.0
      %1074 = vmatprep.subr.mxu0 0.0
      %1075 = vmatpush1.msra.mxu0 0.0
      %1076 = vmatprep.subr.mxu0 0.0
      %1077 = vmatpush1.msra.mxu0 0.0
      %1078 = vmatprep.subr.mxu0 0.0
      %1079 = vmatpush1.msra.mxu0 0.0
      %1080 = vmatprep.subr.mxu0 0.0
      %1081 = vmatpush1.msra.mxu0 0.0
      %1082 = vmatprep.subr.mxu0 0.0
      %1083 = vmatpush1.msra.mxu0 0.0
      %1084 = vmatprep.subr.mxu0 0.0
      %1085 = vmatpush1.msra.mxu0 0.0
      %1086 = vmatprep.subr.mxu0 0.0
      %1087 = vmatpush1.msra.mxu0 0.0
      %1088 = vmatprep.subr.mxu0 0.0
      %1089 = vmatpush1.msra.mxu0 0.0
      %1090 = vmatprep.subr.mxu0 0.0
      %1091 = vmatpush1.msra.mxu0 0.0
      %1092 = vmatprep.subr.mxu0 0.0
      %1093 = vmatpush1.msra.mxu0 0.0
      %1094 = vmatprep.subr.mxu0 0.0
      %1095 = vmatpush1.msra.mxu0 0.0
      %1096 = vmatprep.subr.mxu0 0.0
      %1097 = vmatpush1.msra.mxu0 0.0
      %1098 = vmatprep.subr.mxu0 0.0
      %1099 = vmatpush1.msra.mxu0 0.0
      %1100 = vmatprep.subr.mxu0 0.0
      %1101 = vmatpush1.msra.mxu0 0.0
      %1102 = vmatprep.subr.mxu0 0.0
      %1103 = vmatpush1.msra.mxu0 0.0
      %1104 = vmatprep.subr.mxu0 0.0
      %1105 = vmatpush1.msra.mxu0 0.0
      %1106 = vmatprep.subr.mxu0 0.0
      %1107 = vmatpush1.msra.mxu0 0.0
      %1108 = vmatprep.subr.mxu0 0.0
      %1109 = vmatpush1.msra.mxu0 0.0
      %1110 = vmatprep.subr.mxu0 0.0
      %1111 = vmatpush1.msra.mxu0 0.0
      %1112 = vmatprep.subr.mxu0 0.0
      %1113 = vmatpush1.msra.mxu0 0.0
      %1114 = vmatprep.subr.mxu0 0.0
      %1115 = vmatpush1.msra.mxu0 0.0
      %1116 = vmatprep.subr.mxu0 0.0
      %1117 = vmatpush1.msra.mxu0 0.0
      %1118 = vmatprep.subr.mxu0 0.0
      %1119 = vmatpush1.msra.mxu0 0.0
      %1120 = vmatprep.subr.mxu0 0.0
      %1121 = vmatpush1.msra.mxu0 0.0
      %1122 = vmatprep.subr.mxu0 0.0
      %1123 = vmatpush1.msra.mxu0 0.0
      %1124 = vmatprep.subr.mxu0 0.0
      %1125 = vmatpush1.msra.mxu0 0.0
      %1126 = vmatprep.subr.mxu0 0.0
      %1127 = vmatpush1.msra.mxu0 0.0
      %1128 = vmatprep.mubr.f32.mxu0 0.0
      %1129 = vmatmul.mubr.f32.gmra.mrb[0].mxu0 %v504
      %v1130 = vpop.f32.mrb[0].mxu0
      %v1131 = vadd.f32 %v1046, %v1130
      %v1132 = vpop.f32.mrb[0].mxu0
      %1133 = vmatprep.mubr.f32.mxu0 0.0
      %1134 = vmatmul.mubr.f32.gmra.mrb[0].mxu0 %v507
      %v1135 = vpop.f32.mrb[0].mxu0
      %v1136 = vadd.f32 %v1051, %v1135
      %v1137 = vpop.f32.mrb[0].mxu0
      %1138 = vmatprep.mubr.f32.mxu0 0.0
      %1139 = vmatmul.mubr.f32.gmra.mrb[0].mxu0 %v510
      %v1140 = vpop.f32.mrb[0].mxu0
      %v1141 = vadd.f32 %v1056, %v1140
      %v1142 = vpop.f32.mrb[0].mxu0
      %1143 = vmatprep.mubr.f32.mxu0 0.0
      %1144 = vmatmul.mubr.f32.gmra.mrb[0].mxu0 %v513
      %v1145 = vpop.f32.mrb[0].mxu0
      %v1146 = vadd.f32 %v1061, %v1145
      %v1147 = vpop.f32.mrb[0].mxu0
      %1148 = vdwg.mxu0
      %s1149 = scalar_lea.vmem %s373, 16
      %v1150 = vld [vmem:[%s1149] sm:$0xff]
      %v1151 = vld [vmem:[%s1149 + $0x8] sm:$0xff]
      %s1152 = scalar_lea.vmem %s380, 16
      %v1153 = vld [vmem:[%s1152] sm:$0xff]
      %v1154 = vld [vmem:[%s1152 + $0x8] sm:$0xff]
      %1155 = vmatprep.subr.mxu0 0.0
      %1156 = vmatpush1.msra.mxu0 %v1153
      %1157 = vmatprep.subr.mxu0 0.0
      %1158 = vmatpush1.msra.mxu0 %v1154
      %1159 = vmatprep.subr.mxu0 0.0
      %1160 = vmatpush1.msra.mxu0 0.0
      %1161 = vmatprep.subr.mxu0 0.0
      %1162 = vmatpush1.msra.mxu0 0.0
      %1163 = vmatprep.subr.mxu0 0.0
      %1164 = vmatpush1.msra.mxu0 0.0
      %1165 = vmatprep.subr.mxu0 0.0
      %1166 = vmatpush1.msra.mxu0 0.0
      %1167 = vmatprep.subr.mxu0 0.0
      %1168 = vmatpush1.msra.mxu0 0.0
      %1169 = vmatprep.subr.mxu0 0.0
      %1170 = vmatpush1.msra.mxu0 0.0
      %1171 = vmatprep.subr.mxu0 0.0
      %1172 = vmatpush1.msra.mxu0 0.0
      %1173 = vmatprep.subr.mxu0 0.0
      %1174 = vmatpush1.msra.mxu0 0.0
      %1175 = vmatprep.subr.mxu0 0.0
      %1176 = vmatpush1.msra.mxu0 0.0
      %1177 = vmatprep.subr.mxu0 0.0
      %1178 = vmatpush1.msra.mxu0 0.0
      %1179 = vmatprep.subr.mxu0 0.0
      %1180 = vmatpush1.msra.mxu0 0.0
      %1181 = vmatprep.subr.mxu0 0.0
      %1182 = vmatpush1.msra.mxu0 0.0
      %1183 = vmatprep.subr.mxu0 0.0
      %1184 = vmatpush1.msra.mxu0 0.0
      %1185 = vmatprep.subr.mxu0 0.0
      %1186 = vmatpush1.msra.mxu0 0.0
      %1187 = vmatprep.subr.mxu0 0.0
      %1188 = vmatpush1.msra.mxu0 0.0
      %1189 = vmatprep.subr.mxu0 0.0
      %1190 = vmatpush1.msra.mxu0 0.0
      %1191 = vmatprep.subr.mxu0 0.0
      %1192 = vmatpush1.msra.mxu0 0.0
      %1193 = vmatprep.subr.mxu0 0.0
      %1194 = vmatpush1.msra.mxu0 0.0
      %1195 = vmatprep.subr.mxu0 0.0
      %1196 = vmatpush1.msra.mxu0 0.0
      %1197 = vmatprep.subr.mxu0 0.0
      %1198 = vmatpush1.msra.mxu0 0.0
      %1199 = vmatprep.subr.mxu0 0.0
      %1200 = vmatpush1.msra.mxu0 0.0
      %1201 = vmatprep.subr.mxu0 0.0
      %1202 = vmatpush1.msra.mxu0 0.0
      %1203 = vmatprep.subr.mxu0 0.0
      %1204 = vmatpush1.msra.mxu0 0.0
      %1205 = vmatprep.subr.mxu0 0.0
      %1206 = vmatpush1.msra.mxu0 0.0
      %1207 = vmatprep.subr.mxu0 0.0
      %1208 = vmatpush1.msra.mxu0 0.0
      %1209 = vmatprep.subr.mxu0 0.0
      %1210 = vmatpush1.msra.mxu0 0.0
      %1211 = vmatprep.subr.mxu0 0.0
      %1212 = vmatpush1.msra.mxu0 0.0
      %1213 = vmatprep.subr.mxu0 0.0
      %1214 = vmatpush1.msra.mxu0 0.0
      %1215 = vmatprep.subr.mxu0 0.0
      %1216 = vmatpush1.msra.mxu0 0.0
      %1217 = vmatprep.subr.mxu0 0.0
      %1218 = vmatpush1.msra.mxu0 0.0
      %1219 = vmatprep.mubr.f32.mxu0 0.0
      %1220 = vmatmul.mubr.f32.gmra.mrb[0].mxu0 %v407
      %v1221 = vpop.f32.mrb[0].mxu0
      %v1222 = vadd.f32 0.0, %v1221
      %v1223 = vpop.f32.mrb[0].mxu0
      %1224 = vmatprep.mubr.f32.mxu0 0.0
      %1225 = vmatmul.mubr.f32.gmra.mrb[0].mxu0 %v410
      %v1226 = vpop.f32.mrb[0].mxu0
      %v1227 = vadd.f32 0.0, %v1226
      %v1228 = vpop.f32.mrb[0].mxu0
      %1229 = vmatprep.mubr.f32.mxu0 0.0
      %1230 = vmatmul.mubr.f32.gmra.mrb[0].mxu0 %v413
      %v1231 = vpop.f32.mrb[0].mxu0
      %v1232 = vadd.f32 0.0, %v1231
      %v1233 = vpop.f32.mrb[0].mxu0
      %1234 = vmatprep.mubr.f32.mxu0 0.0
      %1235 = vmatmul.mubr.f32.gmra.mrb[0].mxu0 %v416
      %v1236 = vpop.f32.mrb[0].mxu0
      %v1237 = vadd.f32 0.0, %v1236
      %v1238 = vpop.f32.mrb[0].mxu0
      %1239 = vdwg.mxu0
      %1240 = vmatprep.subr.mxu0 0.0
      %1241 = vmatpush1.msra.mxu0 %v1150
      %1242 = vmatprep.subr.mxu0 0.0
      %1243 = vmatpush1.msra.mxu0 %v1151
      %1244 = vmatprep.subr.mxu0 0.0
      %1245 = vmatpush1.msra.mxu0 0.0
      %1246 = vmatprep.subr.mxu0 0.0
      %1247 = vmatpush1.msra.mxu0 0.0
      %1248 = vmatprep.subr.mxu0 0.0
      %1249 = vmatpush1.msra.mxu0 0.0
      %1250 = vmatprep.subr.mxu0 0.0
      %1251 = vmatpush1.msra.mxu0 0.0
      %1252 = vmatprep.subr.mxu0 0.0
      %1253 = vmatpush1.msra.mxu0 0.0
      %1254 = vmatprep.subr.mxu0 0.0
      %1255 = vmatpush1.msra.mxu0 0.0
      %1256 = vmatprep.subr.mxu0 0.0
      %1257 = vmatpush1.msra.mxu0 0.0
      %1258 = vmatprep.subr.mxu0 0.0
      %1259 = vmatpush1.msra.mxu0 0.0
      %1260 = vmatprep.subr.mxu0 0.0
      %1261 = vmatpush1.msra.mxu0 0.0
      %1262 = vmatprep.subr.mxu0 0.0
      %1263 = vmatpush1.msra.mxu0 0.0
      %1264 = vmatprep.subr.mxu0 0.0
      %1265 = vmatpush1.msra.mxu0 0.0
      %1266 = vmatprep.subr.mxu0 0.0
      %1267 = vmatpush1.msra.mxu0 0.0
      %1268 = vmatprep.subr.mxu0 0.0
      %1269 = vmatpush1.msra.mxu0 0.0
      %1270 = vmatprep.subr.mxu0 0.0
      %1271 = vmatpush1.msra.mxu0 0.0
      %1272 = vmatprep.subr.mxu0 0.0
      %1273 = vmatpush1.msra.mxu0 0.0
      %1274 = vmatprep.subr.mxu0 0.0
      %1275 = vmatpush1.msra.mxu0 0.0
      %1276 = vmatprep.subr.mxu0 0.0
      %1277 = vmatpush1.msra.mxu0 0.0
      %1278 = vmatprep.subr.mxu0 0.0
      %1279 = vmatpush1.msra.mxu0 0.0
      %1280 = vmatprep.subr.mxu0 0.0
      %1281 = vmatpush1.msra.mxu0 0.0
      %1282 = vmatprep.subr.mxu0 0.0
      %1283 = vmatpush1.msra.mxu0 0.0
      %1284 = vmatprep.subr.mxu0 0.0
      %1285 = vmatpush1.msra.mxu0 0.0
      %1286 = vmatprep.subr.mxu0 0.0
      %1287 = vmatpush1.msra.mxu0 0.0
      %1288 = vmatprep.subr.mxu0 0.0
      %1289 = vmatpush1.msra.mxu0 0.0
      %1290 = vmatprep.subr.mxu0 0.0
      %1291 = vmatpush1.msra.mxu0 0.0
      %1292 = vmatprep.subr.mxu0 0.0
      %1293 = vmatpush1.msra.mxu0 0.0
      %1294 = vmatprep.subr.mxu0 0.0
      %1295 = vmatpush1.msra.mxu0 0.0
      %1296 = vmatprep.subr.mxu0 0.0
      %1297 = vmatpush1.msra.mxu0 0.0
      %1298 = vmatprep.subr.mxu0 0.0
      %1299 = vmatpush1.msra.mxu0 0.0
      %1300 = vmatprep.subr.mxu0 0.0
      %1301 = vmatpush1.msra.mxu0 0.0
      %1302 = vmatprep.subr.mxu0 0.0
      %1303 = vmatpush1.msra.mxu0 0.0
      %1304 = vmatprep.mubr.f32.mxu0 0.0
      %1305 = vmatmul.mubr.f32.gmra.mrb[0].mxu0 %v504
      %v1306 = vpop.f32.mrb[0].mxu0
      %v1307 = vadd.f32 %v1222, %v1306
      %v1308 = vpop.f32.mrb[0].mxu0
      %1309 = vmatprep.mubr.f32.mxu0 0.0
      %1310 = vmatmul.mubr.f32.gmra.mrb[0].mxu0 %v507
      %v1311 = vpop.f32.mrb[0].mxu0
      %v1312 = vadd.f32 %v1227, %v1311
      %v1313 = vpop.f32.mrb[0].mxu0
      %1314 = vmatprep.mubr.f32.mxu0 0.0
      %1315 = vmatmul.mubr.f32.gmra.mrb[0].mxu0 %v510
      %v1316 = vpop.f32.mrb[0].mxu0
      %v1317 = vadd.f32 %v1232, %v1316
      %v1318 = vpop.f32.mrb[0].mxu0
      %1319 = vmatprep.mubr.f32.mxu0 0.0
      %1320 = vmatmul.mubr.f32.gmra.mrb[0].mxu0 %v513
      %v1321 = vpop.f32.mrb[0].mxu0
      %v1322 = vadd.f32 %v1237, %v1321
      %v1323 = vpop.f32.mrb[0].mxu0
      %1324 = vdwg.mxu0
      %v1326 = vsel %vm405, %v1307, 0
      %v1329 = vsel %vm405, %v1312, 0
      %v1332 = vsel %vm405, %v1317, 0
      %v1335 = vsel %vm405, %v1322, 0
      %1337 = vmatprep.subr.mxu0 0.0
      %1338 = vmatpush1.msra.mxu0 %v399
      %1339 = vmatprep.subr.mxu0 0.0
      %1340 = vmatpush1.msra.mxu0 %v400
      %1341 = vmatprep.subr.mxu0 0.0
      %1342 = vmatpush1.msra.mxu0 0.0
      %1343 = vmatprep.subr.mxu0 0.0
      %1344 = vmatpush1.msra.mxu0 0.0
      %1345 = vmatprep.subr.mxu0 0.0
      %1346 = vmatpush1.msra.mxu0 0.0
      %1347 = vmatprep.subr.mxu0 0.0
      %1348 = vmatpush1.msra.mxu0 0.0
      %1349 = vmatprep.subr.mxu0 0.0
      %1350 = vmatpush1.msra.mxu0 0.0
      %1351 = vmatprep.subr.mxu0 0.0
      %1352 = vmatpush1.msra.mxu0 0.0
      %1353 = vmatprep.subr.mxu0 0.0
      %1354 = vmatpush1.msra.mxu0 0.0
      %1355 = vmatprep.subr.mxu0 0.0
      %1356 = vmatpush1.msra.mxu0 0.0
      %1357 = vmatprep.subr.mxu0 0.0
      %1358 = vmatpush1.msra.mxu0 0.0
      %1359 = vmatprep.subr.mxu0 0.0
      %1360 = vmatpush1.msra.mxu0 0.0
      %1361 = vmatprep.subr.mxu0 0.0
      %1362 = vmatpush1.msra.mxu0 0.0
      %1363 = vmatprep.subr.mxu0 0.0
      %1364 = vmatpush1.msra.mxu0 0.0
      %1365 = vmatprep.subr.mxu0 0.0
      %1366 = vmatpush1.msra.mxu0 0.0
      %1367 = vmatprep.subr.mxu0 0.0
      %1368 = vmatpush1.msra.mxu0 0.0
      %1369 = vmatprep.subr.mxu0 0.0
      %1370 = vmatpush1.msra.mxu0 0.0
      %1371 = vmatprep.subr.mxu0 0.0
      %1372 = vmatpush1.msra.mxu0 0.0
      %1373 = vmatprep.subr.mxu0 0.0
      %1374 = vmatpush1.msra.mxu0 0.0
      %1375 = vmatprep.subr.mxu0 0.0
      %1376 = vmatpush1.msra.mxu0 0.0
      %1377 = vmatprep.subr.mxu0 0.0
      %1378 = vmatpush1.msra.mxu0 0.0
      %1379 = vmatprep.subr.mxu0 0.0
      %1380 = vmatpush1.msra.mxu0 0.0
      %1381 = vmatprep.subr.mxu0 0.0
      %1382 = vmatpush1.msra.mxu0 0.0
      %1383 = vmatprep.subr.mxu0 0.0
      %1384 = vmatpush1.msra.mxu0 0.0
      %1385 = vmatprep.subr.mxu0 0.0
      %1386 = vmatpush1.msra.mxu0 0.0
      %1387 = vmatprep.subr.mxu0 0.0
      %1388 = vmatpush1.msra.mxu0 0.0
      %1389 = vmatprep.subr.mxu0 0.0
      %1390 = vmatpush1.msra.mxu0 0.0
      %1391 = vmatprep.subr.mxu0 0.0
      %1392 = vmatpush1.msra.mxu0 0.0
      %1393 = vmatprep.subr.mxu0 0.0
      %1394 = vmatpush1.msra.mxu0 0.0
      %1395 = vmatprep.subr.mxu0 0.0
      %1396 = vmatpush1.msra.mxu0 0.0
      %1397 = vmatprep.subr.mxu0 0.0
      %1398 = vmatpush1.msra.mxu0 0.0
      %1399 = vmatprep.subr.mxu0 0.0
      %1400 = vmatpush1.msra.mxu0 0.0
      %1401 = vmatprep.mubr.f32.mxu0 0.0
      %1402 = vmatmul.mubr.f32.gmra.mrb[0].mxu0 %v1326
      %v1403 = vpop.f32.mrb[0].mxu0
      %v1404 = vadd.f32 0.0, %v1403
      %v1405 = vpop.f32.mrb[0].mxu0
      %1406 = vmatprep.mubr.f32.mxu0 0.0
      %1407 = vmatmul.mubr.f32.gmra.mrb[0].mxu0 %v1329
      %v1408 = vpop.f32.mrb[0].mxu0
      %v1409 = vadd.f32 0.0, %v1408
      %v1410 = vpop.f32.mrb[0].mxu0
      %1411 = vmatprep.mubr.f32.mxu0 0.0
      %1412 = vmatmul.mubr.f32.gmra.mrb[0].mxu0 %v1332
      %v1413 = vpop.f32.mrb[0].mxu0
      %v1414 = vadd.f32 0.0, %v1413
      %v1415 = vpop.f32.mrb[0].mxu0
      %1416 = vmatprep.mubr.f32.mxu0 0.0
      %1417 = vmatmul.mubr.f32.gmra.mrb[0].mxu0 %v1335
      %v1418 = vpop.f32.mrb[0].mxu0
      %v1419 = vadd.f32 0.0, %v1418
      %v1420 = vpop.f32.mrb[0].mxu0
      %1421 = vdwg.mxu0
      %v1423 = vsel %vm405, %v1131, 0
      %v1426 = vsel %vm405, %v1136, 0
      %v1429 = vsel %vm405, %v1141, 0
      %v1432 = vsel %vm405, %v1146, 0
      %1434 = vmatprep.subr.mxu0 0.0
      %1435 = vmatpush1.msra.mxu0 %v397
      %1436 = vmatprep.subr.mxu0 0.0
      %1437 = vmatpush1.msra.mxu0 %v398
      %1438 = vmatprep.subr.mxu0 0.0
      %1439 = vmatpush1.msra.mxu0 0.0
      %1440 = vmatprep.subr.mxu0 0.0
      %1441 = vmatpush1.msra.mxu0 0.0
      %1442 = vmatprep.subr.mxu0 0.0
      %1443 = vmatpush1.msra.mxu0 0.0
      %1444 = vmatprep.subr.mxu0 0.0
      %1445 = vmatpush1.msra.mxu0 0.0
      %1446 = vmatprep.subr.mxu0 0.0
      %1447 = vmatpush1.msra.mxu0 0.0
      %1448 = vmatprep.subr.mxu0 0.0
      %1449 = vmatpush1.msra.mxu0 0.0
      %1450 = vmatprep.subr.mxu0 0.0
      %1451 = vmatpush1.msra.mxu0 0.0
      %1452 = vmatprep.subr.mxu0 0.0
      %1453 = vmatpush1.msra.mxu0 0.0
      %1454 = vmatprep.subr.mxu0 0.0
      %1455 = vmatpush1.msra.mxu0 0.0
      %1456 = vmatprep.subr.mxu0 0.0
      %1457 = vmatpush1.msra.mxu0 0.0
      %1458 = vmatprep.subr.mxu0 0.0
      %1459 = vmatpush1.msra.mxu0 0.0
      %1460 = vmatprep.subr.mxu0 0.0
      %1461 = vmatpush1.msra.mxu0 0.0
      %1462 = vmatprep.subr.mxu0 0.0
      %1463 = vmatpush1.msra.mxu0 0.0
      %1464 = vmatprep.subr.mxu0 0.0
      %1465 = vmatpush1.msra.mxu0 0.0
      %1466 = vmatprep.subr.mxu0 0.0
      %1467 = vmatpush1.msra.mxu0 0.0
      %1468 = vmatprep.subr.mxu0 0.0
      %1469 = vmatpush1.msra.mxu0 0.0
      %1470 = vmatprep.subr.mxu0 0.0
      %1471 = vmatpush1.msra.mxu0 0.0
      %1472 = vmatprep.subr.mxu0 0.0
      %1473 = vmatpush1.msra.mxu0 0.0
      %1474 = vmatprep.subr.mxu0 0.0
      %1475 = vmatpush1.msra.mxu0 0.0
      %1476 = vmatprep.subr.mxu0 0.0
      %1477 = vmatpush1.msra.mxu0 0.0
      %1478 = vmatprep.subr.mxu0 0.0
      %1479 = vmatpush1.msra.mxu0 0.0
      %1480 = vmatprep.subr.mxu0 0.0
      %1481 = vmatpush1.msra.mxu0 0.0
      %1482 = vmatprep.subr.mxu0 0.0
      %1483 = vmatpush1.msra.mxu0 0.0
      %1484 = vmatprep.subr.mxu0 0.0
      %1485 = vmatpush1.msra.mxu0 0.0
      %1486 = vmatprep.subr.mxu0 0.0
      %1487 = vmatpush1.msra.mxu0 0.0
      %1488 = vmatprep.subr.mxu0 0.0
      %1489 = vmatpush1.msra.mxu0 0.0
      %1490 = vmatprep.subr.mxu0 0.0
      %1491 = vmatpush1.msra.mxu0 0.0
      %1492 = vmatprep.subr.mxu0 0.0
      %1493 = vmatpush1.msra.mxu0 0.0
      %1494 = vmatprep.subr.mxu0 0.0
      %1495 = vmatpush1.msra.mxu0 0.0
      %1496 = vmatprep.subr.mxu0 0.0
      %1497 = vmatpush1.msra.mxu0 0.0
      %1498 = vmatprep.mubr.f32.mxu0 0.0
      %1499 = vmatmul.mubr.f32.gmra.mrb[0].mxu0 %v1423
      %v1500 = vpop.f32.mrb[0].mxu0
      %v1501 = vadd.f32 %v1404, %v1500
      %v1502 = vpop.f32.mrb[0].mxu0
      %1503 = vmatprep.mubr.f32.mxu0 0.0
      %1504 = vmatmul.mubr.f32.gmra.mrb[0].mxu0 %v1426
      %v1505 = vpop.f32.mrb[0].mxu0
      %v1506 = vadd.f32 %v1409, %v1505
      %v1507 = vpop.f32.mrb[0].mxu0
      %1508 = vmatprep.mubr.f32.mxu0 0.0
      %1509 = vmatmul.mubr.f32.gmra.mrb[0].mxu0 %v1429
      %v1510 = vpop.f32.mrb[0].mxu0
      %v1511 = vadd.f32 %v1414, %v1510
      %v1512 = vpop.f32.mrb[0].mxu0
      %1513 = vmatprep.mubr.f32.mxu0 0.0
      %1514 = vmatmul.mubr.f32.gmra.mrb[0].mxu0 %v1432
      %v1515 = vpop.f32.mrb[0].mxu0
      %v1516 = vadd.f32 %v1419, %v1515
      %v1517 = vpop.f32.mrb[0].mxu0
      %1518 = vdwg.mxu0
      %s1519 = scalar_lea.vmem %s387, 32
      %1520 = vst.msk [vmem:[%s1519] sm:$0xff] %vm968, %v1501
      %1521 = vst.msk [vmem:[%s1519 + $0x8] sm:$0xff] %vm968, %v1506
      %1522 = vst.msk [vmem:[%s1519 + $0x10] sm:$0xff] %vm968, %v1511
      %1523 = vst.msk [vmem:[%s1519 + $0x18] sm:$0xff] %vm968, %v1516
      %s1524 = scalar_lea.vmem %s359, 32
      %v1525 = vld [vmem:[%s1524] sm:$0xff]
      %v1526 = vld [vmem:[%s1524 + $0x8] sm:$0xff]
      %s1527 = scalar_lea.vmem %s366, 32
      %v1528 = vld [vmem:[%s1527] sm:$0xff]
      %v1529 = vld [vmem:[%s1527 + $0x8] sm:$0xff]
      %1530 = vmatprep.subr.mxu0 0.0
      %1531 = vmatpush1.msra.mxu0 %v1528
      %1532 = vmatprep.subr.mxu0 0.0
      %1533 = vmatpush1.msra.mxu0 %v1529
      %1534 = vmatprep.subr.mxu0 0.0
      %1535 = vmatpush1.msra.mxu0 0.0
      %1536 = vmatprep.subr.mxu0 0.0
      %1537 = vmatpush1.msra.mxu0 0.0
      %1538 = vmatprep.subr.mxu0 0.0
      %1539 = vmatpush1.msra.mxu0 0.0
      %1540 = vmatprep.subr.mxu0 0.0
      %1541 = vmatpush1.msra.mxu0 0.0
      %1542 = vmatprep.subr.mxu0 0.0
      %1543 = vmatpush1.msra.mxu0 0.0
      %1544 = vmatprep.subr.mxu0 0.0
      %1545 = vmatpush1.msra.mxu0 0.0
      %1546 = vmatprep.subr.mxu0 0.0
      %1547 = vmatpush1.msra.mxu0 0.0
      %1548 = vmatprep.subr.mxu0 0.0
      %1549 = vmatpush1.msra.mxu0 0.0
      %1550 = vmatprep.subr.mxu0 0.0
      %1551 = vmatpush1.msra.mxu0 0.0
      %1552 = vmatprep.subr.mxu0 0.0
      %1553 = vmatpush1.msra.mxu0 0.0
      %1554 = vmatprep.subr.mxu0 0.0
      %1555 = vmatpush1.msra.mxu0 0.0
      %1556 = vmatprep.subr.mxu0 0.0
      %1557 = vmatpush1.msra.mxu0 0.0
      %1558 = vmatprep.subr.mxu0 0.0
      %1559 = vmatpush1.msra.mxu0 0.0
      %1560 = vmatprep.subr.mxu0 0.0
      %1561 = vmatpush1.msra.mxu0 0.0
      %1562 = vmatprep.subr.mxu0 0.0
      %1563 = vmatpush1.msra.mxu0 0.0
      %1564 = vmatprep.subr.mxu0 0.0
      %1565 = vmatpush1.msra.mxu0 0.0
      %1566 = vmatprep.subr.mxu0 0.0
      %1567 = vmatpush1.msra.mxu0 0.0
      %1568 = vmatprep.subr.mxu0 0.0
      %1569 = vmatpush1.msra.mxu0 0.0
      %1570 = vmatprep.subr.mxu0 0.0
      %1571 = vmatpush1.msra.mxu0 0.0
      %1572 = vmatprep.subr.mxu0 0.0
      %1573 = vmatpush1.msra.mxu0 0.0
      %1574 = vmatprep.subr.mxu0 0.0
      %1575 = vmatpush1.msra.mxu0 0.0
      %1576 = vmatprep.subr.mxu0 0.0
      %1577 = vmatpush1.msra.mxu0 0.0
      %1578 = vmatprep.subr.mxu0 0.0
      %1579 = vmatpush1.msra.mxu0 0.0
      %1580 = vmatprep.subr.mxu0 0.0
      %1581 = vmatpush1.msra.mxu0 0.0
      %1582 = vmatprep.subr.mxu0 0.0
      %1583 = vmatpush1.msra.mxu0 0.0
      %1584 = vmatprep.subr.mxu0 0.0
      %1585 = vmatpush1.msra.mxu0 0.0
      %1586 = vmatprep.subr.mxu0 0.0
      %1587 = vmatpush1.msra.mxu0 0.0
      %1588 = vmatprep.subr.mxu0 0.0
      %1589 = vmatpush1.msra.mxu0 0.0
      %1590 = vmatprep.subr.mxu0 0.0
      %1591 = vmatpush1.msra.mxu0 0.0
      %1592 = vmatprep.subr.mxu0 0.0
      %1593 = vmatpush1.msra.mxu0 0.0
      %1594 = vmatprep.mubr.f32.mxu0 0.0
      %1595 = vmatmul.mubr.f32.gmra.mrb[0].mxu0 %v407
      %v1596 = vpop.f32.mrb[0].mxu0
      %v1597 = vadd.f32 0.0, %v1596
      %v1598 = vpop.f32.mrb[0].mxu0
      %1599 = vmatprep.mubr.f32.mxu0 0.0
      %1600 = vmatmul.mubr.f32.gmra.mrb[0].mxu0 %v410
      %v1601 = vpop.f32.mrb[0].mxu0
      %v1602 = vadd.f32 0.0, %v1601
      %v1603 = vpop.f32.mrb[0].mxu0
      %1604 = vmatprep.mubr.f32.mxu0 0.0
      %1605 = vmatmul.mubr.f32.gmra.mrb[0].mxu0 %v413
      %v1606 = vpop.f32.mrb[0].mxu0
      %v1607 = vadd.f32 0.0, %v1606
      %v1608 = vpop.f32.mrb[0].mxu0
      %1609 = vmatprep.mubr.f32.mxu0 0.0
      %1610 = vmatmul.mubr.f32.gmra.mrb[0].mxu0 %v416
      %v1611 = vpop.f32.mrb[0].mxu0
      %v1612 = vadd.f32 0.0, %v1611
      %v1613 = vpop.f32.mrb[0].mxu0
      %1614 = vdwg.mxu0
      %1615 = vmatprep.subr.mxu0 0.0
      %1616 = vmatpush1.msra.mxu0 %v1525
      %1617 = vmatprep.subr.mxu0 0.0
      %1618 = vmatpush1.msra.mxu0 %v1526
      %1619 = vmatprep.subr.mxu0 0.0
      %1620 = vmatpush1.msra.mxu0 0.0
      %1621 = vmatprep.subr.mxu0 0.0
      %1622 = vmatpush1.msra.mxu0 0.0
      %1623 = vmatprep.subr.mxu0 0.0
      %1624 = vmatpush1.msra.mxu0 0.0
      %1625 = vmatprep.subr.mxu0 0.0
      %1626 = vmatpush1.msra.mxu0 0.0
      %1627 = vmatprep.subr.mxu0 0.0
      %1628 = vmatpush1.msra.mxu0 0.0
      %1629 = vmatprep.subr.mxu0 0.0
      %1630 = vmatpush1.msra.mxu0 0.0
      %1631 = vmatprep.subr.mxu0 0.0
      %1632 = vmatpush1.msra.mxu0 0.0
      %1633 = vmatprep.subr.mxu0 0.0
      %1634 = vmatpush1.msra.mxu0 0.0
      %1635 = vmatprep.subr.mxu0 0.0
      %1636 = vmatpush1.msra.mxu0 0.0
      %1637 = vmatprep.subr.mxu0 0.0
      %1638 = vmatpush1.msra.mxu0 0.0
      %1639 = vmatprep.subr.mxu0 0.0
      %1640 = vmatpush1.msra.mxu0 0.0
      %1641 = vmatprep.subr.mxu0 0.0
      %1642 = vmatpush1.msra.mxu0 0.0
      %1643 = vmatprep.subr.mxu0 0.0
      %1644 = vmatpush1.msra.mxu0 0.0
      %1645 = vmatprep.subr.mxu0 0.0
      %1646 = vmatpush1.msra.mxu0 0.0
      %1647 = vmatprep.subr.mxu0 0.0
      %1648 = vmatpush1.msra.mxu0 0.0
      %1649 = vmatprep.subr.mxu0 0.0
      %1650 = vmatpush1.msra.mxu0 0.0
      %1651 = vmatprep.subr.mxu0 0.0
      %1652 = vmatpush1.msra.mxu0 0.0
      %1653 = vmatprep.subr.mxu0 0.0
      %1654 = vmatpush1.msra.mxu0 0.0
      %1655 = vmatprep.subr.mxu0 0.0
      %1656 = vmatpush1.msra.mxu0 0.0
      %1657 = vmatprep.subr.mxu0 0.0
      %1658 = vmatpush1.msra.mxu0 0.0
      %1659 = vmatprep.subr.mxu0 0.0
      %1660 = vmatpush1.msra.mxu0 0.0
      %1661 = vmatprep.subr.mxu0 0.0
      %1662 = vmatpush1.msra.mxu0 0.0
      %1663 = vmatprep.subr.mxu0 0.0
      %1664 = vmatpush1.msra.mxu0 0.0
      %1665 = vmatprep.subr.mxu0 0.0
      %1666 = vmatpush1.msra.mxu0 0.0
      %1667 = vmatprep.subr.mxu0 0.0
      %1668 = vmatpush1.msra.mxu0 0.0
      %1669 = vmatprep.subr.mxu0 0.0
      %1670 = vmatpush1.msra.mxu0 0.0
      %1671 = vmatprep.subr.mxu0 0.0
      %1672 = vmatpush1.msra.mxu0 0.0
      %1673 = vmatprep.subr.mxu0 0.0
      %1674 = vmatpush1.msra.mxu0 0.0
      %1675 = vmatprep.subr.mxu0 0.0
      %1676 = vmatpush1.msra.mxu0 0.0
      %1677 = vmatprep.subr.mxu0 0.0
      %1678 = vmatpush1.msra.mxu0 0.0
      %1679 = vmatprep.mubr.f32.mxu0 0.0
      %1680 = vmatmul.mubr.f32.gmra.mrb[0].mxu0 %v504
      %v1681 = vpop.f32.mrb[0].mxu0
      %v1682 = vadd.f32 %v1597, %v1681
      %v1683 = vpop.f32.mrb[0].mxu0
      %1684 = vmatprep.mubr.f32.mxu0 0.0
      %1685 = vmatmul.mubr.f32.gmra.mrb[0].mxu0 %v507
      %v1686 = vpop.f32.mrb[0].mxu0
      %v1687 = vadd.f32 %v1602, %v1686
      %v1688 = vpop.f32.mrb[0].mxu0
      %1689 = vmatprep.mubr.f32.mxu0 0.0
      %1690 = vmatmul.mubr.f32.gmra.mrb[0].mxu0 %v510
      %v1691 = vpop.f32.mrb[0].mxu0
      %v1692 = vadd.f32 %v1607, %v1691
      %v1693 = vpop.f32.mrb[0].mxu0
      %1694 = vmatprep.mubr.f32.mxu0 0.0
      %1695 = vmatmul.mubr.f32.gmra.mrb[0].mxu0 %v513
      %v1696 = vpop.f32.mrb[0].mxu0
      %v1697 = vadd.f32 %v1612, %v1696
      %v1698 = vpop.f32.mrb[0].mxu0
      %1699 = vdwg.mxu0
      %s1700 = scalar_lea.vmem %s373, 32
      %v1701 = vld [vmem:[%s1700] sm:$0xff]
      %v1702 = vld [vmem:[%s1700 + $0x8] sm:$0xff]
      %s1703 = scalar_lea.vmem %s380, 32
      %v1704 = vld [vmem:[%s1703] sm:$0xff]
      %v1705 = vld [vmem:[%s1703 + $0x8] sm:$0xff]
      %1706 = vmatprep.subr.mxu0 0.0
      %1707 = vmatpush1.msra.mxu0 %v1704
      %1708 = vmatprep.subr.mxu0 0.0
      %1709 = vmatpush1.msra.mxu0 %v1705
      %1710 = vmatprep.subr.mxu0 0.0
      %1711 = vmatpush1.msra.mxu0 0.0
      %1712 = vmatprep.subr.mxu0 0.0
      %1713 = vmatpush1.msra.mxu0 0.0
      %1714 = vmatprep.subr.mxu0 0.0
      %1715 = vmatpush1.msra.mxu0 0.0
      %1716 = vmatprep.subr.mxu0 0.0
      %1717 = vmatpush1.msra.mxu0 0.0
      %1718 = vmatprep.subr.mxu0 0.0
      %1719 = vmatpush1.msra.mxu0 0.0
      %1720 = vmatprep.subr.mxu0 0.0
      %1721 = vmatpush1.msra.mxu0 0.0
      %1722 = vmatprep.subr.mxu0 0.0
      %1723 = vmatpush1.msra.mxu0 0.0
      %1724 = vmatprep.subr.mxu0 0.0
      %1725 = vmatpush1.msra.mxu0 0.0
      %1726 = vmatprep.subr.mxu0 0.0
      %1727 = vmatpush1.msra.mxu0 0.0
      %1728 = vmatprep.subr.mxu0 0.0
      %1729 = vmatpush1.msra.mxu0 0.0
      %1730 = vmatprep.subr.mxu0 0.0
      %1731 = vmatpush1.msra.mxu0 0.0
      %1732 = vmatprep.subr.mxu0 0.0
      %1733 = vmatpush1.msra.mxu0 0.0
      %1734 = vmatprep.subr.mxu0 0.0
      %1735 = vmatpush1.msra.mxu0 0.0
      %1736 = vmatprep.subr.mxu0 0.0
      %1737 = vmatpush1.msra.mxu0 0.0
      %1738 = vmatprep.subr.mxu0 0.0
      %1739 = vmatpush1.msra.mxu0 0.0
      %1740 = vmatprep.subr.mxu0 0.0
      %1741 = vmatpush1.msra.mxu0 0.0
      %1742 = vmatprep.subr.mxu0 0.0
      %1743 = vmatpush1.msra.mxu0 0.0
      %1744 = vmatprep.subr.mxu0 0.0
      %1745 = vmatpush1.msra.mxu0 0.0
      %1746 = vmatprep.subr.mxu0 0.0
      %1747 = vmatpush1.msra.mxu0 0.0
      %1748 = vmatprep.subr.mxu0 0.0
      %1749 = vmatpush1.msra.mxu0 0.0
      %1750 = vmatprep.subr.mxu0 0.0
      %1751 = vmatpush1.msra.mxu0 0.0
      %1752 = vmatprep.subr.mxu0 0.0
      %1753 = vmatpush1.msra.mxu0 0.0
      %1754 = vmatprep.subr.mxu0 0.0
      %1755 = vmatpush1.msra.mxu0 0.0
      %1756 = vmatprep.subr.mxu0 0.0
      %1757 = vmatpush1.msra.mxu0 0.0
      %1758 = vmatprep.subr.mxu0 0.0
      %1759 = vmatpush1.msra.mxu0 0.0
      %1760 = vmatprep.subr.mxu0 0.0
      %1761 = vmatpush1.msra.mxu0 0.0
      %1762 = vmatprep.subr.mxu0 0.0
      %1763 = vmatpush1.msra.mxu0 0.0
      %1764 = vmatprep.subr.mxu0 0.0
      %1765 = vmatpush1.msra.mxu0 0.0
      %1766 = vmatprep.subr.mxu0 0.0
      %1767 = vmatpush1.msra.mxu0 0.0
      %1768 = vmatprep.subr.mxu0 0.0
      %1769 = vmatpush1.msra.mxu0 0.0
      %1770 = vmatprep.mubr.f32.mxu0 0.0
      %1771 = vmatmul.mubr.f32.gmra.mrb[0].mxu0 %v407
      %v1772 = vpop.f32.mrb[0].mxu0
      %v1773 = vadd.f32 0.0, %v1772
      %v1774 = vpop.f32.mrb[0].mxu0
      %1775 = vmatprep.mubr.f32.mxu0 0.0
      %1776 = vmatmul.mubr.f32.gmra.mrb[0].mxu0 %v410
      %v1777 = vpop.f32.mrb[0].mxu0
      %v1778 = vadd.f32 0.0, %v1777
      %v1779 = vpop.f32.mrb[0].mxu0
      %1780 = vmatprep.mubr.f32.mxu0 0.0
      %1781 = vmatmul.mubr.f32.gmra.mrb[0].mxu0 %v413
      %v1782 = vpop.f32.mrb[0].mxu0
      %v1783 = vadd.f32 0.0, %v1782
      %v1784 = vpop.f32.mrb[0].mxu0
      %1785 = vmatprep.mubr.f32.mxu0 0.0
      %1786 = vmatmul.mubr.f32.gmra.mrb[0].mxu0 %v416
      %v1787 = vpop.f32.mrb[0].mxu0
      %v1788 = vadd.f32 0.0, %v1787
      %v1789 = vpop.f32.mrb[0].mxu0
      %1790 = vdwg.mxu0
      %1791 = vmatprep.subr.mxu0 0.0
      %1792 = vmatpush1.msra.mxu0 %v1701
      %1793 = vmatprep.subr.mxu0 0.0
      %1794 = vmatpush1.msra.mxu0 %v1702
      %1795 = vmatprep.subr.mxu0 0.0
      %1796 = vmatpush1.msra.mxu0 0.0
      %1797 = vmatprep.subr.mxu0 0.0
      %1798 = vmatpush1.msra.mxu0 0.0
      %1799 = vmatprep.subr.mxu0 0.0
      %1800 = vmatpush1.msra.mxu0 0.0
      %1801 = vmatprep.subr.mxu0 0.0
      %1802 = vmatpush1.msra.mxu0 0.0
      %1803 = vmatprep.subr.mxu0 0.0
      %1804 = vmatpush1.msra.mxu0 0.0
      %1805 = vmatprep.subr.mxu0 0.0
      %1806 = vmatpush1.msra.mxu0 0.0
      %1807 = vmatprep.subr.mxu0 0.0
      %1808 = vmatpush1.msra.mxu0 0.0
      %1809 = vmatprep.subr.mxu0 0.0
      %1810 = vmatpush1.msra.mxu0 0.0
      %1811 = vmatprep.subr.mxu0 0.0
      %1812 = vmatpush1.msra.mxu0 0.0
      %1813 = vmatprep.subr.mxu0 0.0
      %1814 = vmatpush1.msra.mxu0 0.0
      %1815 = vmatprep.subr.mxu0 0.0
      %1816 = vmatpush1.msra.mxu0 0.0
      %1817 = vmatprep.subr.mxu0 0.0
      %1818 = vmatpush1.msra.mxu0 0.0
      %1819 = vmatprep.subr.mxu0 0.0
      %1820 = vmatpush1.msra.mxu0 0.0
      %1821 = vmatprep.subr.mxu0 0.0
      %1822 = vmatpush1.msra.mxu0 0.0
      %1823 = vmatprep.subr.mxu0 0.0
      %1824 = vmatpush1.msra.mxu0 0.0
      %1825 = vmatprep.subr.mxu0 0.0
      %1826 = vmatpush1.msra.mxu0 0.0
      %1827 = vmatprep.subr.mxu0 0.0
      %1828 = vmatpush1.msra.mxu0 0.0
      %1829 = vmatprep.subr.mxu0 0.0
      %1830 = vmatpush1.msra.mxu0 0.0
      %1831 = vmatprep.subr.mxu0 0.0
      %1832 = vmatpush1.msra.mxu0 0.0
      %1833 = vmatprep.subr.mxu0 0.0
      %1834 = vmatpush1.msra.mxu0 0.0
      %1835 = vmatprep.subr.mxu0 0.0
      %1836 = vmatpush1.msra.mxu0 0.0
      %1837 = vmatprep.subr.mxu0 0.0
      %1838 = vmatpush1.msra.mxu0 0.0
      %1839 = vmatprep.subr.mxu0 0.0
      %1840 = vmatpush1.msra.mxu0 0.0
      %1841 = vmatprep.subr.mxu0 0.0
      %1842 = vmatpush1.msra.mxu0 0.0
      %1843 = vmatprep.subr.mxu0 0.0
      %1844 = vmatpush1.msra.mxu0 0.0
      %1845 = vmatprep.subr.mxu0 0.0
      %1846 = vmatpush1.msra.mxu0 0.0
      %1847 = vmatprep.subr.mxu0 0.0
      %1848 = vmatpush1.msra.mxu0 0.0
      %1849 = vmatprep.subr.mxu0 0.0
      %1850 = vmatpush1.msra.mxu0 0.0
      %1851 = vmatprep.subr.mxu0 0.0
      %1852 = vmatpush1.msra.mxu0 0.0
      %1853 = vmatprep.subr.mxu0 0.0
      %1854 = vmatpush1.msra.mxu0 0.0
      %1855 = vmatprep.mubr.f32.mxu0 0.0
      %1856 = vmatmul.mubr.f32.gmra.mrb[0].mxu0 %v504
      %v1857 = vpop.f32.mrb[0].mxu0
      %v1858 = vadd.f32 %v1773, %v1857
      %v1859 = vpop.f32.mrb[0].mxu0
      %1860 = vmatprep.mubr.f32.mxu0 0.0
      %1861 = vmatmul.mubr.f32.gmra.mrb[0].mxu0 %v507
      %v1862 = vpop.f32.mrb[0].mxu0
      %v1863 = vadd.f32 %v1778, %v1862
      %v1864 = vpop.f32.mrb[0].mxu0
      %1865 = vmatprep.mubr.f32.mxu0 0.0
      %1866 = vmatmul.mubr.f32.gmra.mrb[0].mxu0 %v510
      %v1867 = vpop.f32.mrb[0].mxu0
      %v1868 = vadd.f32 %v1783, %v1867
      %v1869 = vpop.f32.mrb[0].mxu0
      %1870 = vmatprep.mubr.f32.mxu0 0.0
      %1871 = vmatmul.mubr.f32.gmra.mrb[0].mxu0 %v513
      %v1872 = vpop.f32.mrb[0].mxu0
      %v1873 = vadd.f32 %v1788, %v1872
      %v1874 = vpop.f32.mrb[0].mxu0
      %1875 = vdwg.mxu0
      %v1877 = vsel %vm405, %v1858, 0
      %v1880 = vsel %vm405, %v1863, 0
      %v1883 = vsel %vm405, %v1868, 0
      %v1886 = vsel %vm405, %v1873, 0
      %1888 = vmatprep.subr.mxu0 0.0
      %1889 = vmatpush1.msra.mxu0 %v399
      %1890 = vmatprep.subr.mxu0 0.0
      %1891 = vmatpush1.msra.mxu0 %v400
      %1892 = vmatprep.subr.mxu0 0.0
      %1893 = vmatpush1.msra.mxu0 0.0
      %1894 = vmatprep.subr.mxu0 0.0
      %1895 = vmatpush1.msra.mxu0 0.0
      %1896 = vmatprep.subr.mxu0 0.0
      %1897 = vmatpush1.msra.mxu0 0.0
      %1898 = vmatprep.subr.mxu0 0.0
      %1899 = vmatpush1.msra.mxu0 0.0
      %1900 = vmatprep.subr.mxu0 0.0
      %1901 = vmatpush1.msra.mxu0 0.0
      %1902 = vmatprep.subr.mxu0 0.0
      %1903 = vmatpush1.msra.mxu0 0.0
      %1904 = vmatprep.subr.mxu0 0.0
      %1905 = vmatpush1.msra.mxu0 0.0
      %1906 = vmatprep.subr.mxu0 0.0
      %1907 = vmatpush1.msra.mxu0 0.0
      %1908 = vmatprep.subr.mxu0 0.0
      %1909 = vmatpush1.msra.mxu0 0.0
      %1910 = vmatprep.subr.mxu0 0.0
      %1911 = vmatpush1.msra.mxu0 0.0
      %1912 = vmatprep.subr.mxu0 0.0
      %1913 = vmatpush1.msra.mxu0 0.0
      %1914 = vmatprep.subr.mxu0 0.0
      %1915 = vmatpush1.msra.mxu0 0.0
      %1916 = vmatprep.subr.mxu0 0.0
      %1917 = vmatpush1.msra.mxu0 0.0
      %1918 = vmatprep.subr.mxu0 0.0
      %1919 = vmatpush1.msra.mxu0 0.0
      %1920 = vmatprep.subr.mxu0 0.0
      %1921 = vmatpush1.msra.mxu0 0.0
      %1922 = vmatprep.subr.mxu0 0.0
      %1923 = vmatpush1.msra.mxu0 0.0
      %1924 = vmatprep.subr.mxu0 0.0
      %1925 = vmatpush1.msra.mxu0 0.0
      %1926 = vmatprep.subr.mxu0 0.0
      %1927 = vmatpush1.msra.mxu0 0.0
      %1928 = vmatprep.subr.mxu0 0.0
      %1929 = vmatpush1.msra.mxu0 0.0
      %1930 = vmatprep.subr.mxu0 0.0
      %1931 = vmatpush1.msra.mxu0 0.0
      %1932 = vmatprep.subr.mxu0 0.0
      %1933 = vmatpush1.msra.mxu0 0.0
      %1934 = vmatprep.subr.mxu0 0.0
      %1935 = vmatpush1.msra.mxu0 0.0
      %1936 = vmatprep.subr.mxu0 0.0
      %1937 = vmatpush1.msra.mxu0 0.0
      %1938 = vmatprep.subr.mxu0 0.0
      %1939 = vmatpush1.msra.mxu0 0.0
      %1940 = vmatprep.subr.mxu0 0.0
      %1941 = vmatpush1.msra.mxu0 0.0
      %1942 = vmatprep.subr.mxu0 0.0
      %1943 = vmatpush1.msra.mxu0 0.0
      %1944 = vmatprep.subr.mxu0 0.0
      %1945 = vmatpush1.msra.mxu0 0.0
      %1946 = vmatprep.subr.mxu0 0.0
      %1947 = vmatpush1.msra.mxu0 0.0
      %1948 = vmatprep.subr.mxu0 0.0
      %1949 = vmatpush1.msra.mxu0 0.0
      %1950 = vmatprep.subr.mxu0 0.0
      %1951 = vmatpush1.msra.mxu0 0.0
      %1952 = vmatprep.mubr.f32.mxu0 0.0
      %1953 = vmatmul.mubr.f32.gmra.mrb[0].mxu0 %v1877
      %v1954 = vpop.f32.mrb[0].mxu0
      %v1955 = vadd.f32 0.0, %v1954
      %v1956 = vpop.f32.mrb[0].mxu0
      %1957 = vmatprep.mubr.f32.mxu0 0.0
      %1958 = vmatmul.mubr.f32.gmra.mrb[0].mxu0 %v1880
      %v1959 = vpop.f32.mrb[0].mxu0
      %v1960 = vadd.f32 0.0, %v1959
      %v1961 = vpop.f32.mrb[0].mxu0
      %1962 = vmatprep.mubr.f32.mxu0 0.0
      %1963 = vmatmul.mubr.f32.gmra.mrb[0].mxu0 %v1883
      %v1964 = vpop.f32.mrb[0].mxu0
      %v1965 = vadd.f32 0.0, %v1964
      %v1966 = vpop.f32.mrb[0].mxu0
      %1967 = vmatprep.mubr.f32.mxu0 0.0
      %1968 = vmatmul.mubr.f32.gmra.mrb[0].mxu0 %v1886
      %v1969 = vpop.f32.mrb[0].mxu0
      %v1970 = vadd.f32 0.0, %v1969
      %v1971 = vpop.f32.mrb[0].mxu0
      %1972 = vdwg.mxu0
      %v1974 = vsel %vm405, %v1682, 0
      %v1977 = vsel %vm405, %v1687, 0
      %v1980 = vsel %vm405, %v1692, 0
      %v1983 = vsel %vm405, %v1697, 0
      %1985 = vmatprep.subr.mxu0 0.0
      %1986 = vmatpush1.msra.mxu0 %v397
      %1987 = vmatprep.subr.mxu0 0.0
      %1988 = vmatpush1.msra.mxu0 %v398
      %1989 = vmatprep.subr.mxu0 0.0
      %1990 = vmatpush1.msra.mxu0 0.0
      %1991 = vmatprep.subr.mxu0 0.0
      %1992 = vmatpush1.msra.mxu0 0.0
      %1993 = vmatprep.subr.mxu0 0.0
      %1994 = vmatpush1.msra.mxu0 0.0
      %1995 = vmatprep.subr.mxu0 0.0
      %1996 = vmatpush1.msra.mxu0 0.0
      %1997 = vmatprep.subr.mxu0 0.0
      %1998 = vmatpush1.msra.mxu0 0.0
      %1999 = vmatprep.subr.mxu0 0.0
      %2000 = vmatpush1.msra.mxu0 0.0
      %2001 = vmatprep.subr.mxu0 0.0
      %2002 = vmatpush1.msra.mxu0 0.0
      %2003 = vmatprep.subr.mxu0 0.0
      %2004 = vmatpush1.msra.mxu0 0.0
      %2005 = vmatprep.subr.mxu0 0.0
      %2006 = vmatpush1.msra.mxu0 0.0
      %2007 = vmatprep.subr.mxu0 0.0
      %2008 = vmatpush1.msra.mxu0 0.0
      %2009 = vmatprep.subr.mxu0 0.0
      %2010 = vmatpush1.msra.mxu0 0.0
      %2011 = vmatprep.subr.mxu0 0.0
      %2012 = vmatpush1.msra.mxu0 0.0
      %2013 = vmatprep.subr.mxu0 0.0
      %2014 = vmatpush1.msra.mxu0 0.0
      %2015 = vmatprep.subr.mxu0 0.0
      %2016 = vmatpush1.msra.mxu0 0.0
      %2017 = vmatprep.subr.mxu0 0.0
      %2018 = vmatpush1.msra.mxu0 0.0
      %2019 = vmatprep.subr.mxu0 0.0
      %2020 = vmatpush1.msra.mxu0 0.0
      %2021 = vmatprep.subr.mxu0 0.0
      %2022 = vmatpush1.msra.mxu0 0.0
      %2023 = vmatprep.subr.mxu0 0.0
      %2024 = vmatpush1.msra.mxu0 0.0
      %2025 = vmatprep.subr.mxu0 0.0
      %2026 = vmatpush1.msra.mxu0 0.0
      %2027 = vmatprep.subr.mxu0 0.0
      %2028 = vmatpush1.msra.mxu0 0.0
      %2029 = vmatprep.subr.mxu0 0.0
      %2030 = vmatpush1.msra.mxu0 0.0
      %2031 = vmatprep.subr.mxu0 0.0
      %2032 = vmatpush1.msra.mxu0 0.0
      %2033 = vmatprep.subr.mxu0 0.0
      %2034 = vmatpush1.msra.mxu0 0.0
      %2035 = vmatprep.subr.mxu0 0.0
      %2036 = vmatpush1.msra.mxu0 0.0
      %2037 = vmatprep.subr.mxu0 0.0
      %2038 = vmatpush1.msra.mxu0 0.0
      %2039 = vmatprep.subr.mxu0 0.0
      %2040 = vmatpush1.msra.mxu0 0.0
      %2041 = vmatprep.subr.mxu0 0.0
      %2042 = vmatpush1.msra.mxu0 0.0
      %2043 = vmatprep.subr.mxu0 0.0
      %2044 = vmatpush1.msra.mxu0 0.0
      %2045 = vmatprep.subr.mxu0 0.0
      %2046 = vmatpush1.msra.mxu0 0.0
      %2047 = vmatprep.subr.mxu0 0.0
      %2048 = vmatpush1.msra.mxu0 0.0
      %2049 = vmatprep.mubr.f32.mxu0 0.0
      %2050 = vmatmul.mubr.f32.gmra.mrb[0].mxu0 %v1974
      %v2051 = vpop.f32.mrb[0].mxu0
      %v2052 = vadd.f32 %v1955, %v2051
      %v2053 = vpop.f32.mrb[0].mxu0
      %2054 = vmatprep.mubr.f32.mxu0 0.0
      %2055 = vmatmul.mubr.f32.gmra.mrb[0].mxu0 %v1977
      %v2056 = vpop.f32.mrb[0].mxu0
      %v2057 = vadd.f32 %v1960, %v2056
      %v2058 = vpop.f32.mrb[0].mxu0
      %2059 = vmatprep.mubr.f32.mxu0 0.0
      %2060 = vmatmul.mubr.f32.gmra.mrb[0].mxu0 %v1980
      %v2061 = vpop.f32.mrb[0].mxu0
      %v2062 = vadd.f32 %v1965, %v2061
      %v2063 = vpop.f32.mrb[0].mxu0
      %2064 = vmatprep.mubr.f32.mxu0 0.0
      %2065 = vmatmul.mubr.f32.gmra.mrb[0].mxu0 %v1983
      %v2066 = vpop.f32.mrb[0].mxu0
      %v2067 = vadd.f32 %v1970, %v2066
      %v2068 = vpop.f32.mrb[0].mxu0
      %2069 = vdwg.mxu0
      %s2070 = scalar_lea.vmem %s387, 64
      %2071 = vst.msk [vmem:[%s2070] sm:$0xff] %vm968, %v2052
      %2072 = vst.msk [vmem:[%s2070 + $0x8] sm:$0xff] %vm968, %v2057
      %2073 = vst.msk [vmem:[%s2070 + $0x10] sm:$0xff] %vm968, %v2062
      %2074 = vst.msk [vmem:[%s2070 + $0x18] sm:$0xff] %vm968, %v2067
      %s2075 = scalar_lea.vmem %s359, 48
      %v2076 = vld [vmem:[%s2075] sm:$0xff]
      %v2077 = vld [vmem:[%s2075 + $0x8] sm:$0xff]
      %s2078 = scalar_lea.vmem %s366, 48
      %v2079 = vld [vmem:[%s2078] sm:$0xff]
      %v2080 = vld [vmem:[%s2078 + $0x8] sm:$0xff]
      %2081 = vmatprep.subr.mxu0 0.0
      %2082 = vmatpush1.msra.mxu0 %v2079
      %2083 = vmatprep.subr.mxu0 0.0
      %2084 = vmatpush1.msra.mxu0 %v2080
      %2085 = vmatprep.subr.mxu0 0.0
      %2086 = vmatpush1.msra.mxu0 0.0
      %2087 = vmatprep.subr.mxu0 0.0
      %2088 = vmatpush1.msra.mxu0 0.0
      %2089 = vmatprep.subr.mxu0 0.0
      %2090 = vmatpush1.msra.mxu0 0.0
      %2091 = vmatprep.subr.mxu0 0.0
      %2092 = vmatpush1.msra.mxu0 0.0
      %2093 = vmatprep.subr.mxu0 0.0
      %2094 = vmatpush1.msra.mxu0 0.0
      %2095 = vmatprep.subr.mxu0 0.0
      %2096 = vmatpush1.msra.mxu0 0.0
      %2097 = vmatprep.subr.mxu0 0.0
      %2098 = vmatpush1.msra.mxu0 0.0
      %2099 = vmatprep.subr.mxu0 0.0
      %2100 = vmatpush1.msra.mxu0 0.0
      %2101 = vmatprep.subr.mxu0 0.0
      %2102 = vmatpush1.msra.mxu0 0.0
      %2103 = vmatprep.subr.mxu0 0.0
      %2104 = vmatpush1.msra.mxu0 0.0
      %2105 = vmatprep.subr.mxu0 0.0
      %2106 = vmatpush1.msra.mxu0 0.0
      %2107 = vmatprep.subr.mxu0 0.0
      %2108 = vmatpush1.msra.mxu0 0.0
      %2109 = vmatprep.subr.mxu0 0.0
      %2110 = vmatpush1.msra.mxu0 0.0
      %2111 = vmatprep.subr.mxu0 0.0
      %2112 = vmatpush1.msra.mxu0 0.0
      %2113 = vmatprep.subr.mxu0 0.0
      %2114 = vmatpush1.msra.mxu0 0.0
      %2115 = vmatprep.subr.mxu0 0.0
      %2116 = vmatpush1.msra.mxu0 0.0
      %2117 = vmatprep.subr.mxu0 0.0
      %2118 = vmatpush1.msra.mxu0 0.0
      %2119 = vmatprep.subr.mxu0 0.0
      %2120 = vmatpush1.msra.mxu0 0.0
      %2121 = vmatprep.subr.mxu0 0.0
      %2122 = vmatpush1.msra.mxu0 0.0
      %2123 = vmatprep.subr.mxu0 0.0
      %2124 = vmatpush1.msra.mxu0 0.0
      %2125 = vmatprep.subr.mxu0 0.0
      %2126 = vmatpush1.msra.mxu0 0.0
      %2127 = vmatprep.subr.mxu0 0.0
      %2128 = vmatpush1.msra.mxu0 0.0
      %2129 = vmatprep.subr.mxu0 0.0
      %2130 = vmatpush1.msra.mxu0 0.0
      %2131 = vmatprep.subr.mxu0 0.0
      %2132 = vmatpush1.msra.mxu0 0.0
      %2133 = vmatprep.subr.mxu0 0.0
      %2134 = vmatpush1.msra.mxu0 0.0
      %2135 = vmatprep.subr.mxu0 0.0
      %2136 = vmatpush1.msra.mxu0 0.0
      %2137 = vmatprep.subr.mxu0 0.0
      %2138 = vmatpush1.msra.mxu0 0.0
      %2139 = vmatprep.subr.mxu0 0.0
      %2140 = vmatpush1.msra.mxu0 0.0
      %2141 = vmatprep.subr.mxu0 0.0
      %2142 = vmatpush1.msra.mxu0 0.0
      %2143 = vmatprep.subr.mxu0 0.0
      %2144 = vmatpush1.msra.mxu0 0.0
      %2145 = vmatprep.mubr.f32.mxu0 0.0
      %2146 = vmatmul.mubr.f32.gmra.mrb[0].mxu0 %v407
      %v2147 = vpop.f32.mrb[0].mxu0
      %v2148 = vadd.f32 0.0, %v2147
      %v2149 = vpop.f32.mrb[0].mxu0
      %2150 = vmatprep.mubr.f32.mxu0 0.0
      %2151 = vmatmul.mubr.f32.gmra.mrb[0].mxu0 %v410
      %v2152 = vpop.f32.mrb[0].mxu0
      %v2153 = vadd.f32 0.0, %v2152
      %v2154 = vpop.f32.mrb[0].mxu0
      %2155 = vmatprep.mubr.f32.mxu0 0.0
      %2156 = vmatmul.mubr.f32.gmra.mrb[0].mxu0 %v413
      %v2157 = vpop.f32.mrb[0].mxu0
      %v2158 = vadd.f32 0.0, %v2157
      %v2159 = vpop.f32.mrb[0].mxu0
      %2160 = vmatprep.mubr.f32.mxu0 0.0
      %2161 = vmatmul.mubr.f32.gmra.mrb[0].mxu0 %v416
      %v2162 = vpop.f32.mrb[0].mxu0
      %v2163 = vadd.f32 0.0, %v2162
      %v2164 = vpop.f32.mrb[0].mxu0
      %2165 = vdwg.mxu0
      %2166 = vmatprep.subr.mxu0 0.0
      %2167 = vmatpush1.msra.mxu0 %v2076
      %2168 = vmatprep.subr.mxu0 0.0
      %2169 = vmatpush1.msra.mxu0 %v2077
      %2170 = vmatprep.subr.mxu0 0.0
      %2171 = vmatpush1.msra.mxu0 0.0
      %2172 = vmatprep.subr.mxu0 0.0
      %2173 = vmatpush1.msra.mxu0 0.0
      %2174 = vmatprep.subr.mxu0 0.0
      %2175 = vmatpush1.msra.mxu0 0.0
      %2176 = vmatprep.subr.mxu0 0.0
      %2177 = vmatpush1.msra.mxu0 0.0
      %2178 = vmatprep.subr.mxu0 0.0
      %2179 = vmatpush1.msra.mxu0 0.0
      %2180 = vmatprep.subr.mxu0 0.0
      %2181 = vmatpush1.msra.mxu0 0.0
      %2182 = vmatprep.subr.mxu0 0.0
      %2183 = vmatpush1.msra.mxu0 0.0
      %2184 = vmatprep.subr.mxu0 0.0
      %2185 = vmatpush1.msra.mxu0 0.0
      %2186 = vmatprep.subr.mxu0 0.0
      %2187 = vmatpush1.msra.mxu0 0.0
      %2188 = vmatprep.subr.mxu0 0.0
      %2189 = vmatpush1.msra.mxu0 0.0
      %2190 = vmatprep.subr.mxu0 0.0
      %2191 = vmatpush1.msra.mxu0 0.0
      %2192 = vmatprep.subr.mxu0 0.0
      %2193 = vmatpush1.msra.mxu0 0.0
      %2194 = vmatprep.subr.mxu0 0.0
      %2195 = vmatpush1.msra.mxu0 0.0
      %2196 = vmatprep.subr.mxu0 0.0
      %2197 = vmatpush1.msra.mxu0 0.0
      %2198 = vmatprep.subr.mxu0 0.0
      %2199 = vmatpush1.msra.mxu0 0.0
      %2200 = vmatprep.subr.mxu0 0.0
      %2201 = vmatpush1.msra.mxu0 0.0
      %2202 = vmatprep.subr.mxu0 0.0
      %2203 = vmatpush1.msra.mxu0 0.0
      %2204 = vmatprep.subr.mxu0 0.0
      %2205 = vmatpush1.msra.mxu0 0.0
      %2206 = vmatprep.subr.mxu0 0.0
      %2207 = vmatpush1.msra.mxu0 0.0
      %2208 = vmatprep.subr.mxu0 0.0
      %2209 = vmatpush1.msra.mxu0 0.0
      %2210 = vmatprep.subr.mxu0 0.0
      %2211 = vmatpush1.msra.mxu0 0.0
      %2212 = vmatprep.subr.mxu0 0.0
      %2213 = vmatpush1.msra.mxu0 0.0
      %2214 = vmatprep.subr.mxu0 0.0
      %2215 = vmatpush1.msra.mxu0 0.0
      %2216 = vmatprep.subr.mxu0 0.0
      %2217 = vmatpush1.msra.mxu0 0.0
      %2218 = vmatprep.subr.mxu0 0.0
      %2219 = vmatpush1.msra.mxu0 0.0
      %2220 = vmatprep.subr.mxu0 0.0
      %2221 = vmatpush1.msra.mxu0 0.0
      %2222 = vmatprep.subr.mxu0 0.0
      %2223 = vmatpush1.msra.mxu0 0.0
      %2224 = vmatprep.subr.mxu0 0.0
      %2225 = vmatpush1.msra.mxu0 0.0
      %2226 = vmatprep.subr.mxu0 0.0
      %2227 = vmatpush1.msra.mxu0 0.0
      %2228 = vmatprep.subr.mxu0 0.0
      %2229 = vmatpush1.msra.mxu0 0.0
      %2230 = vmatprep.mubr.f32.mxu0 0.0
      %2231 = vmatmul.mubr.f32.gmra.mrb[0].mxu0 %v504
      %v2232 = vpop.f32.mrb[0].mxu0
      %v2233 = vadd.f32 %v2148, %v2232
      %v2234 = vpop.f32.mrb[0].mxu0
      %2235 = vmatprep.mubr.f32.mxu0 0.0
      %2236 = vmatmul.mubr.f32.gmra.mrb[0].mxu0 %v507
      %v2237 = vpop.f32.mrb[0].mxu0
      %v2238 = vadd.f32 %v2153, %v2237
      %v2239 = vpop.f32.mrb[0].mxu0
      %2240 = vmatprep.mubr.f32.mxu0 0.0
      %2241 = vmatmul.mubr.f32.gmra.mrb[0].mxu0 %v510
      %v2242 = vpop.f32.mrb[0].mxu0
      %v2243 = vadd.f32 %v2158, %v2242
      %v2244 = vpop.f32.mrb[0].mxu0
      %2245 = vmatprep.mubr.f32.mxu0 0.0
      %2246 = vmatmul.mubr.f32.gmra.mrb[0].mxu0 %v513
      %v2247 = vpop.f32.mrb[0].mxu0
      %v2248 = vadd.f32 %v2163, %v2247
      %v2249 = vpop.f32.mrb[0].mxu0
      %2250 = vdwg.mxu0
      %s2251 = scalar_lea.vmem %s373, 48
      %v2252 = vld [vmem:[%s2251] sm:$0xff]
      %v2253 = vld [vmem:[%s2251 + $0x8] sm:$0xff]
      %s2254 = scalar_lea.vmem %s380, 48
      %v2255 = vld [vmem:[%s2254] sm:$0xff]
      %v2256 = vld [vmem:[%s2254 + $0x8] sm:$0xff]
      %2257 = vmatprep.subr.mxu0 0.0
      %2258 = vmatpush1.msra.mxu0 %v2255
      %2259 = vmatprep.subr.mxu0 0.0
      %2260 = vmatpush1.msra.mxu0 %v2256
      %2261 = vmatprep.subr.mxu0 0.0
      %2262 = vmatpush1.msra.mxu0 0.0
      %2263 = vmatprep.subr.mxu0 0.0
      %2264 = vmatpush1.msra.mxu0 0.0
      %2265 = vmatprep.subr.mxu0 0.0
      %2266 = vmatpush1.msra.mxu0 0.0
      %2267 = vmatprep.subr.mxu0 0.0
      %2268 = vmatpush1.msra.mxu0 0.0
      %2269 = vmatprep.subr.mxu0 0.0
      %2270 = vmatpush1.msra.mxu0 0.0
      %2271 = vmatprep.subr.mxu0 0.0
      %2272 = vmatpush1.msra.mxu0 0.0
      %2273 = vmatprep.subr.mxu0 0.0
      %2274 = vmatpush1.msra.mxu0 0.0
      %2275 = vmatprep.subr.mxu0 0.0
      %2276 = vmatpush1.msra.mxu0 0.0
      %2277 = vmatprep.subr.mxu0 0.0
      %2278 = vmatpush1.msra.mxu0 0.0
      %2279 = vmatprep.subr.mxu0 0.0
      %2280 = vmatpush1.msra.mxu0 0.0
      %2281 = vmatprep.subr.mxu0 0.0
      %2282 = vmatpush1.msra.mxu0 0.0
      %2283 = vmatprep.subr.mxu0 0.0
      %2284 = vmatpush1.msra.mxu0 0.0
      %2285 = vmatprep.subr.mxu0 0.0
      %2286 = vmatpush1.msra.mxu0 0.0
      %2287 = vmatprep.subr.mxu0 0.0
      %2288 = vmatpush1.msra.mxu0 0.0
      %2289 = vmatprep.subr.mxu0 0.0
      %2290 = vmatpush1.msra.mxu0 0.0
      %2291 = vmatprep.subr.mxu0 0.0
      %2292 = vmatpush1.msra.mxu0 0.0
      %2293 = vmatprep.subr.mxu0 0.0
      %2294 = vmatpush1.msra.mxu0 0.0
      %2295 = vmatprep.subr.mxu0 0.0
      %2296 = vmatpush1.msra.mxu0 0.0
      %2297 = vmatprep.subr.mxu0 0.0
      %2298 = vmatpush1.msra.mxu0 0.0
      %2299 = vmatprep.subr.mxu0 0.0
      %2300 = vmatpush1.msra.mxu0 0.0
      %2301 = vmatprep.subr.mxu0 0.0
      %2302 = vmatpush1.msra.mxu0 0.0
      %2303 = vmatprep.subr.mxu0 0.0
      %2304 = vmatpush1.msra.mxu0 0.0
      %2305 = vmatprep.subr.mxu0 0.0
      %2306 = vmatpush1.msra.mxu0 0.0
      %2307 = vmatprep.subr.mxu0 0.0
      %2308 = vmatpush1.msra.mxu0 0.0
      %2309 = vmatprep.subr.mxu0 0.0
      %2310 = vmatpush1.msra.mxu0 0.0
      %2311 = vmatprep.subr.mxu0 0.0
      %2312 = vmatpush1.msra.mxu0 0.0
      %2313 = vmatprep.subr.mxu0 0.0
      %2314 = vmatpush1.msra.mxu0 0.0
      %2315 = vmatprep.subr.mxu0 0.0
      %2316 = vmatpush1.msra.mxu0 0.0
      %2317 = vmatprep.subr.mxu0 0.0
      %2318 = vmatpush1.msra.mxu0 0.0
      %2319 = vmatprep.subr.mxu0 0.0
      %2320 = vmatpush1.msra.mxu0 0.0
      %2321 = vmatprep.mubr.f32.mxu0 0.0
      %2322 = vmatmul.mubr.f32.gmra.mrb[0].mxu0 %v407
      %v2323 = vpop.f32.mrb[0].mxu0
      %v2324 = vadd.f32 0.0, %v2323
      %v2325 = vpop.f32.mrb[0].mxu0
      %2326 = vmatprep.mubr.f32.mxu0 0.0
      %2327 = vmatmul.mubr.f32.gmra.mrb[0].mxu0 %v410
      %v2328 = vpop.f32.mrb[0].mxu0
      %v2329 = vadd.f32 0.0, %v2328
      %v2330 = vpop.f32.mrb[0].mxu0
      %2331 = vmatprep.mubr.f32.mxu0 0.0
      %2332 = vmatmul.mubr.f32.gmra.mrb[0].mxu0 %v413
      %v2333 = vpop.f32.mrb[0].mxu0
      %v2334 = vadd.f32 0.0, %v2333
      %v2335 = vpop.f32.mrb[0].mxu0
      %2336 = vmatprep.mubr.f32.mxu0 0.0
      %2337 = vmatmul.mubr.f32.gmra.mrb[0].mxu0 %v416
      %v2338 = vpop.f32.mrb[0].mxu0
      %v2339 = vadd.f32 0.0, %v2338
      %v2340 = vpop.f32.mrb[0].mxu0
      %2341 = vdwg.mxu0
      %2342 = vmatprep.subr.mxu0 0.0
      %2343 = vmatpush1.msra.mxu0 %v2252
      %2344 = vmatprep.subr.mxu0 0.0
      %2345 = vmatpush1.msra.mxu0 %v2253
      %2346 = vmatprep.subr.mxu0 0.0
      %2347 = vmatpush1.msra.mxu0 0.0
      %2348 = vmatprep.subr.mxu0 0.0
      %2349 = vmatpush1.msra.mxu0 0.0
      %2350 = vmatprep.subr.mxu0 0.0
      %2351 = vmatpush1.msra.mxu0 0.0
      %2352 = vmatprep.subr.mxu0 0.0
      %2353 = vmatpush1.msra.mxu0 0.0
      %2354 = vmatprep.subr.mxu0 0.0
      %2355 = vmatpush1.msra.mxu0 0.0
      %2356 = vmatprep.subr.mxu0 0.0
      %2357 = vmatpush1.msra.mxu0 0.0
      %2358 = vmatprep.subr.mxu0 0.0
      %2359 = vmatpush1.msra.mxu0 0.0
      %2360 = vmatprep.subr.mxu0 0.0
      %2361 = vmatpush1.msra.mxu0 0.0
      %2362 = vmatprep.subr.mxu0 0.0
      %2363 = vmatpush1.msra.mxu0 0.0
      %2364 = vmatprep.subr.mxu0 0.0
      %2365 = vmatpush1.msra.mxu0 0.0
      %2366 = vmatprep.subr.mxu0 0.0
      %2367 = vmatpush1.msra.mxu0 0.0
      %2368 = vmatprep.subr.mxu0 0.0
      %2369 = vmatpush1.msra.mxu0 0.0
      %2370 = vmatprep.subr.mxu0 0.0
      %2371 = vmatpush1.msra.mxu0 0.0
      %2372 = vmatprep.subr.mxu0 0.0
      %2373 = vmatpush1.msra.mxu0 0.0
      %2374 = vmatprep.subr.mxu0 0.0
      %2375 = vmatpush1.msra.mxu0 0.0
      %2376 = vmatprep.subr.mxu0 0.0
      %2377 = vmatpush1.msra.mxu0 0.0
      %2378 = vmatprep.subr.mxu0 0.0
      %2379 = vmatpush1.msra.mxu0 0.0
      %2380 = vmatprep.subr.mxu0 0.0
      %2381 = vmatpush1.msra.mxu0 0.0
      %2382 = vmatprep.subr.mxu0 0.0
      %2383 = vmatpush1.msra.mxu0 0.0
      %2384 = vmatprep.subr.mxu0 0.0
      %2385 = vmatpush1.msra.mxu0 0.0
      %2386 = vmatprep.subr.mxu0 0.0
      %2387 = vmatpush1.msra.mxu0 0.0
      %2388 = vmatprep.subr.mxu0 0.0
      %2389 = vmatpush1.msra.mxu0 0.0
      %2390 = vmatprep.subr.mxu0 0.0
      %2391 = vmatpush1.msra.mxu0 0.0
      %2392 = vmatprep.subr.mxu0 0.0
      %2393 = vmatpush1.msra.mxu0 0.0
      %2394 = vmatprep.subr.mxu0 0.0
      %2395 = vmatpush1.msra.mxu0 0.0
      %2396 = vmatprep.subr.mxu0 0.0
      %2397 = vmatpush1.msra.mxu0 0.0
      %2398 = vmatprep.subr.mxu0 0.0
      %2399 = vmatpush1.msra.mxu0 0.0
      %2400 = vmatprep.subr.mxu0 0.0
      %2401 = vmatpush1.msra.mxu0 0.0
      %2402 = vmatprep.subr.mxu0 0.0
      %2403 = vmatpush1.msra.mxu0 0.0
      %2404 = vmatprep.subr.mxu0 0.0
      %2405 = vmatpush1.msra.mxu0 0.0
      %2406 = vmatprep.mubr.f32.mxu0 0.0
      %2407 = vmatmul.mubr.f32.gmra.mrb[0].mxu0 %v504
      %v2408 = vpop.f32.mrb[0].mxu0
      %v2409 = vadd.f32 %v2324, %v2408
      %v2410 = vpop.f32.mrb[0].mxu0
      %2411 = vmatprep.mubr.f32.mxu0 0.0
      %2412 = vmatmul.mubr.f32.gmra.mrb[0].mxu0 %v507
      %v2413 = vpop.f32.mrb[0].mxu0
      %v2414 = vadd.f32 %v2329, %v2413
      %v2415 = vpop.f32.mrb[0].mxu0
      %2416 = vmatprep.mubr.f32.mxu0 0.0
      %2417 = vmatmul.mubr.f32.gmra.mrb[0].mxu0 %v510
      %v2418 = vpop.f32.mrb[0].mxu0
      %v2419 = vadd.f32 %v2334, %v2418
      %v2420 = vpop.f32.mrb[0].mxu0
      %2421 = vmatprep.mubr.f32.mxu0 0.0
      %2422 = vmatmul.mubr.f32.gmra.mrb[0].mxu0 %v513
      %v2423 = vpop.f32.mrb[0].mxu0
      %v2424 = vadd.f32 %v2339, %v2423
      %v2425 = vpop.f32.mrb[0].mxu0
      %2426 = vdwg.mxu0
      %v2428 = vsel %vm405, %v2409, 0
      %v2431 = vsel %vm405, %v2414, 0
      %v2434 = vsel %vm405, %v2419, 0
      %v2437 = vsel %vm405, %v2424, 0
      %2439 = vmatprep.subr.mxu0 0.0
      %2440 = vmatpush1.msra.mxu0 %v399
      %2441 = vmatprep.subr.mxu0 0.0
      %2442 = vmatpush1.msra.mxu0 %v400
      %2443 = vmatprep.subr.mxu0 0.0
      %2444 = vmatpush1.msra.mxu0 0.0
      %2445 = vmatprep.subr.mxu0 0.0
      %2446 = vmatpush1.msra.mxu0 0.0
      %2447 = vmatprep.subr.mxu0 0.0
      %2448 = vmatpush1.msra.mxu0 0.0
      %2449 = vmatprep.subr.mxu0 0.0
      %2450 = vmatpush1.msra.mxu0 0.0
      %2451 = vmatprep.subr.mxu0 0.0
      %2452 = vmatpush1.msra.mxu0 0.0
      %2453 = vmatprep.subr.mxu0 0.0
      %2454 = vmatpush1.msra.mxu0 0.0
      %2455 = vmatprep.subr.mxu0 0.0
      %2456 = vmatpush1.msra.mxu0 0.0
      %2457 = vmatprep.subr.mxu0 0.0
      %2458 = vmatpush1.msra.mxu0 0.0
      %2459 = vmatprep.subr.mxu0 0.0
      %2460 = vmatpush1.msra.mxu0 0.0
      %2461 = vmatprep.subr.mxu0 0.0
      %2462 = vmatpush1.msra.mxu0 0.0
      %2463 = vmatprep.subr.mxu0 0.0
      %2464 = vmatpush1.msra.mxu0 0.0
      %2465 = vmatprep.subr.mxu0 0.0
      %2466 = vmatpush1.msra.mxu0 0.0
      %2467 = vmatprep.subr.mxu0 0.0
      %2468 = vmatpush1.msra.mxu0 0.0
      %2469 = vmatprep.subr.mxu0 0.0
      %2470 = vmatpush1.msra.mxu0 0.0
      %2471 = vmatprep.subr.mxu0 0.0
      %2472 = vmatpush1.msra.mxu0 0.0
      %2473 = vmatprep.subr.mxu0 0.0
      %2474 = vmatpush1.msra.mxu0 0.0
      %2475 = vmatprep.subr.mxu0 0.0
      %2476 = vmatpush1.msra.mxu0 0.0
      %2477 = vmatprep.subr.mxu0 0.0
      %2478 = vmatpush1.msra.mxu0 0.0
      %2479 = vmatprep.subr.mxu0 0.0
      %2480 = vmatpush1.msra.mxu0 0.0
      %2481 = vmatprep.subr.mxu0 0.0
      %2482 = vmatpush1.msra.mxu0 0.0
      %2483 = vmatprep.subr.mxu0 0.0
      %2484 = vmatpush1.msra.mxu0 0.0
      %2485 = vmatprep.subr.mxu0 0.0
      %2486 = vmatpush1.msra.mxu0 0.0
      %2487 = vmatprep.subr.mxu0 0.0
      %2488 = vmatpush1.msra.mxu0 0.0
      %2489 = vmatprep.subr.mxu0 0.0
      %2490 = vmatpush1.msra.mxu0 0.0
      %2491 = vmatprep.subr.mxu0 0.0
      %2492 = vmatpush1.msra.mxu0 0.0
      %2493 = vmatprep.subr.mxu0 0.0
      %2494 = vmatpush1.msra.mxu0 0.0
      %2495 = vmatprep.subr.mxu0 0.0
      %2496 = vmatpush1.msra.mxu0 0.0
      %2497 = vmatprep.subr.mxu0 0.0
      %2498 = vmatpush1.msra.mxu0 0.0
      %2499 = vmatprep.subr.mxu0 0.0
      %2500 = vmatpush1.msra.mxu0 0.0
      %2501 = vmatprep.subr.mxu0 0.0
      %2502 = vmatpush1.msra.mxu0 0.0
      %2503 = vmatprep.mubr.f32.mxu0 0.0
      %2504 = vmatmul.mubr.f32.gmra.mrb[0].mxu0 %v2428
      %v2505 = vpop.f32.mrb[0].mxu0
      %v2506 = vadd.f32 0.0, %v2505
      %v2507 = vpop.f32.mrb[0].mxu0
      %2508 = vmatprep.mubr.f32.mxu0 0.0
      %2509 = vmatmul.mubr.f32.gmra.mrb[0].mxu0 %v2431
      %v2510 = vpop.f32.mrb[0].mxu0
      %v2511 = vadd.f32 0.0, %v2510
      %v2512 = vpop.f32.mrb[0].mxu0
      %2513 = vmatprep.mubr.f32.mxu0 0.0
      %2514 = vmatmul.mubr.f32.gmra.mrb[0].mxu0 %v2434
      %v2515 = vpop.f32.mrb[0].mxu0
      %v2516 = vadd.f32 0.0, %v2515
      %v2517 = vpop.f32.mrb[0].mxu0
      %2518 = vmatprep.mubr.f32.mxu0 0.0
      %2519 = vmatmul.mubr.f32.gmra.mrb[0].mxu0 %v2437
      %v2520 = vpop.f32.mrb[0].mxu0
      %v2521 = vadd.f32 0.0, %v2520
      %v2522 = vpop.f32.mrb[0].mxu0
      %2523 = vdwg.mxu0
      %v2525 = vsel %vm405, %v2233, 0
      %v2528 = vsel %vm405, %v2238, 0
      %v2531 = vsel %vm405, %v2243, 0
      %v2534 = vsel %vm405, %v2248, 0
      %2536 = vmatprep.subr.mxu0 0.0
      %2537 = vmatpush1.msra.mxu0 %v397
      %2538 = vmatprep.subr.mxu0 0.0
      %2539 = vmatpush1.msra.mxu0 %v398
      %2540 = vmatprep.subr.mxu0 0.0
      %2541 = vmatpush1.msra.mxu0 0.0
      %2542 = vmatprep.subr.mxu0 0.0
      %2543 = vmatpush1.msra.mxu0 0.0
      %2544 = vmatprep.subr.mxu0 0.0
      %2545 = vmatpush1.msra.mxu0 0.0
      %2546 = vmatprep.subr.mxu0 0.0
      %2547 = vmatpush1.msra.mxu0 0.0
      %2548 = vmatprep.subr.mxu0 0.0
      %2549 = vmatpush1.msra.mxu0 0.0
      %2550 = vmatprep.subr.mxu0 0.0
      %2551 = vmatpush1.msra.mxu0 0.0
      %2552 = vmatprep.subr.mxu0 0.0
      %2553 = vmatpush1.msra.mxu0 0.0
      %2554 = vmatprep.subr.mxu0 0.0
      %2555 = vmatpush1.msra.mxu0 0.0
      %2556 = vmatprep.subr.mxu0 0.0
      %2557 = vmatpush1.msra.mxu0 0.0
      %2558 = vmatprep.subr.mxu0 0.0
      %2559 = vmatpush1.msra.mxu0 0.0
      %2560 = vmatprep.subr.mxu0 0.0
      %2561 = vmatpush1.msra.mxu0 0.0
      %2562 = vmatprep.subr.mxu0 0.0
      %2563 = vmatpush1.msra.mxu0 0.0
      %2564 = vmatprep.subr.mxu0 0.0
      %2565 = vmatpush1.msra.mxu0 0.0
      %2566 = vmatprep.subr.mxu0 0.0
      %2567 = vmatpush1.msra.mxu0 0.0
      %2568 = vmatprep.subr.mxu0 0.0
      %2569 = vmatpush1.msra.mxu0 0.0
      %2570 = vmatprep.subr.mxu0 0.0
      %2571 = vmatpush1.msra.mxu0 0.0
      %2572 = vmatprep.subr.mxu0 0.0
      %2573 = vmatpush1.msra.mxu0 0.0
      %2574 = vmatprep.subr.mxu0 0.0
      %2575 = vmatpush1.msra.mxu0 0.0
      %2576 = vmatprep.subr.mxu0 0.0
      %2577 = vmatpush1.msra.mxu0 0.0
      %2578 = vmatprep.subr.mxu0 0.0
      %2579 = vmatpush1.msra.mxu0 0.0
      %2580 = vmatprep.subr.mxu0 0.0
      %2581 = vmatpush1.msra.mxu0 0.0
      %2582 = vmatprep.subr.mxu0 0.0
      %2583 = vmatpush1.msra.mxu0 0.0
      %2584 = vmatprep.subr.mxu0 0.0
      %2585 = vmatpush1.msra.mxu0 0.0
      %2586 = vmatprep.subr.mxu0 0.0
      %2587 = vmatpush1.msra.mxu0 0.0
      %2588 = vmatprep.subr.mxu0 0.0
      %2589 = vmatpush1.msra.mxu0 0.0
      %2590 = vmatprep.subr.mxu0 0.0
      %2591 = vmatpush1.msra.mxu0 0.0
      %2592 = vmatprep.subr.mxu0 0.0
      %2593 = vmatpush1.msra.mxu0 0.0
      %2594 = vmatprep.subr.mxu0 0.0
      %2595 = vmatpush1.msra.mxu0 0.0
      %2596 = vmatprep.subr.mxu0 0.0
      %2597 = vmatpush1.msra.mxu0 0.0
      %2598 = vmatprep.subr.mxu0 0.0
      %2599 = vmatpush1.msra.mxu0 0.0
      %2600 = vmatprep.mubr.f32.mxu0 0.0
      %2601 = vmatmul.mubr.f32.gmra.mrb[0].mxu0 %v2525
      %v2602 = vpop.f32.mrb[0].mxu0
      %v2603 = vadd.f32 %v2506, %v2602
      %v2604 = vpop.f32.mrb[0].mxu0
      %2605 = vmatprep.mubr.f32.mxu0 0.0
      %2606 = vmatmul.mubr.f32.gmra.mrb[0].mxu0 %v2528
      %v2607 = vpop.f32.mrb[0].mxu0
      %v2608 = vadd.f32 %v2511, %v2607
      %v2609 = vpop.f32.mrb[0].mxu0
      %2610 = vmatprep.mubr.f32.mxu0 0.0
      %2611 = vmatmul.mubr.f32.gmra.mrb[0].mxu0 %v2531
      %v2612 = vpop.f32.mrb[0].mxu0
      %v2613 = vadd.f32 %v2516, %v2612
      %v2614 = vpop.f32.mrb[0].mxu0
      %2615 = vmatprep.mubr.f32.mxu0 0.0
      %2616 = vmatmul.mubr.f32.gmra.mrb[0].mxu0 %v2534
      %v2617 = vpop.f32.mrb[0].mxu0
      %v2618 = vadd.f32 %v2521, %v2617
      %v2619 = vpop.f32.mrb[0].mxu0
      %2620 = vdwg.mxu0
      %s2621 = scalar_lea.vmem %s387, 96
      %2622 = vst.msk [vmem:[%s2621] sm:$0xff] %vm968, %v2603
      %2623 = vst.msk [vmem:[%s2621 + $0x8] sm:$0xff] %vm968, %v2608
      %2624 = vst.msk [vmem:[%s2621 + $0x10] sm:$0xff] %vm968, %v2613
      %2625 = vst.msk [vmem:[%s2621 + $0x18] sm:$0xff] %vm968, %v2618
      %s2626 = smul.u32 4, %s19
      %p2627 = scmp.lt.s32.totalorder %s2626, 7
      %s2628 = scalar_select %p2627, %s2626, 7
      %s2629 = smul.addr %s2628, 4
      %s2630 = smul.addr %s2629, 8
      %s2631 = scalar_lea.vmem %s8, %s2630
      // Predicated region
      $region53: #{dtcwt_inverse.4} parent=51 // pred_check
        %p2632 = pneg %p225
      $region54: #{dtcwt_inverse.4} parent=51 // pred_check_branch
        %2634 = sbr.rel (%p2632) target = $region56
      $region55: #{dtcwt_inverse.4} parent=51 // pred_region
        %s2635 = smul.u32 4, %s19
      $region56: #{dtcwt_inverse.4} parent=51 // pred_fallthru
        _
    $region52: #{dtcwt_inverse.4} parent=5 // pred_fallthru
      _
    %p2636 = scmp.le.s32.totalorder 2, %s14
    // Predicated region
    $region57: #{dtcwt_inverse.4} parent=5 // pred_check
      %p2637 = pneg %p2636
    $region58: #{dtcwt_inverse.4} parent=5 // pred_check_branch
      %2639 = sbr.rel (%p2637) target = $region60
    $region59: #{dtcwt_inverse.4} parent=5 // pred_region
      %s2640 = ssub.s32 %s14, 2
      // Predicated region
      $region61: #{dtcwt_inverse.4} parent=59 // pred_check
        %p2641 = pneg %p231
      $region62: #{dtcwt_inverse.4} parent=59 // pred_check_branch
        %2643 = sbr.rel (%p2641) target = $region64
      $region63: #{dtcwt_inverse.4} parent=59 // pred_region
        %s2644 = smul.u32 4, %s20
        %p2645 = scmp.lt.s32.totalorder %s2644, 7
        %s2646 = scalar_select %p2645, %s2644, 7
        %s2647 = smul.addr %s2646, 4
        %s2648 = smul.addr %s2647, 8
        %s2649 = scalar_lea.vmem %s8, %s2648
      $region64: #{dtcwt_inverse.4} parent=59 // pred_fallthru
        _
    $region60: #{dtcwt_inverse.4} parent=5 // pred_fallthru
      _
  $region6: #{dtcwt_inverse.4} parent=0 // loop_footer
    %s18 = sadd.s32 1, %s14
  $region7: #{dtcwt_inverse.4} parent=0 // loop_footer_branch
    %13 = sbr.rel target = $region3
  $region8: #{dtcwt_inverse.4} parent=0 // loop_exit
    _

// kernel: dtcwt_inverse.5
$region0: #{dtcwt_inverse.5}
  #allocation0 [shape = 'u32[]', space=smem, size = 0x4, offset = 0x4, fixed_abs, tag = 'smem constant byte address 0x4 - core index']
  #allocation1 [shape = 'u32[144,128]{1,0:T(1,128)}', space=vmem, size = 0x12000, scoped, tag = 'internal scratch']
  %s0 = inlined_call_operand.vmem [shape: f32[32,32], index: 0, kind: input, shape index: {}, may-alias: {0,2}]
  %s1 = inlined_call_operand.vmem [shape: f32[32,32], index: 1, kind: input, shape index: {}, may-alias: {1,3}]
  %s2 = inlined_call_operand.vmem [shape: f32[32,32], index: 2, kind: input, shape index: {}, may-alias: {0,2}]
  %s3 = inlined_call_operand.vmem [shape: f32[32,32], index: 3, kind: input, shape index: {}, may-alias: {1,3}]
  %s4 = inlined_call_operand.vmem [shape: f32[8,32,32], index: 4, kind: input, shape index: {}]
  %s5 = inlined_call_operand.vmem [shape: f32[8,32,32], index: 5, kind: input, shape index: {}]
  %s6 = inlined_call_operand.vmem [shape: f32[8,32,32], index: 6, kind: input, shape index: {}]
  %s7 = inlined_call_operand.vmem [shape: f32[8,32,32], index: 7, kind: input, shape index: {}]
  %s8 = inlined_call_operand.hbm [shape: f32[8,32,32], index: 8, kind: output, shape index: {}]
  %s9 = sld [smem:[#allocation0]]
  $region65: #{dtcwt_inverse.5} parent=0
    _
  %s11 = ssub.s32 1, %s9
  %s12 = scalar_select 0, %s11, %s9
  $region1: #{dtcwt_inverse.5} parent=0
    #allocation2 [shape = 'u8[131072]{0}', space=vmem, size = 0x20000, scoped, tag = 'output window, operand 0']
    #allocation3 [shape = 's32[2]{0}', space=sflag, size = 0x8, scoped, tag = 'scoped memory for dtcwt_inverse.5']
    %13 = vsyncpa [#allocation3], 0
    %s14 = scalar_lea.sflag [#allocation3], 1
    %15 = vsyncpa %s14, 0
    loop: start=0, step=1, limit=4
    $region2: #{dtcwt_inverse.5} parent=1 // loop_pre_header
      _
    $region3: #{dtcwt_inverse.5} parent=1 // loop_header
      %s17 = sphi 0, %s21
      %p18 = scmp.ge.s32.totalorder %s17, 4
      %s25 = sphi 0, %s25
      %s27 = sphi 0, %s25
      %s28 = sphi 0, %s27
      %s42 = sphi 0, %s28
      %s46 = sphi 0, %s46
      %s48 = sphi 0, %s46
      %s49 = sphi 0, %s48
      %s63 = sphi 0, %s49
      %s67 = sphi 0, %s67
      %s69 = sphi 0, %s67
      %s70 = sphi 0, %s69
      %s84 = sphi 0, %s70
      %s88 = sphi 0, %s88
      %s90 = sphi 0, %s88
      %s91 = sphi 0, %s90
      %s105 = sphi 0, %s91
      %s111 = sphi 0, %s113
      %s114 = sphi 0, %s111
      %s115 = sphi 0, %s114
      %s131 = sphi 0, %s115
      %s137 = sphi 0, %s139
      %s140 = sphi 0, %s137
      %s141 = sphi 0, %s140
      %s157 = sphi 0, %s141
      %s163 = sphi 0, %s165
      %s166 = sphi 0, %s163
      %s167 = sphi 0, %s166
      %s183 = sphi 0, %s167
      %s189 = sphi 0, %s191
      %s192 = sphi 0, %s189
      %s193 = sphi 0, %s192
      %s209 = sphi 0, %s193
      %s215 = sphi 0, %s217
      %s218 = sphi 0, %s215
      %s219 = sphi 0, %s218
      %s235 = sphi 0, %s219
    $region4: #{dtcwt_inverse.5} parent=1 // loop_header_branch
      %20 = sbr.rel (%p18) target = $region8
    $region5: #{dtcwt_inverse.5} parent=1 // loop_body
      %s22 = ssub.s32 %s17, 1
      %s23 = ssub.s32 %s17, 2
      %s24 = sadd.s32 %s17, 1
      %s26 = sadd.s32 %s25, 1
      %p29 = scmp.eq.s32.totalorder %s17, 1
      %p30 = scmp.ne.s32.totalorder %s25, %s27
      %p31 = scmp.eq.s32.totalorder %s17, 0
      %p32 = por %p30, %p31
      %p33 = scmp.ne.s32.totalorder %s25, %s27
      %p34 = scmp.eq.s32.totalorder %s22, 1
      %p35 = por %p33, %p34
      %p36 = scmp.ne.s32.totalorder %s27, %s28
      %p37 = scmp.eq.s32.totalorder %s22, 0
      %p38 = por %p36, %p37
      %p39 = scmp.ne.s32.totalorder %s27, %s28
      %p40 = scmp.eq.s32.totalorder %s23, 1
      %p41 = por %p39, %p40
      %p43 = scmp.ne.s32.totalorder %s28, %s42
      %p44 = scmp.eq.s32.totalorder %s23, 0
      %p45 = por %p43, %p44
      %s47 = sadd.s32 %s46, 1
      %p50 = scmp.eq.s32.totalorder %s17, 1
      %p51 = scmp.ne.s32.totalorder %s46, %s48
      %p52 = scmp.eq.s32.totalorder %s17, 0
      %p53 = por %p51, %p52
      %p54 = scmp.ne.s32.totalorder %s46, %s48
      %p55 = scmp.eq.s32.totalorder %s22, 1
      %p56 = por %p54, %p55
      %p57 = scmp.ne.s32.totalorder %s48, %s49
      %p58 = scmp.eq.s32.totalorder %s22, 0
      %p59 = por %p57, %p58
      %p60 = scmp.ne.s32.totalorder %s48, %s49
      %p61 = scmp.eq.s32.totalorder %s23, 1
      %p62 = por %p60, %p61
      %p64 = scmp.ne.s32.totalorder %s49, %s63
      %p65 = scmp.eq.s32.totalorder %s23, 0
      %p66 = por %p64, %p65
      %s68 = sadd.s32 %s67, 1
      %p71 = scmp.eq.s32.totalorder %s17, 1
      %p72 = scmp.ne.s32.totalorder %s67, %s69
      %p73 = scmp.eq.s32.totalorder %s17, 0
      %p74 = por %p72, %p73
      %p75 = scmp.ne.s32.totalorder %s67, %s69
      %p76 = scmp.eq.s32.totalorder %s22, 1
      %p77 = por %p75, %p76
      %p78 = scmp.ne.s32.totalorder %s69, %s70
      %p79 = scmp.eq.s32.totalorder %s22, 0
      %p80 = por %p78, %p79
      %p81 = scmp.ne.s32.totalorder %s69, %s70
      %p82 = scmp.eq.s32.totalorder %s23, 1
      %p83 = por %p81, %p82
      %p85 = scmp.ne.s32.totalorder %s70, %s84
      %p86 = scmp.eq.s32.totalorder %s23, 0
      %p87 = por %p85, %p86
      %s89 = sadd.s32 %s88, 1
      %p92 = scmp.eq.s32.totalorder %s17, 1
      %p93 = scmp.ne.s32.totalorder %s88, %s90
      %p94 = scmp.eq.s32.totalorder %s17, 0
      %p95 = por %p93, %p94
      %p96 = scmp.ne.s32.totalorder %s88, %s90
      %p97 = scmp.eq.s32.totalorder %s22, 1
      %p98 = por %p96, %p97
      %p99 = scmp.ne.s32.totalorder %s90, %s91
      %p100 = scmp.eq.s32.totalorder %s22, 0
      %p101 = por %p99, %p100
      %p102 = scmp.ne.s32.totalorder %s90, %s91
      %p103 = scmp.eq.s32.totalorder %s23, 1
      %p104 = por %p102, %p103
      %p106 = scmp.ne.s32.totalorder %s91, %s105
      %p107 = scmp.eq.s32.totalorder %s23, 0
      %p108 = por %p106, %p107
      %s109 = ssub.s32 %s17, %s24
      %p110 = scmp.eq.s32.totalorder %s109, 0
      %s112 = sadd.s32 %s111, 1
      %s113 = scalar_select %p110, %s111, %s112
      %p116 = pneg %p110
      %p117 = scmp.eq.s32.totalorder %s17, 1
      %p118 = por %p116, %p117
      %p119 = scmp.ne.s32.totalorder %s111, %s114
      %p120 = scmp.eq.s32.totalorder %s17, 0
      %p121 = por %p119, %p120
      %p122 = scmp.ne.s32.totalorder %s111, %s114
      %p123 = scmp.eq.s32.totalorder %s22, 1
      %p124 = por %p122, %p123
      %p125 = scmp.ne.s32.totalorder %s114, %s115
      %p126 = scmp.eq.s32.totalorder %s22, 0
      %p127 = por %p125, %p126
      %p128 = scmp.ne.s32.totalorder %s114, %s115
      %p129 = scmp.eq.s32.totalorder %s23, 1
      %p130 = por %p128, %p129
      %p132 = scmp.ne.s32.totalorder %s115, %s131
      %p133 = scmp.eq.s32.totalorder %s23, 0
      %p134 = por %p132, %p133
      %s135 = ssub.s32 %s17, %s24
      %p136 = scmp.eq.s32.totalorder %s135, 0
      %s138 = sadd.s32 %s137, 1
      %s139 = scalar_select %p136, %s137, %s138
      %p142 = pneg %p136
      %p143 = scmp.eq.s32.totalorder %s17, 1
      %p144 = por %p142, %p143
      %p145 = scmp.ne.s32.totalorder %s137, %s140
      %p146 = scmp.eq.s32.totalorder %s17, 0
      %p147 = por %p145, %p146
      %p148 = scmp.ne.s32.totalorder %s137, %s140
      %p149 = scmp.eq.s32.totalorder %s22, 1
      %p150 = por %p148, %p149
      %p151 = scmp.ne.s32.totalorder %s140, %s141
      %p152 = scmp.eq.s32.totalorder %s22, 0
      %p153 = por %p151, %p152
      %p154 = scmp.ne.s32.totalorder %s140, %s141
      %p155 = scmp.eq.s32.totalorder %s23, 1
      %p156 = por %p154, %p155
      %p158 = scmp.ne.s32.totalorder %s141, %s157
      %p159 = scmp.eq.s32.totalorder %s23, 0
      %p160 = por %p158, %p159
      %s161 = ssub.s32 %s17, %s24
      %p162 = scmp.eq.s32.totalorder %s161, 0
      %s164 = sadd.s32 %s163, 1
      %s165 = scalar_select %p162, %s163, %s164
      %p168 = pneg %p162
      %p169 = scmp.eq.s32.totalorder %s17, 1
      %p170 = por %p168, %p169
      %p171 = scmp.ne.s32.totalorder %s163, %s166
      %p172 = scmp.eq.s32.totalorder %s17, 0
      %p173 = por %p171, %p172
      %p174 = scmp.ne.s32.totalorder %s163, %s166
      %p175 = scmp.eq.s32.totalorder %s22, 1
      %p176 = por %p174, %p175
      %p177 = scmp.ne.s32.totalorder %s166, %s167
      %p178 = scmp.eq.s32.totalorder %s22, 0
      %p179 = por %p177, %p178
      %p180 = scmp.ne.s32.totalorder %s166, %s167
      %p181 = scmp.eq.s32.totalorder %s23, 1
      %p182 = por %p180, %p181
      %p184 = scmp.ne.s32.totalorder %s167, %s183
      %p185 = scmp.eq.s32.totalorder %s23, 0
      %p186 = por %p184, %p185
      %s187 = ssub.s32 %s17, %s24
      %p188 = scmp.eq.s32.totalorder %s187, 0
      %s190 = sadd.s32 %s189, 1
      %s191 = scalar_select %p188, %s189, %s190
      %p194 = pneg %p188
      %p195 = scmp.eq.s32.totalorder %s17, 1
      %p196 = por %p194, %p195
      %p197 = scmp.ne.s32.totalorder %s189, %s192
      %p198 = scmp.eq.s32.totalorder %s17, 0
      %p199 = por %p197, %p198
      %p200 = scmp.ne.s32.totalorder %s189, %s192
      %p201 = scmp.eq.s32.totalorder %s22, 1
      %p202 = por %p200, %p201
      %p203 = scmp.ne.s32.totalorder %s192, %s193
      %p204 = scmp.eq.s32.totalorder %s22, 0
      %p205 = por %p203, %p204
      %p206 = scmp.ne.s32.totalorder %s192, %s193
      %p207 = scmp.eq.s32.totalorder %s23, 1
      %p208 = por %p206, %p207
      %p210 = scmp.ne.s32.totalorder %s193, %s209
      %p211 = scmp.eq.s32.totalorder %s23, 0
      %p212 = por %p210, %p211
      %s213 = ssub.s32 %s17, %s24
      %p214 = scmp.eq.s32.totalorder %s213, 0
      %s216 = sadd.s32 %s215, 1
      %s217 = scalar_select %p214, %s215, %s216
      %p220 = pneg %p214
      %p221 = scmp.eq.s32.totalorder %s17, 1
      %p222 = por %p220, %p221
      %p223 = scmp.ne.s32.totalorder %s215, %s218
      %p224 = scmp.eq.s32.totalorder %s17, 0
      %p225 = por %p223, %p224
      %p226 = scmp.ne.s32.totalorder %s215, %s218
      %p227 = scmp.eq.s32.totalorder %s22, 1
      %p228 = por %p226, %p227
      %p229 = scmp.ne.s32.totalorder %s218, %s219
      %p230 = scmp.eq.s32.totalorder %s22, 0
      %p231 = por %p229, %p230
      %p232 = scmp.ne.s32.totalorder %s218, %s219
      %p233 = scmp.eq.s32.totalorder %s23, 1
      %p234 = por %p232, %p233
      %p236 = scmp.ne.s32.totalorder %s219, %s235
      %p237 = scmp.eq.s32.totalorder %s23, 0
      %p238 = por %p236, %p237
      %p239 = scmp.le.s32.totalorder 1, %s17
      %p240 = scmp.lt.s32.totalorder %s17, 3
      %p241 = pnand %p239, %p240
      %p242 = pneg %p241
      // Predicated region
      $region9: #{dtcwt_inverse.5} parent=5 // pred_check
        _
      $region10: #{dtcwt_inverse.5} parent=5 // pred_check_branch
        %244 = sbr.rel (%p241) target = $region12
      $region11: #{dtcwt_inverse.5} parent=5 // pred_region
        %s245 = ssub.s32 %s17, 1
        // Predicated region
        $region13: #{dtcwt_inverse.5} parent=11 // pred_check
          %p246 = pneg %p38
        $region14: #{dtcwt_inverse.5} parent=11 // pred_check_branch
          %248 = sbr.rel (%p246) target = $region16
        $region15: #{dtcwt_inverse.5} parent=11 // pred_region
          _
        $region16: #{dtcwt_inverse.5} parent=11 // pred_fallthru
          _
        // Predicated region
        $region17: #{dtcwt_inverse.5} parent=11 // pred_check
          %p249 = pneg %p59
        $region18: #{dtcwt_inverse.5} parent=11 // pred_check_branch
          %251 = sbr.rel (%p249) target = $region20
        $region19: #{dtcwt_inverse.5} parent=11 // pred_region
          _
        $region20: #{dtcwt_inverse.5} parent=11 // pred_fallthru
          _
        // Predicated region
        $region21: #{dtcwt_inverse.5} parent=11 // pred_check
          %p252 = pneg %p80
        $region22: #{dtcwt_inverse.5} parent=11 // pred_check_branch
          %254 = sbr.rel (%p252) target = $region24
        $region23: #{dtcwt_inverse.5} parent=11 // pred_region
          _
        $region24: #{dtcwt_inverse.5} parent=11 // pred_fallthru
          _
        // Predicated region
        $region25: #{dtcwt_inverse.5} parent=11 // pred_check
          %p255 = pneg %p101
        $region26: #{dtcwt_inverse.5} parent=11 // pred_check_branch
          %257 = sbr.rel (%p255) target = $region28
        $region27: #{dtcwt_inverse.5} parent=11 // pred_region
          _
        $region28: #{dtcwt_inverse.5} parent=11 // pred_fallthru
          _
      $region12: #{dtcwt_inverse.5} parent=5 // pred_fallthru
        _
      %p258 = scmp.lt.s32.totalorder %s17, 2
      // Predicated region
      $region29: #{dtcwt_inverse.5} parent=5 // pred_check
        %p259 = pneg %p258
      $region30: #{dtcwt_inverse.5} parent=5 // pred_check_branch
        %261 = sbr.rel (%p259) target = $region32
      $region31: #{dtcwt_inverse.5} parent=5 // pred_region
        // Predicated region
        $region33: #{dtcwt_inverse.5} parent=31 // pred_check
          %p262 = pneg %p121
        $region34: #{dtcwt_inverse.5} parent=31 // pred_check_branch
          %264 = sbr.rel (%p262) target = $region36
        $region35: #{dtcwt_inverse.5} parent=31 // pred_region
          %s265 = smul.u32 4, %s17
          %p266 = scmp.lt.s32.totalorder %s265, 7
          %s267 = scalar_select %p266, %s265, 7
          %s268 = smul.addr %s267, 4
          %s269 = smul.addr %s268, 8
          %s270 = scalar_lea.vmem %s4, %s269
          %s271 = smul.u32 4, %s17
        $region36: #{dtcwt_inverse.5} parent=31 // pred_fallthru
          _
        // Predicated region
        $region37: #{dtcwt_inverse.5} parent=31 // pred_check
          %p272 = pneg %p147
        $region38: #{dtcwt_inverse.5} parent=31 // pred_check_branch
          %274 = sbr.rel (%p272) target = $region40
        $region39: #{dtcwt_inverse.5} parent=31 // pred_region
          %s275 = smul.u32 4, %s17
          %p276 = scmp.lt.s32.totalorder %s275, 7
          %s277 = scalar_select %p276, %s275, 7
          %s278 = smul.addr %s277, 4
          %s279 = smul.addr %s278, 8
          %s280 = scalar_lea.vmem %s5, %s279
          %s281 = smul.u32 4, %s17
        $region40: #{dtcwt_inverse.5} parent=31 // pred_fallthru
          _
        // Predicated region
        $region41: #{dtcwt_inverse.5} parent=31 // pred_check
          %p282 = pneg %p173
        $region42: #{dtcwt_inverse.5} parent=31 // pred_check_branch
          %284 = sbr.rel (%p282) target = $region44
        $region43: #{dtcwt_inverse.5} parent=31 // pred_region
          %s285 = smul.u32 4, %s17
          %p286 = scmp.lt.s32.totalorder %s285, 7
          %s287 = scalar_select %p286, %s285, 7
          %s288 = smul.addr %s287, 4
          %s289 = smul.addr %s288, 8
          %s290 = scalar_lea.vmem %s6, %s289
          %s291 = smul.u32 4, %s17
        $region44: #{dtcwt_inverse.5} parent=31 // pred_fallthru
          _
        // Predicated region
        $region45: #{dtcwt_inverse.5} parent=31 // pred_check
          %p292 = pneg %p199
        $region46: #{dtcwt_inverse.5} parent=31 // pred_check_branch
          %294 = sbr.rel (%p292) target = $region48
        $region47: #{dtcwt_inverse.5} parent=31 // pred_region
          %s295 = smul.u32 4, %s17
          %p296 = scmp.lt.s32.totalorder %s295, 7
          %s297 = scalar_select %p296, %s295, 7
          %s298 = smul.addr %s297, 4
          %s299 = smul.addr %s298, 8
          %s300 = scalar_lea.vmem %s7, %s299
          %s301 = smul.u32 4, %s17
        $region48: #{dtcwt_inverse.5} parent=31 // pred_fallthru
          _
      $region32: #{dtcwt_inverse.5} parent=5 // pred_fallthru
        _
      %p302 = scmp.le.s32.totalorder 1, %s17
      %p303 = scmp.lt.s32.totalorder %s17, 3
      %p304 = pnand %p302, %p303
      %p305 = pneg %p304
      // Predicated region
      $region49: #{dtcwt_inverse.5} parent=5 // pred_check
        _
      $region50: #{dtcwt_inverse.5} parent=5 // pred_check_branch
        %307 = sbr.rel (%p304) target = $region52
      $region51: #{dtcwt_inverse.5} parent=5 // pred_region
        %s308 = ssub.s32 %s17, 1
        %p309 = pneg %p38
        %p310 = pneg %p35
        %p311 = pneg %p59
        %p312 = pneg %p56
        %p313 = pneg %p80
        %p314 = pneg %p77
        %p315 = pneg %p101
        %p316 = pneg %p98
        %s317 = smul.u32 4, %s22
        %p318 = scmp.lt.s32.totalorder %s317, 7
        %s319 = scalar_select %p318, %s317, 7
        %s320 = smul.addr %s319, 4
        %s321 = smul.addr %s320, 8
        %s322 = scalar_lea.vmem %s4, %s321
        %p323 = pneg %p127
        %p324 = pneg %p124
        %s325 = smul.u32 4, %s22
        %p326 = scmp.lt.s32.totalorder %s325, 7
        %s327 = scalar_select %p326, %s325, 7
        %s328 = smul.addr %s327, 4
        %s329 = smul.addr %s328, 8
        %s330 = scalar_lea.vmem %s5, %s329
        %p331 = pneg %p153
        %p332 = pneg %p150
        %s333 = smul.u32 4, %s22
        %p334 = scmp.lt.s32.totalorder %s333, 7
        %s335 = scalar_select %p334, %s333, 7
        %s336 = smul.addr %s335, 4
        %s337 = smul.addr %s336, 8
        %s338 = scalar_lea.vmem %s6, %s337
        %p339 = pneg %p179
        %p340 = pneg %p176
        %s341 = smul.u32 4, %s22
        %p342 = scmp.lt.s32.totalorder %s341, 7
        %s343 = scalar_select %p342, %s341, 7
        %s344 = smul.addr %s343, 4
        %s345 = smul.addr %s344, 8
        %s346 = scalar_lea.vmem %s7, %s345
        %p347 = pneg %p205
        %p348 = pneg %p202
        %p349 = pneg %p231
        %p350 = pneg %p228
        %s351 = sand.u32 %s218, 1
        %s352 = scalar_lea.sflag [#allocation3], %s351
        %s353 = sand.u32 %s218, 1
        %s354 = smul.addr %s353, 128
        %s355 = scalar_lea.vmem [#allocation2], %s354
        %s356 = smul.u32 4, %s22
        %p357 = scmp.lt.s32.totalorder %s356, 7
        %s358 = scalar_select %p357, %s356, 7
        %s359 = smul.addr %s358, 4
        %s360 = smul.addr %s359, 8
        %s361 = scalar_lea.vmem %s4, %s360
        %s362 = smul.u32 4, %s22
        %s363 = smul.u32 4, %s22
        %p364 = scmp.lt.s32.totalorder %s363, 7
        %s365 = scalar_select %p364, %s363, 7
        %s366 = smul.addr %s365, 4
        %s367 = smul.addr %s366, 8
        %s368 = scalar_lea.vmem %s5, %s367
        %s369 = smul.u32 4, %s22
        %s370 = smul.u32 4, %s22
        %p371 = scmp.lt.s32.totalorder %s370, 7
        %s372 = scalar_select %p371, %s370, 7
        %s373 = smul.addr %s372, 4
        %s374 = smul.addr %s373, 8
        %s375 = scalar_lea.vmem %s6, %s374
        %s376 = smul.u32 4, %s22
        %s377 = smul.u32 4, %s22
        %p378 = scmp.lt.s32.totalorder %s377, 7
        %s379 = scalar_select %p378, %s377, 7
        %s380 = smul.addr %s379, 4
        %s381 = smul.addr %s380, 8
        %s382 = scalar_lea.vmem %s7, %s381
        %s383 = smul.u32 4, %s22
        %s384 = smul.u32 4, %s22
        %v385 = vld [vmem:[%s0] sm:$0xff]
        %v386 = vld [vmem:[%s0 + $0x8] sm:$0xff]
        %v387 = vld [vmem:[%s0 + $0x10] sm:$0xff]
        %v388 = vld [vmem:[%s0 + $0x18] sm:$0xff]
        %v389 = vld [vmem:[%s1] sm:$0xff]
        %v390 = vld [vmem:[%s1 + $0x8] sm:$0xff]
        %v391 = vld [vmem:[%s1 + $0x10] sm:$0xff]
        %v392 = vld [vmem:[%s1 + $0x18] sm:$0xff]
        %v393 = vld [vmem:[%s2] sm:$0xff]
        %v394 = vld [vmem:[%s2 + $0x8] sm:$0xff]
        %v395 = vld [vmem:[%s2 + $0x10] sm:$0xff]
        %v396 = vld [vmem:[%s2 + $0x18] sm:$0xff]
        %v397 = vld [vmem:[%s3] sm:$0xff]
        %v398 = vld [vmem:[%s3 + $0x8] sm:$0xff]
        %v399 = vld [vmem:[%s3 + $0x10] sm:$0xff]
        %v400 = vld [vmem:[%s3 + $0x18] sm:$0xff]
        %v401 = vld [vmem:[%s361] sm:$0xff]
        %v402 = vld [vmem:[%s361 + $0x8] sm:$0xff]
        %v403 = vld [vmem:[%s361 + $0x10] sm:$0xff]
        %v404 = vld [vmem:[%s361 + $0x18] sm:$0xff]
        %v405 = vld [vmem:[%s368] sm:$0xff]
        %v406 = vld [vmem:[%s368 + $0x8] sm:$0xff]
        %v407 = vld [vmem:[%s368 + $0x10] sm:$0xff]
        %v408 = vld [vmem:[%s368 + $0x18] sm:$0xff]
        %vm409 = vcmask 261120
        %v411 = vsel %vm409, %v389, 0
        %v414 = vsel %vm409, %v390, 0
        %v417 = vsel %vm409, %v391, 0
        %v420 = vsel %vm409, %v392, 0
        %422 = vmatprep.subr.mxu0 0.0
        %423 = vmatpush1.msra.mxu0 %v405
        %424 = vmatprep.subr.mxu0 0.0
        %425 = vmatpush1.msra.mxu0 %v406
        %426 = vmatprep.subr.mxu0 0.0
        %427 = vmatpush1.msra.mxu0 %v407
        %428 = vmatprep.subr.mxu0 0.0
        %429 = vmatpush1.msra.mxu0 %v408
        %430 = vmatprep.subr.mxu0 0.0
        %431 = vmatpush1.msra.mxu0 0.0
        %432 = vmatprep.subr.mxu0 0.0
        %433 = vmatpush1.msra.mxu0 0.0
        %434 = vmatprep.subr.mxu0 0.0
        %435 = vmatpush1.msra.mxu0 0.0
        %436 = vmatprep.subr.mxu0 0.0
        %437 = vmatpush1.msra.mxu0 0.0
        %438 = vmatprep.subr.mxu0 0.0
        %439 = vmatpush1.msra.mxu0 0.0
        %440 = vmatprep.subr.mxu0 0.0
        %441 = vmatpush1.msra.mxu0 0.0
        %442 = vmatprep.subr.mxu0 0.0
        %443 = vmatpush1.msra.mxu0 0.0
        %444 = vmatprep.subr.mxu0 0.0
        %445 = vmatpush1.msra.mxu0 0.0
        %446 = vmatprep.subr.mxu0 0.0
        %447 = vmatpush1.msra.mxu0 0.0
        %448 = vmatprep.subr.mxu0 0.0
        %449 = vmatpush1.msra.mxu0 0.0
        %450 = vmatprep.subr.mxu0 0.0
        %451 = vmatpush1.msra.mxu0 0.0
        %452 = vmatprep.subr.mxu0 0.0
        %453 = vmatpush1.msra.mxu0 0.0
        %454 = vmatprep.subr.mxu0 0.0
        %455 = vmatpush1.msra.mxu0 0.0
        %456 = vmatprep.subr.mxu0 0.0
        %457 = vmatpush1.msra.mxu0 0.0
        %458 = vmatprep.subr.mxu0 0.0
        %459 = vmatpush1.msra.mxu0 0.0
        %460 = vmatprep.subr.mxu0 0.0
        %461 = vmatpush1.msra.mxu0 0.0
        %462 = vmatprep.subr.mxu0 0.0
        %463 = vmatpush1.msra.mxu0 0.0
        %464 = vmatprep.subr.mxu0 0.0
        %465 = vmatpush1.msra.mxu0 0.0
        %466 = vmatprep.subr.mxu0 0.0
        %467 = vmatpush1.msra.mxu0 0.0
        %468 = vmatprep.subr.mxu0 0.0
        %469 = vmatpush1.msra.mxu0 0.0
        %470 = vmatprep.subr.mxu0 0.0
        %471 = vmatpush1.msra.mxu0 0.0
        %472 = vmatprep.subr.mxu0 0.0
        %473 = vmatpush1.msra.mxu0 0.0
        %474 = vmatprep.subr.mxu0 0.0
        %475 = vmatpush1.msra.mxu0 0.0
        %476 = vmatprep.subr.mxu0 0.0
        %477 = vmatpush1.msra.mxu0 0.0
        %478 = vmatprep.subr.mxu0 0.0
        %479 = vmatpush1.msra.mxu0 0.0
        %480 = vmatprep.subr.mxu0 0.0
        %481 = vmatpush1.msra.mxu0 0.0
        %482 = vmatprep.subr.mxu0 0.0
        %483 = vmatpush1.msra.mxu0 0.0
        %484 = vmatprep.subr.mxu0 0.0
        %485 = vmatpush1.msra.mxu0 0.0
        %486 = vmatprep.mubr.f32.mxu0 0.0
        %487 = vmatmul.mubr.f32.gmra.mrb[0].mxu0 %v411
        %v488 = vpop.f32.mrb[0].mxu0
        %v489 = vadd.f32 0.0, %v488
        %v490 = vpop.f32.mrb[0].mxu0
        %491 = vmatprep.mubr.f32.mxu0 0.0
        %492 = vmatmul.mubr.f32.gmra.mrb[0].mxu0 %v414
        %v493 = vpop.f32.mrb[0].mxu0
        %v494 = vadd.f32 0.0, %v493
        %v495 = vpop.f32.mrb[0].mxu0
        %496 = vmatprep.mubr.f32.mxu0 0.0
        %497 = vmatmul.mubr.f32.gmra.mrb[0].mxu0 %v417
        %v498 = vpop.f32.mrb[0].mxu0
        %v499 = vadd.f32 0.0, %v498
        %v500 = vpop.f32.mrb[0].mxu0
        %501 = vmatprep.mubr.f32.mxu0 0.0
        %502 = vmatmul.mubr.f32.gmra.mrb[0].mxu0 %v420
        %v503 = vpop.f32.mrb[0].mxu0
        %v504 = vadd.f32 0.0, %v503
        %v505 = vpop.f32.mrb[0].mxu0
        %506 = vdwg.mxu0
        %v508 = vsel %vm409, %v385, 0
        %v511 = vsel %vm409, %v386, 0
        %v514 = vsel %vm409, %v387, 0
        %v517 = vsel %vm409, %v388, 0
        %519 = vmatprep.subr.mxu0 0.0
        %520 = vmatpush1.msra.mxu0 %v401
        %521 = vmatprep.subr.mxu0 0.0
        %522 = vmatpush1.msra.mxu0 %v402
        %523 = vmatprep.subr.mxu0 0.0
        %524 = vmatpush1.msra.mxu0 %v403
        %525 = vmatprep.subr.mxu0 0.0
        %526 = vmatpush1.msra.mxu0 %v404
        %527 = vmatprep.subr.mxu0 0.0
        %528 = vmatpush1.msra.mxu0 0.0
        %529 = vmatprep.subr.mxu0 0.0
        %530 = vmatpush1.msra.mxu0 0.0
        %531 = vmatprep.subr.mxu0 0.0
        %532 = vmatpush1.msra.mxu0 0.0
        %533 = vmatprep.subr.mxu0 0.0
        %534 = vmatpush1.msra.mxu0 0.0
        %535 = vmatprep.subr.mxu0 0.0
        %536 = vmatpush1.msra.mxu0 0.0
        %537 = vmatprep.subr.mxu0 0.0
        %538 = vmatpush1.msra.mxu0 0.0
        %539 = vmatprep.subr.mxu0 0.0
        %540 = vmatpush1.msra.mxu0 0.0
        %541 = vmatprep.subr.mxu0 0.0
        %542 = vmatpush1.msra.mxu0 0.0
        %543 = vmatprep.subr.mxu0 0.0
        %544 = vmatpush1.msra.mxu0 0.0
        %545 = vmatprep.subr.mxu0 0.0
        %546 = vmatpush1.msra.mxu0 0.0
        %547 = vmatprep.subr.mxu0 0.0
        %548 = vmatpush1.msra.mxu0 0.0
        %549 = vmatprep.subr.mxu0 0.0
        %550 = vmatpush1.msra.mxu0 0.0
        %551 = vmatprep.subr.mxu0 0.0
        %552 = vmatpush1.msra.mxu0 0.0
        %553 = vmatprep.subr.mxu0 0.0
        %554 = vmatpush1.msra.mxu0 0.0
        %555 = vmatprep.subr.mxu0 0.0
        %556 = vmatpush1.msra.mxu0 0.0
        %557 = vmatprep.subr.mxu0 0.0
        %558 = vmatpush1.msra.mxu0 0.0
        %559 = vmatprep.subr.mxu0 0.0
        %560 = vmatpush1.msra.mxu0 0.0
        %561 = vmatprep.subr.mxu0 0.0
        %562 = vmatpush1.msra.mxu0 0.0
        %563 = vmatprep.subr.mxu0 0.0
        %564 = vmatpush1.msra.mxu0 0.0
        %565 = vmatprep.subr.mxu0 0.0
        %566 = vmatpush1.msra.mxu0 0.0
        %567 = vmatprep.subr.mxu0 0.0
        %568 = vmatpush1.msra.mxu0 0.0
        %569 = vmatprep.subr.mxu0 0.0
        %570 = vmatpush1.msra.mxu0 0.0
        %571 = vmatprep.subr.mxu0 0.0
        %572 = vmatpush1.msra.mxu0 0.0
        %573 = vmatprep.subr.mxu0 0.0
        %574 = vmatpush1.msra.mxu0 0.0
        %575 = vmatprep.subr.mxu0 0.0
        %576 = vmatpush1.msra.mxu0 0.0
        %577 = vmatprep.subr.mxu0 0.0
        %578 = vmatpush1.msra.mxu0 0.0
        %579 = vmatprep.subr.mxu0 0.0
        %580 = vmatpush1.msra.mxu0 0.0
        %581 = vmatprep.subr.mxu0 0.0
        %582 = vmatpush1.msra.mxu0 0.0
        %583 = vmatprep.mubr.f32.mxu0 0.0
        %584 = vmatmul.mubr.f32.gmra.mrb[0].mxu0 %v508
        %v585 = vpop.f32.mrb[0].mxu0
        %v586 = vadd.f32 %v489, %v585
        %v587 = vpop.f32.mrb[0].mxu0
        %588 = vmatprep.mubr.f32.mxu0 0.0
        %589 = vmatmul.mubr.f32.gmra.mrb[0].mxu0 %v511
        %v590 = vpop.f32.mrb[0].mxu0
        %v591 = vadd.f32 %v494, %v590
        %v592 = vpop.f32.mrb[0].mxu0
        %593 = vmatprep.mubr.f32.mxu0 0.0
        %594 = vmatmul.mubr.f32.gmra.mrb[0].mxu0 %v514
        %v595 = vpop.f32.mrb[0].mxu0
        %v596 = vadd.f32 %v499, %v595
        %v597 = vpop.f32.mrb[0].mxu0
        %598 = vmatprep.mubr.f32.mxu0 0.0
        %599 = vmatmul.mubr.f32.gmra.mrb[0].mxu0 %v517
        %v600 = vpop.f32.mrb[0].mxu0
        %v601 = vadd.f32 %v504, %v600
        %v602 = vpop.f32.mrb[0].mxu0
        %603 = vdwg.mxu0
        %v604 = vld [vmem:[%s375] sm:$0xff]
        %v605 = vld [vmem:[%s375 + $0x8] sm:$0xff]
        %v606 = vld [vmem:[%s375 + $0x10] sm:$0xff]
        %v607 = vld [vmem:[%s375 + $0x18] sm:$0xff]
        %v608 = vld [vmem:[%s382] sm:$0xff]
        %v609 = vld [vmem:[%s382 + $0x8] sm:$0xff]
        %v610 = vld [vmem:[%s382 + $0x10] sm:$0xff]
        %v611 = vld [vmem:[%s382 + $0x18] sm:$0xff]
        %612 = vmatprep.subr.mxu0 0.0
        %613 = vmatpush1.msra.mxu0 %v608
        %614 = vmatprep.subr.mxu0 0.0
        %615 = vmatpush1.msra.mxu0 %v609
        %616 = vmatprep.subr.mxu0 0.0
        %617 = vmatpush1.msra.mxu0 %v610
        %618 = vmatprep.subr.mxu0 0.0
        %619 = vmatpush1.msra.mxu0 %v611
        %620 = vmatprep.subr.mxu0 0.0
        %621 = vmatpush1.msra.mxu0 0.0
        %622 = vmatprep.subr.mxu0 0.0
        %623 = vmatpush1.msra.mxu0 0.0
        %624 = vmatprep.subr.mxu0 0.0
        %625 = vmatpush1.msra.mxu0 0.0
        %626 = vmatprep.subr.mxu0 0.0
        %627 = vmatpush1.msra.mxu0 0.0
        %628 = vmatprep.subr.mxu0 0.0
        %629 = vmatpush1.msra.mxu0 0.0
        %630 = vmatprep.subr.mxu0 0.0
        %631 = vmatpush1.msra.mxu0 0.0
        %632 = vmatprep.subr.mxu0 0.0
        %633 = vmatpush1.msra.mxu0 0.0
        %634 = vmatprep.subr.mxu0 0.0
        %635 = vmatpush1.msra.mxu0 0.0
        %636 = vmatprep.subr.mxu0 0.0
        %637 = vmatpush1.msra.mxu0 0.0
        %638 = vmatprep.subr.mxu0 0.0
        %639 = vmatpush1.msra.mxu0 0.0
        %640 = vmatprep.subr.mxu0 0.0
        %641 = vmatpush1.msra.mxu0 0.0
        %642 = vmatprep.subr.mxu0 0.0
        %643 = vmatpush1.msra.mxu0 0.0
        %644 = vmatprep.subr.mxu0 0.0
        %645 = vmatpush1.msra.mxu0 0.0
        %646 = vmatprep.subr.mxu0 0.0
        %647 = vmatpush1.msra.mxu0 0.0
        %648 = vmatprep.subr.mxu0 0.0
        %649 = vmatpush1.msra.mxu0 0.0
        %650 = vmatprep.subr.mxu0 0.0
        %651 = vmatpush1.msra.mxu0 0.0
        %652 = vmatprep.subr.mxu0 0.0
        %653 = vmatpush1.msra.mxu0 0.0
        %654 = vmatprep.subr.mxu0 0.0
        %655 = vmatpush1.msra.mxu0 0.0
        %656 = vmatprep.subr.mxu0 0.0
        %657 = vmatpush1.msra.mxu0 0.0
        %658 = vmatprep.subr.mxu0 0.0
        %659 = vmatpush1.msra.mxu0 0.0
        %660 = vmatprep.subr.mxu0 0.0
        %661 = vmatpush1.msra.mxu0 0.0
        %662 = vmatprep.subr.mxu0 0.0
        %663 = vmatpush1.msra.mxu0 0.0
        %664 = vmatprep.subr.mxu0 0.0
        %665 = vmatpush1.msra.mxu0 0.0
        %666 = vmatprep.subr.mxu0 0.0
        %667 = vmatpush1.msra.mxu0 0.0
        %668 = vmatprep.subr.mxu0 0.0
        %669 = vmatpush1.msra.mxu0 0.0
        %670 = vmatprep.subr.mxu0 0.0
        %671 = vmatpush1.msra.mxu0 0.0
        %672 = vmatprep.subr.mxu0 0.0
        %673 = vmatpush1.msra.mxu0 0.0
        %674 = vmatprep.subr.mxu0 0.0
        %675 = vmatpush1.msra.mxu0 0.0
        %676 = vmatprep.mubr.f32.mxu0 0.0
        %677 = vmatmul.mubr.f32.gmra.mrb[0].mxu0 %v411
        %v678 = vpop.f32.mrb[0].mxu0
        %v679 = vadd.f32 0.0, %v678
        %v680 = vpop.f32.mrb[0].mxu0
        %681 = vmatprep.mubr.f32.mxu0 0.0
        %682 = vmatmul.mubr.f32.gmra.mrb[0].mxu0 %v414
        %v683 = vpop.f32.mrb[0].mxu0
        %v684 = vadd.f32 0.0, %v683
        %v685 = vpop.f32.mrb[0].mxu0
        %686 = vmatprep.mubr.f32.mxu0 0.0
        %687 = vmatmul.mubr.f32.gmra.mrb[0].mxu0 %v417
        %v688 = vpop.f32.mrb[0].mxu0
        %v689 = vadd.f32 0.0, %v688
        %v690 = vpop.f32.mrb[0].mxu0
        %691 = vmatprep.mubr.f32.mxu0 0.0
        %692 = vmatmul.mubr.f32.gmra.mrb[0].mxu0 %v420
        %v693 = vpop.f32.mrb[0].mxu0
        %v694 = vadd.f32 0.0, %v693
        %v695 = vpop.f32.mrb[0].mxu0
        %696 = vdwg.mxu0
        %697 = vmatprep.subr.mxu0 0.0
        %698 = vmatpush1.msra.mxu0 %v604
        %699 = vmatprep.subr.mxu0 0.0
        %700 = vmatpush1.msra.mxu0 %v605
        %701 = vmatprep.subr.mxu0 0.0
        %702 = vmatpush1.msra.mxu0 %v606
        %703 = vmatprep.subr.mxu0 0.0
        %704 = vmatpush1.msra.mxu0 %v607
        %705 = vmatprep.subr.mxu0 0.0
        %706 = vmatpush1.msra.mxu0 0.0
        %707 = vmatprep.subr.mxu0 0.0
        %708 = vmatpush1.msra.mxu0 0.0
        %709 = vmatprep.subr.mxu0 0.0
        %710 = vmatpush1.msra.mxu0 0.0
        %711 = vmatprep.subr.mxu0 0.0
        %712 = vmatpush1.msra.mxu0 0.0
        %713 = vmatprep.subr.mxu0 0.0
        %714 = vmatpush1.msra.mxu0 0.0
        %715 = vmatprep.subr.mxu0 0.0
        %716 = vmatpush1.msra.mxu0 0.0
        %717 = vmatprep.subr.mxu0 0.0
        %718 = vmatpush1.msra.mxu0 0.0
        %719 = vmatprep.subr.mxu0 0.0
        %720 = vmatpush1.msra.mxu0 0.0
        %721 = vmatprep.subr.mxu0 0.0
        %722 = vmatpush1.msra.mxu0 0.0
        %723 = vmatprep.subr.mxu0 0.0
        %724 = vmatpush1.msra.mxu0 0.0
        %725 = vmatprep.subr.mxu0 0.0
        %726 = vmatpush1.msra.mxu0 0.0
        %727 = vmatprep.subr.mxu0 0.0
        %728 = vmatpush1.msra.mxu0 0.0
        %729 = vmatprep.subr.mxu0 0.0
        %730 = vmatpush1.msra.mxu0 0.0
        %731 = vmatprep.subr.mxu0 0.0
        %732 = vmatpush1.msra.mxu0 0.0
        %733 = vmatprep.subr.mxu0 0.0
        %734 = vmatpush1.msra.mxu0 0.0
        %735 = vmatprep.subr.mxu0 0.0
        %736 = vmatpush1.msra.mxu0 0.0
        %737 = vmatprep.subr.mxu0 0.0
        %738 = vmatpush1.msra.mxu0 0.0
        %739 = vmatprep.subr.mxu0 0.0
        %740 = vmatpush1.msra.mxu0 0.0
        %741 = vmatprep.subr.mxu0 0.0
        %742 = vmatpush1.msra.mxu0 0.0
        %743 = vmatprep.subr.mxu0 0.0
        %744 = vmatpush1.msra.mxu0 0.0
        %745 = vmatprep.subr.mxu0 0.0
        %746 = vmatpush1.msra.mxu0 0.0
        %747 = vmatprep.subr.mxu0 0.0
        %748 = vmatpush1.msra.mxu0 0.0
        %749 = vmatprep.subr.mxu0 0.0
        %750 = vmatpush1.msra.mxu0 0.0
        %751 = vmatprep.subr.mxu0 0.0
        %752 = vmatpush1.msra.mxu0 0.0
        %753 = vmatprep.subr.mxu0 0.0
        %754 = vmatpush1.msra.mxu0 0.0
        %755 = vmatprep.subr.mxu0 0.0
        %756 = vmatpush1.msra.mxu0 0.0
        %757 = vmatprep.subr.mxu0 0.0
        %758 = vmatpush1.msra.mxu0 0.0
        %759 = vmatprep.subr.mxu0 0.0
        %760 = vmatpush1.msra.mxu0 0.0
        %761 = vmatprep.mubr.f32.mxu0 0.0
        %762 = vmatmul.mubr.f32.gmra.mrb[0].mxu0 %v508
        %v763 = vpop.f32.mrb[0].mxu0
        %v764 = vadd.f32 %v679, %v763
        %v765 = vpop.f32.mrb[0].mxu0
        %766 = vmatprep.mubr.f32.mxu0 0.0
        %767 = vmatmul.mubr.f32.gmra.mrb[0].mxu0 %v511
        %v768 = vpop.f32.mrb[0].mxu0
        %v769 = vadd.f32 %v684, %v768
        %v770 = vpop.f32.mrb[0].mxu0
        %771 = vmatprep.mubr.f32.mxu0 0.0
        %772 = vmatmul.mubr.f32.gmra.mrb[0].mxu0 %v514
        %v773 = vpop.f32.mrb[0].mxu0
        %v774 = vadd.f32 %v689, %v773
        %v775 = vpop.f32.mrb[0].mxu0
        %776 = vmatprep.mubr.f32.mxu0 0.0
        %777 = vmatmul.mubr.f32.gmra.mrb[0].mxu0 %v517
        %v778 = vpop.f32.mrb[0].mxu0
        %v779 = vadd.f32 %v694, %v778
        %v780 = vpop.f32.mrb[0].mxu0
        %781 = vdwg.mxu0
        %v783 = vsel %vm409, %v764, 0
        %v786 = vsel %vm409, %v769, 0
        %v789 = vsel %vm409, %v774, 0
        %v792 = vsel %vm409, %v779, 0
        %794 = vmatprep.subr.mxu0 0.0
        %795 = vmatpush1.msra.mxu0 %v397
        %796 = vmatprep.subr.mxu0 0.0
        %797 = vmatpush1.msra.mxu0 %v398
        %798 = vmatprep.subr.mxu0 0.0
        %799 = vmatpush1.msra.mxu0 %v399
        %800 = vmatprep.subr.mxu0 0.0
        %801 = vmatpush1.msra.mxu0 %v400
        %802 = vmatprep.subr.mxu0 0.0
        %803 = vmatpush1.msra.mxu0 0.0
        %804 = vmatprep.subr.mxu0 0.0
        %805 = vmatpush1.msra.mxu0 0.0
        %806 = vmatprep.subr.mxu0 0.0
        %807 = vmatpush1.msra.mxu0 0.0
        %808 = vmatprep.subr.mxu0 0.0
        %809 = vmatpush1.msra.mxu0 0.0
        %810 = vmatprep.subr.mxu0 0.0
        %811 = vmatpush1.msra.mxu0 0.0
        %812 = vmatprep.subr.mxu0 0.0
        %813 = vmatpush1.msra.mxu0 0.0
        %814 = vmatprep.subr.mxu0 0.0
        %815 = vmatpush1.msra.mxu0 0.0
        %816 = vmatprep.subr.mxu0 0.0
        %817 = vmatpush1.msra.mxu0 0.0
        %818 = vmatprep.subr.mxu0 0.0
        %819 = vmatpush1.msra.mxu0 0.0
        %820 = vmatprep.subr.mxu0 0.0
        %821 = vmatpush1.msra.mxu0 0.0
        %822 = vmatprep.subr.mxu0 0.0
        %823 = vmatpush1.msra.mxu0 0.0
        %824 = vmatprep.subr.mxu0 0.0
        %825 = vmatpush1.msra.mxu0 0.0
        %826 = vmatprep.subr.mxu0 0.0
        %827 = vmatpush1.msra.mxu0 0.0
        %828 = vmatprep.subr.mxu0 0.0
        %829 = vmatpush1.msra.mxu0 0.0
        %830 = vmatprep.subr.mxu0 0.0
        %831 = vmatpush1.msra.mxu0 0.0
        %832 = vmatprep.subr.mxu0 0.0
        %833 = vmatpush1.msra.mxu0 0.0
        %834 = vmatprep.subr.mxu0 0.0
        %835 = vmatpush1.msra.mxu0 0.0
        %836 = vmatprep.subr.mxu0 0.0
        %837 = vmatpush1.msra.mxu0 0.0
        %838 = vmatprep.subr.mxu0 0.0
        %839 = vmatpush1.msra.mxu0 0.0
        %840 = vmatprep.subr.mxu0 0.0
        %841 = vmatpush1.msra.mxu0 0.0
        %842 = vmatprep.subr.mxu0 0.0
        %843 = vmatpush1.msra.mxu0 0.0
        %844 = vmatprep.subr.mxu0 0.0
        %845 = vmatpush1.msra.mxu0 0.0
        %846 = vmatprep.subr.mxu0 0.0
        %847 = vmatpush1.msra.mxu0 0.0
        %848 = vmatprep.subr.mxu0 0.0
        %849 = vmatpush1.msra.mxu0 0.0
        %850 = vmatprep.subr.mxu0 0.0
        %851 = vmatpush1.msra.mxu0 0.0
        %852 = vmatprep.subr.mxu0 0.0
        %853 = vmatpush1.msra.mxu0 0.0
        %854 = vmatprep.subr.mxu0 0.0
        %855 = vmatpush1.msra.mxu0 0.0
        %856 = vmatprep.subr.mxu0 0.0
        %857 = vmatpush1.msra.mxu0 0.0
        %858 = vmatprep.mubr.f32.mxu0 0.0
        %859 = vmatmul.mubr.f32.gmra.mrb[0].mxu0 %v783
        %v860 = vpop.f32.mrb[0].mxu0
        %v861 = vadd.f32 0.0, %v860
        %v862 = vpop.f32.mrb[0].mxu0
        %863 = vmatprep.mubr.f32.mxu0 0.0
        %864 = vmatmul.mubr.f32.gmra.mrb[0].mxu0 %v786
        %v865 = vpop.f32.mrb[0].mxu0
        %v866 = vadd.f32 0.0, %v865
        %v867 = vpop.f32.mrb[0].mxu0
        %868 = vmatprep.mubr.f32.mxu0 0.0
        %869 = vmatmul.mubr.f32.gmra.mrb[0].mxu0 %v789
        %v870 = vpop.f32.mrb[0].mxu0
        %v871 = vadd.f32 0.0, %v870
        %v872 = vpop.f32.mrb[0].mxu0
        %873 = vmatprep.mubr.f32.mxu0 0.0
        %874 = vmatmul.mubr.f32.gmra.mrb[0].mxu0 %v792
        %v875 = vpop.f32.mrb[0].mxu0
        %v876 = vadd.f32 0.0, %v875
        %v877 = vpop.f32.mrb[0].mxu0
        %878 = vdwg.mxu0
        %v880 = vsel %vm409, %v586, 0
        %v883 = vsel %vm409, %v591, 0
        %v886 = vsel %vm409, %v596, 0
        %v889 = vsel %vm409, %v601, 0
        %891 = vmatprep.subr.mxu0 0.0
        %892 = vmatpush1.msra.mxu0 %v393
        %893 = vmatprep.subr.mxu0 0.0
        %894 = vmatpush1.msra.mxu0 %v394
        %895 = vmatprep.subr.mxu0 0.0
        %896 = vmatpush1.msra.mxu0 %v395
        %897 = vmatprep.subr.mxu0 0.0
        %898 = vmatpush1.msra.mxu0 %v396
        %899 = vmatprep.subr.mxu0 0.0
        %900 = vmatpush1.msra.mxu0 0.0
        %901 = vmatprep.subr.mxu0 0.0
        %902 = vmatpush1.msra.mxu0 0.0
        %903 = vmatprep.subr.mxu0 0.0
        %904 = vmatpush1.msra.mxu0 0.0
        %905 = vmatprep.subr.mxu0 0.0
        %906 = vmatpush1.msra.mxu0 0.0
        %907 = vmatprep.subr.mxu0 0.0
        %908 = vmatpush1.msra.mxu0 0.0
        %909 = vmatprep.subr.mxu0 0.0
        %910 = vmatpush1.msra.mxu0 0.0
        %911 = vmatprep.subr.mxu0 0.0
        %912 = vmatpush1.msra.mxu0 0.0
        %913 = vmatprep.subr.mxu0 0.0
        %914 = vmatpush1.msra.mxu0 0.0
        %915 = vmatprep.subr.mxu0 0.0
        %916 = vmatpush1.msra.mxu0 0.0
        %917 = vmatprep.subr.mxu0 0.0
        %918 = vmatpush1.msra.mxu0 0.0
        %919 = vmatprep.subr.mxu0 0.0
        %920 = vmatpush1.msra.mxu0 0.0
        %921 = vmatprep.subr.mxu0 0.0
        %922 = vmatpush1.msra.mxu0 0.0
        %923 = vmatprep.subr.mxu0 0.0
        %924 = vmatpush1.msra.mxu0 0.0
        %925 = vmatprep.subr.mxu0 0.0
        %926 = vmatpush1.msra.mxu0 0.0
        %927 = vmatprep.subr.mxu0 0.0
        %928 = vmatpush1.msra.mxu0 0.0
        %929 = vmatprep.subr.mxu0 0.0
        %930 = vmatpush1.msra.mxu0 0.0
        %931 = vmatprep.subr.mxu0 0.0
        %932 = vmatpush1.msra.mxu0 0.0
        %933 = vmatprep.subr.mxu0 0.0
        %934 = vmatpush1.msra.mxu0 0.0
        %935 = vmatprep.subr.mxu0 0.0
        %936 = vmatpush1.msra.mxu0 0.0
        %937 = vmatprep.subr.mxu0 0.0
        %938 = vmatpush1.msra.mxu0 0.0
        %939 = vmatprep.subr.mxu0 0.0
        %940 = vmatpush1.msra.mxu0 0.0
        %941 = vmatprep.subr.mxu0 0.0
        %942 = vmatpush1.msra.mxu0 0.0
        %943 = vmatprep.subr.mxu0 0.0
        %944 = vmatpush1.msra.mxu0 0.0
        %945 = vmatprep.subr.mxu0 0.0
        %946 = vmatpush1.msra.mxu0 0.0
        %947 = vmatprep.subr.mxu0 0.0
        %948 = vmatpush1.msra.mxu0 0.0
        %949 = vmatprep.subr.mxu0 0.0
        %950 = vmatpush1.msra.mxu0 0.0
        %951 = vmatprep.subr.mxu0 0.0
        %952 = vmatpush1.msra.mxu0 0.0
        %953 = vmatprep.subr.mxu0 0.0
        %954 = vmatpush1.msra.mxu0 0.0
        %955 = vmatprep.mubr.f32.mxu0 0.0
        %956 = vmatmul.mubr.f32.gmra.mrb[0].mxu0 %v880
        %v957 = vpop.f32.mrb[0].mxu0
        %v958 = vadd.f32 %v861, %v957
        %v959 = vpop.f32.mrb[0].mxu0
        %960 = vmatprep.mubr.f32.mxu0 0.0
        %961 = vmatmul.mubr.f32.gmra.mrb[0].mxu0 %v883
        %v962 = vpop.f32.mrb[0].mxu0
        %v963 = vadd.f32 %v866, %v962
        %v964 = vpop.f32.mrb[0].mxu0
        %965 = vmatprep.mubr.f32.mxu0 0.0
        %966 = vmatmul.mubr.f32.gmra.mrb[0].mxu0 %v886
        %v967 = vpop.f32.mrb[0].mxu0
        %v968 = vadd.f32 %v871, %v967
        %v969 = vpop.f32.mrb[0].mxu0
        %970 = vmatprep.mubr.f32.mxu0 0.0
        %971 = vmatmul.mubr.f32.gmra.mrb[0].mxu0 %v889
        %v972 = vpop.f32.mrb[0].mxu0
        %v973 = vadd.f32 %v876, %v972
        %v974 = vpop.f32.mrb[0].mxu0
        %975 = vdwg.mxu0
        %976 = vst.msk [vmem:[%s355] sm:$0xff] %vm409, %v958
        %977 = vst.msk [vmem:[%s355 + $0x8] sm:$0xff] %vm409, %v963
        %978 = vst.msk [vmem:[%s355 + $0x10] sm:$0xff] %vm409, %v968
        %979 = vst.msk [vmem:[%s355 + $0x18] sm:$0xff] %vm409, %v973
        %s980 = scalar_lea.vmem %s361, 32
        %v981 = vld [vmem:[%s980] sm:$0xff]
        %v982 = vld [vmem:[%s980 + $0x8] sm:$0xff]
        %v983 = vld [vmem:[%s980 + $0x10] sm:$0xff]
        %v984 = vld [vmem:[%s980 + $0x18] sm:$0xff]
        %s985 = scalar_lea.vmem %s368, 32
        %v986 = vld [vmem:[%s985] sm:$0xff]
        %v987 = vld [vmem:[%s985 + $0x8] sm:$0xff]
        %v988 = vld [vmem:[%s985 + $0x10] sm:$0xff]
        %v989 = vld [vmem:[%s985 + $0x18] sm:$0xff]
        %990 = vmatprep.subr.mxu0 0.0
        %991 = vmatpush1.msra.mxu0 %v986
        %992 = vmatprep.subr.mxu0 0.0
        %993 = vmatpush1.msra.mxu0 %v987
        %994 = vmatprep.subr.mxu0 0.0
        %995 = vmatpush1.msra.mxu0 %v988
        %996 = vmatprep.subr.mxu0 0.0
        %997 = vmatpush1.msra.mxu0 %v989
        %998 = vmatprep.subr.mxu0 0.0
        %999 = vmatpush1.msra.mxu0 0.0
        %1000 = vmatprep.subr.mxu0 0.0
        %1001 = vmatpush1.msra.mxu0 0.0
        %1002 = vmatprep.subr.mxu0 0.0
        %1003 = vmatpush1.msra.mxu0 0.0
        %1004 = vmatprep.subr.mxu0 0.0
        %1005 = vmatpush1.msra.mxu0 0.0
        %1006 = vmatprep.subr.mxu0 0.0
        %1007 = vmatpush1.msra.mxu0 0.0
        %1008 = vmatprep.subr.mxu0 0.0
        %1009 = vmatpush1.msra.mxu0 0.0
        %1010 = vmatprep.subr.mxu0 0.0
        %1011 = vmatpush1.msra.mxu0 0.0
        %1012 = vmatprep.subr.mxu0 0.0
        %1013 = vmatpush1.msra.mxu0 0.0
        %1014 = vmatprep.subr.mxu0 0.0
        %1015 = vmatpush1.msra.mxu0 0.0
        %1016 = vmatprep.subr.mxu0 0.0
        %1017 = vmatpush1.msra.mxu0 0.0
        %1018 = vmatprep.subr.mxu0 0.0
        %1019 = vmatpush1.msra.mxu0 0.0
        %1020 = vmatprep.subr.mxu0 0.0
        %1021 = vmatpush1.msra.mxu0 0.0
        %1022 = vmatprep.subr.mxu0 0.0
        %1023 = vmatpush1.msra.mxu0 0.0
        %1024 = vmatprep.subr.mxu0 0.0
        %1025 = vmatpush1.msra.mxu0 0.0
        %1026 = vmatprep.subr.mxu0 0.0
        %1027 = vmatpush1.msra.mxu0 0.0
        %1028 = vmatprep.subr.mxu0 0.0
        %1029 = vmatpush1.msra.mxu0 0.0
        %1030 = vmatprep.subr.mxu0 0.0
        %1031 = vmatpush1.msra.mxu0 0.0
        %1032 = vmatprep.subr.mxu0 0.0
        %1033 = vmatpush1.msra.mxu0 0.0
        %1034 = vmatprep.subr.mxu0 0.0
        %1035 = vmatpush1.msra.mxu0 0.0
        %1036 = vmatprep.subr.mxu0 0.0
        %1037 = vmatpush1.msra.mxu0 0.0
        %1038 = vmatprep.subr.mxu0 0.0
        %1039 = vmatpush1.msra.mxu0 0.0
        %1040 = vmatprep.subr.mxu0 0.0
        %1041 = vmatpush1.msra.mxu0 0.0
        %1042 = vmatprep.subr.mxu0 0.0
        %1043 = vmatpush1.msra.mxu0 0.0
        %1044 = vmatprep.subr.mxu0 0.0
        %1045 = vmatpush1.msra.mxu0 0.0
        %1046 = vmatprep.subr.mxu0 0.0
        %1047 = vmatpush1.msra.mxu0 0.0
        %1048 = vmatprep.subr.mxu0 0.0
        %1049 = vmatpush1.msra.mxu0 0.0
        %1050 = vmatprep.subr.mxu0 0.0
        %1051 = vmatpush1.msra.mxu0 0.0
        %1052 = vmatprep.subr.mxu0 0.0
        %1053 = vmatpush1.msra.mxu0 0.0
        %1054 = vmatprep.mubr.f32.mxu0 0.0
        %1055 = vmatmul.mubr.f32.gmra.mrb[0].mxu0 %v411
        %v1056 = vpop.f32.mrb[0].mxu0
        %v1057 = vadd.f32 0.0, %v1056
        %v1058 = vpop.f32.mrb[0].mxu0
        %1059 = vmatprep.mubr.f32.mxu0 0.0
        %1060 = vmatmul.mubr.f32.gmra.mrb[0].mxu0 %v414
        %v1061 = vpop.f32.mrb[0].mxu0
        %v1062 = vadd.f32 0.0, %v1061
        %v1063 = vpop.f32.mrb[0].mxu0
        %1064 = vmatprep.mubr.f32.mxu0 0.0
        %1065 = vmatmul.mubr.f32.gmra.mrb[0].mxu0 %v417
        %v1066 = vpop.f32.mrb[0].mxu0
        %v1067 = vadd.f32 0.0, %v1066
        %v1068 = vpop.f32.mrb[0].mxu0
        %1069 = vmatprep.mubr.f32.mxu0 0.0
        %1070 = vmatmul.mubr.f32.gmra.mrb[0].mxu0 %v420
        %v1071 = vpop.f32.mrb[0].mxu0
        %v1072 = vadd.f32 0.0, %v1071
        %v1073 = vpop.f32.mrb[0].mxu0
        %1074 = vdwg.mxu0
        %1075 = vmatprep.subr.mxu0 0.0
        %1076 = vmatpush1.msra.mxu0 %v981
        %1077 = vmatprep.subr.mxu0 0.0
        %1078 = vmatpush1.msra.mxu0 %v982
        %1079 = vmatprep.subr.mxu0 0.0
        %1080 = vmatpush1.msra.mxu0 %v983
        %1081 = vmatprep.subr.mxu0 0.0
        %1082 = vmatpush1.msra.mxu0 %v984
        %1083 = vmatprep.subr.mxu0 0.0
        %1084 = vmatpush1.msra.mxu0 0.0
        %1085 = vmatprep.subr.mxu0 0.0
        %1086 = vmatpush1.msra.mxu0 0.0
        %1087 = vmatprep.subr.mxu0 0.0
        %1088 = vmatpush1.msra.mxu0 0.0
        %1089 = vmatprep.subr.mxu0 0.0
        %1090 = vmatpush1.msra.mxu0 0.0
        %1091 = vmatprep.subr.mxu0 0.0
        %1092 = vmatpush1.msra.mxu0 0.0
        %1093 = vmatprep.subr.mxu0 0.0
        %1094 = vmatpush1.msra.mxu0 0.0
        %1095 = vmatprep.subr.mxu0 0.0
        %1096 = vmatpush1.msra.mxu0 0.0
        %1097 = vmatprep.subr.mxu0 0.0
        %1098 = vmatpush1.msra.mxu0 0.0
        %1099 = vmatprep.subr.mxu0 0.0
        %1100 = vmatpush1.msra.mxu0 0.0
        %1101 = vmatprep.subr.mxu0 0.0
        %1102 = vmatpush1.msra.mxu0 0.0
        %1103 = vmatprep.subr.mxu0 0.0
        %1104 = vmatpush1.msra.mxu0 0.0
        %1105 = vmatprep.subr.mxu0 0.0
        %1106 = vmatpush1.msra.mxu0 0.0
        %1107 = vmatprep.subr.mxu0 0.0
        %1108 = vmatpush1.msra.mxu0 0.0
        %1109 = vmatprep.subr.mxu0 0.0
        %1110 = vmatpush1.msra.mxu0 0.0
        %1111 = vmatprep.subr.mxu0 0.0
        %1112 = vmatpush1.msra.mxu0 0.0
        %1113 = vmatprep.subr.mxu0 0.0
        %1114 = vmatpush1.msra.mxu0 0.0
        %1115 = vmatprep.subr.mxu0 0.0
        %1116 = vmatpush1.msra.mxu0 0.0
        %1117 = vmatprep.subr.mxu0 0.0
        %1118 = vmatpush1.msra.mxu0 0.0
        %1119 = vmatprep.subr.mxu0 0.0
        %1120 = vmatpush1.msra.mxu0 0.0
        %1121 = vmatprep.subr.mxu0 0.0
        %1122 = vmatpush1.msra.mxu0 0.0
        %1123 = vmatprep.subr.mxu0 0.0
        %1124 = vmatpush1.msra.mxu0 0.0
        %1125 = vmatprep.subr.mxu0 0.0
        %1126 = vmatpush1.msra.mxu0 0.0
        %1127 = vmatprep.subr.mxu0 0.0
        %1128 = vmatpush1.msra.mxu0 0.0
        %1129 = vmatprep.subr.mxu0 0.0
        %1130 = vmatpush1.msra.mxu0 0.0
        %1131 = vmatprep.subr.mxu0 0.0
        %1132 = vmatpush1.msra.mxu0 0.0
        %1133 = vmatprep.subr.mxu0 0.0
        %1134 = vmatpush1.msra.mxu0 0.0
        %1135 = vmatprep.subr.mxu0 0.0
        %1136 = vmatpush1.msra.mxu0 0.0
        %1137 = vmatprep.subr.mxu0 0.0
        %1138 = vmatpush1.msra.mxu0 0.0
        %1139 = vmatprep.mubr.f32.mxu0 0.0
        %1140 = vmatmul.mubr.f32.gmra.mrb[0].mxu0 %v508
        %v1141 = vpop.f32.mrb[0].mxu0
        %v1142 = vadd.f32 %v1057, %v1141
        %v1143 = vpop.f32.mrb[0].mxu0
        %1144 = vmatprep.mubr.f32.mxu0 0.0
        %1145 = vmatmul.mubr.f32.gmra.mrb[0].mxu0 %v511
        %v1146 = vpop.f32.mrb[0].mxu0
        %v1147 = vadd.f32 %v1062, %v1146
        %v1148 = vpop.f32.mrb[0].mxu0
        %1149 = vmatprep.mubr.f32.mxu0 0.0
        %1150 = vmatmul.mubr.f32.gmra.mrb[0].mxu0 %v514
        %v1151 = vpop.f32.mrb[0].mxu0
        %v1152 = vadd.f32 %v1067, %v1151
        %v1153 = vpop.f32.mrb[0].mxu0
        %1154 = vmatprep.mubr.f32.mxu0 0.0
        %1155 = vmatmul.mubr.f32.gmra.mrb[0].mxu0 %v517
        %v1156 = vpop.f32.mrb[0].mxu0
        %v1157 = vadd.f32 %v1072, %v1156
        %v1158 = vpop.f32.mrb[0].mxu0
        %1159 = vdwg.mxu0
        %s1160 = scalar_lea.vmem %s375, 32
        %v1161 = vld [vmem:[%s1160] sm:$0xff]
        %v1162 = vld [vmem:[%s1160 + $0x8] sm:$0xff]
        %v1163 = vld [vmem:[%s1160 + $0x10] sm:$0xff]
        %v1164 = vld [vmem:[%s1160 + $0x18] sm:$0xff]
        %s1165 = scalar_lea.vmem %s382, 32
        %v1166 = vld [vmem:[%s1165] sm:$0xff]
        %v1167 = vld [vmem:[%s1165 + $0x8] sm:$0xff]
        %v1168 = vld [vmem:[%s1165 + $0x10] sm:$0xff]
        %v1169 = vld [vmem:[%s1165 + $0x18] sm:$0xff]
        %1170 = vmatprep.subr.mxu0 0.0
        %1171 = vmatpush1.msra.mxu0 %v1166
        %1172 = vmatprep.subr.mxu0 0.0
        %1173 = vmatpush1.msra.mxu0 %v1167
        %1174 = vmatprep.subr.mxu0 0.0
        %1175 = vmatpush1.msra.mxu0 %v1168
        %1176 = vmatprep.subr.mxu0 0.0
        %1177 = vmatpush1.msra.mxu0 %v1169
        %1178 = vmatprep.subr.mxu0 0.0
        %1179 = vmatpush1.msra.mxu0 0.0
        %1180 = vmatprep.subr.mxu0 0.0
        %1181 = vmatpush1.msra.mxu0 0.0
        %1182 = vmatprep.subr.mxu0 0.0
        %1183 = vmatpush1.msra.mxu0 0.0
        %1184 = vmatprep.subr.mxu0 0.0
        %1185 = vmatpush1.msra.mxu0 0.0
        %1186 = vmatprep.subr.mxu0 0.0
        %1187 = vmatpush1.msra.mxu0 0.0
        %1188 = vmatprep.subr.mxu0 0.0
        %1189 = vmatpush1.msra.mxu0 0.0
        %1190 = vmatprep.subr.mxu0 0.0
        %1191 = vmatpush1.msra.mxu0 0.0
        %1192 = vmatprep.subr.mxu0 0.0
        %1193 = vmatpush1.msra.mxu0 0.0
        %1194 = vmatprep.subr.mxu0 0.0
        %1195 = vmatpush1.msra.mxu0 0.0
        %1196 = vmatprep.subr.mxu0 0.0
        %1197 = vmatpush1.msra.mxu0 0.0
        %1198 = vmatprep.subr.mxu0 0.0
        %1199 = vmatpush1.msra.mxu0 0.0
        %1200 = vmatprep.subr.mxu0 0.0
        %1201 = vmatpush1.msra.mxu0 0.0
        %1202 = vmatprep.subr.mxu0 0.0
        %1203 = vmatpush1.msra.mxu0 0.0
        %1204 = vmatprep.subr.mxu0 0.0
        %1205 = vmatpush1.msra.mxu0 0.0
        %1206 = vmatprep.subr.mxu0 0.0
        %1207 = vmatpush1.msra.mxu0 0.0
        %1208 = vmatprep.subr.mxu0 0.0
        %1209 = vmatpush1.msra.mxu0 0.0
        %1210 = vmatprep.subr.mxu0 0.0
        %1211 = vmatpush1.msra.mxu0 0.0
        %1212 = vmatprep.subr.mxu0 0.0
        %1213 = vmatpush1.msra.mxu0 0.0
        %1214 = vmatprep.subr.mxu0 0.0
        %1215 = vmatpush1.msra.mxu0 0.0
        %1216 = vmatprep.subr.mxu0 0.0
        %1217 = vmatpush1.msra.mxu0 0.0
        %1218 = vmatprep.subr.mxu0 0.0
        %1219 = vmatpush1.msra.mxu0 0.0
        %1220 = vmatprep.subr.mxu0 0.0
        %1221 = vmatpush1.msra.mxu0 0.0
        %1222 = vmatprep.subr.mxu0 0.0
        %1223 = vmatpush1.msra.mxu0 0.0
        %1224 = vmatprep.subr.mxu0 0.0
        %1225 = vmatpush1.msra.mxu0 0.0
        %1226 = vmatprep.subr.mxu0 0.0
        %1227 = vmatpush1.msra.mxu0 0.0
        %1228 = vmatprep.subr.mxu0 0.0
        %1229 = vmatpush1.msra.mxu0 0.0
        %1230 = vmatprep.subr.mxu0 0.0
        %1231 = vmatpush1.msra.mxu0 0.0
        %1232 = vmatprep.subr.mxu0 0.0
        %1233 = vmatpush1.msra.mxu0 0.0
        %1234 = vmatprep.mubr.f32.mxu0 0.0
        %1235 = vmatmul.mubr.f32.gmra.mrb[0].mxu0 %v411
        %v1236 = vpop.f32.mrb[0].mxu0
        %v1237 = vadd.f32 0.0, %v1236
        %v1238 = vpop.f32.mrb[0].mxu0
        %1239 = vmatprep.mubr.f32.mxu0 0.0
        %1240 = vmatmul.mubr.f32.gmra.mrb[0].mxu0 %v414
        %v1241 = vpop.f32.mrb[0].mxu0
        %v1242 = vadd.f32 0.0, %v1241
        %v1243 = vpop.f32.mrb[0].mxu0
        %1244 = vmatprep.mubr.f32.mxu0 0.0
        %1245 = vmatmul.mubr.f32.gmra.mrb[0].mxu0 %v417
        %v1246 = vpop.f32.mrb[0].mxu0
        %v1247 = vadd.f32 0.0, %v1246
        %v1248 = vpop.f32.mrb[0].mxu0
        %1249 = vmatprep.mubr.f32.mxu0 0.0
        %1250 = vmatmul.mubr.f32.gmra.mrb[0].mxu0 %v420
        %v1251 = vpop.f32.mrb[0].mxu0
        %v1252 = vadd.f32 0.0, %v1251
        %v1253 = vpop.f32.mrb[0].mxu0
        %1254 = vdwg.mxu0
        %1255 = vmatprep.subr.mxu0 0.0
        %1256 = vmatpush1.msra.mxu0 %v1161
        %1257 = vmatprep.subr.mxu0 0.0
        %1258 = vmatpush1.msra.mxu0 %v1162
        %1259 = vmatprep.subr.mxu0 0.0
        %1260 = vmatpush1.msra.mxu0 %v1163
        %1261 = vmatprep.subr.mxu0 0.0
        %1262 = vmatpush1.msra.mxu0 %v1164
        %1263 = vmatprep.subr.mxu0 0.0
        %1264 = vmatpush1.msra.mxu0 0.0
        %1265 = vmatprep.subr.mxu0 0.0
        %1266 = vmatpush1.msra.mxu0 0.0
        %1267 = vmatprep.subr.mxu0 0.0
        %1268 = vmatpush1.msra.mxu0 0.0
        %1269 = vmatprep.subr.mxu0 0.0
        %1270 = vmatpush1.msra.mxu0 0.0
        %1271 = vmatprep.subr.mxu0 0.0
        %1272 = vmatpush1.msra.mxu0 0.0
        %1273 = vmatprep.subr.mxu0 0.0
        %1274 = vmatpush1.msra.mxu0 0.0
        %1275 = vmatprep.subr.mxu0 0.0
        %1276 = vmatpush1.msra.mxu0 0.0
        %1277 = vmatprep.subr.mxu0 0.0
        %1278 = vmatpush1.msra.mxu0 0.0
        %1279 = vmatprep.subr.mxu0 0.0
        %1280 = vmatpush1.msra.mxu0 0.0
        %1281 = vmatprep.subr.mxu0 0.0
        %1282 = vmatpush1.msra.mxu0 0.0
        %1283 = vmatprep.subr.mxu0 0.0
        %1284 = vmatpush1.msra.mxu0 0.0
        %1285 = vmatprep.subr.mxu0 0.0
        %1286 = vmatpush1.msra.mxu0 0.0
        %1287 = vmatprep.subr.mxu0 0.0
        %1288 = vmatpush1.msra.mxu0 0.0
        %1289 = vmatprep.subr.mxu0 0.0
        %1290 = vmatpush1.msra.mxu0 0.0
        %1291 = vmatprep.subr.mxu0 0.0
        %1292 = vmatpush1.msra.mxu0 0.0
        %1293 = vmatprep.subr.mxu0 0.0
        %1294 = vmatpush1.msra.mxu0 0.0
        %1295 = vmatprep.subr.mxu0 0.0
        %1296 = vmatpush1.msra.mxu0 0.0
        %1297 = vmatprep.subr.mxu0 0.0
        %1298 = vmatpush1.msra.mxu0 0.0
        %1299 = vmatprep.subr.mxu0 0.0
        %1300 = vmatpush1.msra.mxu0 0.0
        %1301 = vmatprep.subr.mxu0 0.0
        %1302 = vmatpush1.msra.mxu0 0.0
        %1303 = vmatprep.subr.mxu0 0.0
        %1304 = vmatpush1.msra.mxu0 0.0
        %1305 = vmatprep.subr.mxu0 0.0
        %1306 = vmatpush1.msra.mxu0 0.0
        %1307 = vmatprep.subr.mxu0 0.0
        %1308 = vmatpush1.msra.mxu0 0.0
        %1309 = vmatprep.subr.mxu0 0.0
        %1310 = vmatpush1.msra.mxu0 0.0
        %1311 = vmatprep.subr.mxu0 0.0
        %1312 = vmatpush1.msra.mxu0 0.0
        %1313 = vmatprep.subr.mxu0 0.0
        %1314 = vmatpush1.msra.mxu0 0.0
        %1315 = vmatprep.subr.mxu0 0.0
        %1316 = vmatpush1.msra.mxu0 0.0
        %1317 = vmatprep.subr.mxu0 0.0
        %1318 = vmatpush1.msra.mxu0 0.0
        %1319 = vmatprep.mubr.f32.mxu0 0.0
        %1320 = vmatmul.mubr.f32.gmra.mrb[0].mxu0 %v508
        %v1321 = vpop.f32.mrb[0].mxu0
        %v1322 = vadd.f32 %v1237, %v1321
        %v1323 = vpop.f32.mrb[0].mxu0
        %1324 = vmatprep.mubr.f32.mxu0 0.0
        %1325 = vmatmul.mubr.f32.gmra.mrb[0].mxu0 %v511
        %v1326 = vpop.f32.mrb[0].mxu0
        %v1327 = vadd.f32 %v1242, %v1326
        %v1328 = vpop.f32.mrb[0].mxu0
        %1329 = vmatprep.mubr.f32.mxu0 0.0
        %1330 = vmatmul.mubr.f32.gmra.mrb[0].mxu0 %v514
        %v1331 = vpop.f32.mrb[0].mxu0
        %v1332 = vadd.f32 %v1247, %v1331
        %v1333 = vpop.f32.mrb[0].mxu0
        %1334 = vmatprep.mubr.f32.mxu0 0.0
        %1335 = vmatmul.mubr.f32.gmra.mrb[0].mxu0 %v517
        %v1336 = vpop.f32.mrb[0].mxu0
        %v1337 = vadd.f32 %v1252, %v1336
        %v1338 = vpop.f32.mrb[0].mxu0
        %1339 = vdwg.mxu0
        %v1341 = vsel %vm409, %v1322, 0
        %v1344 = vsel %vm409, %v1327, 0
        %v1347 = vsel %vm409, %v1332, 0
        %v1350 = vsel %vm409, %v1337, 0
        %1352 = vmatprep.subr.mxu0 0.0
        %1353 = vmatpush1.msra.mxu0 %v397
        %1354 = vmatprep.subr.mxu0 0.0
        %1355 = vmatpush1.msra.mxu0 %v398
        %1356 = vmatprep.subr.mxu0 0.0
        %1357 = vmatpush1.msra.mxu0 %v399
        %1358 = vmatprep.subr.mxu0 0.0
        %1359 = vmatpush1.msra.mxu0 %v400
        %1360 = vmatprep.subr.mxu0 0.0
        %1361 = vmatpush1.msra.mxu0 0.0
        %1362 = vmatprep.subr.mxu0 0.0
        %1363 = vmatpush1.msra.mxu0 0.0
        %1364 = vmatprep.subr.mxu0 0.0
        %1365 = vmatpush1.msra.mxu0 0.0
        %1366 = vmatprep.subr.mxu0 0.0
        %1367 = vmatpush1.msra.mxu0 0.0
        %1368 = vmatprep.subr.mxu0 0.0
        %1369 = vmatpush1.msra.mxu0 0.0
        %1370 = vmatprep.subr.mxu0 0.0
        %1371 = vmatpush1.msra.mxu0 0.0
        %1372 = vmatprep.subr.mxu0 0.0
        %1373 = vmatpush1.msra.mxu0 0.0
        %1374 = vmatprep.subr.mxu0 0.0
        %1375 = vmatpush1.msra.mxu0 0.0
        %1376 = vmatprep.subr.mxu0 0.0
        %1377 = vmatpush1.msra.mxu0 0.0
        %1378 = vmatprep.subr.mxu0 0.0
        %1379 = vmatpush1.msra.mxu0 0.0
        %1380 = vmatprep.subr.mxu0 0.0
        %1381 = vmatpush1.msra.mxu0 0.0
        %1382 = vmatprep.subr.mxu0 0.0
        %1383 = vmatpush1.msra.mxu0 0.0
        %1384 = vmatprep.subr.mxu0 0.0
        %1385 = vmatpush1.msra.mxu0 0.0
        %1386 = vmatprep.subr.mxu0 0.0
        %1387 = vmatpush1.msra.mxu0 0.0
        %1388 = vmatprep.subr.mxu0 0.0
        %1389 = vmatpush1.msra.mxu0 0.0
        %1390 = vmatprep.subr.mxu0 0.0
        %1391 = vmatpush1.msra.mxu0 0.0
        %1392 = vmatprep.subr.mxu0 0.0
        %1393 = vmatpush1.msra.mxu0 0.0
        %1394 = vmatprep.subr.mxu0 0.0
        %1395 = vmatpush1.msra.mxu0 0.0
        %1396 = vmatprep.subr.mxu0 0.0
        %1397 = vmatpush1.msra.mxu0 0.0
        %1398 = vmatprep.subr.mxu0 0.0
        %1399 = vmatpush1.msra.mxu0 0.0
        %1400 = vmatprep.subr.mxu0 0.0
        %1401 = vmatpush1.msra.mxu0 0.0
        %1402 = vmatprep.subr.mxu0 0.0
        %1403 = vmatpush1.msra.mxu0 0.0
        %1404 = vmatprep.subr.mxu0 0.0
        %1405 = vmatpush1.msra.mxu0 0.0
        %1406 = vmatprep.subr.mxu0 0.0
        %1407 = vmatpush1.msra.mxu0 0.0
        %1408 = vmatprep.subr.mxu0 0.0
        %1409 = vmatpush1.msra.mxu0 0.0
        %1410 = vmatprep.subr.mxu0 0.0
        %1411 = vmatpush1.msra.mxu0 0.0
        %1412 = vmatprep.subr.mxu0 0.0
        %1413 = vmatpush1.msra.mxu0 0.0
        %1414 = vmatprep.subr.mxu0 0.0
        %1415 = vmatpush1.msra.mxu0 0.0
        %1416 = vmatprep.mubr.f32.mxu0 0.0
        %1417 = vmatmul.mubr.f32.gmra.mrb[0].mxu0 %v1341
        %v1418 = vpop.f32.mrb[0].mxu0
        %v1419 = vadd.f32 0.0, %v1418
        %v1420 = vpop.f32.mrb[0].mxu0
        %1421 = vmatprep.mubr.f32.mxu0 0.0
        %1422 = vmatmul.mubr.f32.gmra.mrb[0].mxu0 %v1344
        %v1423 = vpop.f32.mrb[0].mxu0
        %v1424 = vadd.f32 0.0, %v1423
        %v1425 = vpop.f32.mrb[0].mxu0
        %1426 = vmatprep.mubr.f32.mxu0 0.0
        %1427 = vmatmul.mubr.f32.gmra.mrb[0].mxu0 %v1347
        %v1428 = vpop.f32.mrb[0].mxu0
        %v1429 = vadd.f32 0.0, %v1428
        %v1430 = vpop.f32.mrb[0].mxu0
        %1431 = vmatprep.mubr.f32.mxu0 0.0
        %1432 = vmatmul.mubr.f32.gmra.mrb[0].mxu0 %v1350
        %v1433 = vpop.f32.mrb[0].mxu0
        %v1434 = vadd.f32 0.0, %v1433
        %v1435 = vpop.f32.mrb[0].mxu0
        %1436 = vdwg.mxu0
        %v1438 = vsel %vm409, %v1142, 0
        %v1441 = vsel %vm409, %v1147, 0
        %v1444 = vsel %vm409, %v1152, 0
        %v1447 = vsel %vm409, %v1157, 0
        %1449 = vmatprep.subr.mxu0 0.0
        %1450 = vmatpush1.msra.mxu0 %v393
        %1451 = vmatprep.subr.mxu0 0.0
        %1452 = vmatpush1.msra.mxu0 %v394
        %1453 = vmatprep.subr.mxu0 0.0
        %1454 = vmatpush1.msra.mxu0 %v395
        %1455 = vmatprep.subr.mxu0 0.0
        %1456 = vmatpush1.msra.mxu0 %v396
        %1457 = vmatprep.subr.mxu0 0.0
        %1458 = vmatpush1.msra.mxu0 0.0
        %1459 = vmatprep.subr.mxu0 0.0
        %1460 = vmatpush1.msra.mxu0 0.0
        %1461 = vmatprep.subr.mxu0 0.0
        %1462 = vmatpush1.msra.mxu0 0.0
        %1463 = vmatprep.subr.mxu0 0.0
        %1464 = vmatpush1.msra.mxu0 0.0
        %1465 = vmatprep.subr.mxu0 0.0
        %1466 = vmatpush1.msra.mxu0 0.0
        %1467 = vmatprep.subr.mxu0 0.0
        %1468 = vmatpush1.msra.mxu0 0.0
        %1469 = vmatprep.subr.mxu0 0.0
        %1470 = vmatpush1.msra.mxu0 0.0
        %1471 = vmatprep.subr.mxu0 0.0
        %1472 = vmatpush1.msra.mxu0 0.0
        %1473 = vmatprep.subr.mxu0 0.0
        %1474 = vmatpush1.msra.mxu0 0.0
        %1475 = vmatprep.subr.mxu0 0.0
        %1476 = vmatpush1.msra.mxu0 0.0
        %1477 = vmatprep.subr.mxu0 0.0
        %1478 = vmatpush1.msra.mxu0 0.0
        %1479 = vmatprep.subr.mxu0 0.0
        %1480 = vmatpush1.msra.mxu0 0.0
        %1481 = vmatprep.subr.mxu0 0.0
        %1482 = vmatpush1.msra.mxu0 0.0
        %1483 = vmatprep.subr.mxu0 0.0
        %1484 = vmatpush1.msra.mxu0 0.0
        %1485 = vmatprep.subr.mxu0 0.0
        %1486 = vmatpush1.msra.mxu0 0.0
        %1487 = vmatprep.subr.mxu0 0.0
        %1488 = vmatpush1.msra.mxu0 0.0
        %1489 = vmatprep.subr.mxu0 0.0
        %1490 = vmatpush1.msra.mxu0 0.0
        %1491 = vmatprep.subr.mxu0 0.0
        %1492 = vmatpush1.msra.mxu0 0.0
        %1493 = vmatprep.subr.mxu0 0.0
        %1494 = vmatpush1.msra.mxu0 0.0
        %1495 = vmatprep.subr.mxu0 0.0
        %1496 = vmatpush1.msra.mxu0 0.0
        %1497 = vmatprep.subr.mxu0 0.0
        %1498 = vmatpush1.msra.mxu0 0.0
        %1499 = vmatprep.subr.mxu0 0.0
        %1500 = vmatpush1.msra.mxu0 0.0
        %1501 = vmatprep.subr.mxu0 0.0
        %1502 = vmatpush1.msra.mxu0 0.0
        %1503 = vmatprep.subr.mxu0 0.0
        %1504 = vmatpush1.msra.mxu0 0.0
        %1505 = vmatprep.subr.mxu0 0.0
        %1506 = vmatpush1.msra.mxu0 0.0
        %1507 = vmatprep.subr.mxu0 0.0
        %1508 = vmatpush1.msra.mxu0 0.0
        %1509 = vmatprep.subr.mxu0 0.0
        %1510 = vmatpush1.msra.mxu0 0.0
        %1511 = vmatprep.subr.mxu0 0.0
        %1512 = vmatpush1.msra.mxu0 0.0
        %1513 = vmatprep.mubr.f32.mxu0 0.0
        %1514 = vmatmul.mubr.f32.gmra.mrb[0].mxu0 %v1438
        %v1515 = vpop.f32.mrb[0].mxu0
        %v1516 = vadd.f32 %v1419, %v1515
        %v1517 = vpop.f32.mrb[0].mxu0
        %1518 = vmatprep.mubr.f32.mxu0 0.0
        %1519 = vmatmul.mubr.f32.gmra.mrb[0].mxu0 %v1441
        %v1520 = vpop.f32.mrb[0].mxu0
        %v1521 = vadd.f32 %v1424, %v1520
        %v1522 = vpop.f32.mrb[0].mxu0
        %1523 = vmatprep.mubr.f32.mxu0 0.0
        %1524 = vmatmul.mubr.f32.gmra.mrb[0].mxu0 %v1444
        %v1525 = vpop.f32.mrb[0].mxu0
        %v1526 = vadd.f32 %v1429, %v1525
        %v1527 = vpop.f32.mrb[0].mxu0
        %1528 = vmatprep.mubr.f32.mxu0 0.0
        %1529 = vmatmul.mubr.f32.gmra.mrb[0].mxu0 %v1447
        %v1530 = vpop.f32.mrb[0].mxu0
        %v1531 = vadd.f32 %v1434, %v1530
        %v1532 = vpop.f32.mrb[0].mxu0
        %1533 = vdwg.mxu0
        %s1534 = scalar_lea.vmem %s355, 32 [#allocation2]
        %1535 = vst.msk [vmem:[%s1534] sm:$0xff] %vm409, %v1516
        %1536 = vst.msk [vmem:[%s1534 + $0x8] sm:$0xff] %vm409, %v1521
        %1537 = vst.msk [vmem:[%s1534 + $0x10] sm:$0xff] %vm409, %v1526
        %1538 = vst.msk [vmem:[%s1534 + $0x18] sm:$0xff] %vm409, %v1531
        %s1539 = scalar_lea.vmem %s361, 64
        %v1540 = vld [vmem:[%s1539] sm:$0xff]
        %v1541 = vld [vmem:[%s1539 + $0x8] sm:$0xff]
        %v1542 = vld [vmem:[%s1539 + $0x10] sm:$0xff]
        %v1543 = vld [vmem:[%s1539 + $0x18] sm:$0xff]
        %s1544 = scalar_lea.vmem %s368, 64
        %v1545 = vld [vmem:[%s1544] sm:$0xff]
        %v1546 = vld [vmem:[%s1544 + $0x8] sm:$0xff]
        %v1547 = vld [vmem:[%s1544 + $0x10] sm:$0xff]
        %v1548 = vld [vmem:[%s1544 + $0x18] sm:$0xff]
        %1549 = vmatprep.subr.mxu0 0.0
        %1550 = vmatpush1.msra.mxu0 %v1545
        %1551 = vmatprep.subr.mxu0 0.0
        %1552 = vmatpush1.msra.mxu0 %v1546
        %1553 = vmatprep.subr.mxu0 0.0
        %1554 = vmatpush1.msra.mxu0 %v1547
        %1555 = vmatprep.subr.mxu0 0.0
        %1556 = vmatpush1.msra.mxu0 %v1548
        %1557 = vmatprep.subr.mxu0 0.0
        %1558 = vmatpush1.msra.mxu0 0.0
        %1559 = vmatprep.subr.mxu0 0.0
        %1560 = vmatpush1.msra.mxu0 0.0
        %1561 = vmatprep.subr.mxu0 0.0
        %1562 = vmatpush1.msra.mxu0 0.0
        %1563 = vmatprep.subr.mxu0 0.0
        %1564 = vmatpush1.msra.mxu0 0.0
        %1565 = vmatprep.subr.mxu0 0.0
        %1566 = vmatpush1.msra.mxu0 0.0
        %1567 = vmatprep.subr.mxu0 0.0
        %1568 = vmatpush1.msra.mxu0 0.0
        %1569 = vmatprep.subr.mxu0 0.0
        %1570 = vmatpush1.msra.mxu0 0.0
        %1571 = vmatprep.subr.mxu0 0.0
        %1572 = vmatpush1.msra.mxu0 0.0
        %1573 = vmatprep.subr.mxu0 0.0
        %1574 = vmatpush1.msra.mxu0 0.0
        %1575 = vmatprep.subr.mxu0 0.0
        %1576 = vmatpush1.msra.mxu0 0.0
        %1577 = vmatprep.subr.mxu0 0.0
        %1578 = vmatpush1.msra.mxu0 0.0
        %1579 = vmatprep.subr.mxu0 0.0
        %1580 = vmatpush1.msra.mxu0 0.0
        %1581 = vmatprep.subr.mxu0 0.0
        %1582 = vmatpush1.msra.mxu0 0.0
        %1583 = vmatprep.subr.mxu0 0.0
        %1584 = vmatpush1.msra.mxu0 0.0
        %1585 = vmatprep.subr.mxu0 0.0
        %1586 = vmatpush1.msra.mxu0 0.0
        %1587 = vmatprep.subr.mxu0 0.0
        %1588 = vmatpush1.msra.mxu0 0.0
        %1589 = vmatprep.subr.mxu0 0.0
        %1590 = vmatpush1.msra.mxu0 0.0
        %1591 = vmatprep.subr.mxu0 0.0
        %1592 = vmatpush1.msra.mxu0 0.0
        %1593 = vmatprep.subr.mxu0 0.0
        %1594 = vmatpush1.msra.mxu0 0.0
        %1595 = vmatprep.subr.mxu0 0.0
        %1596 = vmatpush1.msra.mxu0 0.0
        %1597 = vmatprep.subr.mxu0 0.0
        %1598 = vmatpush1.msra.mxu0 0.0
        %1599 = vmatprep.subr.mxu0 0.0
        %1600 = vmatpush1.msra.mxu0 0.0
        %1601 = vmatprep.subr.mxu0 0.0
        %1602 = vmatpush1.msra.mxu0 0.0
        %1603 = vmatprep.subr.mxu0 0.0
        %1604 = vmatpush1.msra.mxu0 0.0
        %1605 = vmatprep.subr.mxu0 0.0
        %1606 = vmatpush1.msra.mxu0 0.0
        %1607 = vmatprep.subr.mxu0 0.0
        %1608 = vmatpush1.msra.mxu0 0.0
        %1609 = vmatprep.subr.mxu0 0.0
        %1610 = vmatpush1.msra.mxu0 0.0
        %1611 = vmatprep.subr.mxu0 0.0
        %1612 = vmatpush1.msra.mxu0 0.0
        %1613 = vmatprep.mubr.f32.mxu0 0.0
        %1614 = vmatmul.mubr.f32.gmra.mrb[0].mxu0 %v411
        %v1615 = vpop.f32.mrb[0].mxu0
        %v1616 = vadd.f32 0.0, %v1615
        %v1617 = vpop.f32.mrb[0].mxu0
        %1618 = vmatprep.mubr.f32.mxu0 0.0
        %1619 = vmatmul.mubr.f32.gmra.mrb[0].mxu0 %v414
        %v1620 = vpop.f32.mrb[0].mxu0
        %v1621 = vadd.f32 0.0, %v1620
        %v1622 = vpop.f32.mrb[0].mxu0
        %1623 = vmatprep.mubr.f32.mxu0 0.0
        %1624 = vmatmul.mubr.f32.gmra.mrb[0].mxu0 %v417
        %v1625 = vpop.f32.mrb[0].mxu0
        %v1626 = vadd.f32 0.0, %v1625
        %v1627 = vpop.f32.mrb[0].mxu0
        %1628 = vmatprep.mubr.f32.mxu0 0.0
        %1629 = vmatmul.mubr.f32.gmra.mrb[0].mxu0 %v420
        %v1630 = vpop.f32.mrb[0].mxu0
        %v1631 = vadd.f32 0.0, %v1630
        %v1632 = vpop.f32.mrb[0].mxu0
        %1633 = vdwg.mxu0
        %1634 = vmatprep.subr.mxu0 0.0
        %1635 = vmatpush1.msra.mxu0 %v1540
        %1636 = vmatprep.subr.mxu0 0.0
        %1637 = vmatpush1.msra.mxu0 %v1541
        %1638 = vmatprep.subr.mxu0 0.0
        %1639 = vmatpush1.msra.mxu0 %v1542
        %1640 = vmatprep.subr.mxu0 0.0
        %1641 = vmatpush1.msra.mxu0 %v1543
        %1642 = vmatprep.subr.mxu0 0.0
        %1643 = vmatpush1.msra.mxu0 0.0
        %1644 = vmatprep.subr.mxu0 0.0
        %1645 = vmatpush1.msra.mxu0 0.0
        %1646 = vmatprep.subr.mxu0 0.0
        %1647 = vmatpush1.msra.mxu0 0.0
        %1648 = vmatprep.subr.mxu0 0.0
        %1649 = vmatpush1.msra.mxu0 0.0
        %1650 = vmatprep.subr.mxu0 0.0
        %1651 = vmatpush1.msra.mxu0 0.0
        %1652 = vmatprep.subr.mxu0 0.0
        %1653 = vmatpush1.msra.mxu0 0.0
        %1654 = vmatprep.subr.mxu0 0.0
        %1655 = vmatpush1.msra.mxu0 0.0
        %1656 = vmatprep.subr.mxu0 0.0
        %1657 = vmatpush1.msra.mxu0 0.0
        %1658 = vmatprep.subr.mxu0 0.0
        %1659 = vmatpush1.msra.mxu0 0.0
        %1660 = vmatprep.subr.mxu0 0.0
        %1661 = vmatpush1.msra.mxu0 0.0
        %1662 = vmatprep.subr.mxu0 0.0
        %1663 = vmatpush1.msra.mxu0 0.0
        %1664 = vmatprep.subr.mxu0 0.0
        %1665 = vmatpush1.msra.mxu0 0.0
        %1666 = vmatprep.subr.mxu0 0.0
        %1667 = vmatpush1.msra.mxu0 0.0
        %1668 = vmatprep.subr.mxu0 0.0
        %1669 = vmatpush1.msra.mxu0 0.0
        %1670 = vmatprep.subr.mxu0 0.0
        %1671 = vmatpush1.msra.mxu0 0.0
        %1672 = vmatprep.subr.mxu0 0.0
        %1673 = vmatpush1.msra.mxu0 0.0
        %1674 = vmatprep.subr.mxu0 0.0
        %1675 = vmatpush1.msra.mxu0 0.0
        %1676 = vmatprep.subr.mxu0 0.0
        %1677 = vmatpush1.msra.mxu0 0.0
        %1678 = vmatprep.subr.mxu0 0.0
        %1679 = vmatpush1.msra.mxu0 0.0
        %1680 = vmatprep.subr.mxu0 0.0
        %1681 = vmatpush1.msra.mxu0 0.0
        %1682 = vmatprep.subr.mxu0 0.0
        %1683 = vmatpush1.msra.mxu0 0.0
        %1684 = vmatprep.subr.mxu0 0.0
        %1685 = vmatpush1.msra.mxu0 0.0
        %1686 = vmatprep.subr.mxu0 0.0
        %1687 = vmatpush1.msra.mxu0 0.0
        %1688 = vmatprep.subr.mxu0 0.0
        %1689 = vmatpush1.msra.mxu0 0.0
        %1690 = vmatprep.subr.mxu0 0.0
        %1691 = vmatpush1.msra.mxu0 0.0
        %1692 = vmatprep.subr.mxu0 0.0
        %1693 = vmatpush1.msra.mxu0 0.0
        %1694 = vmatprep.subr.mxu0 0.0
        %1695 = vmatpush1.msra.mxu0 0.0
        %1696 = vmatprep.subr.mxu0 0.0
        %1697 = vmatpush1.msra.mxu0 0.0
        %1698 = vmatprep.mubr.f32.mxu0 0.0
        %1699 = vmatmul.mubr.f32.gmra.mrb[0].mxu0 %v508
        %v1700 = vpop.f32.mrb[0].mxu0
        %v1701 = vadd.f32 %v1616, %v1700
        %v1702 = vpop.f32.mrb[0].mxu0
        %1703 = vmatprep.mubr.f32.mxu0 0.0
        %1704 = vmatmul.mubr.f32.gmra.mrb[0].mxu0 %v511
        %v1705 = vpop.f32.mrb[0].mxu0
        %v1706 = vadd.f32 %v1621, %v1705
        %v1707 = vpop.f32.mrb[0].mxu0
        %1708 = vmatprep.mubr.f32.mxu0 0.0
        %1709 = vmatmul.mubr.f32.gmra.mrb[0].mxu0 %v514
        %v1710 = vpop.f32.mrb[0].mxu0
        %v1711 = vadd.f32 %v1626, %v1710
        %v1712 = vpop.f32.mrb[0].mxu0
        %1713 = vmatprep.mubr.f32.mxu0 0.0
        %1714 = vmatmul.mubr.f32.gmra.mrb[0].mxu0 %v517
        %v1715 = vpop.f32.mrb[0].mxu0
        %v1716 = vadd.f32 %v1631, %v1715
        %v1717 = vpop.f32.mrb[0].mxu0
        %1718 = vdwg.mxu0
        %s1719 = scalar_lea.vmem %s375, 64
        %v1720 = vld [vmem:[%s1719] sm:$0xff]
        %v1721 = vld [vmem:[%s1719 + $0x8] sm:$0xff]
        %v1722 = vld [vmem:[%s1719 + $0x10] sm:$0xff]
        %v1723 = vld [vmem:[%s1719 + $0x18] sm:$0xff]
        %s1724 = scalar_lea.vmem %s382, 64
        %v1725 = vld [vmem:[%s1724] sm:$0xff]
        %v1726 = vld [vmem:[%s1724 + $0x8] sm:$0xff]
        %v1727 = vld [vmem:[%s1724 + $0x10] sm:$0xff]
        %v1728 = vld [vmem:[%s1724 + $0x18] sm:$0xff]
        %1729 = vmatprep.subr.mxu0 0.0
        %1730 = vmatpush1.msra.mxu0 %v1725
        %1731 = vmatprep.subr.mxu0 0.0
        %1732 = vmatpush1.msra.mxu0 %v1726
        %1733 = vmatprep.subr.mxu0 0.0
        %1734 = vmatpush1.msra.mxu0 %v1727
        %1735 = vmatprep.subr.mxu0 0.0
        %1736 = vmatpush1.msra.mxu0 %v1728
        %1737 = vmatprep.subr.mxu0 0.0
        %1738 = vmatpush1.msra.mxu0 0.0
        %1739 = vmatprep.subr.mxu0 0.0
        %1740 = vmatpush1.msra.mxu0 0.0
        %1741 = vmatprep.subr.mxu0 0.0
        %1742 = vmatpush1.msra.mxu0 0.0
        %1743 = vmatprep.subr.mxu0 0.0
        %1744 = vmatpush1.msra.mxu0 0.0
        %1745 = vmatprep.subr.mxu0 0.0
        %1746 = vmatpush1.msra.mxu0 0.0
        %1747 = vmatprep.subr.mxu0 0.0
        %1748 = vmatpush1.msra.mxu0 0.0
        %1749 = vmatprep.subr.mxu0 0.0
        %1750 = vmatpush1.msra.mxu0 0.0
        %1751 = vmatprep.subr.mxu0 0.0
        %1752 = vmatpush1.msra.mxu0 0.0
        %1753 = vmatprep.subr.mxu0 0.0
        %1754 = vmatpush1.msra.mxu0 0.0
        %1755 = vmatprep.subr.mxu0 0.0
        %1756 = vmatpush1.msra.mxu0 0.0
        %1757 = vmatprep.subr.mxu0 0.0
        %1758 = vmatpush1.msra.mxu0 0.0
        %1759 = vmatprep.subr.mxu0 0.0
        %1760 = vmatpush1.msra.mxu0 0.0
        %1761 = vmatprep.subr.mxu0 0.0
        %1762 = vmatpush1.msra.mxu0 0.0
        %1763 = vmatprep.subr.mxu0 0.0
        %1764 = vmatpush1.msra.mxu0 0.0
        %1765 = vmatprep.subr.mxu0 0.0
        %1766 = vmatpush1.msra.mxu0 0.0
        %1767 = vmatprep.subr.mxu0 0.0
        %1768 = vmatpush1.msra.mxu0 0.0
        %1769 = vmatprep.subr.mxu0 0.0
        %1770 = vmatpush1.msra.mxu0 0.0
        %1771 = vmatprep.subr.mxu0 0.0
        %1772 = vmatpush1.msra.mxu0 0.0
        %1773 = vmatprep.subr.mxu0 0.0
        %1774 = vmatpush1.msra.mxu0 0.0
        %1775 = vmatprep.subr.mxu0 0.0
        %1776 = vmatpush1.msra.mxu0 0.0
        %1777 = vmatprep.subr.mxu0 0.0
        %1778 = vmatpush1.msra.mxu0 0.0
        %1779 = vmatprep.subr.mxu0 0.0
        %1780 = vmatpush1.msra.mxu0 0.0
        %1781 = vmatprep.subr.mxu0 0.0
        %1782 = vmatpush1.msra.mxu0 0.0
        %1783 = vmatprep.subr.mxu0 0.0
        %1784 = vmatpush1.msra.mxu0 0.0
        %1785 = vmatprep.subr.mxu0 0.0
        %1786 = vmatpush1.msra.mxu0 0.0
        %1787 = vmatprep.subr.mxu0 0.0
        %1788 = vmatpush1.msra.mxu0 0.0
        %1789 = vmatprep.subr.mxu0 0.0
        %1790 = vmatpush1.msra.mxu0 0.0
        %1791 = vmatprep.subr.mxu0 0.0
        %1792 = vmatpush1.msra.mxu0 0.0
        %1793 = vmatprep.mubr.f32.mxu0 0.0
        %1794 = vmatmul.mubr.f32.gmra.mrb[0].mxu0 %v411
        %v1795 = vpop.f32.mrb[0].mxu0
        %v1796 = vadd.f32 0.0, %v1795
        %v1797 = vpop.f32.mrb[0].mxu0
        %1798 = vmatprep.mubr.f32.mxu0 0.0
        %1799 = vmatmul.mubr.f32.gmra.mrb[0].mxu0 %v414
        %v1800 = vpop.f32.mrb[0].mxu0
        %v1801 = vadd.f32 0.0, %v1800
        %v1802 = vpop.f32.mrb[0].mxu0
        %1803 = vmatprep.mubr.f32.mxu0 0.0
        %1804 = vmatmul.mubr.f32.gmra.mrb[0].mxu0 %v417
        %v1805 = vpop.f32.mrb[0].mxu0
        %v1806 = vadd.f32 0.0, %v1805
        %v1807 = vpop.f32.mrb[0].mxu0
        %1808 = vmatprep.mubr.f32.mxu0 0.0
        %1809 = vmatmul.mubr.f32.gmra.mrb[0].mxu0 %v420
        %v1810 = vpop.f32.mrb[0].mxu0
        %v1811 = vadd.f32 0.0, %v1810
        %v1812 = vpop.f32.mrb[0].mxu0
        %1813 = vdwg.mxu0
        %1814 = vmatprep.subr.mxu0 0.0
        %1815 = vmatpush1.msra.mxu0 %v1720
        %1816 = vmatprep.subr.mxu0 0.0
        %1817 = vmatpush1.msra.mxu0 %v1721
        %1818 = vmatprep.subr.mxu0 0.0
        %1819 = vmatpush1.msra.mxu0 %v1722
        %1820 = vmatprep.subr.mxu0 0.0
        %1821 = vmatpush1.msra.mxu0 %v1723
        %1822 = vmatprep.subr.mxu0 0.0
        %1823 = vmatpush1.msra.mxu0 0.0
        %1824 = vmatprep.subr.mxu0 0.0
        %1825 = vmatpush1.msra.mxu0 0.0
        %1826 = vmatprep.subr.mxu0 0.0
        %1827 = vmatpush1.msra.mxu0 0.0
        %1828 = vmatprep.subr.mxu0 0.0
        %1829 = vmatpush1.msra.mxu0 0.0
        %1830 = vmatprep.subr.mxu0 0.0
        %1831 = vmatpush1.msra.mxu0 0.0
        %1832 = vmatprep.subr.mxu0 0.0
        %1833 = vmatpush1.msra.mxu0 0.0
        %1834 = vmatprep.subr.mxu0 0.0
        %1835 = vmatpush1.msra.mxu0 0.0
        %1836 = vmatprep.subr.mxu0 0.0
        %1837 = vmatpush1.msra.mxu0 0.0
        %1838 = vmatprep.subr.mxu0 0.0
        %1839 = vmatpush1.msra.mxu0 0.0
        %1840 = vmatprep.subr.mxu0 0.0
        %1841 = vmatpush1.msra.mxu0 0.0
        %1842 = vmatprep.subr.mxu0 0.0
        %1843 = vmatpush1.msra.mxu0 0.0
        %1844 = vmatprep.subr.mxu0 0.0
        %1845 = vmatpush1.msra.mxu0 0.0
        %1846 = vmatprep.subr.mxu0 0.0
        %1847 = vmatpush1.msra.mxu0 0.0
        %1848 = vmatprep.subr.mxu0 0.0
        %1849 = vmatpush1.msra.mxu0 0.0
        %1850 = vmatprep.subr.mxu0 0.0
        %1851 = vmatpush1.msra.mxu0 0.0
        %1852 = vmatprep.subr.mxu0 0.0
        %1853 = vmatpush1.msra.mxu0 0.0
        %1854 = vmatprep.subr.mxu0 0.0
        %1855 = vmatpush1.msra.mxu0 0.0
        %1856 = vmatprep.subr.mxu0 0.0
        %1857 = vmatpush1.msra.mxu0 0.0
        %1858 = vmatprep.subr.mxu0 0.0
        %1859 = vmatpush1.msra.mxu0 0.0
        %1860 = vmatprep.subr.mxu0 0.0
        %1861 = vmatpush1.msra.mxu0 0.0
        %1862 = vmatprep.subr.mxu0 0.0
        %1863 = vmatpush1.msra.mxu0 0.0
        %1864 = vmatprep.subr.mxu0 0.0
        %1865 = vmatpush1.msra.mxu0 0.0
        %1866 = vmatprep.subr.mxu0 0.0
        %1867 = vmatpush1.msra.mxu0 0.0
        %1868 = vmatprep.subr.mxu0 0.0
        %1869 = vmatpush1.msra.mxu0 0.0
        %1870 = vmatprep.subr.mxu0 0.0
        %1871 = vmatpush1.msra.mxu0 0.0
        %1872 = vmatprep.subr.mxu0 0.0
        %1873 = vmatpush1.msra.mxu0 0.0
        %1874 = vmatprep.subr.mxu0 0.0
        %1875 = vmatpush1.msra.mxu0 0.0
        %1876 = vmatprep.subr.mxu0 0.0
        %1877 = vmatpush1.msra.mxu0 0.0
        %1878 = vmatprep.mubr.f32.mxu0 0.0
        %1879 = vmatmul.mubr.f32.gmra.mrb[0].mxu0 %v508
        %v1880 = vpop.f32.mrb[0].mxu0
        %v1881 = vadd.f32 %v1796, %v1880
        %v1882 = vpop.f32.mrb[0].mxu0
        %1883 = vmatprep.mubr.f32.mxu0 0.0
        %1884 = vmatmul.mubr.f32.gmra.mrb[0].mxu0 %v511
        %v1885 = vpop.f32.mrb[0].mxu0
        %v1886 = vadd.f32 %v1801, %v1885
        %v1887 = vpop.f32.mrb[0].mxu0
        %1888 = vmatprep.mubr.f32.mxu0 0.0
        %1889 = vmatmul.mubr.f32.gmra.mrb[0].mxu0 %v514
        %v1890 = vpop.f32.mrb[0].mxu0
        %v1891 = vadd.f32 %v1806, %v1890
        %v1892 = vpop.f32.mrb[0].mxu0
        %1893 = vmatprep.mubr.f32.mxu0 0.0
        %1894 = vmatmul.mubr.f32.gmra.mrb[0].mxu0 %v517
        %v1895 = vpop.f32.mrb[0].mxu0
        %v1896 = vadd.f32 %v1811, %v1895
        %v1897 = vpop.f32.mrb[0].mxu0
        %1898 = vdwg.mxu0
        %v1900 = vsel %vm409, %v1881, 0
        %v1903 = vsel %vm409, %v1886, 0
        %v1906 = vsel %vm409, %v1891, 0
        %v1909 = vsel %vm409, %v1896, 0
        %1911 = vmatprep.subr.mxu0 0.0
        %1912 = vmatpush1.msra.mxu0 %v397
        %1913 = vmatprep.subr.mxu0 0.0
        %1914 = vmatpush1.msra.mxu0 %v398
        %1915 = vmatprep.subr.mxu0 0.0
        %1916 = vmatpush1.msra.mxu0 %v399
        %1917 = vmatprep.subr.mxu0 0.0
        %1918 = vmatpush1.msra.mxu0 %v400
        %1919 = vmatprep.subr.mxu0 0.0
        %1920 = vmatpush1.msra.mxu0 0.0
        %1921 = vmatprep.subr.mxu0 0.0
        %1922 = vmatpush1.msra.mxu0 0.0
        %1923 = vmatprep.subr.mxu0 0.0
        %1924 = vmatpush1.msra.mxu0 0.0
        %1925 = vmatprep.subr.mxu0 0.0
        %1926 = vmatpush1.msra.mxu0 0.0
        %1927 = vmatprep.subr.mxu0 0.0
        %1928 = vmatpush1.msra.mxu0 0.0
        %1929 = vmatprep.subr.mxu0 0.0
        %1930 = vmatpush1.msra.mxu0 0.0
        %1931 = vmatprep.subr.mxu0 0.0
        %1932 = vmatpush1.msra.mxu0 0.0
        %1933 = vmatprep.subr.mxu0 0.0
        %1934 = vmatpush1.msra.mxu0 0.0
        %1935 = vmatprep.subr.mxu0 0.0
        %1936 = vmatpush1.msra.mxu0 0.0
        %1937 = vmatprep.subr.mxu0 0.0
        %1938 = vmatpush1.msra.mxu0 0.0
        %1939 = vmatprep.subr.mxu0 0.0
        %1940 = vmatpush1.msra.mxu0 0.0
        %1941 = vmatprep.subr.mxu0 0.0
        %1942 = vmatpush1.msra.mxu0 0.0
        %1943 = vmatprep.subr.mxu0 0.0
        %1944 = vmatpush1.msra.mxu0 0.0
        %1945 = vmatprep.subr.mxu0 0.0
        %1946 = vmatpush1.msra.mxu0 0.0
        %1947 = vmatprep.subr.mxu0 0.0
        %1948 = vmatpush1.msra.mxu0 0.0
        %1949 = vmatprep.subr.mxu0 0.0
        %1950 = vmatpush1.msra.mxu0 0.0
        %1951 = vmatprep.subr.mxu0 0.0
        %1952 = vmatpush1.msra.mxu0 0.0
        %1953 = vmatprep.subr.mxu0 0.0
        %1954 = vmatpush1.msra.mxu0 0.0
        %1955 = vmatprep.subr.mxu0 0.0
        %1956 = vmatpush1.msra.mxu0 0.0
        %1957 = vmatprep.subr.mxu0 0.0
        %1958 = vmatpush1.msra.mxu0 0.0
        %1959 = vmatprep.subr.mxu0 0.0
        %1960 = vmatpush1.msra.mxu0 0.0
        %1961 = vmatprep.subr.mxu0 0.0
        %1962 = vmatpush1.msra.mxu0 0.0
        %1963 = vmatprep.subr.mxu0 0.0
        %1964 = vmatpush1.msra.mxu0 0.0
        %1965 = vmatprep.subr.mxu0 0.0
        %1966 = vmatpush1.msra.mxu0 0.0
        %1967 = vmatprep.subr.mxu0 0.0
        %1968 = vmatpush1.msra.mxu0 0.0
        %1969 = vmatprep.subr.mxu0 0.0
        %1970 = vmatpush1.msra.mxu0 0.0
        %1971 = vmatprep.subr.mxu0 0.0
        %1972 = vmatpush1.msra.mxu0 0.0
        %1973 = vmatprep.subr.mxu0 0.0
        %1974 = vmatpush1.msra.mxu0 0.0
        %1975 = vmatprep.mubr.f32.mxu0 0.0
        %1976 = vmatmul.mubr.f32.gmra.mrb[0].mxu0 %v1900
        %v1977 = vpop.f32.mrb[0].mxu0
        %v1978 = vadd.f32 0.0, %v1977
        %v1979 = vpop.f32.mrb[0].mxu0
        %1980 = vmatprep.mubr.f32.mxu0 0.0
        %1981 = vmatmul.mubr.f32.gmra.mrb[0].mxu0 %v1903
        %v1982 = vpop.f32.mrb[0].mxu0
        %v1983 = vadd.f32 0.0, %v1982
        %v1984 = vpop.f32.mrb[0].mxu0
        %1985 = vmatprep.mubr.f32.mxu0 0.0
        %1986 = vmatmul.mubr.f32.gmra.mrb[0].mxu0 %v1906
        %v1987 = vpop.f32.mrb[0].mxu0
        %v1988 = vadd.f32 0.0, %v1987
        %v1989 = vpop.f32.mrb[0].mxu0
        %1990 = vmatprep.mubr.f32.mxu0 0.0
        %1991 = vmatmul.mubr.f32.gmra.mrb[0].mxu0 %v1909
        %v1992 = vpop.f32.mrb[0].mxu0
        %v1993 = vadd.f32 0.0, %v1992
        %v1994 = vpop.f32.mrb[0].mxu0
        %1995 = vdwg.mxu0
        %v1997 = vsel %vm409, %v1701, 0
        %v2000 = vsel %vm409, %v1706, 0
        %v2003 = vsel %vm409, %v1711, 0
        %v2006 = vsel %vm409, %v1716, 0
        %2008 = vmatprep.subr.mxu0 0.0
        %2009 = vmatpush1.msra.mxu0 %v393
        %2010 = vmatprep.subr.mxu0 0.0
        %2011 = vmatpush1.msra.mxu0 %v394
        %2012 = vmatprep.subr.mxu0 0.0
        %2013 = vmatpush1.msra.mxu0 %v395
        %2014 = vmatprep.subr.mxu0 0.0
        %2015 = vmatpush1.msra.mxu0 %v396
        %2016 = vmatprep.subr.mxu0 0.0
        %2017 = vmatpush1.msra.mxu0 0.0
        %2018 = vmatprep.subr.mxu0 0.0
        %2019 = vmatpush1.msra.mxu0 0.0
        %2020 = vmatprep.subr.mxu0 0.0
        %2021 = vmatpush1.msra.mxu0 0.0
        %2022 = vmatprep.subr.mxu0 0.0
        %2023 = vmatpush1.msra.mxu0 0.0
        %2024 = vmatprep.subr.mxu0 0.0
        %2025 = vmatpush1.msra.mxu0 0.0
        %2026 = vmatprep.subr.mxu0 0.0
        %2027 = vmatpush1.msra.mxu0 0.0
        %2028 = vmatprep.subr.mxu0 0.0
        %2029 = vmatpush1.msra.mxu0 0.0
        %2030 = vmatprep.subr.mxu0 0.0
        %2031 = vmatpush1.msra.mxu0 0.0
        %2032 = vmatprep.subr.mxu0 0.0
        %2033 = vmatpush1.msra.mxu0 0.0
        %2034 = vmatprep.subr.mxu0 0.0
        %2035 = vmatpush1.msra.mxu0 0.0
        %2036 = vmatprep.subr.mxu0 0.0
        %2037 = vmatpush1.msra.mxu0 0.0
        %2038 = vmatprep.subr.mxu0 0.0
        %2039 = vmatpush1.msra.mxu0 0.0
        %2040 = vmatprep.subr.mxu0 0.0
        %2041 = vmatpush1.msra.mxu0 0.0
        %2042 = vmatprep.subr.mxu0 0.0
        %2043 = vmatpush1.msra.mxu0 0.0
        %2044 = vmatprep.subr.mxu0 0.0
        %2045 = vmatpush1.msra.mxu0 0.0
        %2046 = vmatprep.subr.mxu0 0.0
        %2047 = vmatpush1.msra.mxu0 0.0
        %2048 = vmatprep.subr.mxu0 0.0
        %2049 = vmatpush1.msra.mxu0 0.0
        %2050 = vmatprep.subr.mxu0 0.0
        %2051 = vmatpush1.msra.mxu0 0.0
        %2052 = vmatprep.subr.mxu0 0.0
        %2053 = vmatpush1.msra.mxu0 0.0
        %2054 = vmatprep.subr.mxu0 0.0
        %2055 = vmatpush1.msra.mxu0 0.0
        %2056 = vmatprep.subr.mxu0 0.0
        %2057 = vmatpush1.msra.mxu0 0.0
        %2058 = vmatprep.subr.mxu0 0.0
        %2059 = vmatpush1.msra.mxu0 0.0
        %2060 = vmatprep.subr.mxu0 0.0
        %2061 = vmatpush1.msra.mxu0 0.0
        %2062 = vmatprep.subr.mxu0 0.0
        %2063 = vmatpush1.msra.mxu0 0.0
        %2064 = vmatprep.subr.mxu0 0.0
        %2065 = vmatpush1.msra.mxu0 0.0
        %2066 = vmatprep.subr.mxu0 0.0
        %2067 = vmatpush1.msra.mxu0 0.0
        %2068 = vmatprep.subr.mxu0 0.0
        %2069 = vmatpush1.msra.mxu0 0.0
        %2070 = vmatprep.subr.mxu0 0.0
        %2071 = vmatpush1.msra.mxu0 0.0
        %2072 = vmatprep.mubr.f32.mxu0 0.0
        %2073 = vmatmul.mubr.f32.gmra.mrb[0].mxu0 %v1997
        %v2074 = vpop.f32.mrb[0].mxu0
        %v2075 = vadd.f32 %v1978, %v2074
        %v2076 = vpop.f32.mrb[0].mxu0
        %2077 = vmatprep.mubr.f32.mxu0 0.0
        %2078 = vmatmul.mubr.f32.gmra.mrb[0].mxu0 %v2000
        %v2079 = vpop.f32.mrb[0].mxu0
        %v2080 = vadd.f32 %v1983, %v2079
        %v2081 = vpop.f32.mrb[0].mxu0
        %2082 = vmatprep.mubr.f32.mxu0 0.0
        %2083 = vmatmul.mubr.f32.gmra.mrb[0].mxu0 %v2003
        %v2084 = vpop.f32.mrb[0].mxu0
        %v2085 = vadd.f32 %v1988, %v2084
        %v2086 = vpop.f32.mrb[0].mxu0
        %2087 = vmatprep.mubr.f32.mxu0 0.0
        %2088 = vmatmul.mubr.f32.gmra.mrb[0].mxu0 %v2006
        %v2089 = vpop.f32.mrb[0].mxu0
        %v2090 = vadd.f32 %v1993, %v2089
        %v2091 = vpop.f32.mrb[0].mxu0
        %2092 = vdwg.mxu0
        %s2093 = scalar_lea.vmem %s355, 64 [#allocation2]
        %2094 = vst.msk [vmem:[%s2093] sm:$0xff] %vm409, %v2075
        %2095 = vst.msk [vmem:[%s2093 + $0x8] sm:$0xff] %vm409, %v2080
        %2096 = vst.msk [vmem:[%s2093 + $0x10] sm:$0xff] %vm409, %v2085
        %2097 = vst.msk [vmem:[%s2093 + $0x18] sm:$0xff] %vm409, %v2090
        %s2098 = scalar_lea.vmem %s361, 96
        %v2099 = vld [vmem:[%s2098] sm:$0xff]
        %v2100 = vld [vmem:[%s2098 + $0x8] sm:$0xff]
        %v2101 = vld [vmem:[%s2098 + $0x10] sm:$0xff]
        %v2102 = vld [vmem:[%s2098 + $0x18] sm:$0xff]
        %s2103 = scalar_lea.vmem %s368, 96
        %v2104 = vld [vmem:[%s2103] sm:$0xff]
        %v2105 = vld [vmem:[%s2103 + $0x8] sm:$0xff]
        %v2106 = vld [vmem:[%s2103 + $0x10] sm:$0xff]
        %v2107 = vld [vmem:[%s2103 + $0x18] sm:$0xff]
        %2108 = vmatprep.subr.mxu0 0.0
        %2109 = vmatpush1.msra.mxu0 %v2104
        %2110 = vmatprep.subr.mxu0 0.0
        %2111 = vmatpush1.msra.mxu0 %v2105
        %2112 = vmatprep.subr.mxu0 0.0
        %2113 = vmatpush1.msra.mxu0 %v2106
        %2114 = vmatprep.subr.mxu0 0.0
        %2115 = vmatpush1.msra.mxu0 %v2107
        %2116 = vmatprep.subr.mxu0 0.0
        %2117 = vmatpush1.msra.mxu0 0.0
        %2118 = vmatprep.subr.mxu0 0.0
        %2119 = vmatpush1.msra.mxu0 0.0
        %2120 = vmatprep.subr.mxu0 0.0
        %2121 = vmatpush1.msra.mxu0 0.0
        %2122 = vmatprep.subr.mxu0 0.0
        %2123 = vmatpush1.msra.mxu0 0.0
        %2124 = vmatprep.subr.mxu0 0.0
        %2125 = vmatpush1.msra.mxu0 0.0
        %2126 = vmatprep.subr.mxu0 0.0
        %2127 = vmatpush1.msra.mxu0 0.0
        %2128 = vmatprep.subr.mxu0 0.0
        %2129 = vmatpush1.msra.mxu0 0.0
        %2130 = vmatprep.subr.mxu0 0.0
        %2131 = vmatpush1.msra.mxu0 0.0
        %2132 = vmatprep.subr.mxu0 0.0
        %2133 = vmatpush1.msra.mxu0 0.0
        %2134 = vmatprep.subr.mxu0 0.0
        %2135 = vmatpush1.msra.mxu0 0.0
        %2136 = vmatprep.subr.mxu0 0.0
        %2137 = vmatpush1.msra.mxu0 0.0
        %2138 = vmatprep.subr.mxu0 0.0
        %2139 = vmatpush1.msra.mxu0 0.0
        %2140 = vmatprep.subr.mxu0 0.0
        %2141 = vmatpush1.msra.mxu0 0.0
        %2142 = vmatprep.subr.mxu0 0.0
        %2143 = vmatpush1.msra.mxu0 0.0
        %2144 = vmatprep.subr.mxu0 0.0
        %2145 = vmatpush1.msra.mxu0 0.0
        %2146 = vmatprep.subr.mxu0 0.0
        %2147 = vmatpush1.msra.mxu0 0.0
        %2148 = vmatprep.subr.mxu0 0.0
        %2149 = vmatpush1.msra.mxu0 0.0
        %2150 = vmatprep.subr.mxu0 0.0
        %2151 = vmatpush1.msra.mxu0 0.0
        %2152 = vmatprep.subr.mxu0 0.0
        %2153 = vmatpush1.msra.mxu0 0.0
        %2154 = vmatprep.subr.mxu0 0.0
        %2155 = vmatpush1.msra.mxu0 0.0
        %2156 = vmatprep.subr.mxu0 0.0
        %2157 = vmatpush1.msra.mxu0 0.0
        %2158 = vmatprep.subr.mxu0 0.0
        %2159 = vmatpush1.msra.mxu0 0.0
        %2160 = vmatprep.subr.mxu0 0.0
        %2161 = vmatpush1.msra.mxu0 0.0
        %2162 = vmatprep.subr.mxu0 0.0
        %2163 = vmatpush1.msra.mxu0 0.0
        %2164 = vmatprep.subr.mxu0 0.0
        %2165 = vmatpush1.msra.mxu0 0.0
        %2166 = vmatprep.subr.mxu0 0.0
        %2167 = vmatpush1.msra.mxu0 0.0
        %2168 = vmatprep.subr.mxu0 0.0
        %2169 = vmatpush1.msra.mxu0 0.0
        %2170 = vmatprep.subr.mxu0 0.0
        %2171 = vmatpush1.msra.mxu0 0.0
        %2172 = vmatprep.mubr.f32.mxu0 0.0
        %2173 = vmatmul.mubr.f32.gmra.mrb[0].mxu0 %v411
        %v2174 = vpop.f32.mrb[0].mxu0
        %v2175 = vadd.f32 0.0, %v2174
        %v2176 = vpop.f32.mrb[0].mxu0
        %2177 = vmatprep.mubr.f32.mxu0 0.0
        %2178 = vmatmul.mubr.f32.gmra.mrb[0].mxu0 %v414
        %v2179 = vpop.f32.mrb[0].mxu0
        %v2180 = vadd.f32 0.0, %v2179
        %v2181 = vpop.f32.mrb[0].mxu0
        %2182 = vmatprep.mubr.f32.mxu0 0.0
        %2183 = vmatmul.mubr.f32.gmra.mrb[0].mxu0 %v417
        %v2184 = vpop.f32.mrb[0].mxu0
        %v2185 = vadd.f32 0.0, %v2184
        %v2186 = vpop.f32.mrb[0].mxu0
        %2187 = vmatprep.mubr.f32.mxu0 0.0
        %2188 = vmatmul.mubr.f32.gmra.mrb[0].mxu0 %v420
        %v2189 = vpop.f32.mrb[0].mxu0
        %v2190 = vadd.f32 0.0, %v2189
        %v2191 = vpop.f32.mrb[0].mxu0
        %2192 = vdwg.mxu0
        %2193 = vmatprep.subr.mxu0 0.0
        %2194 = vmatpush1.msra.mxu0 %v2099
        %2195 = vmatprep.subr.mxu0 0.0
        %2196 = vmatpush1.msra.mxu0 %v2100
        %2197 = vmatprep.subr.mxu0 0.0
        %2198 = vmatpush1.msra.mxu0 %v2101
        %2199 = vmatprep.subr.mxu0 0.0
        %2200 = vmatpush1.msra.mxu0 %v2102
        %2201 = vmatprep.subr.mxu0 0.0
        %2202 = vmatpush1.msra.mxu0 0.0
        %2203 = vmatprep.subr.mxu0 0.0
        %2204 = vmatpush1.msra.mxu0 0.0
        %2205 = vmatprep.subr.mxu0 0.0
        %2206 = vmatpush1.msra.mxu0 0.0
        %2207 = vmatprep.subr.mxu0 0.0
        %2208 = vmatpush1.msra.mxu0 0.0
        %2209 = vmatprep.subr.mxu0 0.0
        %2210 = vmatpush1.msra.mxu0 0.0
        %2211 = vmatprep.subr.mxu0 0.0
        %2212 = vmatpush1.msra.mxu0 0.0
        %2213 = vmatprep.subr.mxu0 0.0
        %2214 = vmatpush1.msra.mxu0 0.0
        %2215 = vmatprep.subr.mxu0 0.0
        %2216 = vmatpush1.msra.mxu0 0.0
        %2217 = vmatprep.subr.mxu0 0.0
        %2218 = vmatpush1.msra.mxu0 0.0
        %2219 = vmatprep.subr.mxu0 0.0
        %2220 = vmatpush1.msra.mxu0 0.0
        %2221 = vmatprep.subr.mxu0 0.0
        %2222 = vmatpush1.msra.mxu0 0.0
        %2223 = vmatprep.subr.mxu0 0.0
        %2224 = vmatpush1.msra.mxu0 0.0
        %2225 = vmatprep.subr.mxu0 0.0
        %2226 = vmatpush1.msra.mxu0 0.0
        %2227 = vmatprep.subr.mxu0 0.0
        %2228 = vmatpush1.msra.mxu0 0.0
        %2229 = vmatprep.subr.mxu0 0.0
        %2230 = vmatpush1.msra.mxu0 0.0
        %2231 = vmatprep.subr.mxu0 0.0
        %2232 = vmatpush1.msra.mxu0 0.0
        %2233 = vmatprep.subr.mxu0 0.0
        %2234 = vmatpush1.msra.mxu0 0.0
        %2235 = vmatprep.subr.mxu0 0.0
        %2236 = vmatpush1.msra.mxu0 0.0
        %2237 = vmatprep.subr.mxu0 0.0
        %2238 = vmatpush1.msra.mxu0 0.0
        %2239 = vmatprep.subr.mxu0 0.0
        %2240 = vmatpush1.msra.mxu0 0.0
        %2241 = vmatprep.subr.mxu0 0.0
        %2242 = vmatpush1.msra.mxu0 0.0
        %2243 = vmatprep.subr.mxu0 0.0
        %2244 = vmatpush1.msra.mxu0 0.0
        %2245 = vmatprep.subr.mxu0 0.0
        %2246 = vmatpush1.msra.mxu0 0.0
        %2247 = vmatprep.subr.mxu0 0.0
        %2248 = vmatpush1.msra.mxu0 0.0
        %2249 = vmatprep.subr.mxu0 0.0
        %2250 = vmatpush1.msra.mxu0 0.0
        %2251 = vmatprep.subr.mxu0 0.0
        %2252 = vmatpush1.msra.mxu0 0.0
        %2253 = vmatprep.subr.mxu0 0.0
        %2254 = vmatpush1.msra.mxu0 0.0
        %2255 = vmatprep.subr.mxu0 0.0
        %2256 = vmatpush1.msra.mxu0 0.0
        %2257 = vmatprep.mubr.f32.mxu0 0.0
        %2258 = vmatmul.mubr.f32.gmra.mrb[0].mxu0 %v508
        %v2259 = vpop.f32.mrb[0].mxu0
        %v2260 = vadd.f32 %v2175, %v2259
        %v2261 = vpop.f32.mrb[0].mxu0
        %2262 = vmatprep.mubr.f32.mxu0 0.0
        %2263 = vmatmul.mubr.f32.gmra.mrb[0].mxu0 %v511
        %v2264 = vpop.f32.mrb[0].mxu0
        %v2265 = vadd.f32 %v2180, %v2264
        %v2266 = vpop.f32.mrb[0].mxu0
        %2267 = vmatprep.mubr.f32.mxu0 0.0
        %2268 = vmatmul.mubr.f32.gmra.mrb[0].mxu0 %v514
        %v2269 = vpop.f32.mrb[0].mxu0
        %v2270 = vadd.f32 %v2185, %v2269
        %v2271 = vpop.f32.mrb[0].mxu0
        %2272 = vmatprep.mubr.f32.mxu0 0.0
        %2273 = vmatmul.mubr.f32.gmra.mrb[0].mxu0 %v517
        %v2274 = vpop.f32.mrb[0].mxu0
        %v2275 = vadd.f32 %v2190, %v2274
        %v2276 = vpop.f32.mrb[0].mxu0
        %2277 = vdwg.mxu0
        %s2278 = scalar_lea.vmem %s375, 96
        %v2279 = vld [vmem:[%s2278] sm:$0xff]
        %v2280 = vld [vmem:[%s2278 + $0x8] sm:$0xff]
        %v2281 = vld [vmem:[%s2278 + $0x10] sm:$0xff]
        %v2282 = vld [vmem:[%s2278 + $0x18] sm:$0xff]
        %s2283 = scalar_lea.vmem %s382, 96
        %v2284 = vld [vmem:[%s2283] sm:$0xff]
        %v2285 = vld [vmem:[%s2283 + $0x8] sm:$0xff]
        %v2286 = vld [vmem:[%s2283 + $0x10] sm:$0xff]
        %v2287 = vld [vmem:[%s2283 + $0x18] sm:$0xff]
        %2288 = vmatprep.subr.mxu0 0.0
        %2289 = vmatpush1.msra.mxu0 %v2284
        %2290 = vmatprep.subr.mxu0 0.0
        %2291 = vmatpush1.msra.mxu0 %v2285
        %2292 = vmatprep.subr.mxu0 0.0
        %2293 = vmatpush1.msra.mxu0 %v2286
        %2294 = vmatprep.subr.mxu0 0.0
        %2295 = vmatpush1.msra.mxu0 %v2287
        %2296 = vmatprep.subr.mxu0 0.0
        %2297 = vmatpush1.msra.mxu0 0.0
        %2298 = vmatprep.subr.mxu0 0.0
        %2299 = vmatpush1.msra.mxu0 0.0
        %2300 = vmatprep.subr.mxu0 0.0
        %2301 = vmatpush1.msra.mxu0 0.0
        %2302 = vmatprep.subr.mxu0 0.0
        %2303 = vmatpush1.msra.mxu0 0.0
        %2304 = vmatprep.subr.mxu0 0.0
        %2305 = vmatpush1.msra.mxu0 0.0
        %2306 = vmatprep.subr.mxu0 0.0
        %2307 = vmatpush1.msra.mxu0 0.0
        %2308 = vmatprep.subr.mxu0 0.0
        %2309 = vmatpush1.msra.mxu0 0.0
        %2310 = vmatprep.subr.mxu0 0.0
        %2311 = vmatpush1.msra.mxu0 0.0
        %2312 = vmatprep.subr.mxu0 0.0
        %2313 = vmatpush1.msra.mxu0 0.0
        %2314 = vmatprep.subr.mxu0 0.0
        %2315 = vmatpush1.msra.mxu0 0.0
        %2316 = vmatprep.subr.mxu0 0.0
        %2317 = vmatpush1.msra.mxu0 0.0
        %2318 = vmatprep.subr.mxu0 0.0
        %2319 = vmatpush1.msra.mxu0 0.0
        %2320 = vmatprep.subr.mxu0 0.0
        %2321 = vmatpush1.msra.mxu0 0.0
        %2322 = vmatprep.subr.mxu0 0.0
        %2323 = vmatpush1.msra.mxu0 0.0
        %2324 = vmatprep.subr.mxu0 0.0
        %2325 = vmatpush1.msra.mxu0 0.0
        %2326 = vmatprep.subr.mxu0 0.0
        %2327 = vmatpush1.msra.mxu0 0.0
        %2328 = vmatprep.subr.mxu0 0.0
        %2329 = vmatpush1.msra.mxu0 0.0
        %2330 = vmatprep.subr.mxu0 0.0
        %2331 = vmatpush1.msra.mxu0 0.0
        %2332 = vmatprep.subr.mxu0 0.0
        %2333 = vmatpush1.msra.mxu0 0.0
        %2334 = vmatprep.subr.mxu0 0.0
        %2335 = vmatpush1.msra.mxu0 0.0
        %2336 = vmatprep.subr.mxu0 0.0
        %2337 = vmatpush1.msra.mxu0 0.0
        %2338 = vmatprep.subr.mxu0 0.0
        %2339 = vmatpush1.msra.mxu0 0.0
        %2340 = vmatprep.subr.mxu0 0.0
        %2341 = vmatpush1.msra.mxu0 0.0
        %2342 = vmatprep.subr.mxu0 0.0
        %2343 = vmatpush1.msra.mxu0 0.0
        %2344 = vmatprep.subr.mxu0 0.0
        %2345 = vmatpush1.msra.mxu0 0.0
        %2346 = vmatprep.subr.mxu0 0.0
        %2347 = vmatpush1.msra.mxu0 0.0
        %2348 = vmatprep.subr.mxu0 0.0
        %2349 = vmatpush1.msra.mxu0 0.0
        %2350 = vmatprep.subr.mxu0 0.0
        %2351 = vmatpush1.msra.mxu0 0.0
        %2352 = vmatprep.mubr.f32.mxu0 0.0
        %2353 = vmatmul.mubr.f32.gmra.mrb[0].mxu0 %v411
        %v2354 = vpop.f32.mrb[0].mxu0
        %v2355 = vadd.f32 0.0, %v2354
        %v2356 = vpop.f32.mrb[0].mxu0
        %2357 = vmatprep.mubr.f32.mxu0 0.0
        %2358 = vmatmul.mubr.f32.gmra.mrb[0].mxu0 %v414
        %v2359 = vpop.f32.mrb[0].mxu0
        %v2360 = vadd.f32 0.0, %v2359
        %v2361 = vpop.f32.mrb[0].mxu0
        %2362 = vmatprep.mubr.f32.mxu0 0.0
        %2363 = vmatmul.mubr.f32.gmra.mrb[0].mxu0 %v417
        %v2364 = vpop.f32.mrb[0].mxu0
        %v2365 = vadd.f32 0.0, %v2364
        %v2366 = vpop.f32.mrb[0].mxu0
        %2367 = vmatprep.mubr.f32.mxu0 0.0
        %2368 = vmatmul.mubr.f32.gmra.mrb[0].mxu0 %v420
        %v2369 = vpop.f32.mrb[0].mxu0
        %v2370 = vadd.f32 0.0, %v2369
        %v2371 = vpop.f32.mrb[0].mxu0
        %2372 = vdwg.mxu0
        %2373 = vmatprep.subr.mxu0 0.0
        %2374 = vmatpush1.msra.mxu0 %v2279
        %2375 = vmatprep.subr.mxu0 0.0
        %2376 = vmatpush1.msra.mxu0 %v2280
        %2377 = vmatprep.subr.mxu0 0.0
        %2378 = vmatpush1.msra.mxu0 %v2281
        %2379 = vmatprep.subr.mxu0 0.0
        %2380 = vmatpush1.msra.mxu0 %v2282
        %2381 = vmatprep.subr.mxu0 0.0
        %2382 = vmatpush1.msra.mxu0 0.0
        %2383 = vmatprep.subr.mxu0 0.0
        %2384 = vmatpush1.msra.mxu0 0.0
        %2385 = vmatprep.subr.mxu0 0.0
        %2386 = vmatpush1.msra.mxu0 0.0
        %2387 = vmatprep.subr.mxu0 0.0
        %2388 = vmatpush1.msra.mxu0 0.0
        %2389 = vmatprep.subr.mxu0 0.0
        %2390 = vmatpush1.msra.mxu0 0.0
        %2391 = vmatprep.subr.mxu0 0.0
        %2392 = vmatpush1.msra.mxu0 0.0
        %2393 = vmatprep.subr.mxu0 0.0
        %2394 = vmatpush1.msra.mxu0 0.0
        %2395 = vmatprep.subr.mxu0 0.0
        %2396 = vmatpush1.msra.mxu0 0.0
        %2397 = vmatprep.subr.mxu0 0.0
        %2398 = vmatpush1.msra.mxu0 0.0
        %2399 = vmatprep.subr.mxu0 0.0
        %2400 = vmatpush1.msra.mxu0 0.0
        %2401 = vmatprep.subr.mxu0 0.0
        %2402 = vmatpush1.msra.mxu0 0.0
        %2403 = vmatprep.subr.mxu0 0.0
        %2404 = vmatpush1.msra.mxu0 0.0
        %2405 = vmatprep.subr.mxu0 0.0
        %2406 = vmatpush1.msra.mxu0 0.0
        %2407 = vmatprep.subr.mxu0 0.0
        %2408 = vmatpush1.msra.mxu0 0.0
        %2409 = vmatprep.subr.mxu0 0.0
        %2410 = vmatpush1.msra.mxu0 0.0
        %2411 = vmatprep.subr.mxu0 0.0
        %2412 = vmatpush1.msra.mxu0 0.0
        %2413 = vmatprep.subr.mxu0 0.0
        %2414 = vmatpush1.msra.mxu0 0.0
        %2415 = vmatprep.subr.mxu0 0.0
        %2416 = vmatpush1.msra.mxu0 0.0
        %2417 = vmatprep.subr.mxu0 0.0
        %2418 = vmatpush1.msra.mxu0 0.0
        %2419 = vmatprep.subr.mxu0 0.0
        %2420 = vmatpush1.msra.mxu0 0.0
        %2421 = vmatprep.subr.mxu0 0.0
        %2422 = vmatpush1.msra.mxu0 0.0
        %2423 = vmatprep.subr.mxu0 0.0
        %2424 = vmatpush1.msra.mxu0 0.0
        %2425 = vmatprep.subr.mxu0 0.0
        %2426 = vmatpush1.msra.mxu0 0.0
        %2427 = vmatprep.subr.mxu0 0.0
        %2428 = vmatpush1.msra.mxu0 0.0
        %2429 = vmatprep.subr.mxu0 0.0
        %2430 = vmatpush1.msra.mxu0 0.0
        %2431 = vmatprep.subr.mxu0 0.0
        %2432 = vmatpush1.msra.mxu0 0.0
        %2433 = vmatprep.subr.mxu0 0.0
        %2434 = vmatpush1.msra.mxu0 0.0
        %2435 = vmatprep.subr.mxu0 0.0
        %2436 = vmatpush1.msra.mxu0 0.0
        %2437 = vmatprep.mubr.f32.mxu0 0.0
        %2438 = vmatmul.mubr.f32.gmra.mrb[0].mxu0 %v508
        %v2439 = vpop.f32.mrb[0].mxu0
        %v2440 = vadd.f32 %v2355, %v2439
        %v2441 = vpop.f32.mrb[0].mxu0
        %2442 = vmatprep.mubr.f32.mxu0 0.0
        %2443 = vmatmul.mubr.f32.gmra.mrb[0].mxu0 %v511
        %v2444 = vpop.f32.mrb[0].mxu0
        %v2445 = vadd.f32 %v2360, %v2444
        %v2446 = vpop.f32.mrb[0].mxu0
        %2447 = vmatprep.mubr.f32.mxu0 0.0
        %2448 = vmatmul.mubr.f32.gmra.mrb[0].mxu0 %v514
        %v2449 = vpop.f32.mrb[0].mxu0
        %v2450 = vadd.f32 %v2365, %v2449
        %v2451 = vpop.f32.mrb[0].mxu0
        %2452 = vmatprep.mubr.f32.mxu0 0.0
        %2453 = vmatmul.mubr.f32.gmra.mrb[0].mxu0 %v517
        %v2454 = vpop.f32.mrb[0].mxu0
        %v2455 = vadd.f32 %v2370, %v2454
        %v2456 = vpop.f32.mrb[0].mxu0
        %2457 = vdwg.mxu0
        %v2459 = vsel %vm409, %v2440, 0
        %v2462 = vsel %vm409, %v2445, 0
        %v2465 = vsel %vm409, %v2450, 0
        %v2468 = vsel %vm409, %v2455, 0
        %2470 = vmatprep.subr.mxu0 0.0
        %2471 = vmatpush1.msra.mxu0 %v397
        %2472 = vmatprep.subr.mxu0 0.0
        %2473 = vmatpush1.msra.mxu0 %v398
        %2474 = vmatprep.subr.mxu0 0.0
        %2475 = vmatpush1.msra.mxu0 %v399
        %2476 = vmatprep.subr.mxu0 0.0
        %2477 = vmatpush1.msra.mxu0 %v400
        %2478 = vmatprep.subr.mxu0 0.0
        %2479 = vmatpush1.msra.mxu0 0.0
        %2480 = vmatprep.subr.mxu0 0.0
        %2481 = vmatpush1.msra.mxu0 0.0
        %2482 = vmatprep.subr.mxu0 0.0
        %2483 = vmatpush1.msra.mxu0 0.0
        %2484 = vmatprep.subr.mxu0 0.0
        %2485 = vmatpush1.msra.mxu0 0.0
        %2486 = vmatprep.subr.mxu0 0.0
        %2487 = vmatpush1.msra.mxu0 0.0
        %2488 = vmatprep.subr.mxu0 0.0
        %2489 = vmatpush1.msra.mxu0 0.0
        %2490 = vmatprep.subr.mxu0 0.0
        %2491 = vmatpush1.msra.mxu0 0.0
        %2492 = vmatprep.subr.mxu0 0.0
        %2493 = vmatpush1.msra.mxu0 0.0
        %2494 = vmatprep.subr.mxu0 0.0
        %2495 = vmatpush1.msra.mxu0 0.0
        %2496 = vmatprep.subr.mxu0 0.0
        %2497 = vmatpush1.msra.mxu0 0.0
        %2498 = vmatprep.subr.mxu0 0.0
        %2499 = vmatpush1.msra.mxu0 0.0
        %2500 = vmatprep.subr.mxu0 0.0
        %2501 = vmatpush1.msra.mxu0 0.0
        %2502 = vmatprep.subr.mxu0 0.0
        %2503 = vmatpush1.msra.mxu0 0.0
        %2504 = vmatprep.subr.mxu0 0.0
        %2505 = vmatpush1.msra.mxu0 0.0
        %2506 = vmatprep.subr.mxu0 0.0
        %2507 = vmatpush1.msra.mxu0 0.0
        %2508 = vmatprep.subr.mxu0 0.0
        %2509 = vmatpush1.msra.mxu0 0.0
        %2510 = vmatprep.subr.mxu0 0.0
        %2511 = vmatpush1.msra.mxu0 0.0
        %2512 = vmatprep.subr.mxu0 0.0
        %2513 = vmatpush1.msra.mxu0 0.0
        %2514 = vmatprep.subr.mxu0 0.0
        %2515 = vmatpush1.msra.mxu0 0.0
        %2516 = vmatprep.subr.mxu0 0.0
        %2517 = vmatpush1.msra.mxu0 0.0
        %2518 = vmatprep.subr.mxu0 0.0
        %2519 = vmatpush1.msra.mxu0 0.0
        %2520 = vmatprep.subr.mxu0 0.0
        %2521 = vmatpush1.msra.mxu0 0.0
        %2522 = vmatprep.subr.mxu0 0.0
        %2523 = vmatpush1.msra.mxu0 0.0
        %2524 = vmatprep.subr.mxu0 0.0
        %2525 = vmatpush1.msra.mxu0 0.0
        %2526 = vmatprep.subr.mxu0 0.0
        %2527 = vmatpush1.msra.mxu0 0.0
        %2528 = vmatprep.subr.mxu0 0.0
        %2529 = vmatpush1.msra.mxu0 0.0
        %2530 = vmatprep.subr.mxu0 0.0
        %2531 = vmatpush1.msra.mxu0 0.0
        %2532 = vmatprep.subr.mxu0 0.0
        %2533 = vmatpush1.msra.mxu0 0.0
        %2534 = vmatprep.mubr.f32.mxu0 0.0
        %2535 = vmatmul.mubr.f32.gmra.mrb[0].mxu0 %v2459
        %v2536 = vpop.f32.mrb[0].mxu0
        %v2537 = vadd.f32 0.0, %v2536
        %v2538 = vpop.f32.mrb[0].mxu0
        %2539 = vmatprep.mubr.f32.mxu0 0.0
        %2540 = vmatmul.mubr.f32.gmra.mrb[0].mxu0 %v2462
        %v2541 = vpop.f32.mrb[0].mxu0
        %v2542 = vadd.f32 0.0, %v2541
        %v2543 = vpop.f32.mrb[0].mxu0
        %2544 = vmatprep.mubr.f32.mxu0 0.0
        %2545 = vmatmul.mubr.f32.gmra.mrb[0].mxu0 %v2465
        %v2546 = vpop.f32.mrb[0].mxu0
        %v2547 = vadd.f32 0.0, %v2546
        %v2548 = vpop.f32.mrb[0].mxu0
        %2549 = vmatprep.mubr.f32.mxu0 0.0
        %2550 = vmatmul.mubr.f32.gmra.mrb[0].mxu0 %v2468
        %v2551 = vpop.f32.mrb[0].mxu0
        %v2552 = vadd.f32 0.0, %v2551
        %v2553 = vpop.f32.mrb[0].mxu0
        %2554 = vdwg.mxu0
        %v2556 = vsel %vm409, %v2260, 0
        %v2559 = vsel %vm409, %v2265, 0
        %v2562 = vsel %vm409, %v2270, 0
        %v2565 = vsel %vm409, %v2275, 0
        %2567 = vmatprep.subr.mxu0 0.0
        %2568 = vmatpush1.msra.mxu0 %v393
        %2569 = vmatprep.subr.mxu0 0.0
        %2570 = vmatpush1.msra.mxu0 %v394
        %2571 = vmatprep.subr.mxu0 0.0
        %2572 = vmatpush1.msra.mxu0 %v395
        %2573 = vmatprep.subr.mxu0 0.0
        %2574 = vmatpush1.msra.mxu0 %v396
        %2575 = vmatprep.subr.mxu0 0.0
        %2576 = vmatpush1.msra.mxu0 0.0
        %2577 = vmatprep.subr.mxu0 0.0
        %2578 = vmatpush1.msra.mxu0 0.0
        %2579 = vmatprep.subr.mxu0 0.0
        %2580 = vmatpush1.msra.mxu0 0.0
        %2581 = vmatprep.subr.mxu0 0.0
        %2582 = vmatpush1.msra.mxu0 0.0
        %2583 = vmatprep.subr.mxu0 0.0
        %2584 = vmatpush1.msra.mxu0 0.0
        %2585 = vmatprep.subr.mxu0 0.0
        %2586 = vmatpush1.msra.mxu0 0.0
        %2587 = vmatprep.subr.mxu0 0.0
        %2588 = vmatpush1.msra.mxu0 0.0
        %2589 = vmatprep.subr.mxu0 0.0
        %2590 = vmatpush1.msra.mxu0 0.0
        %2591 = vmatprep.subr.mxu0 0.0
        %2592 = vmatpush1.msra.mxu0 0.0
        %2593 = vmatprep.subr.mxu0 0.0
        %2594 = vmatpush1.msra.mxu0 0.0
        %2595 = vmatprep.subr.mxu0 0.0
        %2596 = vmatpush1.msra.mxu0 0.0
        %2597 = vmatprep.subr.mxu0 0.0
        %2598 = vmatpush1.msra.mxu0 0.0
        %2599 = vmatprep.subr.mxu0 0.0
        %2600 = vmatpush1.msra.mxu0 0.0
        %2601 = vmatprep.subr.mxu0 0.0
        %2602 = vmatpush1.msra.mxu0 0.0
        %2603 = vmatprep.subr.mxu0 0.0
        %2604 = vmatpush1.msra.mxu0 0.0
        %2605 = vmatprep.subr.mxu0 0.0
        %2606 = vmatpush1.msra.mxu0 0.0
        %2607 = vmatprep.subr.mxu0 0.0
        %2608 = vmatpush1.msra.mxu0 0.0
        %2609 = vmatprep.subr.mxu0 0.0
        %2610 = vmatpush1.msra.mxu0 0.0
        %2611 = vmatprep.subr.mxu0 0.0
        %2612 = vmatpush1.msra.mxu0 0.0
        %2613 = vmatprep.subr.mxu0 0.0
        %2614 = vmatpush1.msra.mxu0 0.0
        %2615 = vmatprep.subr.mxu0 0.0
        %2616 = vmatpush1.msra.mxu0 0.0
        %2617 = vmatprep.subr.mxu0 0.0
        %2618 = vmatpush1.msra.mxu0 0.0
        %2619 = vmatprep.subr.mxu0 0.0
        %2620 = vmatpush1.msra.mxu0 0.0
        %2621 = vmatprep.subr.mxu0 0.0
        %2622 = vmatpush1.msra.mxu0 0.0
        %2623 = vmatprep.subr.mxu0 0.0
        %2624 = vmatpush1.msra.mxu0 0.0
        %2625 = vmatprep.subr.mxu0 0.0
        %2626 = vmatpush1.msra.mxu0 0.0
        %2627 = vmatprep.subr.mxu0 0.0
        %2628 = vmatpush1.msra.mxu0 0.0
        %2629 = vmatprep.subr.mxu0 0.0
        %2630 = vmatpush1.msra.mxu0 0.0
        %2631 = vmatprep.mubr.f32.mxu0 0.0
        %2632 = vmatmul.mubr.f32.gmra.mrb[0].mxu0 %v2556
        %v2633 = vpop.f32.mrb[0].mxu0
        %v2634 = vadd.f32 %v2537, %v2633
        %v2635 = vpop.f32.mrb[0].mxu0
        %2636 = vmatprep.mubr.f32.mxu0 0.0
        %2637 = vmatmul.mubr.f32.gmra.mrb[0].mxu0 %v2559
        %v2638 = vpop.f32.mrb[0].mxu0
        %v2639 = vadd.f32 %v2542, %v2638
        %v2640 = vpop.f32.mrb[0].mxu0
        %2641 = vmatprep.mubr.f32.mxu0 0.0
        %2642 = vmatmul.mubr.f32.gmra.mrb[0].mxu0 %v2562
        %v2643 = vpop.f32.mrb[0].mxu0
        %v2644 = vadd.f32 %v2547, %v2643
        %v2645 = vpop.f32.mrb[0].mxu0
        %2646 = vmatprep.mubr.f32.mxu0 0.0
        %2647 = vmatmul.mubr.f32.gmra.mrb[0].mxu0 %v2565
        %v2648 = vpop.f32.mrb[0].mxu0
        %v2649 = vadd.f32 %v2552, %v2648
        %v2650 = vpop.f32.mrb[0].mxu0
        %2651 = vdwg.mxu0
        %s2652 = scalar_lea.vmem %s355, 96 [#allocation2]
        %2653 = vst.msk [vmem:[%s2652] sm:$0xff] %vm409, %v2634
        %2654 = vst.msk [vmem:[%s2652 + $0x8] sm:$0xff] %vm409, %v2639
        %2655 = vst.msk [vmem:[%s2652 + $0x10] sm:$0xff] %vm409, %v2644
        %2656 = vst.msk [vmem:[%s2652 + $0x18] sm:$0xff] %vm409, %v2649
        %s2657 = sand.u32 %s218, 1
        %s2658 = scalar_lea.sflag [#allocation3], %s2657
        %s2659 = sand.u32 %s218, 1
        %s2660 = smul.addr %s2659, 128
        %s2661 = scalar_lea.vmem [#allocation2], %s2660
        // Predicated region
        $region53: #{dtcwt_inverse.5} parent=51 // pred_check
          %p2662 = pneg %p228
        $region54: #{dtcwt_inverse.5} parent=51 // pred_check_branch
          %2664 = sbr.rel (%p2662) target = $region56
        $region55: #{dtcwt_inverse.5} parent=51 // pred_region
          %s2665 = smul.u32 4, %s22
          %s2667 = ssub.s32 2048, 2048
          %2668 = vsyncadd %s2658, %s2667
          %s2669 = smul.addr %s2665, 4
          %s2670 = smul.addr %s2669, 128
          %s2671 = scalar_lea.hbm %s8, %s2670
          %s2672 = sshll.u32 %s2661, 4
          %s2673 = int_to_ptr.vmem [resolvable:$true] %s2672
          %2678 = dma.vmem_to_hbm [thread:$0]  %s2673, 2048, %s2671, %s2658, 128, 128, 8
        $region56: #{dtcwt_inverse.5} parent=51 // pred_fallthru
          _
      $region52: #{dtcwt_inverse.5} parent=5 // pred_fallthru
        _
      %p2679 = scmp.le.s32.totalorder 2, %s17
      // Predicated region
      $region57: #{dtcwt_inverse.5} parent=5 // pred_check
        %p2680 = pneg %p2679
      $region58: #{dtcwt_inverse.5} parent=5 // pred_check_branch
        %2682 = sbr.rel (%p2680) target = $region60
      $region59: #{dtcwt_inverse.5} parent=5 // pred_region
        %s2683 = ssub.s32 %s17, 2
        // Predicated region
        $region61: #{dtcwt_inverse.5} parent=59 // pred_check
          %p2684 = pneg %p234
        $region62: #{dtcwt_inverse.5} parent=59 // pred_check_branch
          %2686 = sbr.rel (%p2684) target = $region64
        $region63: #{dtcwt_inverse.5} parent=59 // pred_region
          %s2687 = sand.u32 %s219, 1
          %s2688 = scalar_lea.sflag [#allocation3], %s2687
          %s2689 = sand.u32 %s219, 1
          %s2690 = smul.addr %s2689, 128
          %s2691 = scalar_lea.vmem [#allocation2], %s2690
          %2692 = dma.done %s2688, 2048
        $region64: #{dtcwt_inverse.5} parent=59 // pred_fallthru
          _
      $region60: #{dtcwt_inverse.5} parent=5 // pred_fallthru
        _
    $region6: #{dtcwt_inverse.5} parent=1 // loop_footer
      %s21 = sadd.s32 1, %s17
    $region7: #{dtcwt_inverse.5} parent=1 // loop_footer_branch
      %16 = sbr.rel target = $region3
    $region8: #{dtcwt_inverse.5} parent=1 // loop_exit
      _
    %2693 = vsyncpa [#allocation3], 1
    %s2694 = scalar_lea.sflag [#allocation3], 1
    %2695 = vsyncpa %s2694, 1

</llo_original>
